<compile_context>
chip_gen: v7x
topology: tpu7x:2x2x1
jax: 0.10.0
libtpu: 0.0.40
codegen_flags: <defaults>
</compile_context>

<pallas_src>
import jax
import jax.numpy as jnp
import numpy as np
from jax import lax
from jax.experimental import pallas as pl
from jax.experimental.pallas import tpu as pltpu

EPS = 1e-5
_INV_SQRT2 = 0.7071067811865476


def _gelu(x):
    # exact (erf) GELU, matching torch.nn.GELU() default
    return 0.5 * x * (1.0 + lax.erf(x * _INV_SQRT2))


# --------------------------------------------------------------------------
# Fused kernel: conv1(1x1)+bn1+gelu -> conv2(3x3, im2col)+bn2+gelu ->
#               conv3(1x1)+bn3 -> SE -> +identity -> gelu.   One image per
#               grid step; everything stays in VMEM between stages.
# --------------------------------------------------------------------------
def _bottleneck_se_kernel(x_ref, w1_ref, s1_ref, b1_ref,
                          w2_ref, s2_ref, b2_ref,
                          w3_ref, s3_ref, b3_ref,
                          f1w_ref, f1b_ref, f2w_ref, f2b_ref,
                          o_ref, xp_ref, col_ref):
    H, W, Cin = x_ref.shape[1], x_ref.shape[2], x_ref.shape[3]
    Cmid = w1_ref.shape[1]
    C4 = w3_ref.shape[1]
    P = W + 2                    # row pitch of the flat zero-padded plane
    nrows = H * P                # conv2 output rows (incl. 2 wrap cols per row)
    HW = H * W

    # ---- conv1 (1x1) + bn1 + gelu: one (H*W, Cin) x (Cin, Cmid) matmul ------
    xf = x_ref[0].reshape(HW, Cin)                                 # bf16
    o1 = jnp.dot(xf, w1_ref[...], preferred_element_type=jnp.float32)
    o1 = _gelu(o1 * s1_ref[...] + b1_ref[...])
    o1 = o1.astype(jnp.bfloat16).reshape(H, W, Cmid)

    # ---- zero-padded flat plane (pitch P) in VMEM ----------------------------
    # Border: top padded row (+ left pad of first data row) and the bottom
    # margin read by the dy=1,2 taps.  Interior rows and their left/right pad
    # columns are all rewritten each image -> no cross-iteration state.
    xp_ref[0:P + 1, :] = jnp.zeros((P + 1, Cmid), dtype=xp_ref.dtype)
    xp_ref[(H + 1) * P:(H + 3) * P, :] = jnp.zeros((2 * P, Cmid),
                                                   dtype=xp_ref.dtype)
    z2 = jnp.zeros((2, Cmid), dtype=xp_ref.dtype)
    for y in range(H):                                             # static unroll
        base = (y + 1) * P
        xp_ref[base + 1:base + 1 + W, :] = o1[y]                   # data row
        xp_ref[base + W + 1:base + W + 3, :] = z2                  # right pad + next left pad

    # ---- conv2 (3x3) as one im2col matmul with K = 9*Cmid --------------------
    # Each tap is a contiguous row-offset slice of the flat plane; pack the 9
    # taps into the (nrows, 9*Cmid) slab, then a single MXU contraction.
    for t in range(9):
        dy, dx = t // 3, t % 3
        t0 = dy * P + dx
        col_ref[:, t * Cmid:(t + 1) * Cmid] = xp_ref[t0:t0 + nrows, :]
    o2 = jnp.dot(col_ref[...], w2_ref[...], preferred_element_type=jnp.float32)
    o2 = _gelu(o2 * s2_ref[...] + b2_ref[...])
    # drop the 2 wrap columns per row -> (H*W, Cmid)
    o2 = o2.reshape(H, P, Cmid)[:, :W, :].reshape(HW, Cmid).astype(jnp.bfloat16)

    # ---- conv3 (1x1) + bn3 ----------------------------------------------------
    o3 = jnp.dot(o2, w3_ref[...], preferred_element_type=jnp.float32)
    o3 = o3 * s3_ref[...] + b3_ref[...]                            # (H*W, C4) f32

    # ---- SE: global average pool, fc1+relu, fc2+sigmoid ----------------------
    # (In the H-tiled large-map variant this pool becomes a running per-tile
    #  accumulation / ones-vector matmul; here the plane is already resident.)
    pooled = jnp.mean(o3, axis=0, keepdims=True)                   # (1, C4)
    y = jnp.dot(pooled, f1w_ref[...],
                preferred_element_type=jnp.float32) + f1b_ref[...]
    y = jnp.maximum(y, 0.0)
    y = jnp.dot(y, f2w_ref[...],
                preferred_element_type=jnp.float32) + f2b_ref[...]
    y = jax.nn.sigmoid(y)                                          # (1, C4)

    # ---- channel gate + residual (identity = x, downsample=None) + gelu -----
    idf = x_ref[0].reshape(HW, Cin).astype(jnp.float32)
    out = _gelu(o3 * y + idf)
    o_ref[0] = out.reshape(H, W, C4).astype(o_ref.dtype)


def bottleneck_se_forward_nhwc(x, p, *, out_dtype=jnp.float32):
    N, H, W, Cin = x.shape
    Cmid = p["w1"].shape[1]
    C4 = p["w3"].shape[1]
    Cr = p["fc1w"].shape[1]
    assert Cin == C4, "downsample=None requires in_channels == out_channels*4"
    P = W + 2

    xb = x.astype(jnp.bfloat16)
    w1 = p["w1"].astype(jnp.bfloat16)                      # (Cin, Cmid)
    w2 = p["w2"].reshape(9 * Cmid, Cmid).astype(jnp.bfloat16)   # tap-major (9*Cmid, Cmid)
    w3 = p["w3"].astype(jnp.bfloat16)                      # (Cmid, C4)

    const = lambda n: (0, 0)
    return pl.pallas_call(
        _bottleneck_se_kernel,
        out_shape=jax.ShapeDtypeStruct((N, H, W, C4), out_dtype),
        grid=(N,),
        in_specs=[
            pl.BlockSpec((1, H, W, Cin), lambda n: (n, 0, 0, 0)),
            pl.BlockSpec((Cin, Cmid), const),      # resident weights (tiny; the
            pl.BlockSpec((1, Cmid), const),        # default double buffer costs
            pl.BlockSpec((1, Cmid), const),        # < 100 KiB total here)
            pl.BlockSpec((9 * Cmid, Cmid), const),
            pl.BlockSpec((1, Cmid), const),
            pl.BlockSpec((1, Cmid), const),
            pl.BlockSpec((Cmid, C4), const),
            pl.BlockSpec((1, C4), const),
            pl.BlockSpec((1, C4), const),
            pl.BlockSpec((C4, Cr), const),
            pl.BlockSpec((1, Cr), const),
            pl.BlockSpec((Cr, C4), const),
            pl.BlockSpec((1, C4), const),
        ],
        out_specs=pl.BlockSpec((1, H, W, C4), lambda n: (n, 0, 0, 0)),
        scratch_shapes=[
            pltpu.VMEM(((H + 3) * P, Cmid), jnp.bfloat16),   # flat padded plane
            pltpu.VMEM((H * P, 9 * Cmid), jnp.bfloat16),     # im2col slab
        ],
        compiler_params=pltpu.CompilerParams(
            dimension_semantics=("parallel",),
            vmem_limit_bytes=32 * 1024 * 1024),
    )(xb, w1, p["s1"], p["b1"], w2, p["s2"], p["b2"],
      w3, p["s3"], p["b3"], p["fc1w"], p["fc1b"], p["fc2w"], p["fc2b"])


def bottleneck_se_forward(x_nchw, p):
    # NCHW entry point for torch parity; prefer the NHWC entry point when the
    # surrounding model is already channels-last.
    x = jnp.transpose(x_nchw, (0, 2, 3, 1))                # NCHW -> NHWC
    out = bottleneck_se_forward_nhwc(x, p)
    return jnp.transpose(out, (0, 3, 1, 2))                # NHWC -> NCHW


# --------------------------------------------------------------------------
# Parameter setup
# --------------------------------------------------------------------------
def _fold_bn(gamma, beta, rmean, rvar):
    s = gamma / jnp.sqrt(rvar + EPS)
    b = beta - rmean * s
    return s.reshape(1, -1), b.reshape(1, -1)


def make_params(key, in_channels, out_channels, reduction=16):
    c_mid = out_channels
    c4 = out_channels * 4
    cr = c4 // reduction
    ks = jax.random.split(key, 16)

    def nrm(k, shape, scale=0.1):
        return scale * jax.random.normal(k, shape, jnp.float32)

    def bn(k, c):
        k1, k2, k3, k4 = jax.random.split(k, 4)
        gamma = 1.0 + 0.1 * jax.random.normal(k1, (c,), jnp.float32)
        beta = 0.1 * jax.random.normal(k2, (c,), jnp.float32)
        rmean = 0.1 * jax.random.normal(k3, (c,), jnp.float32)
        rvar = jax.random.uniform(k4, (c,), jnp.float32, 0.5, 1.5)
        return _fold_bn(gamma, beta, rmean, rvar)

    p = {}
    p["w1"] = nrm(ks[0], (in_channels, c_mid))             # (Cin, Cmid)   1x1
    p["w2"] = nrm(ks[1], (3, 3, c_mid, c_mid))             # HWIO          3x3
    p["w3"] = nrm(ks[2], (c_mid, c4))                      # (Cmid, C4)    1x1
    p["s1"], p["b1"] = bn(ks[3], c_mid)
    p["s2"], p["b2"] = bn(ks[4], c_mid)
    p["s3"], p["b3"] = bn(ks[5], c4)
    p["fc1w"] = nrm(ks[6], (c4, cr))                       # SE linears (in, out)
    p["fc1b"] = nrm(ks[7], (1, cr))
    p["fc2w"] = nrm(ks[8], (cr, c4))
    p["fc2b"] = nrm(ks[9], (1, c4))
    return p


# --------------------------------------------------------------------------
# Pure-JAX reference (same bf16-operand / f32-accumulate precision policy)
# --------------------------------------------------------------------------
def reference_forward(x_nchw, p):
    x = jnp.transpose(x_nchw, (0, 2, 3, 1))
    dn = ("NHWC", "HWIO", "NHWC")

    def conv(inp, w_hwio):
        return lax.conv_general_dilated(
            inp.astype(jnp.bfloat16), w_hwio.astype(jnp.bfloat16), (1, 1),
            "SAME", dimension_numbers=dn, preferred_element_type=jnp.float32)

    out = _gelu(conv(x, p["w1"].reshape(1, 1, *p["w1"].shape)) * p["s1"] + p["b1"])
    out = _gelu(conv(out, p["w2"]) * p["s2"] + p["b2"])
    out = conv(out, p["w3"].reshape(1, 1, *p["w3"].shape)) * p["s3"] + p["b3"]
    # SE
    y = jnp.mean(out, axis=(1, 2))                          # (N, C4)
    y = jnp.maximum(y @ p["fc1w"] + p["fc1b"], 0.0)
    y = jax.nn.sigmoid(y @ p["fc2w"] + p["fc2b"])
    out = out * y[:, None, None, :]
    # identity follows the kernel's bf16-input precision policy
    identity = x.astype(jnp.bfloat16).astype(jnp.float32)
    out = _gelu(out + identity)
    return jnp.transpose(out, (0, 3, 1, 2))


if __name__ == "__main__":
    # small config; in_channels = out_channels * expansion so the residual works
    # and Cin = C4 = 128 keeps every HBM-touching tensor lane-dense.
    N, H, W = 2, 16, 16
    out_channels = 32
    in_channels = out_channels * 4        # 128

    key = jax.random.PRNGKey(0)
    kx, kp = jax.random.split(key)
    x = jax.random.normal(kx, (N, in_channels, H, W), jnp.float32)
    params = make_params(kp, in_channels, out_channels)

    out = jax.block_until_ready(bottleneck_se_forward(x, params))
    ref = jax.block_until_ready(reference_forward(x, params))
    np.testing.assert_allclose(np.asarray(out), np.asarray(ref),
                               rtol=2e-2, atol=2e-2)
    print("KERNEL_OK")
</pallas_src>

<mosaic_0001>
module attributes {stable_mosaic.version = 11 : i64} {
  func.func @_bottleneck_se_kernel(%arg0: i32, %arg1: memref<1x16x16x128xbf16, #tpu.memory_space<vmem>>, %arg2: memref<128x32xbf16, #tpu.memory_space<vmem>>, %arg3: memref<1x32xf32, #tpu.memory_space<vmem>>, %arg4: memref<1x32xf32, #tpu.memory_space<vmem>>, %arg5: memref<288x32xbf16, #tpu.memory_space<vmem>>, %arg6: memref<1x32xf32, #tpu.memory_space<vmem>>, %arg7: memref<1x32xf32, #tpu.memory_space<vmem>>, %arg8: memref<32x128xbf16, #tpu.memory_space<vmem>>, %arg9: memref<1x128xf32, #tpu.memory_space<vmem>>, %arg10: memref<1x128xf32, #tpu.memory_space<vmem>>, %arg11: memref<128x8xf32, #tpu.memory_space<vmem>>, %arg12: memref<1x8xf32, #tpu.memory_space<vmem>>, %arg13: memref<8x128xf32, #tpu.memory_space<vmem>>, %arg14: memref<1x128xf32, #tpu.memory_space<vmem>>, %arg15: memref<1x16x16x128xf32, #tpu.memory_space<vmem>>, %arg16: memref<342x32xbf16, #tpu.memory_space<vmem>>, %arg17: memref<288x288xbf16, #tpu.memory_space<vmem>>) attributes {dimension_semantics = [#tpu.dimension_semantics<parallel>], iteration_bounds = array<i64: 2>, scalar_prefetch = 0 : i64, scratch_operands = 2 : i64, tpu.core_type = #tpu.core_type<tc>, window_params = [{transform_indices = @transform_0, window_bounds = array<i64: 1, 16, 16, 128>}, {pipeline_mode = #tpu.pipeline_mode<synchronous>, transform_indices = @transform_1, window_bounds = array<i64: 128, 32>}, {pipeline_mode = #tpu.pipeline_mode<synchronous>, transform_indices = @transform_2, window_bounds = array<i64: 1, 32>}, {pipeline_mode = #tpu.pipeline_mode<synchronous>, transform_indices = @transform_3, window_bounds = array<i64: 1, 32>}, {pipeline_mode = #tpu.pipeline_mode<synchronous>, transform_indices = @transform_4, window_bounds = array<i64: 288, 32>}, {pipeline_mode = #tpu.pipeline_mode<synchronous>, transform_indices = @transform_5, window_bounds = array<i64: 1, 32>}, {pipeline_mode = #tpu.pipeline_mode<synchronous>, transform_indices = @transform_6, window_bounds = array<i64: 1, 32>}, {pipeline_mode = #tpu.pipeline_mode<synchronous>, transform_indices = @transform_7, window_bounds = array<i64: 32, 128>}, {pipeline_mode = #tpu.pipeline_mode<synchronous>, transform_indices = @transform_8, window_bounds = array<i64: 1, 128>}, {pipeline_mode = #tpu.pipeline_mode<synchronous>, transform_indices = @transform_9, window_bounds = array<i64: 1, 128>}, {pipeline_mode = #tpu.pipeline_mode<synchronous>, transform_indices = @transform_10, window_bounds = array<i64: 128, 8>}, {pipeline_mode = #tpu.pipeline_mode<synchronous>, transform_indices = @transform_11, window_bounds = array<i64: 1, 8>}, {pipeline_mode = #tpu.pipeline_mode<synchronous>, transform_indices = @transform_12, window_bounds = array<i64: 8, 128>}, {pipeline_mode = #tpu.pipeline_mode<synchronous>, transform_indices = @transform_13, window_bounds = array<i64: 1, 128>}, {transform_indices = @transform_14, window_bounds = array<i64: 1, 16, 16, 128>}]} {
    %c0 = arith.constant 0 : index
    %c0_0 = arith.constant 0 : index
    %c0_1 = arith.constant 0 : index
    %c0_2 = arith.constant 0 : index
    %0 = vector.load %arg1[%c0, %c0_0, %c0_1, %c0_2] : memref<1x16x16x128xbf16, #tpu.memory_space<vmem>>, vector<1x16x16x128xbf16>
    %1 = vector.shape_cast %0 : vector<1x16x16x128xbf16> to vector<16x16x128xbf16>
    %2 = vector.shape_cast %1 : vector<16x16x128xbf16> to vector<256x128xbf16>
    %c0_3 = arith.constant 0 : index
    %c0_4 = arith.constant 0 : index
    %3 = vector.load %arg2[%c0_3, %c0_4] : memref<128x32xbf16, #tpu.memory_space<vmem>>, vector<128x32xbf16>
    %cst = arith.constant dense<0.000000e+00> : vector<256x32xf32>
    %4 = tpu.matmul %2, %3, %cst {dimension_numbers = #tpu.dot_dimension_numbers<[1], [0], [0], [1], [0, 0, 1, 1], [], []>} : vector<256x128xbf16>, vector<128x32xbf16>, vector<256x32xf32> -> vector<256x32xf32>
    %c0_5 = arith.constant 0 : index
    %c0_6 = arith.constant 0 : index
    %5 = vector.load %arg3[%c0_5, %c0_6] : memref<1x32xf32, #tpu.memory_space<vmem>>, vector<1x32xf32>
    %6 = vector.broadcast %5 : vector<1x32xf32> to vector<256x32xf32>
    %7 = arith.mulf %4, %6 : vector<256x32xf32>
    %c0_7 = arith.constant 0 : index
    %c0_8 = arith.constant 0 : index
    %8 = vector.load %arg4[%c0_7, %c0_8] : memref<1x32xf32, #tpu.memory_space<vmem>>, vector<1x32xf32>
    %9 = vector.broadcast %8 : vector<1x32xf32> to vector<256x32xf32>
    %10 = arith.addf %7, %9 : vector<256x32xf32>
    %cst_9 = arith.constant 5.000000e-01 : f32
    %11 = vector.broadcast %cst_9 : f32 to vector<256x32xf32>
    %12 = arith.mulf %11, %10 : vector<256x32xf32>
    %cst_10 = arith.constant 0.707106769 : f32
    %13 = vector.broadcast %cst_10 : f32 to vector<256x32xf32>
    %14 = arith.mulf %10, %13 : vector<256x32xf32>
    %15 = math.erf %14 : vector<256x32xf32>
    %cst_11 = arith.constant 1.000000e+00 : f32
    %16 = vector.broadcast %cst_11 : f32 to vector<256x32xf32>
    %17 = arith.addf %16, %15 : vector<256x32xf32>
    %18 = arith.mulf %12, %17 : vector<256x32xf32>
    %19 = arith.truncf %18 : vector<256x32xf32> to vector<256x32xbf16>
    %20 = vector.shape_cast %19 : vector<256x32xbf16> to vector<16x16x32xbf16>
    %cst_12 = arith.constant 0.000000e+00 : bf16
    %21 = vector.broadcast %cst_12 : bf16 to vector<19x32xbf16>
    %c0_13 = arith.constant 0 : index
    %c0_14 = arith.constant 0 : index
    %22 = vector.load %arg16[%c0_13, %c0_14] : memref<342x32xbf16, #tpu.memory_space<vmem>>, vector<19x32xbf16>
    tpu.vector_store %arg16[%c0_13, %c0_14], %21 {strides = array<i32>} : memref<342x32xbf16, #tpu.memory_space<vmem>>, vector<19x32xbf16>,
    %cst_15 = arith.constant 0.000000e+00 : bf16
    %23 = vector.broadcast %cst_15 : bf16 to vector<36x32xbf16>
    %c306 = arith.constant 306 : index
    %c0_16 = arith.constant 0 : index
    %24 = vector.load %arg16[%c306, %c0_16] : memref<342x32xbf16, #tpu.memory_space<vmem>>, vector<36x32xbf16>
    tpu.vector_store %arg16[%c306, %c0_16], %23 {strides = array<i32>} : memref<342x32xbf16, #tpu.memory_space<vmem>>, vector<36x32xbf16>,
    %cst_17 = arith.constant 0.000000e+00 : bf16
    %25 = vector.broadcast %cst_17 : bf16 to vector<2x32xbf16>
    %26 = vector.extract_strided_slice %20 {offsets = [0, 0, 0], sizes = [1, 16, 32], strides = [1, 1, 1]} : vector<16x16x32xbf16> to vector<1x16x32xbf16>
    %27 = vector.shape_cast %26 : vector<1x16x32xbf16> to vector<16x32xbf16>
    %c19 = arith.constant 19 : index
    %c0_18 = arith.constant 0 : index
    %28 = vector.load %arg16[%c19, %c0_18] : memref<342x32xbf16, #tpu.memory_space<vmem>>, vector<16x32xbf16>
    tpu.vector_store %arg16[%c19, %c0_18], %27 {strides = array<i32>} : memref<342x32xbf16, #tpu.memory_space<vmem>>, vector<16x32xbf16>,
    %c35 = arith.constant 35 : index
    %c0_19 = arith.constant 0 : index
    %29 = vector.load %arg16[%c35, %c0_19] : memref<342x32xbf16, #tpu.memory_space<vmem>>, vector<2x32xbf16>
    tpu.vector_store %arg16[%c35, %c0_19], %25 {strides = array<i32>} : memref<342x32xbf16, #tpu.memory_space<vmem>>, vector<2x32xbf16>,
    %30 = vector.extract_strided_slice %20 {offsets = [1, 0, 0], sizes = [1, 16, 32], strides = [1, 1, 1]} : vector<16x16x32xbf16> to vector<1x16x32xbf16>
    %31 = vector.shape_cast %30 : vector<1x16x32xbf16> to vector<16x32xbf16>
    %c37 = arith.constant 37 : index
    %c0_20 = arith.constant 0 : index
    %32 = vector.load %arg16[%c37, %c0_20] : memref<342x32xbf16, #tpu.memory_space<vmem>>, vector<16x32xbf16>
    tpu.vector_store %arg16[%c37, %c0_20], %31 {strides = array<i32>} : memref<342x32xbf16, #tpu.memory_space<vmem>>, vector<16x32xbf16>,
    %c53 = arith.constant 53 : index
    %c0_21 = arith.constant 0 : index
    %33 = vector.load %arg16[%c53, %c0_21] : memref<342x32xbf16, #tpu.memory_space<vmem>>, vector<2x32xbf16>
    tpu.vector_store %arg16[%c53, %c0_21], %25 {strides = array<i32>} : memref<342x32xbf16, #tpu.memory_space<vmem>>, vector<2x32xbf16>,
    %34 = vector.extract_strided_slice %20 {offsets = [2, 0, 0], sizes = [1, 16, 32], strides = [1, 1, 1]} : vector<16x16x32xbf16> to vector<1x16x32xbf16>
    %35 = vector.shape_cast %34 : vector<1x16x32xbf16> to vector<16x32xbf16>
    %c55 = arith.constant 55 : index
    %c0_22 = arith.constant 0 : index
    %36 = vector.load %arg16[%c55, %c0_22] : memref<342x32xbf16, #tpu.memory_space<vmem>>, vector<16x32xbf16>
    tpu.vector_store %arg16[%c55, %c0_22], %35 {strides = array<i32>} : memref<342x32xbf16, #tpu.memory_space<vmem>>, vector<16x32xbf16>,
    %c71 = arith.constant 71 : index
    %c0_23 = arith.constant 0 : index
    %37 = vector.load %arg16[%c71, %c0_23] : memref<342x32xbf16, #tpu.memory_space<vmem>>, vector<2x32xbf16>
    tpu.vector_store %arg16[%c71, %c0_23], %25 {strides = array<i32>} : memref<342x32xbf16, #tpu.memory_space<vmem>>, vector<2x32xbf16>,
    %38 = vector.extract_strided_slice %20 {offsets = [3, 0, 0], sizes = [1, 16, 32], strides = [1, 1, 1]} : vector<16x16x32xbf16> to vector<1x16x32xbf16>
    %39 = vector.shape_cast %38 : vector<1x16x32xbf16> to vector<16x32xbf16>
    %c73 = arith.constant 73 : index
    %c0_24 = arith.constant 0 : index
    %40 = vector.load %arg16[%c73, %c0_24] : memref<342x32xbf16, #tpu.memory_space<vmem>>, vector<16x32xbf16>
    tpu.vector_store %arg16[%c73, %c0_24], %39 {strides = array<i32>} : memref<342x32xbf16, #tpu.memory_space<vmem>>, vector<16x32xbf16>,
    %c89 = arith.constant 89 : index
    %c0_25 = arith.constant 0 : index
    %41 = vector.load %arg16[%c89, %c0_25] : memref<342x32xbf16, #tpu.memory_space<vmem>>, vector<2x32xbf16>
    tpu.vector_store %arg16[%c89, %c0_25], %25 {strides = array<i32>} : memref<342x32xbf16, #tpu.memory_space<vmem>>, vector<2x32xbf16>,
    %42 = vector.extract_strided_slice %20 {offsets = [4, 0, 0], sizes = [1, 16, 32], strides = [1, 1, 1]} : vector<16x16x32xbf16> to vector<1x16x32xbf16>
    %43 = vector.shape_cast %42 : vector<1x16x32xbf16> to vector<16x32xbf16>
    %c91 = arith.constant 91 : index
    %c0_26 = arith.constant 0 : index
    %44 = vector.load %arg16[%c91, %c0_26] : memref<342x32xbf16, #tpu.memory_space<vmem>>, vector<16x32xbf16>
    tpu.vector_store %arg16[%c91, %c0_26], %43 {strides = array<i32>} : memref<342x32xbf16, #tpu.memory_space<vmem>>, vector<16x32xbf16>,
    %c107 = arith.constant 107 : index
    %c0_27 = arith.constant 0 : index
    %45 = vector.load %arg16[%c107, %c0_27] : memref<342x32xbf16, #tpu.memory_space<vmem>>, vector<2x32xbf16>
    tpu.vector_store %arg16[%c107, %c0_27], %25 {strides = array<i32>} : memref<342x32xbf16, #tpu.memory_space<vmem>>, vector<2x32xbf16>,
    %46 = vector.extract_strided_slice %20 {offsets = [5, 0, 0], sizes = [1, 16, 32], strides = [1, 1, 1]} : vector<16x16x32xbf16> to vector<1x16x32xbf16>
    %47 = vector.shape_cast %46 : vector<1x16x32xbf16> to vector<16x32xbf16>
    %c109 = arith.constant 109 : index
    %c0_28 = arith.constant 0 : index
    %48 = vector.load %arg16[%c109, %c0_28] : memref<342x32xbf16, #tpu.memory_space<vmem>>, vector<16x32xbf16>
    tpu.vector_store %arg16[%c109, %c0_28], %47 {strides = array<i32>} : memref<342x32xbf16, #tpu.memory_space<vmem>>, vector<16x32xbf16>,
    %c125 = arith.constant 125 : index
    %c0_29 = arith.constant 0 : index
    %49 = vector.load %arg16[%c125, %c0_29] : memref<342x32xbf16, #tpu.memory_space<vmem>>, vector<2x32xbf16>
    tpu.vector_store %arg16[%c125, %c0_29], %25 {strides = array<i32>} : memref<342x32xbf16, #tpu.memory_space<vmem>>, vector<2x32xbf16>,
    %50 = vector.extract_strided_slice %20 {offsets = [6, 0, 0], sizes = [1, 16, 32], strides = [1, 1, 1]} : vector<16x16x32xbf16> to vector<1x16x32xbf16>
    %51 = vector.shape_cast %50 : vector<1x16x32xbf16> to vector<16x32xbf16>
    %c127 = arith.constant 127 : index
    %c0_30 = arith.constant 0 : index
    %52 = vector.load %arg16[%c127, %c0_30] : memref<342x32xbf16, #tpu.memory_space<vmem>>, vector<16x32xbf16>
    tpu.vector_store %arg16[%c127, %c0_30], %51 {strides = array<i32>} : memref<342x32xbf16, #tpu.memory_space<vmem>>, vector<16x32xbf16>,
    %c143 = arith.constant 143 : index
    %c0_31 = arith.constant 0 : index
    %53 = vector.load %arg16[%c143, %c0_31] : memref<342x32xbf16, #tpu.memory_space<vmem>>, vector<2x32xbf16>
    tpu.vector_store %arg16[%c143, %c0_31], %25 {strides = array<i32>} : memref<342x32xbf16, #tpu.memory_space<vmem>>, vector<2x32xbf16>,
    %54 = vector.extract_strided_slice %20 {offsets = [7, 0, 0], sizes = [1, 16, 32], strides = [1, 1, 1]} : vector<16x16x32xbf16> to vector<1x16x32xbf16>
    %55 = vector.shape_cast %54 : vector<1x16x32xbf16> to vector<16x32xbf16>
    %c145 = arith.constant 145 : index
    %c0_32 = arith.constant 0 : index
    %56 = vector.load %arg16[%c145, %c0_32] : memref<342x32xbf16, #tpu.memory_space<vmem>>, vector<16x32xbf16>
    tpu.vector_store %arg16[%c145, %c0_32], %55 {strides = array<i32>} : memref<342x32xbf16, #tpu.memory_space<vmem>>, vector<16x32xbf16>,
    %c161 = arith.constant 161 : index
    %c0_33 = arith.constant 0 : index
    %57 = vector.load %arg16[%c161, %c0_33] : memref<342x32xbf16, #tpu.memory_space<vmem>>, vector<2x32xbf16>
    tpu.vector_store %arg16[%c161, %c0_33], %25 {strides = array<i32>} : memref<342x32xbf16, #tpu.memory_space<vmem>>, vector<2x32xbf16>,
    %58 = vector.extract_strided_slice %20 {offsets = [8, 0, 0], sizes = [1, 16, 32], strides = [1, 1, 1]} : vector<16x16x32xbf16> to vector<1x16x32xbf16>
    %59 = vector.shape_cast %58 : vector<1x16x32xbf16> to vector<16x32xbf16>
    %c163 = arith.constant 163 : index
    %c0_34 = arith.constant 0 : index
    %60 = vector.load %arg16[%c163, %c0_34] : memref<342x32xbf16, #tpu.memory_space<vmem>>, vector<16x32xbf16>
    tpu.vector_store %arg16[%c163, %c0_34], %59 {strides = array<i32>} : memref<342x32xbf16, #tpu.memory_space<vmem>>, vector<16x32xbf16>,
    %c179 = arith.constant 179 : index
    %c0_35 = arith.constant 0 : index
    %61 = vector.load %arg16[%c179, %c0_35] : memref<342x32xbf16, #tpu.memory_space<vmem>>, vector<2x32xbf16>
    tpu.vector_store %arg16[%c179, %c0_35], %25 {strides = array<i32>} : memref<342x32xbf16, #tpu.memory_space<vmem>>, vector<2x32xbf16>,
    %62 = vector.extract_strided_slice %20 {offsets = [9, 0, 0], sizes = [1, 16, 32], strides = [1, 1, 1]} : vector<16x16x32xbf16> to vector<1x16x32xbf16>
    %63 = vector.shape_cast %62 : vector<1x16x32xbf16> to vector<16x32xbf16>
    %c181 = arith.constant 181 : index
    %c0_36 = arith.constant 0 : index
    %64 = vector.load %arg16[%c181, %c0_36] : memref<342x32xbf16, #tpu.memory_space<vmem>>, vector<16x32xbf16>
    tpu.vector_store %arg16[%c181, %c0_36], %63 {strides = array<i32>} : memref<342x32xbf16, #tpu.memory_space<vmem>>, vector<16x32xbf16>,
    %c197 = arith.constant 197 : index
    %c0_37 = arith.constant 0 : index
    %65 = vector.load %arg16[%c197, %c0_37] : memref<342x32xbf16, #tpu.memory_space<vmem>>, vector<2x32xbf16>
    tpu.vector_store %arg16[%c197, %c0_37], %25 {strides = array<i32>} : memref<342x32xbf16, #tpu.memory_space<vmem>>, vector<2x32xbf16>,
    %66 = vector.extract_strided_slice %20 {offsets = [10, 0, 0], sizes = [1, 16, 32], strides = [1, 1, 1]} : vector<16x16x32xbf16> to vector<1x16x32xbf16>
    %67 = vector.shape_cast %66 : vector<1x16x32xbf16> to vector<16x32xbf16>
    %c199 = arith.constant 199 : index
    %c0_38 = arith.constant 0 : index
    %68 = vector.load %arg16[%c199, %c0_38] : memref<342x32xbf16, #tpu.memory_space<vmem>>, vector<16x32xbf16>
    tpu.vector_store %arg16[%c199, %c0_38], %67 {strides = array<i32>} : memref<342x32xbf16, #tpu.memory_space<vmem>>, vector<16x32xbf16>,
    %c215 = arith.constant 215 : index
    %c0_39 = arith.constant 0 : index
    %69 = vector.load %arg16[%c215, %c0_39] : memref<342x32xbf16, #tpu.memory_space<vmem>>, vector<2x32xbf16>
    tpu.vector_store %arg16[%c215, %c0_39], %25 {strides = array<i32>} : memref<342x32xbf16, #tpu.memory_space<vmem>>, vector<2x32xbf16>,
    %70 = vector.extract_strided_slice %20 {offsets = [11, 0, 0], sizes = [1, 16, 32], strides = [1, 1, 1]} : vector<16x16x32xbf16> to vector<1x16x32xbf16>
    %71 = vector.shape_cast %70 : vector<1x16x32xbf16> to vector<16x32xbf16>
    %c217 = arith.constant 217 : index
    %c0_40 = arith.constant 0 : index
    %72 = vector.load %arg16[%c217, %c0_40] : memref<342x32xbf16, #tpu.memory_space<vmem>>, vector<16x32xbf16>
    tpu.vector_store %arg16[%c217, %c0_40], %71 {strides = array<i32>} : memref<342x32xbf16, #tpu.memory_space<vmem>>, vector<16x32xbf16>,
    %c233 = arith.constant 233 : index
    %c0_41 = arith.constant 0 : index
    %73 = vector.load %arg16[%c233, %c0_41] : memref<342x32xbf16, #tpu.memory_space<vmem>>, vector<2x32xbf16>
    tpu.vector_store %arg16[%c233, %c0_41], %25 {strides = array<i32>} : memref<342x32xbf16, #tpu.memory_space<vmem>>, vector<2x32xbf16>,
    %74 = vector.extract_strided_slice %20 {offsets = [12, 0, 0], sizes = [1, 16, 32], strides = [1, 1, 1]} : vector<16x16x32xbf16> to vector<1x16x32xbf16>
    %75 = vector.shape_cast %74 : vector<1x16x32xbf16> to vector<16x32xbf16>
    %c235 = arith.constant 235 : index
    %c0_42 = arith.constant 0 : index
    %76 = vector.load %arg16[%c235, %c0_42] : memref<342x32xbf16, #tpu.memory_space<vmem>>, vector<16x32xbf16>
    tpu.vector_store %arg16[%c235, %c0_42], %75 {strides = array<i32>} : memref<342x32xbf16, #tpu.memory_space<vmem>>, vector<16x32xbf16>,
    %c251 = arith.constant 251 : index
    %c0_43 = arith.constant 0 : index
    %77 = vector.load %arg16[%c251, %c0_43] : memref<342x32xbf16, #tpu.memory_space<vmem>>, vector<2x32xbf16>
    tpu.vector_store %arg16[%c251, %c0_43], %25 {strides = array<i32>} : memref<342x32xbf16, #tpu.memory_space<vmem>>, vector<2x32xbf16>,
    %78 = vector.extract_strided_slice %20 {offsets = [13, 0, 0], sizes = [1, 16, 32], strides = [1, 1, 1]} : vector<16x16x32xbf16> to vector<1x16x32xbf16>
    %79 = vector.shape_cast %78 : vector<1x16x32xbf16> to vector<16x32xbf16>
    %c253 = arith.constant 253 : index
    %c0_44 = arith.constant 0 : index
    %80 = vector.load %arg16[%c253, %c0_44] : memref<342x32xbf16, #tpu.memory_space<vmem>>, vector<16x32xbf16>
    tpu.vector_store %arg16[%c253, %c0_44], %79 {strides = array<i32>} : memref<342x32xbf16, #tpu.memory_space<vmem>>, vector<16x32xbf16>,
    %c269 = arith.constant 269 : index
    %c0_45 = arith.constant 0 : index
    %81 = vector.load %arg16[%c269, %c0_45] : memref<342x32xbf16, #tpu.memory_space<vmem>>, vector<2x32xbf16>
    tpu.vector_store %arg16[%c269, %c0_45], %25 {strides = array<i32>} : memref<342x32xbf16, #tpu.memory_space<vmem>>, vector<2x32xbf16>,
    %82 = vector.extract_strided_slice %20 {offsets = [14, 0, 0], sizes = [1, 16, 32], strides = [1, 1, 1]} : vector<16x16x32xbf16> to vector<1x16x32xbf16>
    %83 = vector.shape_cast %82 : vector<1x16x32xbf16> to vector<16x32xbf16>
    %c271 = arith.constant 271 : index
    %c0_46 = arith.constant 0 : index
    %84 = vector.load %arg16[%c271, %c0_46] : memref<342x32xbf16, #tpu.memory_space<vmem>>, vector<16x32xbf16>
    tpu.vector_store %arg16[%c271, %c0_46], %83 {strides = array<i32>} : memref<342x32xbf16, #tpu.memory_space<vmem>>, vector<16x32xbf16>,
    %c287 = arith.constant 287 : index
    %c0_47 = arith.constant 0 : index
    %85 = vector.load %arg16[%c287, %c0_47] : memref<342x32xbf16, #tpu.memory_space<vmem>>, vector<2x32xbf16>
    tpu.vector_store %arg16[%c287, %c0_47], %25 {strides = array<i32>} : memref<342x32xbf16, #tpu.memory_space<vmem>>, vector<2x32xbf16>,
    %86 = vector.extract_strided_slice %20 {offsets = [15, 0, 0], sizes = [1, 16, 32], strides = [1, 1, 1]} : vector<16x16x32xbf16> to vector<1x16x32xbf16>
    %87 = vector.shape_cast %86 : vector<1x16x32xbf16> to vector<16x32xbf16>
    %c289 = arith.constant 289 : index
    %c0_48 = arith.constant 0 : index
    %88 = vector.load %arg16[%c289, %c0_48] : memref<342x32xbf16, #tpu.memory_space<vmem>>, vector<16x32xbf16>
    tpu.vector_store %arg16[%c289, %c0_48], %87 {strides = array<i32>} : memref<342x32xbf16, #tpu.memory_space<vmem>>, vector<16x32xbf16>,
    %c305 = arith.constant 305 : index
    %c0_49 = arith.constant 0 : index
    %89 = vector.load %arg16[%c305, %c0_49] : memref<342x32xbf16, #tpu.memory_space<vmem>>, vector<2x32xbf16>
    tpu.vector_store %arg16[%c305, %c0_49], %25 {strides = array<i32>} : memref<342x32xbf16, #tpu.memory_space<vmem>>, vector<2x32xbf16>,
    %c0_50 = arith.constant 0 : index
    %c0_51 = arith.constant 0 : index
    %90 = vector.load %arg16[%c0_50, %c0_51] : memref<342x32xbf16, #tpu.memory_space<vmem>>, vector<288x32xbf16>
    %c0_52 = arith.constant 0 : index
    %c0_53 = arith.constant 0 : index
    %91 = vector.load %arg17[%c0_52, %c0_53] : memref<288x288xbf16, #tpu.memory_space<vmem>>, vector<288x32xbf16>
    tpu.vector_store %arg17[%c0_52, %c0_53], %90 {strides = array<i32>} : memref<288x288xbf16, #tpu.memory_space<vmem>>, vector<288x32xbf16>,
    %c1 = arith.constant 1 : index
    %c0_54 = arith.constant 0 : index
    %92 = vector.load %arg16[%c1, %c0_54] : memref<342x32xbf16, #tpu.memory_space<vmem>>, vector<288x32xbf16>
    %c0_55 = arith.constant 0 : index
    %c32 = arith.constant 32 : index
    %93 = vector.load %arg17[%c0_55, %c32] : memref<288x288xbf16, #tpu.memory_space<vmem>>, vector<288x32xbf16>
    tpu.vector_store %arg17[%c0_55, %c32], %92 {strides = array<i32>} : memref<288x288xbf16, #tpu.memory_space<vmem>>, vector<288x32xbf16>,
    %c2 = arith.constant 2 : index
    %c0_56 = arith.constant 0 : index
    %94 = vector.load %arg16[%c2, %c0_56] : memref<342x32xbf16, #tpu.memory_space<vmem>>, vector<288x32xbf16>
    %c0_57 = arith.constant 0 : index
    %c64 = arith.constant 64 : index
    %95 = vector.load %arg17[%c0_57, %c64] : memref<288x288xbf16, #tpu.memory_space<vmem>>, vector<288x32xbf16>
    tpu.vector_store %arg17[%c0_57, %c64], %94 {strides = array<i32>} : memref<288x288xbf16, #tpu.memory_space<vmem>>, vector<288x32xbf16>,
    %c18 = arith.constant 18 : index
    %c0_58 = arith.constant 0 : index
    %96 = vector.load %arg16[%c18, %c0_58] : memref<342x32xbf16, #tpu.memory_space<vmem>>, vector<288x32xbf16>
    %c0_59 = arith.constant 0 : index
    %c96 = arith.constant 96 : index
    %97 = vector.load %arg17[%c0_59, %c96] : memref<288x288xbf16, #tpu.memory_space<vmem>>, vector<288x32xbf16>
    tpu.vector_store %arg17[%c0_59, %c96], %96 {strides = array<i32>} : memref<288x288xbf16, #tpu.memory_space<vmem>>, vector<288x32xbf16>,
    %c19_60 = arith.constant 19 : index
    %c0_61 = arith.constant 0 : index
    %98 = vector.load %arg16[%c19_60, %c0_61] : memref<342x32xbf16, #tpu.memory_space<vmem>>, vector<288x32xbf16>
    %c0_62 = arith.constant 0 : index
    %c128 = arith.constant 128 : index
    %99 = vector.load %arg17[%c0_62, %c128] : memref<288x288xbf16, #tpu.memory_space<vmem>>, vector<288x32xbf16>
    tpu.vector_store %arg17[%c0_62, %c128], %98 {strides = array<i32>} : memref<288x288xbf16, #tpu.memory_space<vmem>>, vector<288x32xbf16>,
    %c20 = arith.constant 20 : index
    %c0_63 = arith.constant 0 : index
    %100 = vector.load %arg16[%c20, %c0_63] : memref<342x32xbf16, #tpu.memory_space<vmem>>, vector<288x32xbf16>
    %c0_64 = arith.constant 0 : index
    %c160 = arith.constant 160 : index
    %101 = vector.load %arg17[%c0_64, %c160] : memref<288x288xbf16, #tpu.memory_space<vmem>>, vector<288x32xbf16>
    tpu.vector_store %arg17[%c0_64, %c160], %100 {strides = array<i32>} : memref<288x288xbf16, #tpu.memory_space<vmem>>, vector<288x32xbf16>,
    %c36 = arith.constant 36 : index
    %c0_65 = arith.constant 0 : index
    %102 = vector.load %arg16[%c36, %c0_65] : memref<342x32xbf16, #tpu.memory_space<vmem>>, vector<288x32xbf16>
    %c0_66 = arith.constant 0 : index
    %c192 = arith.constant 192 : index
    %103 = vector.load %arg17[%c0_66, %c192] : memref<288x288xbf16, #tpu.memory_space<vmem>>, vector<288x32xbf16>
    tpu.vector_store %arg17[%c0_66, %c192], %102 {strides = array<i32>} : memref<288x288xbf16, #tpu.memory_space<vmem>>, vector<288x32xbf16>,
    %c37_67 = arith.constant 37 : index
    %c0_68 = arith.constant 0 : index
    %104 = vector.load %arg16[%c37_67, %c0_68] : memref<342x32xbf16, #tpu.memory_space<vmem>>, vector<288x32xbf16>
    %c0_69 = arith.constant 0 : index
    %c224 = arith.constant 224 : index
    %105 = vector.load %arg17[%c0_69, %c224] : memref<288x288xbf16, #tpu.memory_space<vmem>>, vector<288x32xbf16>
    tpu.vector_store %arg17[%c0_69, %c224], %104 {strides = array<i32>} : memref<288x288xbf16, #tpu.memory_space<vmem>>, vector<288x32xbf16>,
    %c38 = arith.constant 38 : index
    %c0_70 = arith.constant 0 : index
    %106 = vector.load %arg16[%c38, %c0_70] : memref<342x32xbf16, #tpu.memory_space<vmem>>, vector<288x32xbf16>
    %c0_71 = arith.constant 0 : index
    %c256 = arith.constant 256 : index
    %107 = vector.load %arg17[%c0_71, %c256] : memref<288x288xbf16, #tpu.memory_space<vmem>>, vector<288x32xbf16>
    tpu.vector_store %arg17[%c0_71, %c256], %106 {strides = array<i32>} : memref<288x288xbf16, #tpu.memory_space<vmem>>, vector<288x32xbf16>,
    %c0_72 = arith.constant 0 : index
    %c0_73 = arith.constant 0 : index
    %108 = vector.load %arg17[%c0_72, %c0_73] : memref<288x288xbf16, #tpu.memory_space<vmem>>, vector<288x288xbf16>
    %c0_74 = arith.constant 0 : index
    %c0_75 = arith.constant 0 : index
    %109 = vector.load %arg5[%c0_74, %c0_75] : memref<288x32xbf16, #tpu.memory_space<vmem>>, vector<288x32xbf16>
    %cst_76 = arith.constant dense<0.000000e+00> : vector<288x32xf32>
    %110 = tpu.matmul %108, %109, %cst_76 {dimension_numbers = #tpu.dot_dimension_numbers<[1], [0], [0], [1], [0, 0, 1, 1], [], []>} : vector<288x288xbf16>, vector<288x32xbf16>, vector<288x32xf32> -> vector<288x32xf32>
    %c0_77 = arith.constant 0 : index
    %c0_78 = arith.constant 0 : index
    %111 = vector.load %arg6[%c0_77, %c0_78] : memref<1x32xf32, #tpu.memory_space<vmem>>, vector<1x32xf32>
    %112 = vector.broadcast %111 : vector<1x32xf32> to vector<288x32xf32>
    %113 = arith.mulf %110, %112 : vector<288x32xf32>
    %c0_79 = arith.constant 0 : index
    %c0_80 = arith.constant 0 : index
    %114 = vector.load %arg7[%c0_79, %c0_80] : memref<1x32xf32, #tpu.memory_space<vmem>>, vector<1x32xf32>
    %115 = vector.broadcast %114 : vector<1x32xf32> to vector<288x32xf32>
    %116 = arith.addf %113, %115 : vector<288x32xf32>
    %cst_81 = arith.constant 5.000000e-01 : f32
    %117 = vector.broadcast %cst_81 : f32 to vector<288x32xf32>
    %118 = arith.mulf %117, %116 : vector<288x32xf32>
    %cst_82 = arith.constant 0.707106769 : f32
    %119 = vector.broadcast %cst_82 : f32 to vector<288x32xf32>
    %120 = arith.mulf %116, %119 : vector<288x32xf32>
    %121 = math.erf %120 : vector<288x32xf32>
    %cst_83 = arith.constant 1.000000e+00 : f32
    %122 = vector.broadcast %cst_83 : f32 to vector<288x32xf32>
    %123 = arith.addf %122, %121 : vector<288x32xf32>
    %124 = arith.mulf %118, %123 : vector<288x32xf32>
    %125 = vector.shape_cast %124 : vector<288x32xf32> to vector<16x18x32xf32>
    %126 = vector.extract_strided_slice %125 {offsets = [0, 0, 0], sizes = [16, 16, 32], strides = [1, 1, 1]} : vector<16x18x32xf32> to vector<16x16x32xf32>
    %127 = vector.shape_cast %126 : vector<16x16x32xf32> to vector<256x32xf32>
    %128 = arith.truncf %127 : vector<256x32xf32> to vector<256x32xbf16>
    %c0_84 = arith.constant 0 : index
    %c0_85 = arith.constant 0 : index
    %129 = vector.load %arg8[%c0_84, %c0_85] : memref<32x128xbf16, #tpu.memory_space<vmem>>, vector<32x128xbf16>
    %cst_86 = arith.constant dense<0.000000e+00> : vector<256x128xf32>
    %130 = tpu.matmul %128, %129, %cst_86 {dimension_numbers = #tpu.dot_dimension_numbers<[1], [0], [0], [1], [0, 0, 1, 1], [], []>} : vector<256x32xbf16>, vector<32x128xbf16>, vector<256x128xf32> -> vector<256x128xf32>
    %c0_87 = arith.constant 0 : index
    %c0_88 = arith.constant 0 : index
    %131 = vector.load %arg9[%c0_87, %c0_88] : memref<1x128xf32, #tpu.memory_space<vmem>>, vector<1x128xf32>
    %132 = vector.broadcast %131 : vector<1x128xf32> to vector<256x128xf32>
    %133 = arith.mulf %130, %132 : vector<256x128xf32>
    %c0_89 = arith.constant 0 : index
    %c0_90 = arith.constant 0 : index
    %134 = vector.load %arg10[%c0_89, %c0_90] : memref<1x128xf32, #tpu.memory_space<vmem>>, vector<1x128xf32>
    %135 = vector.broadcast %134 : vector<1x128xf32> to vector<256x128xf32>
    %136 = arith.addf %133, %135 : vector<256x128xf32>
    %cst_91 = arith.constant dense<0.000000e+00> : vector<128xf32>
    %137 = vector.multi_reduction <add>, %136, %cst_91 [0] : vector<256x128xf32> to vector<128xf32>
    %138 = vector.shape_cast %137 : vector<128xf32> to vector<1x128xf32>
    %cst_92 = arith.constant 2.560000e+02 : f32
    %139 = vector.broadcast %cst_92 : f32 to vector<1x128xf32>
    %140 = arith.divf %138, %139 : vector<1x128xf32>
    %c0_93 = arith.constant 0 : index
    %c0_94 = arith.constant 0 : index
    %141 = vector.load %arg11[%c0_93, %c0_94] : memref<128x8xf32, #tpu.memory_space<vmem>>, vector<128x8xf32>
    %cst_95 = arith.constant dense<0.000000e+00> : vector<1x8xf32>
    %142 = tpu.matmul %140, %141, %cst_95 {dimension_numbers = #tpu.dot_dimension_numbers<[1], [0], [0], [1], [0, 0, 1, 1], [], []>} : vector<1x128xf32>, vector<128x8xf32>, vector<1x8xf32> -> vector<1x8xf32>
    %c0_96 = arith.constant 0 : index
    %c0_97 = arith.constant 0 : index
    %143 = vector.load %arg12[%c0_96, %c0_97] : memref<1x8xf32, #tpu.memory_space<vmem>>, vector<1x8xf32>
    %144 = arith.addf %142, %143 : vector<1x8xf32>
    %cst_98 = arith.constant 0.000000e+00 : f32
    %145 = vector.broadcast %cst_98 : f32 to vector<1x8xf32>
    %146 = arith.maximumf %144, %145 : vector<1x8xf32>
    %c0_99 = arith.constant 0 : index
    %c0_100 = arith.constant 0 : index
    %147 = vector.load %arg13[%c0_99, %c0_100] : memref<8x128xf32, #tpu.memory_space<vmem>>, vector<8x128xf32>
    %cst_101 = arith.constant dense<0.000000e+00> : vector<1x128xf32>
    %148 = tpu.matmul %146, %147, %cst_101 {dimension_numbers = #tpu.dot_dimension_numbers<[1], [0], [0], [1], [0, 0, 1, 1], [], []>} : vector<1x8xf32>, vector<8x128xf32>, vector<1x128xf32> -> vector<1x128xf32>
    %c0_102 = arith.constant 0 : index
    %c0_103 = arith.constant 0 : index
    %149 = vector.load %arg14[%c0_102, %c0_103] : memref<1x128xf32, #tpu.memory_space<vmem>>, vector<1x128xf32>
    %150 = arith.addf %148, %149 : vector<1x128xf32>
    %151 = arith.negf %150 : vector<1x128xf32>
    %152 = math.exp %151 : vector<1x128xf32>
    %cst_104 = arith.constant 1.000000e+00 : f32
    %153 = vector.broadcast %cst_104 : f32 to vector<1x128xf32>
    %154 = arith.addf %153, %152 : vector<1x128xf32>
    %155 = arith.divf %153, %154 : vector<1x128xf32>
    %c0_105 = arith.constant 0 : index
    %c0_106 = arith.constant 0 : index
    %c0_107 = arith.constant 0 : index
    %c0_108 = arith.constant 0 : index
    %156 = vector.load %arg1[%c0_105, %c0_106, %c0_107, %c0_108] : memref<1x16x16x128xbf16, #tpu.memory_space<vmem>>, vector<1x16x16x128xbf16>
    %157 = vector.shape_cast %156 : vector<1x16x16x128xbf16> to vector<16x16x128xbf16>
    %158 = vector.shape_cast %157 : vector<16x16x128xbf16> to vector<256x128xbf16>
    %159 = arith.extf %158 : vector<256x128xbf16> to vector<256x128xf32>
    %160 = vector.broadcast %155 : vector<1x128xf32> to vector<256x128xf32>
    %161 = arith.mulf %136, %160 : vector<256x128xf32>
    %162 = arith.addf %161, %159 : vector<256x128xf32>
    %cst_109 = arith.constant 5.000000e-01 : f32
    %163 = vector.broadcast %cst_109 : f32 to vector<256x128xf32>
    %164 = arith.mulf %163, %162 : vector<256x128xf32>
    %cst_110 = arith.constant 0.707106769 : f32
    %165 = vector.broadcast %cst_110 : f32 to vector<256x128xf32>
    %166 = arith.mulf %162, %165 : vector<256x128xf32>
    %167 = math.erf %166 : vector<256x128xf32>
    %cst_111 = arith.constant 1.000000e+00 : f32
    %168 = vector.broadcast %cst_111 : f32 to vector<256x128xf32>
    %169 = arith.addf %168, %167 : vector<256x128xf32>
    %170 = arith.mulf %164, %169 : vector<256x128xf32>
    %171 = vector.shape_cast %170 : vector<256x128xf32> to vector<16x16x128xf32>
    %c0_112 = arith.constant 0 : index
    %c0_113 = arith.constant 0 : index
    %c0_114 = arith.constant 0 : index
    %c0_115 = arith.constant 0 : index
    %172 = vector.load %arg15[%c0_112, %c0_113, %c0_114, %c0_115] : memref<1x16x16x128xf32, #tpu.memory_space<vmem>>, vector<1x16x16x128xf32>
    %173 = vector.shape_cast %172 : vector<1x16x16x128xf32> to vector<16x16x128xf32>
    %174 = vector.shape_cast %171 : vector<16x16x128xf32> to vector<1x16x16x128xf32>
    tpu.vector_store %arg15[%c0_112, %c0_113, %c0_114, %c0_115], %174 {strides = array<i32>} : memref<1x16x16x128xf32, #tpu.memory_space<vmem>>, vector<1x16x16x128xf32>,
    return
  }
  func.func @transform_0(%arg0: i32) -> (i32, i32, i32, i32) {
    %c0_i32 = arith.constant 0 : i32
    %c0_i32_0 = arith.constant 0 : i32
    %c0_i32_1 = arith.constant 0 : i32
    %c0_i32_2 = arith.constant 0 : i32
    return %arg0, %c0_i32, %c0_i32_0, %c0_i32_1 : i32, i32, i32, i32
  }
  func.func @transform_1(%arg0: i32) -> (i32, i32) {
    %c0_i32 = arith.constant 0 : i32
    %c0_i32_0 = arith.constant 0 : i32
    %c0_i32_1 = arith.constant 0 : i32
    return %c0_i32, %c0_i32_0 : i32, i32
  }
  func.func @transform_2(%arg0: i32) -> (i32, i32) {
    %c0_i32 = arith.constant 0 : i32
    %c0_i32_0 = arith.constant 0 : i32
    %c0_i32_1 = arith.constant 0 : i32
    return %c0_i32, %c0_i32_0 : i32, i32
  }
  func.func @transform_3(%arg0: i32) -> (i32, i32) {
    %c0_i32 = arith.constant 0 : i32
    %c0_i32_0 = arith.constant 0 : i32
    %c0_i32_1 = arith.constant 0 : i32
    return %c0_i32, %c0_i32_0 : i32, i32
  }
  func.func @transform_4(%arg0: i32) -> (i32, i32) {
    %c0_i32 = arith.constant 0 : i32
    %c0_i32_0 = arith.constant 0 : i32
    %c0_i32_1 = arith.constant 0 : i32
    return %c0_i32, %c0_i32_0 : i32, i32
  }
  func.func @transform_5(%arg0: i32) -> (i32, i32) {
    %c0_i32 = arith.constant 0 : i32
    %c0_i32_0 = arith.constant 0 : i32
    %c0_i32_1 = arith.constant 0 : i32
    return %c0_i32, %c0_i32_0 : i32, i32
  }
  func.func @transform_6(%arg0: i32) -> (i32, i32) {
    %c0_i32 = arith.constant 0 : i32
    %c0_i32_0 = arith.constant 0 : i32
    %c0_i32_1 = arith.constant 0 : i32
    return %c0_i32, %c0_i32_0 : i32, i32
  }
  func.func @transform_7(%arg0: i32) -> (i32, i32) {
    %c0_i32 = arith.constant 0 : i32
    %c0_i32_0 = arith.constant 0 : i32
    %c0_i32_1 = arith.constant 0 : i32
    return %c0_i32, %c0_i32_0 : i32, i32
  }
  func.func @transform_8(%arg0: i32) -> (i32, i32) {
    %c0_i32 = arith.constant 0 : i32
    %c0_i32_0 = arith.constant 0 : i32
    %c0_i32_1 = arith.constant 0 : i32
    return %c0_i32, %c0_i32_0 : i32, i32
  }
  func.func @transform_9(%arg0: i32) -> (i32, i32) {
    %c0_i32 = arith.constant 0 : i32
    %c0_i32_0 = arith.constant 0 : i32
    %c0_i32_1 = arith.constant 0 : i32
    return %c0_i32, %c0_i32_0 : i32, i32
  }
  func.func @transform_10(%arg0: i32) -> (i32, i32) {
    %c0_i32 = arith.constant 0 : i32
    %c0_i32_0 = arith.constant 0 : i32
    %c0_i32_1 = arith.constant 0 : i32
    return %c0_i32, %c0_i32_0 : i32, i32
  }
  func.func @transform_11(%arg0: i32) -> (i32, i32) {
    %c0_i32 = arith.constant 0 : i32
    %c0_i32_0 = arith.constant 0 : i32
    %c0_i32_1 = arith.constant 0 : i32
    return %c0_i32, %c0_i32_0 : i32, i32
  }
  func.func @transform_12(%arg0: i32) -> (i32, i32) {
    %c0_i32 = arith.constant 0 : i32
    %c0_i32_0 = arith.constant 0 : i32
    %c0_i32_1 = arith.constant 0 : i32
    return %c0_i32, %c0_i32_0 : i32, i32
  }
  func.func @transform_13(%arg0: i32) -> (i32, i32) {
    %c0_i32 = arith.constant 0 : i32
    %c0_i32_0 = arith.constant 0 : i32
    %c0_i32_1 = arith.constant 0 : i32
    return %c0_i32, %c0_i32_0 : i32, i32
  }
  func.func @transform_14(%arg0: i32) -> (i32, i32, i32, i32) {
    %c0_i32 = arith.constant 0 : i32
    %c0_i32_0 = arith.constant 0 : i32
    %c0_i32_1 = arith.constant 0 : i32
    %c0_i32_2 = arith.constant 0 : i32
    return %arg0, %c0_i32, %c0_i32_0, %c0_i32_1 : i32, i32, i32, i32
  }
}

</mosaic_0001>

<llo_original>
// kernel: tpu_custom_call.1
$region0: #{tpu_custom_call.1}
  #allocation0 [shape = 'u32[]', space=smem, size = 0x4, offset = 0x4, fixed_abs, tag = 'smem constant byte address 0x4 - core index']
  #allocation1 [shape = 'u32[144,128]{1,0:T(1,128)}', space=vmem, size = 0x12000, scoped, tag = 'internal scratch']
  #allocation2 [shape = 'bf16[342,32]{1,0:T(8,128)(2,1)}', space=vmem, size = 0x15800, scoped, tag = 'scratch operand']
  #allocation3 [shape = 'bf16[288,288]{1,0:T(16,128)(2,1)}', space=vmem, size = 0x36000, scoped, tag = 'scratch operand']
  %s0 = inlined_call_operand.vmem [shape: bf16[2,16,16,128], index: 0, kind: input, shape index: {}]
  %s1 = inlined_call_operand.vmem [shape: bf16[128,32], index: 1, kind: input, shape index: {}]
  %s2 = inlined_call_operand.vmem [shape: f32[1,32], index: 2, kind: input, shape index: {}]
  %s3 = inlined_call_operand.vmem [shape: f32[1,32], index: 3, kind: input, shape index: {}]
  %s4 = inlined_call_operand.vmem [shape: bf16[288,32], index: 4, kind: input, shape index: {}]
  %s5 = inlined_call_operand.vmem [shape: f32[1,32], index: 5, kind: input, shape index: {}]
  %s6 = inlined_call_operand.vmem [shape: f32[1,32], index: 6, kind: input, shape index: {}]
  %s7 = inlined_call_operand.vmem [shape: bf16[32,128], index: 7, kind: input, shape index: {}]
  %s8 = inlined_call_operand.vmem [shape: f32[1,128], index: 8, kind: input, shape index: {}]
  %s9 = inlined_call_operand.vmem [shape: f32[1,128], index: 9, kind: input, shape index: {}]
  %s10 = inlined_call_operand.vmem [shape: f32[128,8], index: 10, kind: input, shape index: {}]
  %s11 = inlined_call_operand.vmem [shape: f32[1,8], index: 11, kind: input, shape index: {}]
  %s12 = inlined_call_operand.vmem [shape: f32[8,128], index: 12, kind: input, shape index: {}]
  %s13 = inlined_call_operand.vmem [shape: f32[1,128], index: 13, kind: input, shape index: {}]
  %s14 = inlined_call_operand.hbm [shape: f32[2,16,16,128], index: 14, kind: output, shape index: {}]
  %s15 = sld [smem:[#allocation0]]
  $region89: #{tpu_custom_call.1} parent=0
    _
  %s17 = ssub.s32 1, %s15
  %s18 = scalar_select 0, %s17, %s15
  $region1: #{tpu_custom_call.1} parent=0
    #allocation4 [shape = 'u8[262144]{0}', space=vmem, size = 0x40000, scoped, tag = 'output window, operand 0']
    #allocation5 [shape = 's32[2]{0}', space=sflag, size = 0x8, scoped, tag = 'scoped memory for tpu_custom_call.1']
    %19 = vsyncpa [#allocation5], 0
    %s20 = scalar_lea.sflag [#allocation5], 1
    %21 = vsyncpa %s20, 0
    loop: start=0, step=1, limit=4
    $region2: #{tpu_custom_call.1} parent=1 // loop_pre_header
      _
    $region3: #{tpu_custom_call.1} parent=1 // loop_header
      %s23 = sphi 0, %s27
      %p24 = scmp.ge.s32.totalorder %s23, 4
      %s33 = sphi 0, %s35
      %s36 = sphi 0, %s33
      %s37 = sphi 0, %s36
      %s53 = sphi 0, %s37
      %s57 = sphi 0, %s57
      %s59 = sphi 0, %s57
      %s60 = sphi 0, %s59
      %s74 = sphi 0, %s60
      %s78 = sphi 0, %s78
      %s80 = sphi 0, %s78
      %s81 = sphi 0, %s80
      %s95 = sphi 0, %s81
      %s99 = sphi 0, %s99
      %s101 = sphi 0, %s99
      %s102 = sphi 0, %s101
      %s116 = sphi 0, %s102
      %s120 = sphi 0, %s120
      %s122 = sphi 0, %s120
      %s123 = sphi 0, %s122
      %s137 = sphi 0, %s123
      %s141 = sphi 0, %s141
      %s143 = sphi 0, %s141
      %s144 = sphi 0, %s143
      %s158 = sphi 0, %s144
      %s162 = sphi 0, %s162
      %s164 = sphi 0, %s162
      %s165 = sphi 0, %s164
      %s179 = sphi 0, %s165
      %s183 = sphi 0, %s183
      %s185 = sphi 0, %s183
      %s186 = sphi 0, %s185
      %s200 = sphi 0, %s186
      %s204 = sphi 0, %s204
      %s206 = sphi 0, %s204
      %s207 = sphi 0, %s206
      %s221 = sphi 0, %s207
      %s225 = sphi 0, %s225
      %s227 = sphi 0, %s225
      %s228 = sphi 0, %s227
      %s242 = sphi 0, %s228
      %s246 = sphi 0, %s246
      %s248 = sphi 0, %s246
      %s249 = sphi 0, %s248
      %s263 = sphi 0, %s249
      %s267 = sphi 0, %s267
      %s269 = sphi 0, %s267
      %s270 = sphi 0, %s269
      %s284 = sphi 0, %s270
      %s288 = sphi 0, %s288
      %s290 = sphi 0, %s288
      %s291 = sphi 0, %s290
      %s305 = sphi 0, %s291
      %s309 = sphi 0, %s309
      %s311 = sphi 0, %s309
      %s312 = sphi 0, %s311
      %s326 = sphi 0, %s312
      %s332 = sphi 0, %s334
      %s335 = sphi 0, %s332
      %s336 = sphi 0, %s335
      %s352 = sphi 0, %s336
    $region4: #{tpu_custom_call.1} parent=1 // loop_header_branch
      %26 = sbr.rel (%p24) target = $region8
    $region5: #{tpu_custom_call.1} parent=1 // loop_body
      %s28 = ssub.s32 %s23, 1
      %s29 = ssub.s32 %s23, 2
      %s30 = sadd.s32 %s23, 1
      %s31 = ssub.s32 %s23, %s30
      %p32 = scmp.eq.s32.totalorder %s31, 0
      %s34 = sadd.s32 %s33, 1
      %s35 = scalar_select %p32, %s33, %s34
      %p38 = pneg %p32
      %p39 = scmp.eq.s32.totalorder %s23, 1
      %p40 = por %p38, %p39
      %p41 = scmp.ne.s32.totalorder %s33, %s36
      %p42 = scmp.eq.s32.totalorder %s23, 0
      %p43 = por %p41, %p42
      %p44 = scmp.ne.s32.totalorder %s33, %s36
      %p45 = scmp.eq.s32.totalorder %s28, 1
      %p46 = por %p44, %p45
      %p47 = scmp.ne.s32.totalorder %s36, %s37
      %p48 = scmp.eq.s32.totalorder %s28, 0
      %p49 = por %p47, %p48
      %p50 = scmp.ne.s32.totalorder %s36, %s37
      %p51 = scmp.eq.s32.totalorder %s29, 1
      %p52 = por %p50, %p51
      %p54 = scmp.ne.s32.totalorder %s37, %s53
      %p55 = scmp.eq.s32.totalorder %s29, 0
      %p56 = por %p54, %p55
      %s58 = sadd.s32 %s57, 1
      %p61 = scmp.eq.s32.totalorder %s23, 1
      %p62 = scmp.ne.s32.totalorder %s57, %s59
      %p63 = scmp.eq.s32.totalorder %s23, 0
      %p64 = por %p62, %p63
      %p65 = scmp.ne.s32.totalorder %s57, %s59
      %p66 = scmp.eq.s32.totalorder %s28, 1
      %p67 = por %p65, %p66
      %p68 = scmp.ne.s32.totalorder %s59, %s60
      %p69 = scmp.eq.s32.totalorder %s28, 0
      %p70 = por %p68, %p69
      %p71 = scmp.ne.s32.totalorder %s59, %s60
      %p72 = scmp.eq.s32.totalorder %s29, 1
      %p73 = por %p71, %p72
      %p75 = scmp.ne.s32.totalorder %s60, %s74
      %p76 = scmp.eq.s32.totalorder %s29, 0
      %p77 = por %p75, %p76
      %s79 = sadd.s32 %s78, 1
      %p82 = scmp.eq.s32.totalorder %s23, 1
      %p83 = scmp.ne.s32.totalorder %s78, %s80
      %p84 = scmp.eq.s32.totalorder %s23, 0
      %p85 = por %p83, %p84
      %p86 = scmp.ne.s32.totalorder %s78, %s80
      %p87 = scmp.eq.s32.totalorder %s28, 1
      %p88 = por %p86, %p87
      %p89 = scmp.ne.s32.totalorder %s80, %s81
      %p90 = scmp.eq.s32.totalorder %s28, 0
      %p91 = por %p89, %p90
      %p92 = scmp.ne.s32.totalorder %s80, %s81
      %p93 = scmp.eq.s32.totalorder %s29, 1
      %p94 = por %p92, %p93
      %p96 = scmp.ne.s32.totalorder %s81, %s95
      %p97 = scmp.eq.s32.totalorder %s29, 0
      %p98 = por %p96, %p97
      %s100 = sadd.s32 %s99, 1
      %p103 = scmp.eq.s32.totalorder %s23, 1
      %p104 = scmp.ne.s32.totalorder %s99, %s101
      %p105 = scmp.eq.s32.totalorder %s23, 0
      %p106 = por %p104, %p105
      %p107 = scmp.ne.s32.totalorder %s99, %s101
      %p108 = scmp.eq.s32.totalorder %s28, 1
      %p109 = por %p107, %p108
      %p110 = scmp.ne.s32.totalorder %s101, %s102
      %p111 = scmp.eq.s32.totalorder %s28, 0
      %p112 = por %p110, %p111
      %p113 = scmp.ne.s32.totalorder %s101, %s102
      %p114 = scmp.eq.s32.totalorder %s29, 1
      %p115 = por %p113, %p114
      %p117 = scmp.ne.s32.totalorder %s102, %s116
      %p118 = scmp.eq.s32.totalorder %s29, 0
      %p119 = por %p117, %p118
      %s121 = sadd.s32 %s120, 1
      %p124 = scmp.eq.s32.totalorder %s23, 1
      %p125 = scmp.ne.s32.totalorder %s120, %s122
      %p126 = scmp.eq.s32.totalorder %s23, 0
      %p127 = por %p125, %p126
      %p128 = scmp.ne.s32.totalorder %s120, %s122
      %p129 = scmp.eq.s32.totalorder %s28, 1
      %p130 = por %p128, %p129
      %p131 = scmp.ne.s32.totalorder %s122, %s123
      %p132 = scmp.eq.s32.totalorder %s28, 0
      %p133 = por %p131, %p132
      %p134 = scmp.ne.s32.totalorder %s122, %s123
      %p135 = scmp.eq.s32.totalorder %s29, 1
      %p136 = por %p134, %p135
      %p138 = scmp.ne.s32.totalorder %s123, %s137
      %p139 = scmp.eq.s32.totalorder %s29, 0
      %p140 = por %p138, %p139
      %s142 = sadd.s32 %s141, 1
      %p145 = scmp.eq.s32.totalorder %s23, 1
      %p146 = scmp.ne.s32.totalorder %s141, %s143
      %p147 = scmp.eq.s32.totalorder %s23, 0
      %p148 = por %p146, %p147
      %p149 = scmp.ne.s32.totalorder %s141, %s143
      %p150 = scmp.eq.s32.totalorder %s28, 1
      %p151 = por %p149, %p150
      %p152 = scmp.ne.s32.totalorder %s143, %s144
      %p153 = scmp.eq.s32.totalorder %s28, 0
      %p154 = por %p152, %p153
      %p155 = scmp.ne.s32.totalorder %s143, %s144
      %p156 = scmp.eq.s32.totalorder %s29, 1
      %p157 = por %p155, %p156
      %p159 = scmp.ne.s32.totalorder %s144, %s158
      %p160 = scmp.eq.s32.totalorder %s29, 0
      %p161 = por %p159, %p160
      %s163 = sadd.s32 %s162, 1
      %p166 = scmp.eq.s32.totalorder %s23, 1
      %p167 = scmp.ne.s32.totalorder %s162, %s164
      %p168 = scmp.eq.s32.totalorder %s23, 0
      %p169 = por %p167, %p168
      %p170 = scmp.ne.s32.totalorder %s162, %s164
      %p171 = scmp.eq.s32.totalorder %s28, 1
      %p172 = por %p170, %p171
      %p173 = scmp.ne.s32.totalorder %s164, %s165
      %p174 = scmp.eq.s32.totalorder %s28, 0
      %p175 = por %p173, %p174
      %p176 = scmp.ne.s32.totalorder %s164, %s165
      %p177 = scmp.eq.s32.totalorder %s29, 1
      %p178 = por %p176, %p177
      %p180 = scmp.ne.s32.totalorder %s165, %s179
      %p181 = scmp.eq.s32.totalorder %s29, 0
      %p182 = por %p180, %p181
      %s184 = sadd.s32 %s183, 1
      %p187 = scmp.eq.s32.totalorder %s23, 1
      %p188 = scmp.ne.s32.totalorder %s183, %s185
      %p189 = scmp.eq.s32.totalorder %s23, 0
      %p190 = por %p188, %p189
      %p191 = scmp.ne.s32.totalorder %s183, %s185
      %p192 = scmp.eq.s32.totalorder %s28, 1
      %p193 = por %p191, %p192
      %p194 = scmp.ne.s32.totalorder %s185, %s186
      %p195 = scmp.eq.s32.totalorder %s28, 0
      %p196 = por %p194, %p195
      %p197 = scmp.ne.s32.totalorder %s185, %s186
      %p198 = scmp.eq.s32.totalorder %s29, 1
      %p199 = por %p197, %p198
      %p201 = scmp.ne.s32.totalorder %s186, %s200
      %p202 = scmp.eq.s32.totalorder %s29, 0
      %p203 = por %p201, %p202
      %s205 = sadd.s32 %s204, 1
      %p208 = scmp.eq.s32.totalorder %s23, 1
      %p209 = scmp.ne.s32.totalorder %s204, %s206
      %p210 = scmp.eq.s32.totalorder %s23, 0
      %p211 = por %p209, %p210
      %p212 = scmp.ne.s32.totalorder %s204, %s206
      %p213 = scmp.eq.s32.totalorder %s28, 1
      %p214 = por %p212, %p213
      %p215 = scmp.ne.s32.totalorder %s206, %s207
      %p216 = scmp.eq.s32.totalorder %s28, 0
      %p217 = por %p215, %p216
      %p218 = scmp.ne.s32.totalorder %s206, %s207
      %p219 = scmp.eq.s32.totalorder %s29, 1
      %p220 = por %p218, %p219
      %p222 = scmp.ne.s32.totalorder %s207, %s221
      %p223 = scmp.eq.s32.totalorder %s29, 0
      %p224 = por %p222, %p223
      %s226 = sadd.s32 %s225, 1
      %p229 = scmp.eq.s32.totalorder %s23, 1
      %p230 = scmp.ne.s32.totalorder %s225, %s227
      %p231 = scmp.eq.s32.totalorder %s23, 0
      %p232 = por %p230, %p231
      %p233 = scmp.ne.s32.totalorder %s225, %s227
      %p234 = scmp.eq.s32.totalorder %s28, 1
      %p235 = por %p233, %p234
      %p236 = scmp.ne.s32.totalorder %s227, %s228
      %p237 = scmp.eq.s32.totalorder %s28, 0
      %p238 = por %p236, %p237
      %p239 = scmp.ne.s32.totalorder %s227, %s228
      %p240 = scmp.eq.s32.totalorder %s29, 1
      %p241 = por %p239, %p240
      %p243 = scmp.ne.s32.totalorder %s228, %s242
      %p244 = scmp.eq.s32.totalorder %s29, 0
      %p245 = por %p243, %p244
      %s247 = sadd.s32 %s246, 1
      %p250 = scmp.eq.s32.totalorder %s23, 1
      %p251 = scmp.ne.s32.totalorder %s246, %s248
      %p252 = scmp.eq.s32.totalorder %s23, 0
      %p253 = por %p251, %p252
      %p254 = scmp.ne.s32.totalorder %s246, %s248
      %p255 = scmp.eq.s32.totalorder %s28, 1
      %p256 = por %p254, %p255
      %p257 = scmp.ne.s32.totalorder %s248, %s249
      %p258 = scmp.eq.s32.totalorder %s28, 0
      %p259 = por %p257, %p258
      %p260 = scmp.ne.s32.totalorder %s248, %s249
      %p261 = scmp.eq.s32.totalorder %s29, 1
      %p262 = por %p260, %p261
      %p264 = scmp.ne.s32.totalorder %s249, %s263
      %p265 = scmp.eq.s32.totalorder %s29, 0
      %p266 = por %p264, %p265
      %s268 = sadd.s32 %s267, 1
      %p271 = scmp.eq.s32.totalorder %s23, 1
      %p272 = scmp.ne.s32.totalorder %s267, %s269
      %p273 = scmp.eq.s32.totalorder %s23, 0
      %p274 = por %p272, %p273
      %p275 = scmp.ne.s32.totalorder %s267, %s269
      %p276 = scmp.eq.s32.totalorder %s28, 1
      %p277 = por %p275, %p276
      %p278 = scmp.ne.s32.totalorder %s269, %s270
      %p279 = scmp.eq.s32.totalorder %s28, 0
      %p280 = por %p278, %p279
      %p281 = scmp.ne.s32.totalorder %s269, %s270
      %p282 = scmp.eq.s32.totalorder %s29, 1
      %p283 = por %p281, %p282
      %p285 = scmp.ne.s32.totalorder %s270, %s284
      %p286 = scmp.eq.s32.totalorder %s29, 0
      %p287 = por %p285, %p286
      %s289 = sadd.s32 %s288, 1
      %p292 = scmp.eq.s32.totalorder %s23, 1
      %p293 = scmp.ne.s32.totalorder %s288, %s290
      %p294 = scmp.eq.s32.totalorder %s23, 0
      %p295 = por %p293, %p294
      %p296 = scmp.ne.s32.totalorder %s288, %s290
      %p297 = scmp.eq.s32.totalorder %s28, 1
      %p298 = por %p296, %p297
      %p299 = scmp.ne.s32.totalorder %s290, %s291
      %p300 = scmp.eq.s32.totalorder %s28, 0
      %p301 = por %p299, %p300
      %p302 = scmp.ne.s32.totalorder %s290, %s291
      %p303 = scmp.eq.s32.totalorder %s29, 1
      %p304 = por %p302, %p303
      %p306 = scmp.ne.s32.totalorder %s291, %s305
      %p307 = scmp.eq.s32.totalorder %s29, 0
      %p308 = por %p306, %p307
      %s310 = sadd.s32 %s309, 1
      %p313 = scmp.eq.s32.totalorder %s23, 1
      %p314 = scmp.ne.s32.totalorder %s309, %s311
      %p315 = scmp.eq.s32.totalorder %s23, 0
      %p316 = por %p314, %p315
      %p317 = scmp.ne.s32.totalorder %s309, %s311
      %p318 = scmp.eq.s32.totalorder %s28, 1
      %p319 = por %p317, %p318
      %p320 = scmp.ne.s32.totalorder %s311, %s312
      %p321 = scmp.eq.s32.totalorder %s28, 0
      %p322 = por %p320, %p321
      %p323 = scmp.ne.s32.totalorder %s311, %s312
      %p324 = scmp.eq.s32.totalorder %s29, 1
      %p325 = por %p323, %p324
      %p327 = scmp.ne.s32.totalorder %s312, %s326
      %p328 = scmp.eq.s32.totalorder %s29, 0
      %p329 = por %p327, %p328
      %s330 = ssub.s32 %s23, %s30
      %p331 = scmp.eq.s32.totalorder %s330, 0
      %s333 = sadd.s32 %s332, 1
      %s334 = scalar_select %p331, %s332, %s333
      %p337 = pneg %p331
      %p338 = scmp.eq.s32.totalorder %s23, 1
      %p339 = por %p337, %p338
      %p340 = scmp.ne.s32.totalorder %s332, %s335
      %p341 = scmp.eq.s32.totalorder %s23, 0
      %p342 = por %p340, %p341
      %p343 = scmp.ne.s32.totalorder %s332, %s335
      %p344 = scmp.eq.s32.totalorder %s28, 1
      %p345 = por %p343, %p344
      %p346 = scmp.ne.s32.totalorder %s335, %s336
      %p347 = scmp.eq.s32.totalorder %s28, 0
      %p348 = por %p346, %p347
      %p349 = scmp.ne.s32.totalorder %s335, %s336
      %p350 = scmp.eq.s32.totalorder %s29, 1
      %p351 = por %p349, %p350
      %p353 = scmp.ne.s32.totalorder %s336, %s352
      %p354 = scmp.eq.s32.totalorder %s29, 0
      %p355 = por %p353, %p354
      %p356 = scmp.le.s32.totalorder 1, %s23
      %p357 = scmp.lt.s32.totalorder %s23, 3
      %p358 = pnand %p356, %p357
      %p359 = pneg %p358
      // Predicated region
      $region9: #{tpu_custom_call.1} parent=5 // pred_check
        _
      $region10: #{tpu_custom_call.1} parent=5 // pred_check_branch
        %361 = sbr.rel (%p358) target = $region12
      $region11: #{tpu_custom_call.1} parent=5 // pred_region
        %s362 = ssub.s32 %s23, 1
        // Predicated region
        $region13: #{tpu_custom_call.1} parent=11 // pred_check
          %p363 = pneg %p70
        $region14: #{tpu_custom_call.1} parent=11 // pred_check_branch
          %365 = sbr.rel (%p363) target = $region16
        $region15: #{tpu_custom_call.1} parent=11 // pred_region
          _
        $region16: #{tpu_custom_call.1} parent=11 // pred_fallthru
          _
        // Predicated region
        $region17: #{tpu_custom_call.1} parent=11 // pred_check
          %p366 = pneg %p91
        $region18: #{tpu_custom_call.1} parent=11 // pred_check_branch
          %368 = sbr.rel (%p366) target = $region20
        $region19: #{tpu_custom_call.1} parent=11 // pred_region
          _
        $region20: #{tpu_custom_call.1} parent=11 // pred_fallthru
          _
        // Predicated region
        $region21: #{tpu_custom_call.1} parent=11 // pred_check
          %p369 = pneg %p112
        $region22: #{tpu_custom_call.1} parent=11 // pred_check_branch
          %371 = sbr.rel (%p369) target = $region24
        $region23: #{tpu_custom_call.1} parent=11 // pred_region
          _
        $region24: #{tpu_custom_call.1} parent=11 // pred_fallthru
          _
        // Predicated region
        $region25: #{tpu_custom_call.1} parent=11 // pred_check
          %p372 = pneg %p133
        $region26: #{tpu_custom_call.1} parent=11 // pred_check_branch
          %374 = sbr.rel (%p372) target = $region28
        $region27: #{tpu_custom_call.1} parent=11 // pred_region
          _
        $region28: #{tpu_custom_call.1} parent=11 // pred_fallthru
          _
        // Predicated region
        $region29: #{tpu_custom_call.1} parent=11 // pred_check
          %p375 = pneg %p154
        $region30: #{tpu_custom_call.1} parent=11 // pred_check_branch
          %377 = sbr.rel (%p375) target = $region32
        $region31: #{tpu_custom_call.1} parent=11 // pred_region
          _
        $region32: #{tpu_custom_call.1} parent=11 // pred_fallthru
          _
        // Predicated region
        $region33: #{tpu_custom_call.1} parent=11 // pred_check
          %p378 = pneg %p175
        $region34: #{tpu_custom_call.1} parent=11 // pred_check_branch
          %380 = sbr.rel (%p378) target = $region36
        $region35: #{tpu_custom_call.1} parent=11 // pred_region
          _
        $region36: #{tpu_custom_call.1} parent=11 // pred_fallthru
          _
        // Predicated region
        $region37: #{tpu_custom_call.1} parent=11 // pred_check
          %p381 = pneg %p196
        $region38: #{tpu_custom_call.1} parent=11 // pred_check_branch
          %383 = sbr.rel (%p381) target = $region40
        $region39: #{tpu_custom_call.1} parent=11 // pred_region
          _
        $region40: #{tpu_custom_call.1} parent=11 // pred_fallthru
          _
        // Predicated region
        $region41: #{tpu_custom_call.1} parent=11 // pred_check
          %p384 = pneg %p217
        $region42: #{tpu_custom_call.1} parent=11 // pred_check_branch
          %386 = sbr.rel (%p384) target = $region44
        $region43: #{tpu_custom_call.1} parent=11 // pred_region
          _
        $region44: #{tpu_custom_call.1} parent=11 // pred_fallthru
          _
        // Predicated region
        $region45: #{tpu_custom_call.1} parent=11 // pred_check
          %p387 = pneg %p238
        $region46: #{tpu_custom_call.1} parent=11 // pred_check_branch
          %389 = sbr.rel (%p387) target = $region48
        $region47: #{tpu_custom_call.1} parent=11 // pred_region
          _
        $region48: #{tpu_custom_call.1} parent=11 // pred_fallthru
          _
        // Predicated region
        $region49: #{tpu_custom_call.1} parent=11 // pred_check
          %p390 = pneg %p259
        $region50: #{tpu_custom_call.1} parent=11 // pred_check_branch
          %392 = sbr.rel (%p390) target = $region52
        $region51: #{tpu_custom_call.1} parent=11 // pred_region
          _
        $region52: #{tpu_custom_call.1} parent=11 // pred_fallthru
          _
        // Predicated region
        $region53: #{tpu_custom_call.1} parent=11 // pred_check
          %p393 = pneg %p280
        $region54: #{tpu_custom_call.1} parent=11 // pred_check_branch
          %395 = sbr.rel (%p393) target = $region56
        $region55: #{tpu_custom_call.1} parent=11 // pred_region
          _
        $region56: #{tpu_custom_call.1} parent=11 // pred_fallthru
          _
        // Predicated region
        $region57: #{tpu_custom_call.1} parent=11 // pred_check
          %p396 = pneg %p301
        $region58: #{tpu_custom_call.1} parent=11 // pred_check_branch
          %398 = sbr.rel (%p396) target = $region60
        $region59: #{tpu_custom_call.1} parent=11 // pred_region
          _
        $region60: #{tpu_custom_call.1} parent=11 // pred_fallthru
          _
        // Predicated region
        $region61: #{tpu_custom_call.1} parent=11 // pred_check
          %p399 = pneg %p322
        $region62: #{tpu_custom_call.1} parent=11 // pred_check_branch
          %401 = sbr.rel (%p399) target = $region64
        $region63: #{tpu_custom_call.1} parent=11 // pred_region
          _
        $region64: #{tpu_custom_call.1} parent=11 // pred_fallthru
          _
      $region12: #{tpu_custom_call.1} parent=5 // pred_fallthru
        _
      %p402 = scmp.lt.s32.totalorder %s23, 2
      // Predicated region
      $region65: #{tpu_custom_call.1} parent=5 // pred_check
        %p403 = pneg %p402
      $region66: #{tpu_custom_call.1} parent=5 // pred_check_branch
        %405 = sbr.rel (%p403) target = $region68
      $region67: #{tpu_custom_call.1} parent=5 // pred_region
        // Predicated region
        $region69: #{tpu_custom_call.1} parent=67 // pred_check
          %p406 = pneg %p43
        $region70: #{tpu_custom_call.1} parent=67 // pred_check_branch
          %408 = sbr.rel (%p406) target = $region72
        $region71: #{tpu_custom_call.1} parent=67 // pred_region
          %p409 = scmp.lt.s32.totalorder %s23, 1
          %s410 = scalar_select %p409, %s23, 1
          %s411 = smul.addr %s410, 32
          %s412 = smul.addr %s411, 4
          %s413 = scalar_lea.vmem %s0, %s412
        $region72: #{tpu_custom_call.1} parent=67 // pred_fallthru
          _
      $region68: #{tpu_custom_call.1} parent=5 // pred_fallthru
        _
      %p414 = scmp.le.s32.totalorder 1, %s23
      %p415 = scmp.lt.s32.totalorder %s23, 3
      %p416 = pnand %p414, %p415
      %p417 = pneg %p416
      // Predicated region
      $region73: #{tpu_custom_call.1} parent=5 // pred_check
        _
      $region74: #{tpu_custom_call.1} parent=5 // pred_check_branch
        %419 = sbr.rel (%p416) target = $region76
      $region75: #{tpu_custom_call.1} parent=5 // pred_region
        %s420 = ssub.s32 %s23, 1
        %p421 = scmp.lt.s32.totalorder %s28, 1
        %s422 = scalar_select %p421, %s28, 1
        %s423 = smul.addr %s422, 32
        %s424 = smul.addr %s423, 4
        %s425 = scalar_lea.vmem %s0, %s424
        %p426 = pneg %p49
        %p427 = pneg %p46
        %p428 = pneg %p70
        %p429 = pneg %p67
        %p430 = pneg %p91
        %p431 = pneg %p88
        %p432 = pneg %p112
        %p433 = pneg %p109
        %p434 = pneg %p133
        %p435 = pneg %p130
        %p436 = pneg %p154
        %p437 = pneg %p151
        %p438 = pneg %p175
        %p439 = pneg %p172
        %p440 = pneg %p196
        %p441 = pneg %p193
        %p442 = pneg %p217
        %p443 = pneg %p214
        %p444 = pneg %p238
        %p445 = pneg %p235
        %p446 = pneg %p259
        %p447 = pneg %p256
        %p448 = pneg %p280
        %p449 = pneg %p277
        %p450 = pneg %p301
        %p451 = pneg %p298
        %p452 = pneg %p322
        %p453 = pneg %p319
        %p454 = pneg %p348
        %p455 = pneg %p345
        %s456 = sand.u32 %s335, 1
        %s457 = scalar_lea.sflag [#allocation5], %s456
        %s458 = sand.u32 %s335, 1
        %s459 = smul.addr %s458, 256
        %s460 = scalar_lea.vmem [#allocation4], %s459
        %p461 = scmp.lt.s32.totalorder %s28, 1
        %s462 = scalar_select %p461, %s28, 1
        %s463 = smul.addr %s462, 32
        %s464 = smul.addr %s463, 4
        %s465 = scalar_lea.vmem %s0, %s464
        %v467 = vld [vmem:[%s465] sm:$0xf]
        %v468 = vld [vmem:[%s465 + $0x4] sm:$0xf]
        %v469 = vld [vmem:[%s465 + $0x8] sm:$0xf]
        %v470 = vld [vmem:[%s465 + $0xc] sm:$0xf]
        %v471 = vld [vmem:[%s465 + $0x10] sm:$0xf]
        %v472 = vld [vmem:[%s465 + $0x14] sm:$0xf]
        %v473 = vld [vmem:[%s465 + $0x18] sm:$0xf]
        %v474 = vld [vmem:[%s465 + $0x1c] sm:$0xf]
        %v475 = vld [vmem:[%s465 + $0x20] sm:$0xf]
        %v476 = vld [vmem:[%s465 + $0x24] sm:$0xf]
        %v477 = vld [vmem:[%s465 + $0x28] sm:$0xf]
        %v478 = vld [vmem:[%s465 + $0x2c] sm:$0xf]
        %v479 = vld [vmem:[%s465 + $0x30] sm:$0xf]
        %v480 = vld [vmem:[%s465 + $0x34] sm:$0xf]
        %v481 = vld [vmem:[%s465 + $0x38] sm:$0xf]
        %v482 = vld [vmem:[%s465 + $0x3c] sm:$0xf]
        %v483 = vld [vmem:[%s465 + $0x40] sm:$0xf]
        %v484 = vld [vmem:[%s465 + $0x44] sm:$0xf]
        %v485 = vld [vmem:[%s465 + $0x48] sm:$0xf]
        %v486 = vld [vmem:[%s465 + $0x4c] sm:$0xf]
        %v487 = vld [vmem:[%s465 + $0x50] sm:$0xf]
        %v488 = vld [vmem:[%s465 + $0x54] sm:$0xf]
        %v489 = vld [vmem:[%s465 + $0x58] sm:$0xf]
        %v490 = vld [vmem:[%s465 + $0x5c] sm:$0xf]
        %v491 = vld [vmem:[%s465 + $0x60] sm:$0xf]
        %v492 = vld [vmem:[%s465 + $0x64] sm:$0xf]
        %v493 = vld [vmem:[%s465 + $0x68] sm:$0xf]
        %v494 = vld [vmem:[%s465 + $0x6c] sm:$0xf]
        %v495 = vld [vmem:[%s465 + $0x70] sm:$0xf]
        %v496 = vld [vmem:[%s465 + $0x74] sm:$0xf]
        %v497 = vld [vmem:[%s465 + $0x78] sm:$0xf]
        %v498 = vld [vmem:[%s465 + $0x7c] sm:$0xf]
        %v499 = vld [vmem:[%s1] sm:$0xf]
        %v500 = vld [vmem:[%s1 + $0x4] sm:$0xf]
        %v501 = vld [vmem:[%s1 + $0x8] sm:$0xf]
        %v502 = vld [vmem:[%s1 + $0xc] sm:$0xf]
        %v503 = vld [vmem:[%s1 + $0x10] sm:$0xf]
        %v504 = vld [vmem:[%s1 + $0x14] sm:$0xf]
        %v505 = vld [vmem:[%s1 + $0x18] sm:$0xf]
        %v506 = vld [vmem:[%s1 + $0x1c] sm:$0xf]
        %v507 = vld [vmem:[%s1 + $0x20] sm:$0xf]
        %v508 = vld [vmem:[%s1 + $0x24] sm:$0xf]
        %v509 = vld [vmem:[%s1 + $0x28] sm:$0xf]
        %v510 = vld [vmem:[%s1 + $0x2c] sm:$0xf]
        %v511 = vld [vmem:[%s1 + $0x30] sm:$0xf]
        %v512 = vld [vmem:[%s1 + $0x34] sm:$0xf]
        %v513 = vld [vmem:[%s1 + $0x38] sm:$0xf]
        %v514 = vld [vmem:[%s1 + $0x3c] sm:$0xf]
        %v547 = vunpack.c.l.b16 %v467
        %v548 = vunpack.c.l.b16 %v468
        %v549 = vunpack.c.l.b16 %v469
        %v550 = vunpack.c.l.b16 %v470
        %v551 = vunpack.c.l.b16 %v471
        %v552 = vunpack.c.l.b16 %v472
        %v553 = vunpack.c.l.b16 %v473
        %v554 = vunpack.c.l.b16 %v474
        %v555 = vunpack.c.l.b16 %v475
        %v556 = vunpack.c.l.b16 %v476
        %v557 = vunpack.c.l.b16 %v477
        %v558 = vunpack.c.l.b16 %v478
        %v559 = vunpack.c.l.b16 %v479
        %v560 = vunpack.c.l.b16 %v480
        %v561 = vunpack.c.l.b16 %v481
        %v562 = vunpack.c.l.b16 %v482
        %v563 = vunpack.c.l.b16 %v483
        %v564 = vunpack.c.l.b16 %v484
        %v565 = vunpack.c.l.b16 %v485
        %v566 = vunpack.c.l.b16 %v486
        %v567 = vunpack.c.l.b16 %v487
        %v568 = vunpack.c.l.b16 %v488
        %v569 = vunpack.c.l.b16 %v489
        %v570 = vunpack.c.l.b16 %v490
        %v571 = vunpack.c.l.b16 %v491
        %v572 = vunpack.c.l.b16 %v492
        %v573 = vunpack.c.l.b16 %v493
        %v574 = vunpack.c.l.b16 %v494
        %v575 = vunpack.c.l.b16 %v495
        %v576 = vunpack.c.l.b16 %v496
        %v577 = vunpack.c.l.b16 %v497
        %v578 = vunpack.c.l.b16 %v498
        %v579 = vpack.c.b16 %v548, %v547
        %v580 = vpack.c.b16 %v550, %v549
        %v581 = vpack.c.b16 %v552, %v551
        %v582 = vpack.c.b16 %v554, %v553
        %v583 = vpack.c.b16 %v556, %v555
        %v584 = vpack.c.b16 %v558, %v557
        %v585 = vpack.c.b16 %v560, %v559
        %v586 = vpack.c.b16 %v562, %v561
        %v587 = vpack.c.b16 %v564, %v563
        %v588 = vpack.c.b16 %v566, %v565
        %v589 = vpack.c.b16 %v568, %v567
        %v590 = vpack.c.b16 %v570, %v569
        %v591 = vpack.c.b16 %v572, %v571
        %v592 = vpack.c.b16 %v574, %v573
        %v593 = vpack.c.b16 %v576, %v575
        %v594 = vpack.c.b16 %v578, %v577
        %v627 = vunpack.c.l.b16 %v499
        %v628 = vunpack.c.l.b16 %v500
        %v629 = vunpack.c.l.b16 %v501
        %v630 = vunpack.c.l.b16 %v502
        %v631 = vunpack.c.l.b16 %v503
        %v632 = vunpack.c.l.b16 %v504
        %v633 = vunpack.c.l.b16 %v505
        %v634 = vunpack.c.l.b16 %v506
        %v635 = vunpack.c.l.b16 %v507
        %v636 = vunpack.c.l.b16 %v508
        %v637 = vunpack.c.l.b16 %v509
        %v638 = vunpack.c.l.b16 %v510
        %v639 = vunpack.c.l.b16 %v511
        %v640 = vunpack.c.l.b16 %v512
        %v641 = vunpack.c.l.b16 %v513
        %v642 = vunpack.c.l.b16 %v514
        %v643 = vpack.c.b16 %v628, %v627
        %v644 = vpack.c.b16 %v630, %v629
        %v645 = vpack.c.b16 %v632, %v631
        %v646 = vpack.c.b16 %v634, %v633
        %v647 = vpack.c.b16 %v636, %v635
        %v648 = vpack.c.b16 %v638, %v637
        %v649 = vpack.c.b16 %v640, %v639
        %v650 = vpack.c.b16 %v642, %v641
        %659 = vmatprep.subr.bf16.mxu0 0
        %660 = vmatpush1.bf16.msra.mxu0 %v643
        %661 = vmatprep.subr.bf16.mxu0 0
        %662 = vmatpush1.bf16.msra.mxu0 %v644
        %663 = vmatprep.subr.bf16.mxu0 0
        %664 = vmatpush1.bf16.msra.mxu0 %v645
        %665 = vmatprep.subr.bf16.mxu0 0
        %666 = vmatpush1.bf16.msra.mxu0 %v646
        %667 = vmatprep.subr.bf16.mxu0 0
        %668 = vmatpush1.bf16.msra.mxu0 %v647
        %669 = vmatprep.subr.bf16.mxu0 0
        %670 = vmatpush1.bf16.msra.mxu0 %v648
        %671 = vmatprep.subr.bf16.mxu0 0
        %672 = vmatpush1.bf16.msra.mxu0 %v649
        %673 = vmatprep.subr.bf16.mxu0 0
        %674 = vmatpush1.bf16.msra.mxu0 %v650
        %675 = vmatprep.subr.bf16.mxu0 0
        %676 = vmatpush1.bf16.msra.mxu0 0
        %677 = vmatprep.subr.bf16.mxu0 0
        %678 = vmatpush1.bf16.msra.mxu0 0
        %679 = vmatprep.subr.bf16.mxu0 0
        %680 = vmatpush1.bf16.msra.mxu0 0
        %681 = vmatprep.subr.bf16.mxu0 0
        %682 = vmatpush1.bf16.msra.mxu0 0
        %683 = vmatprep.subr.bf16.mxu0 0
        %684 = vmatpush1.bf16.msra.mxu0 0
        %685 = vmatprep.subr.bf16.mxu0 0
        %686 = vmatpush1.bf16.msra.mxu0 0
        %687 = vmatprep.subr.bf16.mxu0 0
        %688 = vmatpush1.bf16.msra.mxu0 0
        %689 = vmatprep.subr.bf16.mxu0 0
        %690 = vmatpush1.bf16.msra.mxu0 0
        %691 = vmatprep.mubr.bf16.mxu0 0
        %692 = vmatmul.mubr.bf16.gmra.mrb[0].mxu0 %v579
        %v693 = vpop.f32.mrb[0].mxu0
        %v694 = vadd.f32 0.0, %v693
        %v695 = vpop.f32.mrb[0].mxu0
        %v696 = vpop.f32.mrb[0].mxu0
        %v697 = vadd.f32 0.0, %v696
        %v698 = vpop.f32.mrb[0].mxu0
        %699 = vmatprep.mubr.bf16.mxu0 0
        %700 = vmatmul.mubr.bf16.gmra.mrb[0].mxu0 %v580
        %v701 = vpop.f32.mrb[0].mxu0
        %v702 = vadd.f32 0.0, %v701
        %v703 = vpop.f32.mrb[0].mxu0
        %v704 = vpop.f32.mrb[0].mxu0
        %v705 = vadd.f32 0.0, %v704
        %v706 = vpop.f32.mrb[0].mxu0
        %707 = vmatprep.mubr.bf16.mxu0 0
        %708 = vmatmul.mubr.bf16.gmra.mrb[0].mxu0 %v581
        %v709 = vpop.f32.mrb[0].mxu0
        %v710 = vadd.f32 0.0, %v709
        %v711 = vpop.f32.mrb[0].mxu0
        %v712 = vpop.f32.mrb[0].mxu0
        %v713 = vadd.f32 0.0, %v712
        %v714 = vpop.f32.mrb[0].mxu0
        %715 = vmatprep.mubr.bf16.mxu0 0
        %716 = vmatmul.mubr.bf16.gmra.mrb[0].mxu0 %v582
        %v717 = vpop.f32.mrb[0].mxu0
        %v718 = vadd.f32 0.0, %v717
        %v719 = vpop.f32.mrb[0].mxu0
        %v720 = vpop.f32.mrb[0].mxu0
        %v721 = vadd.f32 0.0, %v720
        %v722 = vpop.f32.mrb[0].mxu0
        %723 = vmatprep.mubr.bf16.mxu0 0
        %724 = vmatmul.mubr.bf16.gmra.mrb[0].mxu0 %v583
        %v725 = vpop.f32.mrb[0].mxu0
        %v726 = vadd.f32 0.0, %v725
        %v727 = vpop.f32.mrb[0].mxu0
        %v728 = vpop.f32.mrb[0].mxu0
        %v729 = vadd.f32 0.0, %v728
        %v730 = vpop.f32.mrb[0].mxu0
        %731 = vmatprep.mubr.bf16.mxu0 0
        %732 = vmatmul.mubr.bf16.gmra.mrb[0].mxu0 %v584
        %v733 = vpop.f32.mrb[0].mxu0
        %v734 = vadd.f32 0.0, %v733
        %v735 = vpop.f32.mrb[0].mxu0
        %v736 = vpop.f32.mrb[0].mxu0
        %v737 = vadd.f32 0.0, %v736
        %v738 = vpop.f32.mrb[0].mxu0
        %739 = vmatprep.mubr.bf16.mxu0 0
        %740 = vmatmul.mubr.bf16.gmra.mrb[0].mxu0 %v585
        %v741 = vpop.f32.mrb[0].mxu0
        %v742 = vadd.f32 0.0, %v741
        %v743 = vpop.f32.mrb[0].mxu0
        %v744 = vpop.f32.mrb[0].mxu0
        %v745 = vadd.f32 0.0, %v744
        %v746 = vpop.f32.mrb[0].mxu0
        %747 = vmatprep.mubr.bf16.mxu0 0
        %748 = vmatmul.mubr.bf16.gmra.mrb[0].mxu0 %v586
        %v749 = vpop.f32.mrb[0].mxu0
        %v750 = vadd.f32 0.0, %v749
        %v751 = vpop.f32.mrb[0].mxu0
        %v752 = vpop.f32.mrb[0].mxu0
        %v753 = vadd.f32 0.0, %v752
        %v754 = vpop.f32.mrb[0].mxu0
        %755 = vmatprep.mubr.bf16.mxu0 0
        %756 = vmatmul.mubr.bf16.gmra.mrb[0].mxu0 %v587
        %v757 = vpop.f32.mrb[0].mxu0
        %v758 = vadd.f32 0.0, %v757
        %v759 = vpop.f32.mrb[0].mxu0
        %v760 = vpop.f32.mrb[0].mxu0
        %v761 = vadd.f32 0.0, %v760
        %v762 = vpop.f32.mrb[0].mxu0
        %763 = vmatprep.mubr.bf16.mxu0 0
        %764 = vmatmul.mubr.bf16.gmra.mrb[0].mxu0 %v588
        %v765 = vpop.f32.mrb[0].mxu0
        %v766 = vadd.f32 0.0, %v765
        %v767 = vpop.f32.mrb[0].mxu0
        %v768 = vpop.f32.mrb[0].mxu0
        %v769 = vadd.f32 0.0, %v768
        %v770 = vpop.f32.mrb[0].mxu0
        %771 = vmatprep.mubr.bf16.mxu0 0
        %772 = vmatmul.mubr.bf16.gmra.mrb[0].mxu0 %v589
        %v773 = vpop.f32.mrb[0].mxu0
        %v774 = vadd.f32 0.0, %v773
        %v775 = vpop.f32.mrb[0].mxu0
        %v776 = vpop.f32.mrb[0].mxu0
        %v777 = vadd.f32 0.0, %v776
        %v778 = vpop.f32.mrb[0].mxu0
        %779 = vmatprep.mubr.bf16.mxu0 0
        %780 = vmatmul.mubr.bf16.gmra.mrb[0].mxu0 %v590
        %v781 = vpop.f32.mrb[0].mxu0
        %v782 = vadd.f32 0.0, %v781
        %v783 = vpop.f32.mrb[0].mxu0
        %v784 = vpop.f32.mrb[0].mxu0
        %v785 = vadd.f32 0.0, %v784
        %v786 = vpop.f32.mrb[0].mxu0
        %787 = vmatprep.mubr.bf16.mxu0 0
        %788 = vmatmul.mubr.bf16.gmra.mrb[0].mxu0 %v591
        %v789 = vpop.f32.mrb[0].mxu0
        %v790 = vadd.f32 0.0, %v789
        %v791 = vpop.f32.mrb[0].mxu0
        %v792 = vpop.f32.mrb[0].mxu0
        %v793 = vadd.f32 0.0, %v792
        %v794 = vpop.f32.mrb[0].mxu0
        %795 = vmatprep.mubr.bf16.mxu0 0
        %796 = vmatmul.mubr.bf16.gmra.mrb[0].mxu0 %v592
        %v797 = vpop.f32.mrb[0].mxu0
        %v798 = vadd.f32 0.0, %v797
        %v799 = vpop.f32.mrb[0].mxu0
        %v800 = vpop.f32.mrb[0].mxu0
        %v801 = vadd.f32 0.0, %v800
        %v802 = vpop.f32.mrb[0].mxu0
        %803 = vmatprep.mubr.bf16.mxu0 0
        %804 = vmatmul.mubr.bf16.gmra.mrb[0].mxu0 %v593
        %v805 = vpop.f32.mrb[0].mxu0
        %v806 = vadd.f32 0.0, %v805
        %v807 = vpop.f32.mrb[0].mxu0
        %v808 = vpop.f32.mrb[0].mxu0
        %v809 = vadd.f32 0.0, %v808
        %v810 = vpop.f32.mrb[0].mxu0
        %811 = vmatprep.mubr.bf16.mxu0 0
        %812 = vmatmul.mubr.bf16.gmra.mrb[0].mxu0 %v594
        %v813 = vpop.f32.mrb[0].mxu0
        %v814 = vadd.f32 0.0, %v813
        %v815 = vpop.f32.mrb[0].mxu0
        %v816 = vpop.f32.mrb[0].mxu0
        %v817 = vadd.f32 0.0, %v816
        %v818 = vpop.f32.mrb[0].mxu0
        %819 = vdwg.mxu0
        %v820 = vld [vmem:[%s2] sm:$0x1]
        %v822 = vlaneseq
        %v823 = vshrl.u32 %v822, 7
        %v824 = vsub.s32 0, %v823
        %v825 = vrot.slane %v820, %v824
        %v827 = vmul.f32 %v694, %v825
        %v828 = vmul.f32 %v697, %v825
        %v829 = vmul.f32 %v702, %v825
        %v830 = vmul.f32 %v705, %v825
        %v831 = vmul.f32 %v710, %v825
        %v832 = vmul.f32 %v713, %v825
        %v833 = vmul.f32 %v718, %v825
        %v834 = vmul.f32 %v721, %v825
        %v835 = vmul.f32 %v726, %v825
        %v836 = vmul.f32 %v729, %v825
        %v837 = vmul.f32 %v734, %v825
        %v838 = vmul.f32 %v737, %v825
        %v839 = vmul.f32 %v742, %v825
        %v840 = vmul.f32 %v745, %v825
        %v841 = vmul.f32 %v750, %v825
        %v842 = vmul.f32 %v753, %v825
        %v843 = vmul.f32 %v758, %v825
        %v844 = vmul.f32 %v761, %v825
        %v845 = vmul.f32 %v766, %v825
        %v846 = vmul.f32 %v769, %v825
        %v847 = vmul.f32 %v774, %v825
        %v848 = vmul.f32 %v777, %v825
        %v849 = vmul.f32 %v782, %v825
        %v850 = vmul.f32 %v785, %v825
        %v851 = vmul.f32 %v790, %v825
        %v852 = vmul.f32 %v793, %v825
        %v853 = vmul.f32 %v798, %v825
        %v854 = vmul.f32 %v801, %v825
        %v855 = vmul.f32 %v806, %v825
        %v856 = vmul.f32 %v809, %v825
        %v857 = vmul.f32 %v814, %v825
        %v858 = vmul.f32 %v817, %v825
        %v859 = vld [vmem:[%s3] sm:$0x1]
        %v861 = vlaneseq
        %v862 = vshrl.u32 %v861, 7
        %v863 = vsub.s32 0, %v862
        %v864 = vrot.slane %v859, %v863
        %v866 = vadd.f32 %v827, %v864
        %v867 = vadd.f32 %v828, %v864
        %v868 = vadd.f32 %v829, %v864
        %v869 = vadd.f32 %v830, %v864
        %v870 = vadd.f32 %v831, %v864
        %v871 = vadd.f32 %v832, %v864
        %v872 = vadd.f32 %v833, %v864
        %v873 = vadd.f32 %v834, %v864
        %v874 = vadd.f32 %v835, %v864
        %v875 = vadd.f32 %v836, %v864
        %v876 = vadd.f32 %v837, %v864
        %v877 = vadd.f32 %v838, %v864
        %v878 = vadd.f32 %v839, %v864
        %v879 = vadd.f32 %v840, %v864
        %v880 = vadd.f32 %v841, %v864
        %v881 = vadd.f32 %v842, %v864
        %v882 = vadd.f32 %v843, %v864
        %v883 = vadd.f32 %v844, %v864
        %v884 = vadd.f32 %v845, %v864
        %v885 = vadd.f32 %v846, %v864
        %v886 = vadd.f32 %v847, %v864
        %v887 = vadd.f32 %v848, %v864
        %v888 = vadd.f32 %v849, %v864
        %v889 = vadd.f32 %v850, %v864
        %v890 = vadd.f32 %v851, %v864
        %v891 = vadd.f32 %v852, %v864
        %v892 = vadd.f32 %v853, %v864
        %v893 = vadd.f32 %v854, %v864
        %v894 = vadd.f32 %v855, %v864
        %v895 = vadd.f32 %v856, %v864
        %v896 = vadd.f32 %v857, %v864
        %v897 = vadd.f32 %v858, %v864
        %v898 = vmul.f32 %v866, 0.5
        %v899 = vmul.f32 %v867, 0.5
        %v900 = vmul.f32 %v868, 0.5
        %v901 = vmul.f32 %v869, 0.5
        %v902 = vmul.f32 %v870, 0.5
        %v903 = vmul.f32 %v871, 0.5
        %v904 = vmul.f32 %v872, 0.5
        %v905 = vmul.f32 %v873, 0.5
        %v906 = vmul.f32 %v874, 0.5
        %v907 = vmul.f32 %v875, 0.5
        %v908 = vmul.f32 %v876, 0.5
        %v909 = vmul.f32 %v877, 0.5
        %v910 = vmul.f32 %v878, 0.5
        %v911 = vmul.f32 %v879, 0.5
        %v912 = vmul.f32 %v880, 0.5
        %v913 = vmul.f32 %v881, 0.5
        %v914 = vmul.f32 %v882, 0.5
        %v915 = vmul.f32 %v883, 0.5
        %v916 = vmul.f32 %v884, 0.5
        %v917 = vmul.f32 %v885, 0.5
        %v918 = vmul.f32 %v886, 0.5
        %v919 = vmul.f32 %v887, 0.5
        %v920 = vmul.f32 %v888, 0.5
        %v921 = vmul.f32 %v889, 0.5
        %v922 = vmul.f32 %v890, 0.5
        %v923 = vmul.f32 %v891, 0.5
        %v924 = vmul.f32 %v892, 0.5
        %v925 = vmul.f32 %v893, 0.5
        %v926 = vmul.f32 %v894, 0.5
        %v927 = vmul.f32 %v895, 0.5
        %v928 = vmul.f32 %v896, 0.5
        %v929 = vmul.f32 %v897, 0.5
        %v930 = vmul.f32 %v866, 0.70710677
        %v931 = vmul.f32 %v867, 0.70710677
        %v932 = vmul.f32 %v868, 0.70710677
        %v933 = vmul.f32 %v869, 0.70710677
        %v934 = vmul.f32 %v870, 0.70710677
        %v935 = vmul.f32 %v871, 0.70710677
        %v936 = vmul.f32 %v872, 0.70710677
        %v937 = vmul.f32 %v873, 0.70710677
        %v938 = vmul.f32 %v874, 0.70710677
        %v939 = vmul.f32 %v875, 0.70710677
        %v940 = vmul.f32 %v876, 0.70710677
        %v941 = vmul.f32 %v877, 0.70710677
        %v942 = vmul.f32 %v878, 0.70710677
        %v943 = vmul.f32 %v879, 0.70710677
        %v944 = vmul.f32 %v880, 0.70710677
        %v945 = vmul.f32 %v881, 0.70710677
        %v946 = vmul.f32 %v882, 0.70710677
        %v947 = vmul.f32 %v883, 0.70710677
        %v948 = vmul.f32 %v884, 0.70710677
        %v949 = vmul.f32 %v885, 0.70710677
        %v950 = vmul.f32 %v886, 0.70710677
        %v951 = vmul.f32 %v887, 0.70710677
        %v952 = vmul.f32 %v888, 0.70710677
        %v953 = vmul.f32 %v889, 0.70710677
        %v954 = vmul.f32 %v890, 0.70710677
        %v955 = vmul.f32 %v891, 0.70710677
        %v956 = vmul.f32 %v892, 0.70710677
        %v957 = vmul.f32 %v893, 0.70710677
        %v958 = vmul.f32 %v894, 0.70710677
        %v959 = vmul.f32 %v895, 0.70710677
        %v960 = vmul.f32 %v896, 0.70710677
        %v961 = vmul.f32 %v897, 0.70710677
        %v962 = verf.f32.pop %v930
        %v963 = verf.f32.pop %v931
        %v964 = verf.f32.pop %v932
        %v965 = verf.f32.pop %v933
        %v966 = verf.f32.pop %v934
        %v967 = verf.f32.pop %v935
        %v968 = verf.f32.pop %v936
        %v969 = verf.f32.pop %v937
        %v970 = verf.f32.pop %v938
        %v971 = verf.f32.pop %v939
        %v972 = verf.f32.pop %v940
        %v973 = verf.f32.pop %v941
        %v974 = verf.f32.pop %v942
        %v975 = verf.f32.pop %v943
        %v976 = verf.f32.pop %v944
        %v977 = verf.f32.pop %v945
        %v978 = verf.f32.pop %v946
        %v979 = verf.f32.pop %v947
        %v980 = verf.f32.pop %v948
        %v981 = verf.f32.pop %v949
        %v982 = verf.f32.pop %v950
        %v983 = verf.f32.pop %v951
        %v984 = verf.f32.pop %v952
        %v985 = verf.f32.pop %v953
        %v986 = verf.f32.pop %v954
        %v987 = verf.f32.pop %v955
        %v988 = verf.f32.pop %v956
        %v989 = verf.f32.pop %v957
        %v990 = verf.f32.pop %v958
        %v991 = verf.f32.pop %v959
        %v992 = verf.f32.pop %v960
        %v993 = verf.f32.pop %v961
        %v994 = vadd.f32 %v962, 1.0
        %v995 = vadd.f32 %v963, 1.0
        %v996 = vadd.f32 %v964, 1.0
        %v997 = vadd.f32 %v965, 1.0
        %v998 = vadd.f32 %v966, 1.0
        %v999 = vadd.f32 %v967, 1.0
        %v1000 = vadd.f32 %v968, 1.0
        %v1001 = vadd.f32 %v969, 1.0
        %v1002 = vadd.f32 %v970, 1.0
        %v1003 = vadd.f32 %v971, 1.0
        %v1004 = vadd.f32 %v972, 1.0
        %v1005 = vadd.f32 %v973, 1.0
        %v1006 = vadd.f32 %v974, 1.0
        %v1007 = vadd.f32 %v975, 1.0
        %v1008 = vadd.f32 %v976, 1.0
        %v1009 = vadd.f32 %v977, 1.0
        %v1010 = vadd.f32 %v978, 1.0
        %v1011 = vadd.f32 %v979, 1.0
        %v1012 = vadd.f32 %v980, 1.0
        %v1013 = vadd.f32 %v981, 1.0
        %v1014 = vadd.f32 %v982, 1.0
        %v1015 = vadd.f32 %v983, 1.0
        %v1016 = vadd.f32 %v984, 1.0
        %v1017 = vadd.f32 %v985, 1.0
        %v1018 = vadd.f32 %v986, 1.0
        %v1019 = vadd.f32 %v987, 1.0
        %v1020 = vadd.f32 %v988, 1.0
        %v1021 = vadd.f32 %v989, 1.0
        %v1022 = vadd.f32 %v990, 1.0
        %v1023 = vadd.f32 %v991, 1.0
        %v1024 = vadd.f32 %v992, 1.0
        %v1025 = vadd.f32 %v993, 1.0
        %v1026 = vmul.f32 %v898, %v994
        %v1027 = vmul.f32 %v899, %v995
        %v1028 = vmul.f32 %v900, %v996
        %v1029 = vmul.f32 %v901, %v997
        %v1030 = vmul.f32 %v902, %v998
        %v1031 = vmul.f32 %v903, %v999
        %v1032 = vmul.f32 %v904, %v1000
        %v1033 = vmul.f32 %v905, %v1001
        %v1034 = vmul.f32 %v906, %v1002
        %v1035 = vmul.f32 %v907, %v1003
        %v1036 = vmul.f32 %v908, %v1004
        %v1037 = vmul.f32 %v909, %v1005
        %v1038 = vmul.f32 %v910, %v1006
        %v1039 = vmul.f32 %v911, %v1007
        %v1040 = vmul.f32 %v912, %v1008
        %v1041 = vmul.f32 %v913, %v1009
        %v1042 = vmul.f32 %v914, %v1010
        %v1043 = vmul.f32 %v915, %v1011
        %v1044 = vmul.f32 %v916, %v1012
        %v1045 = vmul.f32 %v917, %v1013
        %v1046 = vmul.f32 %v918, %v1014
        %v1047 = vmul.f32 %v919, %v1015
        %v1048 = vmul.f32 %v920, %v1016
        %v1049 = vmul.f32 %v921, %v1017
        %v1050 = vmul.f32 %v922, %v1018
        %v1051 = vmul.f32 %v923, %v1019
        %v1052 = vmul.f32 %v924, %v1020
        %v1053 = vmul.f32 %v925, %v1021
        %v1054 = vmul.f32 %v926, %v1022
        %v1055 = vmul.f32 %v927, %v1023
        %v1056 = vmul.f32 %v928, %v1024
        %v1057 = vmul.f32 %v929, %v1025
        %v1058 = vpack.c.bf16 %v1027, %v1026
        %v1059 = vpack.c.bf16 %v1029, %v1028
        %v1060 = vpack.c.bf16 %v1031, %v1030
        %v1061 = vpack.c.bf16 %v1033, %v1032
        %v1062 = vpack.c.bf16 %v1035, %v1034
        %v1063 = vpack.c.bf16 %v1037, %v1036
        %v1064 = vpack.c.bf16 %v1039, %v1038
        %v1065 = vpack.c.bf16 %v1041, %v1040
        %v1066 = vpack.c.bf16 %v1043, %v1042
        %v1067 = vpack.c.bf16 %v1045, %v1044
        %v1068 = vpack.c.bf16 %v1047, %v1046
        %v1069 = vpack.c.bf16 %v1049, %v1048
        %v1070 = vpack.c.bf16 %v1051, %v1050
        %v1071 = vpack.c.bf16 %v1053, %v1052
        %v1072 = vpack.c.bf16 %v1055, %v1054
        %v1073 = vpack.c.bf16 %v1057, %v1056
        %vm1074 = vcmask 257024
        %1075 = vst.msk [vmem:[#allocation2] sm:$0xf] %vm1074, 0
        %1076 = vst.msk [vmem:[#allocation2 + $0x4] sm:$0xf] %vm1074, 0
        %vm1077 = vcmask 254976
        %vm1078 = vsmask.f32 1280
        %vm1079 = vmand %vm1077, %vm1078
        %v1080 = vld [vmem:[#allocation2 + $0x8] sm:$0x3]
        %v1081 = vsel %vm1079, 0, %v1080
        %1082 = vst [vmem:[#allocation2 + $0x8] sm:$0x3] %v1081
        %vm1083 = vcmask 257025
        %1084 = vst.msk [vmem:[#allocation2 + $0x98] sm:$0xe] %vm1083, 0
        %1085 = vst.msk [vmem:[#allocation2 + $0x9c] sm:$0xf] %vm1074, 0
        %1086 = vst.msk [vmem:[#allocation2 + $0xa0] sm:$0xf] %vm1074, 0
        %1087 = vst.msk [vmem:[#allocation2 + $0xa4] sm:$0xf] %vm1074, 0
        %vm1088 = vcmask 256000
        %1089 = vst.msk [vmem:[#allocation2 + $0xa8] sm:$0x7] %vm1088, 0
        %v1091 = vunpack.c.l.b16 %v1058
        %v1092 = vunpack.c.h.b16 %v1058
        %v1093 = vpack.c.b16 %v1091, %v1091
        %v1094 = vpack.c.b16 %v1092, %v1092
        %vm1095 = vsmask.f32 5392
        %vm1096 = vmor %vm1078, %vm1095
        %v1098 = vshrl.u32 %v1093, 16
        %v1100 = vrot.slane %v1098, 6
        %v1101 = vshll.u32 %v1093, 16
        %v1103 = vrot.slane %v1101, 7
        %v1104 = vor.u32 %v1100, %v1103
        %v1105 = vrot.slane %v1104, 4
        %v1107 = vshrl.u32 %v1094, 16
        %v1109 = vrot.slane %v1107, 6
        %v1110 = vshll.u32 %v1094, 16
        %v1112 = vrot.slane %v1110, 7
        %v1113 = vor.u32 %v1109, %v1112
        %v1114 = vsel %vm1096, %v1105, %v1113
        %v1115 = vrot.slane %v1113, 4
        %vm1119 = vcmask 257025
        %vm1120 = vsmask.f32 7942
        %vm1121 = vmand %vm1119, %vm1120
        %v1122 = vld [vmem:[#allocation2 + $0x8] sm:$0xe]
        %v1123 = vsel %vm1121, %v1104, %v1122
        %1124 = vst [vmem:[#allocation2 + $0x8] sm:$0xe] %v1123
        %1125 = vst.msk [vmem:[#allocation2 + $0xc] sm:$0xf] %vm1074, %v1114
        %v1126 = vld [vmem:[#allocation2 + $0x10] sm:$0x3]
        %v1127 = vsel %vm1079, %v1115, %v1126
        %1128 = vst [vmem:[#allocation2 + $0x10] sm:$0x3] %v1127
        %vm1129 = vcmask 256001
        %vm1130 = vsmask.f32 2310
        %vm1131 = vmand %vm1129, %vm1130
        %v1132 = vld [vmem:[#allocation2 + $0x10] sm:$0x6]
        %v1133 = vsel %vm1131, 0, %v1132
        %1134 = vst [vmem:[#allocation2 + $0x10] sm:$0x6] %v1133
        %v1136 = vunpack.c.l.b16 %v1059
        %v1137 = vunpack.c.h.b16 %v1059
        %v1138 = vpack.c.b16 %v1136, %v1136
        %v1139 = vpack.c.b16 %v1137, %v1137
        %vm1140 = vsmask.f32 2304
        %vm1141 = vsmask.f32 6416
        %vm1142 = vmor %vm1140, %vm1141
        %v1144 = vshrl.u32 %v1138, 16
        %v1146 = vrot.slane %v1144, 5
        %v1147 = vshll.u32 %v1138, 16
        %v1149 = vrot.slane %v1147, 6
        %v1150 = vor.u32 %v1146, %v1149
        %v1151 = vrot.slane %v1150, 4
        %v1153 = vshrl.u32 %v1139, 16
        %v1155 = vrot.slane %v1153, 5
        %v1156 = vshll.u32 %v1139, 16
        %v1158 = vrot.slane %v1156, 6
        %v1159 = vor.u32 %v1155, %v1158
        %v1160 = vsel %vm1142, %v1151, %v1159
        %v1161 = vrot.slane %v1159, 4
        %vm1165 = vcmask 257026
        %vm1166 = vsmask.f32 7946
        %vm1167 = vmand %vm1165, %vm1166
        %v1168 = vld [vmem:[#allocation2 + $0x10] sm:$0xc]
        %v1169 = vsel %vm1167, %v1150, %v1168
        %1170 = vst [vmem:[#allocation2 + $0x10] sm:$0xc] %v1169
        %1171 = vst.msk [vmem:[#allocation2 + $0x14] sm:$0xf] %vm1074, %v1160
        %vm1172 = vcmask 256000
        %vm1173 = vmand %vm1172, %vm1140
        %v1174 = vld [vmem:[#allocation2 + $0x18] sm:$0x7]
        %v1175 = vsel %vm1173, %v1161, %v1174
        %1176 = vst [vmem:[#allocation2 + $0x18] sm:$0x7] %v1175
        %vm1177 = vsmask.f32 3338
        %vm1178 = vmand %vm1165, %vm1177
        %v1179 = vld [vmem:[#allocation2 + $0x18] sm:$0xc]
        %v1180 = vsel %vm1178, 0, %v1179
        %1181 = vst [vmem:[#allocation2 + $0x18] sm:$0xc] %v1180
        %v1183 = vunpack.c.l.b16 %v1060
        %v1184 = vunpack.c.h.b16 %v1060
        %v1185 = vpack.c.b16 %v1183, %v1183
        %v1186 = vpack.c.b16 %v1184, %v1184
        %vm1187 = vsmask.f32 3328
        %vm1188 = vsmask.f32 7440
        %vm1189 = vmor %vm1187, %vm1188
        %v1191 = vshll.u32 %v1185, 16
        %v1193 = vrot.slane %v1191, 5
        %v1194 = vshrl.u32 %v1185, 16
        %v1196 = vrot.slane %v1194, 4
        %v1197 = vor.u32 %v1196, %v1193
        %v1198 = vrot.slane %v1197, 4
        %v1200 = vshll.u32 %v1186, 16
        %v1202 = vrot.slane %v1200, 5
        %v1203 = vsel %vm1189, %v1198, %v1202
        %v1204 = vshrl.u32 %v1186, 16
        %v1206 = vrot.slane %v1204, 4
        %v1207 = vor.u32 %v1206, %v1202
        %v1208 = vrot.slane %v1207, 4
        %vm1212 = vcmask 257027
        %vm1213 = vsmask.f32 7950
        %vm1214 = vmand %vm1212, %vm1213
        %v1215 = vld [vmem:[#allocation2 + $0x18] sm:$0x8]
        %v1216 = vsel %vm1214, %v1193, %v1215
        %1217 = vst [vmem:[#allocation2 + $0x18] sm:$0x8] %v1216
        %1218 = vst.msk [vmem:[#allocation2 + $0x1c] sm:$0xf] %vm1074, %v1203
        %vm1219 = vcmask 257024
        %vm1220 = vmand %vm1219, %vm1187
        %v1221 = vld [vmem:[#allocation2 + $0x20] sm:$0xf]
        %v1222 = vsel %vm1220, %v1208, %v1221
        %1223 = vst [vmem:[#allocation2 + $0x20] sm:$0xf] %v1222
        %v1224 = vld [vmem:[#allocation2 + $0x20] sm:$0x8]
        %v1225 = vsel %vm1214, 0, %v1224
        %1226 = vst [vmem:[#allocation2 + $0x20] sm:$0x8] %v1225
        %vm1227 = vcmask 253952
        %vm1228 = vsmask.f32 256
        %vm1229 = vmand %vm1227, %vm1228
        %v1230 = vld [vmem:[#allocation2 + $0x24] sm:$0x1]
        %v1231 = vsel %vm1229, 0, %v1230
        %1232 = vst [vmem:[#allocation2 + $0x24] sm:$0x1] %v1231
        %v1234 = vunpack.c.l.b16 %v1061
        %v1235 = vunpack.c.h.b16 %v1061
        %v1236 = vpack.c.b16 %v1234, %v1234
        %v1237 = vpack.c.b16 %v1235, %v1235
        %vm1238 = vsmask.f32 4368
        %vm1239 = vmor %vm1228, %vm1238
        %v1241 = vshrl.u32 %v1236, 16
        %v1243 = vrot.slane %v1241, 7
        %v1244 = vshll.u32 %v1236, 16
        %v1246 = vor.u32 %v1243, %v1244
        %v1247 = vrot.slane %v1243, 4
        %v1249 = vshrl.u32 %v1237, 16
        %v1251 = vrot.slane %v1249, 7
        %v1252 = vshll.u32 %v1237, 16
        %v1254 = vor.u32 %v1251, %v1252
        %v1255 = vsel %vm1239, %v1247, %v1254
        %v1256 = vrot.slane %v1251, 4
        %vm1260 = vsmask.f32 7938
        %vm1261 = vmand %vm1219, %vm1260
        %v1262 = vld [vmem:[#allocation2 + $0x24] sm:$0xf]
        %v1263 = vsel %vm1261, %v1246, %v1262
        %1264 = vst [vmem:[#allocation2 + $0x24] sm:$0xf] %v1263
        %1265 = vst.msk [vmem:[#allocation2 + $0x28] sm:$0xf] %vm1074, %v1255
        %v1266 = vld [vmem:[#allocation2 + $0x2c] sm:$0x1]
        %v1267 = vsel %vm1229, %v1256, %v1266
        %1268 = vst [vmem:[#allocation2 + $0x2c] sm:$0x1] %v1267
        %vm1269 = vsmask.f32 1282
        %vm1270 = vmand %vm1077, %vm1269
        %v1271 = vld [vmem:[#allocation2 + $0x2c] sm:$0x3]
        %v1272 = vsel %vm1270, 0, %v1271
        %1273 = vst [vmem:[#allocation2 + $0x2c] sm:$0x3] %v1272
        %v1275 = vunpack.c.l.b16 %v1062
        %v1276 = vunpack.c.h.b16 %v1062
        %v1277 = vpack.c.b16 %v1275, %v1275
        %v1278 = vpack.c.b16 %v1276, %v1276
        %v1280 = vshrl.u32 %v1277, 16
        %v1282 = vrot.slane %v1280, 6
        %v1283 = vshll.u32 %v1277, 16
        %v1285 = vrot.slane %v1283, 7
        %v1286 = vor.u32 %v1282, %v1285
        %v1287 = vrot.slane %v1286, 4
        %v1289 = vshrl.u32 %v1278, 16
        %v1291 = vrot.slane %v1289, 6
        %v1292 = vshll.u32 %v1278, 16
        %v1294 = vrot.slane %v1292, 7
        %v1295 = vor.u32 %v1291, %v1294
        %v1296 = vsel %vm1096, %v1287, %v1295
        %v1297 = vrot.slane %v1295, 4
        %v1301 = vld [vmem:[#allocation2 + $0x2c] sm:$0xe]
        %v1302 = vsel %vm1121, %v1286, %v1301
        %1303 = vst [vmem:[#allocation2 + $0x2c] sm:$0xe] %v1302
        %1304 = vst.msk [vmem:[#allocation2 + $0x30] sm:$0xf] %vm1074, %v1296
        %v1305 = vld [vmem:[#allocation2 + $0x34] sm:$0x3]
        %v1306 = vsel %vm1079, %v1297, %v1305
        %1307 = vst [vmem:[#allocation2 + $0x34] sm:$0x3] %v1306
        %v1308 = vld [vmem:[#allocation2 + $0x34] sm:$0x6]
        %v1309 = vsel %vm1131, 0, %v1308
        %1310 = vst [vmem:[#allocation2 + $0x34] sm:$0x6] %v1309
        %v1312 = vunpack.c.l.b16 %v1063
        %v1313 = vunpack.c.h.b16 %v1063
        %v1314 = vpack.c.b16 %v1312, %v1312
        %v1315 = vpack.c.b16 %v1313, %v1313
        %v1317 = vshrl.u32 %v1314, 16
        %v1319 = vrot.slane %v1317, 5
        %v1320 = vshll.u32 %v1314, 16
        %v1322 = vrot.slane %v1320, 6
        %v1323 = vor.u32 %v1319, %v1322
        %v1324 = vrot.slane %v1323, 4
        %v1326 = vshrl.u32 %v1315, 16
        %v1328 = vrot.slane %v1326, 5
        %v1329 = vshll.u32 %v1315, 16
        %v1331 = vrot.slane %v1329, 6
        %v1332 = vor.u32 %v1328, %v1331
        %v1333 = vsel %vm1142, %v1324, %v1332
        %v1334 = vrot.slane %v1332, 4
        %v1338 = vld [vmem:[#allocation2 + $0x34] sm:$0xc]
        %v1339 = vsel %vm1167, %v1323, %v1338
        %1340 = vst [vmem:[#allocation2 + $0x34] sm:$0xc] %v1339
        %1341 = vst.msk [vmem:[#allocation2 + $0x38] sm:$0xf] %vm1074, %v1333
        %v1342 = vld [vmem:[#allocation2 + $0x3c] sm:$0x7]
        %v1343 = vsel %vm1173, %v1334, %v1342
        %1344 = vst [vmem:[#allocation2 + $0x3c] sm:$0x7] %v1343
        %v1345 = vld [vmem:[#allocation2 + $0x3c] sm:$0xc]
        %v1346 = vsel %vm1178, 0, %v1345
        %1347 = vst [vmem:[#allocation2 + $0x3c] sm:$0xc] %v1346
        %v1349 = vunpack.c.l.b16 %v1064
        %v1350 = vunpack.c.h.b16 %v1064
        %v1351 = vpack.c.b16 %v1349, %v1349
        %v1352 = vpack.c.b16 %v1350, %v1350
        %v1354 = vshll.u32 %v1351, 16
        %v1356 = vrot.slane %v1354, 5
        %v1357 = vshrl.u32 %v1351, 16
        %v1359 = vrot.slane %v1357, 4
        %v1360 = vor.u32 %v1359, %v1356
        %v1361 = vrot.slane %v1360, 4
        %v1363 = vshll.u32 %v1352, 16
        %v1365 = vrot.slane %v1363, 5
        %v1366 = vsel %vm1189, %v1361, %v1365
        %v1367 = vshrl.u32 %v1352, 16
        %v1369 = vrot.slane %v1367, 4
        %v1370 = vor.u32 %v1369, %v1365
        %v1371 = vrot.slane %v1370, 4
        %v1375 = vld [vmem:[#allocation2 + $0x3c] sm:$0x8]
        %v1376 = vsel %vm1214, %v1356, %v1375
        %1377 = vst [vmem:[#allocation2 + $0x3c] sm:$0x8] %v1376
        %1378 = vst.msk [vmem:[#allocation2 + $0x40] sm:$0xf] %vm1074, %v1366
        %v1379 = vld [vmem:[#allocation2 + $0x44] sm:$0xf]
        %v1380 = vsel %vm1220, %v1371, %v1379
        %1381 = vst [vmem:[#allocation2 + $0x44] sm:$0xf] %v1380
        %v1382 = vld [vmem:[#allocation2 + $0x44] sm:$0x8]
        %v1383 = vsel %vm1214, 0, %v1382
        %1384 = vst [vmem:[#allocation2 + $0x44] sm:$0x8] %v1383
        %v1385 = vld [vmem:[#allocation2 + $0x48] sm:$0x1]
        %v1386 = vsel %vm1229, 0, %v1385
        %1387 = vst [vmem:[#allocation2 + $0x48] sm:$0x1] %v1386
        %v1389 = vunpack.c.l.b16 %v1065
        %v1390 = vunpack.c.h.b16 %v1065
        %v1391 = vpack.c.b16 %v1389, %v1389
        %v1392 = vpack.c.b16 %v1390, %v1390
        %v1394 = vshrl.u32 %v1391, 16
        %v1396 = vrot.slane %v1394, 7
        %v1397 = vshll.u32 %v1391, 16
        %v1399 = vor.u32 %v1396, %v1397
        %v1400 = vrot.slane %v1396, 4
        %v1402 = vshrl.u32 %v1392, 16
        %v1404 = vrot.slane %v1402, 7
        %v1405 = vshll.u32 %v1392, 16
        %v1407 = vor.u32 %v1404, %v1405
        %v1408 = vsel %vm1239, %v1400, %v1407
        %v1409 = vrot.slane %v1404, 4
        %v1413 = vld [vmem:[#allocation2 + $0x48] sm:$0xf]
        %v1414 = vsel %vm1261, %v1399, %v1413
        %1415 = vst [vmem:[#allocation2 + $0x48] sm:$0xf] %v1414
        %1416 = vst.msk [vmem:[#allocation2 + $0x4c] sm:$0xf] %vm1074, %v1408
        %v1417 = vld [vmem:[#allocation2 + $0x50] sm:$0x1]
        %v1418 = vsel %vm1229, %v1409, %v1417
        %1419 = vst [vmem:[#allocation2 + $0x50] sm:$0x1] %v1418
        %v1420 = vld [vmem:[#allocation2 + $0x50] sm:$0x3]
        %v1421 = vsel %vm1270, 0, %v1420
        %1422 = vst [vmem:[#allocation2 + $0x50] sm:$0x3] %v1421
        %v1424 = vunpack.c.l.b16 %v1066
        %v1425 = vunpack.c.h.b16 %v1066
        %v1426 = vpack.c.b16 %v1424, %v1424
        %v1427 = vpack.c.b16 %v1425, %v1425
        %v1429 = vshrl.u32 %v1426, 16
        %v1431 = vrot.slane %v1429, 6
        %v1432 = vshll.u32 %v1426, 16
        %v1434 = vrot.slane %v1432, 7
        %v1435 = vor.u32 %v1431, %v1434
        %v1436 = vrot.slane %v1435, 4
        %v1438 = vshrl.u32 %v1427, 16
        %v1440 = vrot.slane %v1438, 6
        %v1441 = vshll.u32 %v1427, 16
        %v1443 = vrot.slane %v1441, 7
        %v1444 = vor.u32 %v1440, %v1443
        %v1445 = vsel %vm1096, %v1436, %v1444
        %v1446 = vrot.slane %v1444, 4
        %v1450 = vld [vmem:[#allocation2 + $0x50] sm:$0xe]
        %v1451 = vsel %vm1121, %v1435, %v1450
        %1452 = vst [vmem:[#allocation2 + $0x50] sm:$0xe] %v1451
        %1453 = vst.msk [vmem:[#allocation2 + $0x54] sm:$0xf] %vm1074, %v1445
        %v1454 = vld [vmem:[#allocation2 + $0x58] sm:$0x3]
        %v1455 = vsel %vm1079, %v1446, %v1454
        %1456 = vst [vmem:[#allocation2 + $0x58] sm:$0x3] %v1455
        %v1457 = vld [vmem:[#allocation2 + $0x58] sm:$0x6]
        %v1458 = vsel %vm1131, 0, %v1457
        %1459 = vst [vmem:[#allocation2 + $0x58] sm:$0x6] %v1458
        %v1461 = vunpack.c.l.b16 %v1067
        %v1462 = vunpack.c.h.b16 %v1067
        %v1463 = vpack.c.b16 %v1461, %v1461
        %v1464 = vpack.c.b16 %v1462, %v1462
        %v1466 = vshrl.u32 %v1463, 16
        %v1468 = vrot.slane %v1466, 5
        %v1469 = vshll.u32 %v1463, 16
        %v1471 = vrot.slane %v1469, 6
        %v1472 = vor.u32 %v1468, %v1471
        %v1473 = vrot.slane %v1472, 4
        %v1475 = vshrl.u32 %v1464, 16
        %v1477 = vrot.slane %v1475, 5
        %v1478 = vshll.u32 %v1464, 16
        %v1480 = vrot.slane %v1478, 6
        %v1481 = vor.u32 %v1477, %v1480
        %v1482 = vsel %vm1142, %v1473, %v1481
        %v1483 = vrot.slane %v1481, 4
        %v1487 = vld [vmem:[#allocation2 + $0x58] sm:$0xc]
        %v1488 = vsel %vm1167, %v1472, %v1487
        %1489 = vst [vmem:[#allocation2 + $0x58] sm:$0xc] %v1488
        %1490 = vst.msk [vmem:[#allocation2 + $0x5c] sm:$0xf] %vm1074, %v1482
        %v1491 = vld [vmem:[#allocation2 + $0x60] sm:$0x7]
        %v1492 = vsel %vm1173, %v1483, %v1491
        %1493 = vst [vmem:[#allocation2 + $0x60] sm:$0x7] %v1492
        %v1494 = vld [vmem:[#allocation2 + $0x60] sm:$0xc]
        %v1495 = vsel %vm1178, 0, %v1494
        %1496 = vst [vmem:[#allocation2 + $0x60] sm:$0xc] %v1495
        %v1498 = vunpack.c.l.b16 %v1068
        %v1499 = vunpack.c.h.b16 %v1068
        %v1500 = vpack.c.b16 %v1498, %v1498
        %v1501 = vpack.c.b16 %v1499, %v1499
        %v1503 = vshll.u32 %v1500, 16
        %v1505 = vrot.slane %v1503, 5
        %v1506 = vshrl.u32 %v1500, 16
        %v1508 = vrot.slane %v1506, 4
        %v1509 = vor.u32 %v1508, %v1505
        %v1510 = vrot.slane %v1509, 4
        %v1512 = vshll.u32 %v1501, 16
        %v1514 = vrot.slane %v1512, 5
        %v1515 = vsel %vm1189, %v1510, %v1514
        %v1516 = vshrl.u32 %v1501, 16
        %v1518 = vrot.slane %v1516, 4
        %v1519 = vor.u32 %v1518, %v1514
        %v1520 = vrot.slane %v1519, 4
        %v1524 = vld [vmem:[#allocation2 + $0x60] sm:$0x8]
        %v1525 = vsel %vm1214, %v1505, %v1524
        %1526 = vst [vmem:[#allocation2 + $0x60] sm:$0x8] %v1525
        %1527 = vst.msk [vmem:[#allocation2 + $0x64] sm:$0xf] %vm1074, %v1515
        %v1528 = vld [vmem:[#allocation2 + $0x68] sm:$0xf]
        %v1529 = vsel %vm1220, %v1520, %v1528
        %1530 = vst [vmem:[#allocation2 + $0x68] sm:$0xf] %v1529
        %v1531 = vld [vmem:[#allocation2 + $0x68] sm:$0x8]
        %v1532 = vsel %vm1214, 0, %v1531
        %1533 = vst [vmem:[#allocation2 + $0x68] sm:$0x8] %v1532
        %v1534 = vld [vmem:[#allocation2 + $0x6c] sm:$0x1]
        %v1535 = vsel %vm1229, 0, %v1534
        %1536 = vst [vmem:[#allocation2 + $0x6c] sm:$0x1] %v1535
        %v1538 = vunpack.c.l.b16 %v1069
        %v1539 = vunpack.c.h.b16 %v1069
        %v1540 = vpack.c.b16 %v1538, %v1538
        %v1541 = vpack.c.b16 %v1539, %v1539
        %v1543 = vshrl.u32 %v1540, 16
        %v1545 = vrot.slane %v1543, 7
        %v1546 = vshll.u32 %v1540, 16
        %v1548 = vor.u32 %v1545, %v1546
        %v1549 = vrot.slane %v1545, 4
        %v1551 = vshrl.u32 %v1541, 16
        %v1553 = vrot.slane %v1551, 7
        %v1554 = vshll.u32 %v1541, 16
        %v1556 = vor.u32 %v1553, %v1554
        %v1557 = vsel %vm1239, %v1549, %v1556
        %v1558 = vrot.slane %v1553, 4
        %v1562 = vld [vmem:[#allocation2 + $0x6c] sm:$0xf]
        %v1563 = vsel %vm1261, %v1548, %v1562
        %1564 = vst [vmem:[#allocation2 + $0x6c] sm:$0xf] %v1563
        %1565 = vst.msk [vmem:[#allocation2 + $0x70] sm:$0xf] %vm1074, %v1557
        %v1566 = vld [vmem:[#allocation2 + $0x74] sm:$0x1]
        %v1567 = vsel %vm1229, %v1558, %v1566
        %1568 = vst [vmem:[#allocation2 + $0x74] sm:$0x1] %v1567
        %v1569 = vld [vmem:[#allocation2 + $0x74] sm:$0x3]
        %v1570 = vsel %vm1270, 0, %v1569
        %1571 = vst [vmem:[#allocation2 + $0x74] sm:$0x3] %v1570
        %v1573 = vunpack.c.l.b16 %v1070
        %v1574 = vunpack.c.h.b16 %v1070
        %v1575 = vpack.c.b16 %v1573, %v1573
        %v1576 = vpack.c.b16 %v1574, %v1574
        %v1578 = vshrl.u32 %v1575, 16
        %v1580 = vrot.slane %v1578, 6
        %v1581 = vshll.u32 %v1575, 16
        %v1583 = vrot.slane %v1581, 7
        %v1584 = vor.u32 %v1580, %v1583
        %v1585 = vrot.slane %v1584, 4
        %v1587 = vshrl.u32 %v1576, 16
        %v1589 = vrot.slane %v1587, 6
        %v1590 = vshll.u32 %v1576, 16
        %v1592 = vrot.slane %v1590, 7
        %v1593 = vor.u32 %v1589, %v1592
        %v1594 = vsel %vm1096, %v1585, %v1593
        %v1595 = vrot.slane %v1593, 4
        %v1599 = vld [vmem:[#allocation2 + $0x74] sm:$0xe]
        %v1600 = vsel %vm1121, %v1584, %v1599
        %1601 = vst [vmem:[#allocation2 + $0x74] sm:$0xe] %v1600
        %1602 = vst.msk [vmem:[#allocation2 + $0x78] sm:$0xf] %vm1074, %v1594
        %v1603 = vld [vmem:[#allocation2 + $0x7c] sm:$0x3]
        %v1604 = vsel %vm1079, %v1595, %v1603
        %1605 = vst [vmem:[#allocation2 + $0x7c] sm:$0x3] %v1604
        %v1606 = vld [vmem:[#allocation2 + $0x7c] sm:$0x6]
        %v1607 = vsel %vm1131, 0, %v1606
        %1608 = vst [vmem:[#allocation2 + $0x7c] sm:$0x6] %v1607
        %v1610 = vunpack.c.l.b16 %v1071
        %v1611 = vunpack.c.h.b16 %v1071
        %v1612 = vpack.c.b16 %v1610, %v1610
        %v1613 = vpack.c.b16 %v1611, %v1611
        %v1615 = vshrl.u32 %v1612, 16
        %v1617 = vrot.slane %v1615, 5
        %v1618 = vshll.u32 %v1612, 16
        %v1620 = vrot.slane %v1618, 6
        %v1621 = vor.u32 %v1617, %v1620
        %v1622 = vrot.slane %v1621, 4
        %v1624 = vshrl.u32 %v1613, 16
        %v1626 = vrot.slane %v1624, 5
        %v1627 = vshll.u32 %v1613, 16
        %v1629 = vrot.slane %v1627, 6
        %v1630 = vor.u32 %v1626, %v1629
        %v1631 = vsel %vm1142, %v1622, %v1630
        %v1632 = vrot.slane %v1630, 4
        %v1636 = vld [vmem:[#allocation2 + $0x7c] sm:$0xc]
        %v1637 = vsel %vm1167, %v1621, %v1636
        %1638 = vst [vmem:[#allocation2 + $0x7c] sm:$0xc] %v1637
        %1639 = vst.msk [vmem:[#allocation2 + $0x80] sm:$0xf] %vm1074, %v1631
        %v1640 = vld [vmem:[#allocation2 + $0x84] sm:$0x7]
        %v1641 = vsel %vm1173, %v1632, %v1640
        %1642 = vst [vmem:[#allocation2 + $0x84] sm:$0x7] %v1641
        %v1643 = vld [vmem:[#allocation2 + $0x84] sm:$0xc]
        %v1644 = vsel %vm1178, 0, %v1643
        %1645 = vst [vmem:[#allocation2 + $0x84] sm:$0xc] %v1644
        %v1647 = vunpack.c.l.b16 %v1072
        %v1648 = vunpack.c.h.b16 %v1072
        %v1649 = vpack.c.b16 %v1647, %v1647
        %v1650 = vpack.c.b16 %v1648, %v1648
        %v1652 = vshll.u32 %v1649, 16
        %v1654 = vrot.slane %v1652, 5
        %v1655 = vshrl.u32 %v1649, 16
        %v1657 = vrot.slane %v1655, 4
        %v1658 = vor.u32 %v1657, %v1654
        %v1659 = vrot.slane %v1658, 4
        %v1661 = vshll.u32 %v1650, 16
        %v1663 = vrot.slane %v1661, 5
        %v1664 = vsel %vm1189, %v1659, %v1663
        %v1665 = vshrl.u32 %v1650, 16
        %v1667 = vrot.slane %v1665, 4
        %v1668 = vor.u32 %v1667, %v1663
        %v1669 = vrot.slane %v1668, 4
        %v1673 = vld [vmem:[#allocation2 + $0x84] sm:$0x8]
        %v1674 = vsel %vm1214, %v1654, %v1673
        %1675 = vst [vmem:[#allocation2 + $0x84] sm:$0x8] %v1674
        %1676 = vst.msk [vmem:[#allocation2 + $0x88] sm:$0xf] %vm1074, %v1664
        %v1677 = vld [vmem:[#allocation2 + $0x8c] sm:$0xf]
        %v1678 = vsel %vm1220, %v1669, %v1677
        %1679 = vst [vmem:[#allocation2 + $0x8c] sm:$0xf] %v1678
        %v1680 = vld [vmem:[#allocation2 + $0x8c] sm:$0x8]
        %v1681 = vsel %vm1214, 0, %v1680
        %1682 = vst [vmem:[#allocation2 + $0x8c] sm:$0x8] %v1681
        %v1683 = vld [vmem:[#allocation2 + $0x90] sm:$0x1]
        %v1684 = vsel %vm1229, 0, %v1683
        %1685 = vst [vmem:[#allocation2 + $0x90] sm:$0x1] %v1684
        %v1687 = vunpack.c.l.b16 %v1073
        %v1688 = vunpack.c.h.b16 %v1073
        %v1689 = vpack.c.b16 %v1687, %v1687
        %v1690 = vpack.c.b16 %v1688, %v1688
        %v1692 = vshrl.u32 %v1689, 16
        %v1694 = vrot.slane %v1692, 7
        %v1695 = vshll.u32 %v1689, 16
        %v1697 = vor.u32 %v1694, %v1695
        %v1698 = vrot.slane %v1694, 4
        %v1700 = vshrl.u32 %v1690, 16
        %v1702 = vrot.slane %v1700, 7
        %v1703 = vshll.u32 %v1690, 16
        %v1705 = vor.u32 %v1702, %v1703
        %v1706 = vsel %vm1239, %v1698, %v1705
        %v1707 = vrot.slane %v1702, 4
        %v1711 = vld [vmem:[#allocation2 + $0x90] sm:$0xf]
        %v1712 = vsel %vm1261, %v1697, %v1711
        %1713 = vst [vmem:[#allocation2 + $0x90] sm:$0xf] %v1712
        %1714 = vst.msk [vmem:[#allocation2 + $0x94] sm:$0xf] %vm1074, %v1706
        %v1715 = vld [vmem:[#allocation2 + $0x98] sm:$0x1]
        %v1716 = vsel %vm1229, %v1707, %v1715
        %1717 = vst [vmem:[#allocation2 + $0x98] sm:$0x1] %v1716
        %v1718 = vld [vmem:[#allocation2 + $0x98] sm:$0x3]
        %v1719 = vsel %vm1270, 0, %v1718
        %1720 = vst [vmem:[#allocation2 + $0x98] sm:$0x3] %v1719
        %v1721 = vld [vmem:[#allocation2] sm:$0xf]
        %v1722 = vld [vmem:[#allocation2 + $0x4] sm:$0xf]
        %v1723 = vld [vmem:[#allocation2 + $0x8] sm:$0xf]
        %v1724 = vld [vmem:[#allocation2 + $0xc] sm:$0xf]
        %v1725 = vld [vmem:[#allocation2 + $0x10] sm:$0xf]
        %v1726 = vld [vmem:[#allocation2 + $0x14] sm:$0xf]
        %v1727 = vld [vmem:[#allocation2 + $0x18] sm:$0xf]
        %v1728 = vld [vmem:[#allocation2 + $0x1c] sm:$0xf]
        %v1729 = vld [vmem:[#allocation2 + $0x20] sm:$0xf]
        %v1730 = vld [vmem:[#allocation2 + $0x24] sm:$0xf]
        %v1731 = vld [vmem:[#allocation2 + $0x28] sm:$0xf]
        %v1732 = vld [vmem:[#allocation2 + $0x2c] sm:$0xf]
        %v1733 = vld [vmem:[#allocation2 + $0x30] sm:$0xf]
        %v1734 = vld [vmem:[#allocation2 + $0x34] sm:$0xf]
        %v1735 = vld [vmem:[#allocation2 + $0x38] sm:$0xf]
        %v1736 = vld [vmem:[#allocation2 + $0x3c] sm:$0xf]
        %v1737 = vld [vmem:[#allocation2 + $0x40] sm:$0xf]
        %v1738 = vld [vmem:[#allocation2 + $0x44] sm:$0xf]
        %v1739 = vld [vmem:[#allocation2 + $0x48] sm:$0xf]
        %v1740 = vld [vmem:[#allocation2 + $0x4c] sm:$0xf]
        %v1741 = vld [vmem:[#allocation2 + $0x50] sm:$0xf]
        %v1742 = vld [vmem:[#allocation2 + $0x54] sm:$0xf]
        %v1743 = vld [vmem:[#allocation2 + $0x58] sm:$0xf]
        %v1744 = vld [vmem:[#allocation2 + $0x5c] sm:$0xf]
        %v1745 = vld [vmem:[#allocation2 + $0x60] sm:$0xf]
        %v1746 = vld [vmem:[#allocation2 + $0x64] sm:$0xf]
        %v1747 = vld [vmem:[#allocation2 + $0x68] sm:$0xf]
        %v1748 = vld [vmem:[#allocation2 + $0x6c] sm:$0xf]
        %v1749 = vld [vmem:[#allocation2 + $0x70] sm:$0xf]
        %v1750 = vld [vmem:[#allocation2 + $0x74] sm:$0xf]
        %v1751 = vld [vmem:[#allocation2 + $0x78] sm:$0xf]
        %v1752 = vld [vmem:[#allocation2 + $0x7c] sm:$0xf]
        %v1753 = vld [vmem:[#allocation2 + $0x80] sm:$0xf]
        %v1754 = vld [vmem:[#allocation2 + $0x84] sm:$0xf]
        %v1755 = vld [vmem:[#allocation2 + $0x88] sm:$0xf]
        %v1756 = vld [vmem:[#allocation2 + $0x8c] sm:$0xf]
        %v1793 = vunpack.c.l.b16 %v1721
        %v1794 = vunpack.c.l.b16 %v1722
        %v1795 = vunpack.c.l.b16 %v1723
        %v1796 = vunpack.c.l.b16 %v1724
        %v1797 = vunpack.c.l.b16 %v1725
        %v1798 = vunpack.c.l.b16 %v1726
        %v1799 = vunpack.c.l.b16 %v1727
        %v1800 = vunpack.c.l.b16 %v1728
        %v1801 = vunpack.c.l.b16 %v1729
        %v1802 = vunpack.c.l.b16 %v1730
        %v1803 = vunpack.c.l.b16 %v1731
        %v1804 = vunpack.c.l.b16 %v1732
        %v1805 = vunpack.c.l.b16 %v1733
        %v1806 = vunpack.c.l.b16 %v1734
        %v1807 = vunpack.c.l.b16 %v1735
        %v1808 = vunpack.c.l.b16 %v1736
        %v1809 = vunpack.c.l.b16 %v1737
        %v1810 = vunpack.c.l.b16 %v1738
        %v1811 = vunpack.c.l.b16 %v1739
        %v1812 = vunpack.c.l.b16 %v1740
        %v1813 = vunpack.c.l.b16 %v1741
        %v1814 = vunpack.c.l.b16 %v1742
        %v1815 = vunpack.c.l.b16 %v1743
        %v1816 = vunpack.c.l.b16 %v1744
        %v1817 = vunpack.c.l.b16 %v1745
        %v1818 = vunpack.c.l.b16 %v1746
        %v1819 = vunpack.c.l.b16 %v1747
        %v1820 = vunpack.c.l.b16 %v1748
        %v1821 = vunpack.c.l.b16 %v1749
        %v1822 = vunpack.c.l.b16 %v1750
        %v1823 = vunpack.c.l.b16 %v1751
        %v1824 = vunpack.c.l.b16 %v1752
        %v1825 = vunpack.c.l.b16 %v1753
        %v1826 = vunpack.c.l.b16 %v1754
        %v1827 = vunpack.c.l.b16 %v1755
        %v1828 = vunpack.c.l.b16 %v1756
        %v1829 = vpack.c.b16 %v1794, %v1793
        %v1830 = vpack.c.b16 %v1796, %v1795
        %v1831 = vpack.c.b16 %v1798, %v1797
        %v1832 = vpack.c.b16 %v1800, %v1799
        %v1833 = vpack.c.b16 %v1802, %v1801
        %v1834 = vpack.c.b16 %v1804, %v1803
        %v1835 = vpack.c.b16 %v1806, %v1805
        %v1836 = vpack.c.b16 %v1808, %v1807
        %v1837 = vpack.c.b16 %v1810, %v1809
        %v1838 = vpack.c.b16 %v1812, %v1811
        %v1839 = vpack.c.b16 %v1814, %v1813
        %v1840 = vpack.c.b16 %v1816, %v1815
        %v1841 = vpack.c.b16 %v1818, %v1817
        %v1842 = vpack.c.b16 %v1820, %v1819
        %v1843 = vpack.c.b16 %v1822, %v1821
        %v1844 = vpack.c.b16 %v1824, %v1823
        %v1845 = vpack.c.b16 %v1826, %v1825
        %v1846 = vpack.c.b16 %v1828, %v1827
        %vm1865 = vcmask 261120
        %1866 = vst.msk [vmem:[#allocation3] sm:$0xff] %vm1865, %v1829
        %1867 = vst.msk [vmem:[#allocation3 + $0x18] sm:$0xff] %vm1865, %v1830
        %1868 = vst.msk [vmem:[#allocation3 + $0x30] sm:$0xff] %vm1865, %v1831
        %1869 = vst.msk [vmem:[#allocation3 + $0x48] sm:$0xff] %vm1865, %v1832
        %1870 = vst.msk [vmem:[#allocation3 + $0x60] sm:$0xff] %vm1865, %v1833
        %1871 = vst.msk [vmem:[#allocation3 + $0x78] sm:$0xff] %vm1865, %v1834
        %1872 = vst.msk [vmem:[#allocation3 + $0x90] sm:$0xff] %vm1865, %v1835
        %1873 = vst.msk [vmem:[#allocation3 + $0xa8] sm:$0xff] %vm1865, %v1836
        %1874 = vst.msk [vmem:[#allocation3 + $0xc0] sm:$0xff] %vm1865, %v1837
        %1875 = vst.msk [vmem:[#allocation3 + $0xd8] sm:$0xff] %vm1865, %v1838
        %1876 = vst.msk [vmem:[#allocation3 + $0xf0] sm:$0xff] %vm1865, %v1839
        %1877 = vst.msk [vmem:[#allocation3 + $0x108] sm:$0xff] %vm1865, %v1840
        %1878 = vst.msk [vmem:[#allocation3 + $0x120] sm:$0xff] %vm1865, %v1841
        %1879 = vst.msk [vmem:[#allocation3 + $0x138] sm:$0xff] %vm1865, %v1842
        %1880 = vst.msk [vmem:[#allocation3 + $0x150] sm:$0xff] %vm1865, %v1843
        %1881 = vst.msk [vmem:[#allocation3 + $0x168] sm:$0xff] %vm1865, %v1844
        %1882 = vst.msk [vmem:[#allocation3 + $0x180] sm:$0xff] %vm1865, %v1845
        %1883 = vst.msk [vmem:[#allocation3 + $0x198] sm:$0xff] %vm1865, %v1846
        %v1884 = vld [vmem:[#allocation2] sm:$0xf]
        %v1885 = vld [vmem:[#allocation2 + $0x4] sm:$0xf]
        %v1886 = vld [vmem:[#allocation2 + $0x8] sm:$0xf]
        %v1887 = vld [vmem:[#allocation2 + $0xc] sm:$0xf]
        %v1888 = vld [vmem:[#allocation2 + $0x10] sm:$0xf]
        %v1889 = vld [vmem:[#allocation2 + $0x14] sm:$0xf]
        %v1890 = vld [vmem:[#allocation2 + $0x18] sm:$0xf]
        %v1891 = vld [vmem:[#allocation2 + $0x1c] sm:$0xf]
        %v1892 = vld [vmem:[#allocation2 + $0x20] sm:$0xf]
        %v1893 = vld [vmem:[#allocation2 + $0x24] sm:$0xf]
        %v1894 = vld [vmem:[#allocation2 + $0x28] sm:$0xf]
        %v1895 = vld [vmem:[#allocation2 + $0x2c] sm:$0xf]
        %v1896 = vld [vmem:[#allocation2 + $0x30] sm:$0xf]
        %v1897 = vld [vmem:[#allocation2 + $0x34] sm:$0xf]
        %v1898 = vld [vmem:[#allocation2 + $0x38] sm:$0xf]
        %v1899 = vld [vmem:[#allocation2 + $0x3c] sm:$0xf]
        %v1900 = vld [vmem:[#allocation2 + $0x40] sm:$0xf]
        %v1901 = vld [vmem:[#allocation2 + $0x44] sm:$0xf]
        %v1902 = vld [vmem:[#allocation2 + $0x48] sm:$0xf]
        %v1903 = vld [vmem:[#allocation2 + $0x4c] sm:$0xf]
        %v1904 = vld [vmem:[#allocation2 + $0x50] sm:$0xf]
        %v1905 = vld [vmem:[#allocation2 + $0x54] sm:$0xf]
        %v1906 = vld [vmem:[#allocation2 + $0x58] sm:$0xf]
        %v1907 = vld [vmem:[#allocation2 + $0x5c] sm:$0xf]
        %v1908 = vld [vmem:[#allocation2 + $0x60] sm:$0xf]
        %v1909 = vld [vmem:[#allocation2 + $0x64] sm:$0xf]
        %v1910 = vld [vmem:[#allocation2 + $0x68] sm:$0xf]
        %v1911 = vld [vmem:[#allocation2 + $0x6c] sm:$0xf]
        %v1912 = vld [vmem:[#allocation2 + $0x70] sm:$0xf]
        %v1913 = vld [vmem:[#allocation2 + $0x74] sm:$0xf]
        %v1914 = vld [vmem:[#allocation2 + $0x78] sm:$0xf]
        %v1915 = vld [vmem:[#allocation2 + $0x7c] sm:$0xf]
        %v1916 = vld [vmem:[#allocation2 + $0x80] sm:$0xf]
        %v1917 = vld [vmem:[#allocation2 + $0x84] sm:$0xf]
        %v1918 = vld [vmem:[#allocation2 + $0x88] sm:$0xf]
        %v1919 = vld [vmem:[#allocation2 + $0x8c] sm:$0xf]
        %v1920 = vld [vmem:[#allocation2 + $0x90] sm:$0x1]
        %v1958 = vunpack.c.l.b16 %v1884
        %v1959 = vunpack.c.l.b16 %v1885
        %v1960 = vunpack.c.l.b16 %v1886
        %v1961 = vunpack.c.l.b16 %v1887
        %v1962 = vunpack.c.l.b16 %v1888
        %v1963 = vunpack.c.l.b16 %v1889
        %v1964 = vunpack.c.l.b16 %v1890
        %v1965 = vunpack.c.l.b16 %v1891
        %v1966 = vunpack.c.l.b16 %v1892
        %v1967 = vunpack.c.l.b16 %v1893
        %v1968 = vunpack.c.l.b16 %v1894
        %v1969 = vunpack.c.l.b16 %v1895
        %v1970 = vunpack.c.l.b16 %v1896
        %v1971 = vunpack.c.l.b16 %v1897
        %v1972 = vunpack.c.l.b16 %v1898
        %v1973 = vunpack.c.l.b16 %v1899
        %v1974 = vunpack.c.l.b16 %v1900
        %v1975 = vunpack.c.l.b16 %v1901
        %v1976 = vunpack.c.l.b16 %v1902
        %v1977 = vunpack.c.l.b16 %v1903
        %v1978 = vunpack.c.l.b16 %v1904
        %v1979 = vunpack.c.l.b16 %v1905
        %v1980 = vunpack.c.l.b16 %v1906
        %v1981 = vunpack.c.l.b16 %v1907
        %v1982 = vunpack.c.l.b16 %v1908
        %v1983 = vunpack.c.l.b16 %v1909
        %v1984 = vunpack.c.l.b16 %v1910
        %v1985 = vunpack.c.l.b16 %v1911
        %v1986 = vunpack.c.l.b16 %v1912
        %v1987 = vunpack.c.l.b16 %v1913
        %v1988 = vunpack.c.l.b16 %v1914
        %v1989 = vunpack.c.l.b16 %v1915
        %v1990 = vunpack.c.l.b16 %v1916
        %v1991 = vunpack.c.l.b16 %v1917
        %v1992 = vunpack.c.l.b16 %v1918
        %v1993 = vunpack.c.l.b16 %v1919
        %v1994 = vunpack.c.l.b16 %v1920
        %v1995 = vpack.c.b16 %v1959, %v1958
        %v1996 = vpack.c.b16 %v1961, %v1960
        %v1997 = vpack.c.b16 %v1963, %v1962
        %v1998 = vpack.c.b16 %v1965, %v1964
        %v1999 = vpack.c.b16 %v1967, %v1966
        %v2000 = vpack.c.b16 %v1969, %v1968
        %v2001 = vpack.c.b16 %v1971, %v1970
        %v2002 = vpack.c.b16 %v1973, %v1972
        %v2003 = vpack.c.b16 %v1975, %v1974
        %v2004 = vpack.c.b16 %v1977, %v1976
        %v2005 = vpack.c.b16 %v1979, %v1978
        %v2006 = vpack.c.b16 %v1981, %v1980
        %v2007 = vpack.c.b16 %v1983, %v1982
        %v2008 = vpack.c.b16 %v1985, %v1984
        %v2009 = vpack.c.b16 %v1987, %v1986
        %v2010 = vpack.c.b16 %v1989, %v1988
        %v2011 = vpack.c.b16 %v1991, %v1990
        %v2012 = vpack.c.b16 %v1993, %v1992
        %v2013 = vpack.c.b16 %v1994, %v1994
        %vm2014 = vsmask.f32 7424
        %v2016 = vshrl.u32 %v1995, 16
        %v2018 = vshll.u32 %v1995, 16
        %v2020 = vrot.slane %v2018, 1
        %v2021 = vor.u32 %v2016, %v2020
        %v2023 = vshll.u32 %v1996, 16
        %v2025 = vrot.slane %v2023, 1
        %v2026 = vsel %vm2014, %v2021, %v2025
        %v2027 = vshrl.u32 %v1996, 16
        %v2029 = vor.u32 %v2027, %v2025
        %v2031 = vshll.u32 %v1997, 16
        %v2033 = vrot.slane %v2031, 1
        %v2034 = vsel %vm2014, %v2029, %v2033
        %v2035 = vshrl.u32 %v1997, 16
        %v2037 = vor.u32 %v2035, %v2033
        %v2039 = vshll.u32 %v1998, 16
        %v2041 = vrot.slane %v2039, 1
        %v2042 = vsel %vm2014, %v2037, %v2041
        %v2043 = vshrl.u32 %v1998, 16
        %v2045 = vor.u32 %v2043, %v2041
        %v2047 = vshll.u32 %v1999, 16
        %v2049 = vrot.slane %v2047, 1
        %v2050 = vsel %vm2014, %v2045, %v2049
        %v2051 = vshrl.u32 %v1999, 16
        %v2053 = vor.u32 %v2051, %v2049
        %v2055 = vshll.u32 %v2000, 16
        %v2057 = vrot.slane %v2055, 1
        %v2058 = vsel %vm2014, %v2053, %v2057
        %v2059 = vshrl.u32 %v2000, 16
        %v2061 = vor.u32 %v2059, %v2057
        %v2063 = vshll.u32 %v2001, 16
        %v2065 = vrot.slane %v2063, 1
        %v2066 = vsel %vm2014, %v2061, %v2065
        %v2067 = vshrl.u32 %v2001, 16
        %v2069 = vor.u32 %v2067, %v2065
        %v2071 = vshll.u32 %v2002, 16
        %v2073 = vrot.slane %v2071, 1
        %v2074 = vsel %vm2014, %v2069, %v2073
        %v2075 = vshrl.u32 %v2002, 16
        %v2077 = vor.u32 %v2075, %v2073
        %v2079 = vshll.u32 %v2003, 16
        %v2081 = vrot.slane %v2079, 1
        %v2082 = vsel %vm2014, %v2077, %v2081
        %v2083 = vshrl.u32 %v2003, 16
        %v2085 = vor.u32 %v2083, %v2081
        %v2087 = vshll.u32 %v2004, 16
        %v2089 = vrot.slane %v2087, 1
        %v2090 = vsel %vm2014, %v2085, %v2089
        %v2091 = vshrl.u32 %v2004, 16
        %v2093 = vor.u32 %v2091, %v2089
        %v2095 = vshll.u32 %v2005, 16
        %v2097 = vrot.slane %v2095, 1
        %v2098 = vsel %vm2014, %v2093, %v2097
        %v2099 = vshrl.u32 %v2005, 16
        %v2101 = vor.u32 %v2099, %v2097
        %v2103 = vshll.u32 %v2006, 16
        %v2105 = vrot.slane %v2103, 1
        %v2106 = vsel %vm2014, %v2101, %v2105
        %v2107 = vshrl.u32 %v2006, 16
        %v2109 = vor.u32 %v2107, %v2105
        %v2111 = vshll.u32 %v2007, 16
        %v2113 = vrot.slane %v2111, 1
        %v2114 = vsel %vm2014, %v2109, %v2113
        %v2115 = vshrl.u32 %v2007, 16
        %v2117 = vor.u32 %v2115, %v2113
        %v2119 = vshll.u32 %v2008, 16
        %v2121 = vrot.slane %v2119, 1
        %v2122 = vsel %vm2014, %v2117, %v2121
        %v2123 = vshrl.u32 %v2008, 16
        %v2125 = vor.u32 %v2123, %v2121
        %v2127 = vshll.u32 %v2009, 16
        %v2129 = vrot.slane %v2127, 1
        %v2130 = vsel %vm2014, %v2125, %v2129
        %v2131 = vshrl.u32 %v2009, 16
        %v2133 = vor.u32 %v2131, %v2129
        %v2135 = vshll.u32 %v2010, 16
        %v2137 = vrot.slane %v2135, 1
        %v2138 = vsel %vm2014, %v2133, %v2137
        %v2139 = vshrl.u32 %v2010, 16
        %v2141 = vor.u32 %v2139, %v2137
        %v2143 = vshll.u32 %v2011, 16
        %v2145 = vrot.slane %v2143, 1
        %v2146 = vsel %vm2014, %v2141, %v2145
        %v2147 = vshrl.u32 %v2011, 16
        %v2149 = vor.u32 %v2147, %v2145
        %v2151 = vshll.u32 %v2012, 16
        %v2153 = vrot.slane %v2151, 1
        %v2154 = vsel %vm2014, %v2149, %v2153
        %v2155 = vshrl.u32 %v2012, 16
        %v2157 = vor.u32 %v2155, %v2153
        %v2159 = vshll.u32 %v2013, 16
        %v2161 = vrot.slane %v2159, 1
        %v2162 = vsel %vm2014, %v2157, %v2161
        %2163 = vrot.lane.b32.xlu0 %v2026, 32
        %v2164 = vpop.permute.xlu0 %2163
        %2165 = vrot.lane.b32.xlu0 %v2034, 32
        %v2166 = vpop.permute.xlu0 %2165
        %2167 = vrot.lane.b32.xlu0 %v2042, 32
        %v2168 = vpop.permute.xlu0 %2167
        %2169 = vrot.lane.b32.xlu0 %v2050, 32
        %v2170 = vpop.permute.xlu0 %2169
        %2171 = vrot.lane.b32.xlu0 %v2058, 32
        %v2172 = vpop.permute.xlu0 %2171
        %2173 = vrot.lane.b32.xlu0 %v2066, 32
        %v2174 = vpop.permute.xlu0 %2173
        %2175 = vrot.lane.b32.xlu0 %v2074, 32
        %v2176 = vpop.permute.xlu0 %2175
        %2177 = vrot.lane.b32.xlu0 %v2082, 32
        %v2178 = vpop.permute.xlu0 %2177
        %2179 = vrot.lane.b32.xlu0 %v2090, 32
        %v2180 = vpop.permute.xlu0 %2179
        %2181 = vrot.lane.b32.xlu0 %v2098, 32
        %v2182 = vpop.permute.xlu0 %2181
        %2183 = vrot.lane.b32.xlu0 %v2106, 32
        %v2184 = vpop.permute.xlu0 %2183
        %2185 = vrot.lane.b32.xlu0 %v2114, 32
        %v2186 = vpop.permute.xlu0 %2185
        %2187 = vrot.lane.b32.xlu0 %v2122, 32
        %v2188 = vpop.permute.xlu0 %2187
        %2189 = vrot.lane.b32.xlu0 %v2130, 32
        %v2190 = vpop.permute.xlu0 %2189
        %2191 = vrot.lane.b32.xlu0 %v2138, 32
        %v2192 = vpop.permute.xlu0 %2191
        %2193 = vrot.lane.b32.xlu0 %v2146, 32
        %v2194 = vpop.permute.xlu0 %2193
        %2195 = vrot.lane.b32.xlu0 %v2154, 32
        %v2196 = vpop.permute.xlu0 %2195
        %2197 = vrot.lane.b32.xlu0 %v2162, 32
        %v2198 = vpop.permute.xlu0 %2197
        %vm2217 = vcmask 523520
        %2218 = vst.msk [vmem:[#allocation3] sm:$0xff] %vm2217, %v2164
        %2219 = vst.msk [vmem:[#allocation3 + $0x18] sm:$0xff] %vm2217, %v2166
        %2220 = vst.msk [vmem:[#allocation3 + $0x30] sm:$0xff] %vm2217, %v2168
        %2221 = vst.msk [vmem:[#allocation3 + $0x48] sm:$0xff] %vm2217, %v2170
        %2222 = vst.msk [vmem:[#allocation3 + $0x60] sm:$0xff] %vm2217, %v2172
        %2223 = vst.msk [vmem:[#allocation3 + $0x78] sm:$0xff] %vm2217, %v2174
        %2224 = vst.msk [vmem:[#allocation3 + $0x90] sm:$0xff] %vm2217, %v2176
        %2225 = vst.msk [vmem:[#allocation3 + $0xa8] sm:$0xff] %vm2217, %v2178
        %2226 = vst.msk [vmem:[#allocation3 + $0xc0] sm:$0xff] %vm2217, %v2180
        %2227 = vst.msk [vmem:[#allocation3 + $0xd8] sm:$0xff] %vm2217, %v2182
        %2228 = vst.msk [vmem:[#allocation3 + $0xf0] sm:$0xff] %vm2217, %v2184
        %2229 = vst.msk [vmem:[#allocation3 + $0x108] sm:$0xff] %vm2217, %v2186
        %2230 = vst.msk [vmem:[#allocation3 + $0x120] sm:$0xff] %vm2217, %v2188
        %2231 = vst.msk [vmem:[#allocation3 + $0x138] sm:$0xff] %vm2217, %v2190
        %2232 = vst.msk [vmem:[#allocation3 + $0x150] sm:$0xff] %vm2217, %v2192
        %2233 = vst.msk [vmem:[#allocation3 + $0x168] sm:$0xff] %vm2217, %v2194
        %2234 = vst.msk [vmem:[#allocation3 + $0x180] sm:$0xff] %vm2217, %v2196
        %2235 = vst.msk [vmem:[#allocation3 + $0x198] sm:$0xff] %vm2217, %v2198
        %v2236 = vld [vmem:[#allocation2] sm:$0xe]
        %v2237 = vld [vmem:[#allocation2 + $0x4] sm:$0xf]
        %v2238 = vld [vmem:[#allocation2 + $0x8] sm:$0xf]
        %v2239 = vld [vmem:[#allocation2 + $0xc] sm:$0xf]
        %v2240 = vld [vmem:[#allocation2 + $0x10] sm:$0xf]
        %v2241 = vld [vmem:[#allocation2 + $0x14] sm:$0xf]
        %v2242 = vld [vmem:[#allocation2 + $0x18] sm:$0xf]
        %v2243 = vld [vmem:[#allocation2 + $0x1c] sm:$0xf]
        %v2244 = vld [vmem:[#allocation2 + $0x20] sm:$0xf]
        %v2245 = vld [vmem:[#allocation2 + $0x24] sm:$0xf]
        %v2246 = vld [vmem:[#allocation2 + $0x28] sm:$0xf]
        %v2247 = vld [vmem:[#allocation2 + $0x2c] sm:$0xf]
        %v2248 = vld [vmem:[#allocation2 + $0x30] sm:$0xf]
        %v2249 = vld [vmem:[#allocation2 + $0x34] sm:$0xf]
        %v2250 = vld [vmem:[#allocation2 + $0x38] sm:$0xf]
        %v2251 = vld [vmem:[#allocation2 + $0x3c] sm:$0xf]
        %v2252 = vld [vmem:[#allocation2 + $0x40] sm:$0xf]
        %v2253 = vld [vmem:[#allocation2 + $0x44] sm:$0xf]
        %v2254 = vld [vmem:[#allocation2 + $0x48] sm:$0xf]
        %v2255 = vld [vmem:[#allocation2 + $0x4c] sm:$0xf]
        %v2256 = vld [vmem:[#allocation2 + $0x50] sm:$0xf]
        %v2257 = vld [vmem:[#allocation2 + $0x54] sm:$0xf]
        %v2258 = vld [vmem:[#allocation2 + $0x58] sm:$0xf]
        %v2259 = vld [vmem:[#allocation2 + $0x5c] sm:$0xf]
        %v2260 = vld [vmem:[#allocation2 + $0x60] sm:$0xf]
        %v2261 = vld [vmem:[#allocation2 + $0x64] sm:$0xf]
        %v2262 = vld [vmem:[#allocation2 + $0x68] sm:$0xf]
        %v2263 = vld [vmem:[#allocation2 + $0x6c] sm:$0xf]
        %v2264 = vld [vmem:[#allocation2 + $0x70] sm:$0xf]
        %v2265 = vld [vmem:[#allocation2 + $0x74] sm:$0xf]
        %v2266 = vld [vmem:[#allocation2 + $0x78] sm:$0xf]
        %v2267 = vld [vmem:[#allocation2 + $0x7c] sm:$0xf]
        %v2268 = vld [vmem:[#allocation2 + $0x80] sm:$0xf]
        %v2269 = vld [vmem:[#allocation2 + $0x84] sm:$0xf]
        %v2270 = vld [vmem:[#allocation2 + $0x88] sm:$0xf]
        %v2271 = vld [vmem:[#allocation2 + $0x8c] sm:$0xf]
        %v2272 = vld [vmem:[#allocation2 + $0x90] sm:$0x1]
        %v2310 = vunpack.c.l.b16 %v2236
        %v2311 = vunpack.c.l.b16 %v2237
        %v2312 = vunpack.c.l.b16 %v2238
        %v2313 = vunpack.c.l.b16 %v2239
        %v2314 = vunpack.c.l.b16 %v2240
        %v2315 = vunpack.c.l.b16 %v2241
        %v2316 = vunpack.c.l.b16 %v2242
        %v2317 = vunpack.c.l.b16 %v2243
        %v2318 = vunpack.c.l.b16 %v2244
        %v2319 = vunpack.c.l.b16 %v2245
        %v2320 = vunpack.c.l.b16 %v2246
        %v2321 = vunpack.c.l.b16 %v2247
        %v2322 = vunpack.c.l.b16 %v2248
        %v2323 = vunpack.c.l.b16 %v2249
        %v2324 = vunpack.c.l.b16 %v2250
        %v2325 = vunpack.c.l.b16 %v2251
        %v2326 = vunpack.c.l.b16 %v2252
        %v2327 = vunpack.c.l.b16 %v2253
        %v2328 = vunpack.c.l.b16 %v2254
        %v2329 = vunpack.c.l.b16 %v2255
        %v2330 = vunpack.c.l.b16 %v2256
        %v2331 = vunpack.c.l.b16 %v2257
        %v2332 = vunpack.c.l.b16 %v2258
        %v2333 = vunpack.c.l.b16 %v2259
        %v2334 = vunpack.c.l.b16 %v2260
        %v2335 = vunpack.c.l.b16 %v2261
        %v2336 = vunpack.c.l.b16 %v2262
        %v2337 = vunpack.c.l.b16 %v2263
        %v2338 = vunpack.c.l.b16 %v2264
        %v2339 = vunpack.c.l.b16 %v2265
        %v2340 = vunpack.c.l.b16 %v2266
        %v2341 = vunpack.c.l.b16 %v2267
        %v2342 = vunpack.c.l.b16 %v2268
        %v2343 = vunpack.c.l.b16 %v2269
        %v2344 = vunpack.c.l.b16 %v2270
        %v2345 = vunpack.c.l.b16 %v2271
        %v2346 = vunpack.c.l.b16 %v2272
        %v2347 = vpack.c.b16 %v2311, %v2310
        %v2348 = vpack.c.b16 %v2313, %v2312
        %v2349 = vpack.c.b16 %v2315, %v2314
        %v2350 = vpack.c.b16 %v2317, %v2316
        %v2351 = vpack.c.b16 %v2319, %v2318
        %v2352 = vpack.c.b16 %v2321, %v2320
        %v2353 = vpack.c.b16 %v2323, %v2322
        %v2354 = vpack.c.b16 %v2325, %v2324
        %v2355 = vpack.c.b16 %v2327, %v2326
        %v2356 = vpack.c.b16 %v2329, %v2328
        %v2357 = vpack.c.b16 %v2331, %v2330
        %v2358 = vpack.c.b16 %v2333, %v2332
        %v2359 = vpack.c.b16 %v2335, %v2334
        %v2360 = vpack.c.b16 %v2337, %v2336
        %v2361 = vpack.c.b16 %v2339, %v2338
        %v2362 = vpack.c.b16 %v2341, %v2340
        %v2363 = vpack.c.b16 %v2343, %v2342
        %v2364 = vpack.c.b16 %v2345, %v2344
        %v2365 = vpack.c.b16 %v2346, %v2346
        %vm2366 = vcmask 1046528
        %v2367 = vrot.slane %v2347, 1
        %v2368 = vrot.slane %v2348, 1
        %v2369 = vsel %vm2366, %v2367, %v2368
        %v2370 = vrot.slane %v2349, 1
        %v2371 = vsel %vm2366, %v2368, %v2370
        %v2372 = vrot.slane %v2350, 1
        %v2373 = vsel %vm2366, %v2370, %v2372
        %v2374 = vrot.slane %v2351, 1
        %v2375 = vsel %vm2366, %v2372, %v2374
        %v2376 = vrot.slane %v2352, 1
        %v2377 = vsel %vm2366, %v2374, %v2376
        %v2378 = vrot.slane %v2353, 1
        %v2379 = vsel %vm2366, %v2376, %v2378
        %v2380 = vrot.slane %v2354, 1
        %v2381 = vsel %vm2366, %v2378, %v2380
        %v2382 = vrot.slane %v2355, 1
        %v2383 = vsel %vm2366, %v2380, %v2382
        %v2384 = vrot.slane %v2356, 1
        %v2385 = vsel %vm2366, %v2382, %v2384
        %v2386 = vrot.slane %v2357, 1
        %v2387 = vsel %vm2366, %v2384, %v2386
        %v2388 = vrot.slane %v2358, 1
        %v2389 = vsel %vm2366, %v2386, %v2388
        %v2390 = vrot.slane %v2359, 1
        %v2391 = vsel %vm2366, %v2388, %v2390
        %v2392 = vrot.slane %v2360, 1
        %v2393 = vsel %vm2366, %v2390, %v2392
        %v2394 = vrot.slane %v2361, 1
        %v2395 = vsel %vm2366, %v2392, %v2394
        %v2396 = vrot.slane %v2362, 1
        %v2397 = vsel %vm2366, %v2394, %v2396
        %v2398 = vrot.slane %v2363, 1
        %v2399 = vsel %vm2366, %v2396, %v2398
        %v2400 = vrot.slane %v2364, 1
        %v2401 = vsel %vm2366, %v2398, %v2400
        %v2402 = vrot.slane %v2365, 1
        %v2403 = vsel %vm2366, %v2400, %v2402
        %2404 = vrot.lane.b32.xlu0 %v2369, 64
        %v2405 = vpop.permute.xlu0 %2404
        %2406 = vrot.lane.b32.xlu0 %v2371, 64
        %v2407 = vpop.permute.xlu0 %2406
        %2408 = vrot.lane.b32.xlu0 %v2373, 64
        %v2409 = vpop.permute.xlu0 %2408
        %2410 = vrot.lane.b32.xlu0 %v2375, 64
        %v2411 = vpop.permute.xlu0 %2410
        %2412 = vrot.lane.b32.xlu0 %v2377, 64
        %v2413 = vpop.permute.xlu0 %2412
        %2414 = vrot.lane.b32.xlu0 %v2379, 64
        %v2415 = vpop.permute.xlu0 %2414
        %2416 = vrot.lane.b32.xlu0 %v2381, 64
        %v2417 = vpop.permute.xlu0 %2416
        %2418 = vrot.lane.b32.xlu0 %v2383, 64
        %v2419 = vpop.permute.xlu0 %2418
        %2420 = vrot.lane.b32.xlu0 %v2385, 64
        %v2421 = vpop.permute.xlu0 %2420
        %2422 = vrot.lane.b32.xlu0 %v2387, 64
        %v2423 = vpop.permute.xlu0 %2422
        %2424 = vrot.lane.b32.xlu0 %v2389, 64
        %v2425 = vpop.permute.xlu0 %2424
        %2426 = vrot.lane.b32.xlu0 %v2391, 64
        %v2427 = vpop.permute.xlu0 %2426
        %2428 = vrot.lane.b32.xlu0 %v2393, 64
        %v2429 = vpop.permute.xlu0 %2428
        %2430 = vrot.lane.b32.xlu0 %v2395, 64
        %v2431 = vpop.permute.xlu0 %2430
        %2432 = vrot.lane.b32.xlu0 %v2397, 64
        %v2433 = vpop.permute.xlu0 %2432
        %2434 = vrot.lane.b32.xlu0 %v2399, 64
        %v2435 = vpop.permute.xlu0 %2434
        %2436 = vrot.lane.b32.xlu0 %v2401, 64
        %v2437 = vpop.permute.xlu0 %2436
        %2438 = vrot.lane.b32.xlu0 %v2403, 64
        %v2439 = vpop.permute.xlu0 %2438
        %vm2458 = vcmask 785920
        %2459 = vst.msk [vmem:[#allocation3] sm:$0xff] %vm2458, %v2405
        %2460 = vst.msk [vmem:[#allocation3 + $0x18] sm:$0xff] %vm2458, %v2407
        %2461 = vst.msk [vmem:[#allocation3 + $0x30] sm:$0xff] %vm2458, %v2409
        %2462 = vst.msk [vmem:[#allocation3 + $0x48] sm:$0xff] %vm2458, %v2411
        %2463 = vst.msk [vmem:[#allocation3 + $0x60] sm:$0xff] %vm2458, %v2413
        %2464 = vst.msk [vmem:[#allocation3 + $0x78] sm:$0xff] %vm2458, %v2415
        %2465 = vst.msk [vmem:[#allocation3 + $0x90] sm:$0xff] %vm2458, %v2417
        %2466 = vst.msk [vmem:[#allocation3 + $0xa8] sm:$0xff] %vm2458, %v2419
        %2467 = vst.msk [vmem:[#allocation3 + $0xc0] sm:$0xff] %vm2458, %v2421
        %2468 = vst.msk [vmem:[#allocation3 + $0xd8] sm:$0xff] %vm2458, %v2423
        %2469 = vst.msk [vmem:[#allocation3 + $0xf0] sm:$0xff] %vm2458, %v2425
        %2470 = vst.msk [vmem:[#allocation3 + $0x108] sm:$0xff] %vm2458, %v2427
        %2471 = vst.msk [vmem:[#allocation3 + $0x120] sm:$0xff] %vm2458, %v2429
        %2472 = vst.msk [vmem:[#allocation3 + $0x138] sm:$0xff] %vm2458, %v2431
        %2473 = vst.msk [vmem:[#allocation3 + $0x150] sm:$0xff] %vm2458, %v2433
        %2474 = vst.msk [vmem:[#allocation3 + $0x168] sm:$0xff] %vm2458, %v2435
        %2475 = vst.msk [vmem:[#allocation3 + $0x180] sm:$0xff] %vm2458, %v2437
        %2476 = vst.msk [vmem:[#allocation3 + $0x198] sm:$0xff] %vm2458, %v2439
        %v2477 = vld [vmem:[#allocation2 + $0x8] sm:$0xe]
        %v2478 = vld [vmem:[#allocation2 + $0xc] sm:$0xf]
        %v2479 = vld [vmem:[#allocation2 + $0x10] sm:$0xf]
        %v2480 = vld [vmem:[#allocation2 + $0x14] sm:$0xf]
        %v2481 = vld [vmem:[#allocation2 + $0x18] sm:$0xf]
        %v2482 = vld [vmem:[#allocation2 + $0x1c] sm:$0xf]
        %v2483 = vld [vmem:[#allocation2 + $0x20] sm:$0xf]
        %v2484 = vld [vmem:[#allocation2 + $0x24] sm:$0xf]
        %v2485 = vld [vmem:[#allocation2 + $0x28] sm:$0xf]
        %v2486 = vld [vmem:[#allocation2 + $0x2c] sm:$0xf]
        %v2487 = vld [vmem:[#allocation2 + $0x30] sm:$0xf]
        %v2488 = vld [vmem:[#allocation2 + $0x34] sm:$0xf]
        %v2489 = vld [vmem:[#allocation2 + $0x38] sm:$0xf]
        %v2490 = vld [vmem:[#allocation2 + $0x3c] sm:$0xf]
        %v2491 = vld [vmem:[#allocation2 + $0x40] sm:$0xf]
        %v2492 = vld [vmem:[#allocation2 + $0x44] sm:$0xf]
        %v2493 = vld [vmem:[#allocation2 + $0x48] sm:$0xf]
        %v2494 = vld [vmem:[#allocation2 + $0x4c] sm:$0xf]
        %v2495 = vld [vmem:[#allocation2 + $0x50] sm:$0xf]
        %v2496 = vld [vmem:[#allocation2 + $0x54] sm:$0xf]
        %v2497 = vld [vmem:[#allocation2 + $0x58] sm:$0xf]
        %v2498 = vld [vmem:[#allocation2 + $0x5c] sm:$0xf]
        %v2499 = vld [vmem:[#allocation2 + $0x60] sm:$0xf]
        %v2500 = vld [vmem:[#allocation2 + $0x64] sm:$0xf]
        %v2501 = vld [vmem:[#allocation2 + $0x68] sm:$0xf]
        %v2502 = vld [vmem:[#allocation2 + $0x6c] sm:$0xf]
        %v2503 = vld [vmem:[#allocation2 + $0x70] sm:$0xf]
        %v2504 = vld [vmem:[#allocation2 + $0x74] sm:$0xf]
        %v2505 = vld [vmem:[#allocation2 + $0x78] sm:$0xf]
        %v2506 = vld [vmem:[#allocation2 + $0x7c] sm:$0xf]
        %v2507 = vld [vmem:[#allocation2 + $0x80] sm:$0xf]
        %v2508 = vld [vmem:[#allocation2 + $0x84] sm:$0xf]
        %v2509 = vld [vmem:[#allocation2 + $0x88] sm:$0xf]
        %v2510 = vld [vmem:[#allocation2 + $0x8c] sm:$0xf]
        %v2511 = vld [vmem:[#allocation2 + $0x90] sm:$0xf]
        %v2512 = vld [vmem:[#allocation2 + $0x94] sm:$0xf]
        %v2513 = vld [vmem:[#allocation2 + $0x98] sm:$0x1]
        %v2551 = vunpack.c.l.b16 %v2477
        %v2552 = vunpack.c.l.b16 %v2478
        %v2553 = vunpack.c.l.b16 %v2479
        %v2554 = vunpack.c.l.b16 %v2480
        %v2555 = vunpack.c.l.b16 %v2481
        %v2556 = vunpack.c.l.b16 %v2482
        %v2557 = vunpack.c.l.b16 %v2483
        %v2558 = vunpack.c.l.b16 %v2484
        %v2559 = vunpack.c.l.b16 %v2485
        %v2560 = vunpack.c.l.b16 %v2486
        %v2561 = vunpack.c.l.b16 %v2487
        %v2562 = vunpack.c.l.b16 %v2488
        %v2563 = vunpack.c.l.b16 %v2489
        %v2564 = vunpack.c.l.b16 %v2490
        %v2565 = vunpack.c.l.b16 %v2491
        %v2566 = vunpack.c.l.b16 %v2492
        %v2567 = vunpack.c.l.b16 %v2493
        %v2568 = vunpack.c.l.b16 %v2494
        %v2569 = vunpack.c.l.b16 %v2495
        %v2570 = vunpack.c.l.b16 %v2496
        %v2571 = vunpack.c.l.b16 %v2497
        %v2572 = vunpack.c.l.b16 %v2498
        %v2573 = vunpack.c.l.b16 %v2499
        %v2574 = vunpack.c.l.b16 %v2500
        %v2575 = vunpack.c.l.b16 %v2501
        %v2576 = vunpack.c.l.b16 %v2502
        %v2577 = vunpack.c.l.b16 %v2503
        %v2578 = vunpack.c.l.b16 %v2504
        %v2579 = vunpack.c.l.b16 %v2505
        %v2580 = vunpack.c.l.b16 %v2506
        %v2581 = vunpack.c.l.b16 %v2507
        %v2582 = vunpack.c.l.b16 %v2508
        %v2583 = vunpack.c.l.b16 %v2509
        %v2584 = vunpack.c.l.b16 %v2510
        %v2585 = vunpack.c.l.b16 %v2511
        %v2586 = vunpack.c.l.b16 %v2512
        %v2587 = vunpack.c.l.b16 %v2513
        %v2588 = vpack.c.b16 %v2552, %v2551
        %v2589 = vpack.c.b16 %v2554, %v2553
        %v2590 = vpack.c.b16 %v2556, %v2555
        %v2591 = vpack.c.b16 %v2558, %v2557
        %v2592 = vpack.c.b16 %v2560, %v2559
        %v2593 = vpack.c.b16 %v2562, %v2561
        %v2594 = vpack.c.b16 %v2564, %v2563
        %v2595 = vpack.c.b16 %v2566, %v2565
        %v2596 = vpack.c.b16 %v2568, %v2567
        %v2597 = vpack.c.b16 %v2570, %v2569
        %v2598 = vpack.c.b16 %v2572, %v2571
        %v2599 = vpack.c.b16 %v2574, %v2573
        %v2600 = vpack.c.b16 %v2576, %v2575
        %v2601 = vpack.c.b16 %v2578, %v2577
        %v2602 = vpack.c.b16 %v2580, %v2579
        %v2603 = vpack.c.b16 %v2582, %v2581
        %v2604 = vpack.c.b16 %v2584, %v2583
        %v2605 = vpack.c.b16 %v2586, %v2585
        %v2606 = vpack.c.b16 %v2587, %v2587
        %v2607 = vrot.slane %v2588, 1
        %v2608 = vrot.slane %v2589, 1
        %v2609 = vsel %vm2366, %v2607, %v2608
        %v2610 = vrot.slane %v2590, 1
        %v2611 = vsel %vm2366, %v2608, %v2610
        %v2612 = vrot.slane %v2591, 1
        %v2613 = vsel %vm2366, %v2610, %v2612
        %v2614 = vrot.slane %v2592, 1
        %v2615 = vsel %vm2366, %v2612, %v2614
        %v2616 = vrot.slane %v2593, 1
        %v2617 = vsel %vm2366, %v2614, %v2616
        %v2618 = vrot.slane %v2594, 1
        %v2619 = vsel %vm2366, %v2616, %v2618
        %v2620 = vrot.slane %v2595, 1
        %v2621 = vsel %vm2366, %v2618, %v2620
        %v2622 = vrot.slane %v2596, 1
        %v2623 = vsel %vm2366, %v2620, %v2622
        %v2624 = vrot.slane %v2597, 1
        %v2625 = vsel %vm2366, %v2622, %v2624
        %v2626 = vrot.slane %v2598, 1
        %v2627 = vsel %vm2366, %v2624, %v2626
        %v2628 = vrot.slane %v2599, 1
        %v2629 = vsel %vm2366, %v2626, %v2628
        %v2630 = vrot.slane %v2600, 1
        %v2631 = vsel %vm2366, %v2628, %v2630
        %v2632 = vrot.slane %v2601, 1
        %v2633 = vsel %vm2366, %v2630, %v2632
        %v2634 = vrot.slane %v2602, 1
        %v2635 = vsel %vm2366, %v2632, %v2634
        %v2636 = vrot.slane %v2603, 1
        %v2637 = vsel %vm2366, %v2634, %v2636
        %v2638 = vrot.slane %v2604, 1
        %v2639 = vsel %vm2366, %v2636, %v2638
        %v2640 = vrot.slane %v2605, 1
        %v2641 = vsel %vm2366, %v2638, %v2640
        %v2642 = vrot.slane %v2606, 1
        %v2643 = vsel %vm2366, %v2640, %v2642
        %2644 = vrot.lane.b32.xlu0 %v2609, 96
        %v2645 = vpop.permute.xlu0 %2644
        %2646 = vrot.lane.b32.xlu0 %v2611, 96
        %v2647 = vpop.permute.xlu0 %2646
        %2648 = vrot.lane.b32.xlu0 %v2613, 96
        %v2649 = vpop.permute.xlu0 %2648
        %2650 = vrot.lane.b32.xlu0 %v2615, 96
        %v2651 = vpop.permute.xlu0 %2650
        %2652 = vrot.lane.b32.xlu0 %v2617, 96
        %v2653 = vpop.permute.xlu0 %2652
        %2654 = vrot.lane.b32.xlu0 %v2619, 96
        %v2655 = vpop.permute.xlu0 %2654
        %2656 = vrot.lane.b32.xlu0 %v2621, 96
        %v2657 = vpop.permute.xlu0 %2656
        %2658 = vrot.lane.b32.xlu0 %v2623, 96
        %v2659 = vpop.permute.xlu0 %2658
        %2660 = vrot.lane.b32.xlu0 %v2625, 96
        %v2661 = vpop.permute.xlu0 %2660
        %2662 = vrot.lane.b32.xlu0 %v2627, 96
        %v2663 = vpop.permute.xlu0 %2662
        %2664 = vrot.lane.b32.xlu0 %v2629, 96
        %v2665 = vpop.permute.xlu0 %2664
        %2666 = vrot.lane.b32.xlu0 %v2631, 96
        %v2667 = vpop.permute.xlu0 %2666
        %2668 = vrot.lane.b32.xlu0 %v2633, 96
        %v2669 = vpop.permute.xlu0 %2668
        %2670 = vrot.lane.b32.xlu0 %v2635, 96
        %v2671 = vpop.permute.xlu0 %2670
        %2672 = vrot.lane.b32.xlu0 %v2637, 96
        %v2673 = vpop.permute.xlu0 %2672
        %2674 = vrot.lane.b32.xlu0 %v2639, 96
        %v2675 = vpop.permute.xlu0 %2674
        %2676 = vrot.lane.b32.xlu0 %v2641, 96
        %v2677 = vpop.permute.xlu0 %2676
        %2678 = vrot.lane.b32.xlu0 %v2643, 96
        %v2679 = vpop.permute.xlu0 %2678
        %vm2698 = vcmask 1048320
        %2699 = vst.msk [vmem:[#allocation3] sm:$0xff] %vm2698, %v2645
        %2700 = vst.msk [vmem:[#allocation3 + $0x18] sm:$0xff] %vm2698, %v2647
        %2701 = vst.msk [vmem:[#allocation3 + $0x30] sm:$0xff] %vm2698, %v2649
        %2702 = vst.msk [vmem:[#allocation3 + $0x48] sm:$0xff] %vm2698, %v2651
        %2703 = vst.msk [vmem:[#allocation3 + $0x60] sm:$0xff] %vm2698, %v2653
        %2704 = vst.msk [vmem:[#allocation3 + $0x78] sm:$0xff] %vm2698, %v2655
        %2705 = vst.msk [vmem:[#allocation3 + $0x90] sm:$0xff] %vm2698, %v2657
        %2706 = vst.msk [vmem:[#allocation3 + $0xa8] sm:$0xff] %vm2698, %v2659
        %2707 = vst.msk [vmem:[#allocation3 + $0xc0] sm:$0xff] %vm2698, %v2661
        %2708 = vst.msk [vmem:[#allocation3 + $0xd8] sm:$0xff] %vm2698, %v2663
        %2709 = vst.msk [vmem:[#allocation3 + $0xf0] sm:$0xff] %vm2698, %v2665
        %2710 = vst.msk [vmem:[#allocation3 + $0x108] sm:$0xff] %vm2698, %v2667
        %2711 = vst.msk [vmem:[#allocation3 + $0x120] sm:$0xff] %vm2698, %v2669
        %2712 = vst.msk [vmem:[#allocation3 + $0x138] sm:$0xff] %vm2698, %v2671
        %2713 = vst.msk [vmem:[#allocation3 + $0x150] sm:$0xff] %vm2698, %v2673
        %2714 = vst.msk [vmem:[#allocation3 + $0x168] sm:$0xff] %vm2698, %v2675
        %2715 = vst.msk [vmem:[#allocation3 + $0x180] sm:$0xff] %vm2698, %v2677
        %2716 = vst.msk [vmem:[#allocation3 + $0x198] sm:$0xff] %vm2698, %v2679
        %v2717 = vld [vmem:[#allocation2 + $0x8] sm:$0xe]
        %v2718 = vld [vmem:[#allocation2 + $0xc] sm:$0xf]
        %v2719 = vld [vmem:[#allocation2 + $0x10] sm:$0xf]
        %v2720 = vld [vmem:[#allocation2 + $0x14] sm:$0xf]
        %v2721 = vld [vmem:[#allocation2 + $0x18] sm:$0xf]
        %v2722 = vld [vmem:[#allocation2 + $0x1c] sm:$0xf]
        %v2723 = vld [vmem:[#allocation2 + $0x20] sm:$0xf]
        %v2724 = vld [vmem:[#allocation2 + $0x24] sm:$0xf]
        %v2725 = vld [vmem:[#allocation2 + $0x28] sm:$0xf]
        %v2726 = vld [vmem:[#allocation2 + $0x2c] sm:$0xf]
        %v2727 = vld [vmem:[#allocation2 + $0x30] sm:$0xf]
        %v2728 = vld [vmem:[#allocation2 + $0x34] sm:$0xf]
        %v2729 = vld [vmem:[#allocation2 + $0x38] sm:$0xf]
        %v2730 = vld [vmem:[#allocation2 + $0x3c] sm:$0xf]
        %v2731 = vld [vmem:[#allocation2 + $0x40] sm:$0xf]
        %v2732 = vld [vmem:[#allocation2 + $0x44] sm:$0xf]
        %v2733 = vld [vmem:[#allocation2 + $0x48] sm:$0xf]
        %v2734 = vld [vmem:[#allocation2 + $0x4c] sm:$0xf]
        %v2735 = vld [vmem:[#allocation2 + $0x50] sm:$0xf]
        %v2736 = vld [vmem:[#allocation2 + $0x54] sm:$0xf]
        %v2737 = vld [vmem:[#allocation2 + $0x58] sm:$0xf]
        %v2738 = vld [vmem:[#allocation2 + $0x5c] sm:$0xf]
        %v2739 = vld [vmem:[#allocation2 + $0x60] sm:$0xf]
        %v2740 = vld [vmem:[#allocation2 + $0x64] sm:$0xf]
        %v2741 = vld [vmem:[#allocation2 + $0x68] sm:$0xf]
        %v2742 = vld [vmem:[#allocation2 + $0x6c] sm:$0xf]
        %v2743 = vld [vmem:[#allocation2 + $0x70] sm:$0xf]
        %v2744 = vld [vmem:[#allocation2 + $0x74] sm:$0xf]
        %v2745 = vld [vmem:[#allocation2 + $0x78] sm:$0xf]
        %v2746 = vld [vmem:[#allocation2 + $0x7c] sm:$0xf]
        %v2747 = vld [vmem:[#allocation2 + $0x80] sm:$0xf]
        %v2748 = vld [vmem:[#allocation2 + $0x84] sm:$0xf]
        %v2749 = vld [vmem:[#allocation2 + $0x88] sm:$0xf]
        %v2750 = vld [vmem:[#allocation2 + $0x8c] sm:$0xf]
        %v2751 = vld [vmem:[#allocation2 + $0x90] sm:$0xf]
        %v2752 = vld [vmem:[#allocation2 + $0x94] sm:$0xf]
        %v2753 = vld [vmem:[#allocation2 + $0x98] sm:$0x3]
        %v2791 = vunpack.c.l.b16 %v2717
        %v2792 = vunpack.c.l.b16 %v2718
        %v2793 = vunpack.c.l.b16 %v2719
        %v2794 = vunpack.c.l.b16 %v2720
        %v2795 = vunpack.c.l.b16 %v2721
        %v2796 = vunpack.c.l.b16 %v2722
        %v2797 = vunpack.c.l.b16 %v2723
        %v2798 = vunpack.c.l.b16 %v2724
        %v2799 = vunpack.c.l.b16 %v2725
        %v2800 = vunpack.c.l.b16 %v2726
        %v2801 = vunpack.c.l.b16 %v2727
        %v2802 = vunpack.c.l.b16 %v2728
        %v2803 = vunpack.c.l.b16 %v2729
        %v2804 = vunpack.c.l.b16 %v2730
        %v2805 = vunpack.c.l.b16 %v2731
        %v2806 = vunpack.c.l.b16 %v2732
        %v2807 = vunpack.c.l.b16 %v2733
        %v2808 = vunpack.c.l.b16 %v2734
        %v2809 = vunpack.c.l.b16 %v2735
        %v2810 = vunpack.c.l.b16 %v2736
        %v2811 = vunpack.c.l.b16 %v2737
        %v2812 = vunpack.c.l.b16 %v2738
        %v2813 = vunpack.c.l.b16 %v2739
        %v2814 = vunpack.c.l.b16 %v2740
        %v2815 = vunpack.c.l.b16 %v2741
        %v2816 = vunpack.c.l.b16 %v2742
        %v2817 = vunpack.c.l.b16 %v2743
        %v2818 = vunpack.c.l.b16 %v2744
        %v2819 = vunpack.c.l.b16 %v2745
        %v2820 = vunpack.c.l.b16 %v2746
        %v2821 = vunpack.c.l.b16 %v2747
        %v2822 = vunpack.c.l.b16 %v2748
        %v2823 = vunpack.c.l.b16 %v2749
        %v2824 = vunpack.c.l.b16 %v2750
        %v2825 = vunpack.c.l.b16 %v2751
        %v2826 = vunpack.c.l.b16 %v2752
        %v2827 = vunpack.c.l.b16 %v2753
        %v2828 = vpack.c.b16 %v2792, %v2791
        %v2829 = vpack.c.b16 %v2794, %v2793
        %v2830 = vpack.c.b16 %v2796, %v2795
        %v2831 = vpack.c.b16 %v2798, %v2797
        %v2832 = vpack.c.b16 %v2800, %v2799
        %v2833 = vpack.c.b16 %v2802, %v2801
        %v2834 = vpack.c.b16 %v2804, %v2803
        %v2835 = vpack.c.b16 %v2806, %v2805
        %v2836 = vpack.c.b16 %v2808, %v2807
        %v2837 = vpack.c.b16 %v2810, %v2809
        %v2838 = vpack.c.b16 %v2812, %v2811
        %v2839 = vpack.c.b16 %v2814, %v2813
        %v2840 = vpack.c.b16 %v2816, %v2815
        %v2841 = vpack.c.b16 %v2818, %v2817
        %v2842 = vpack.c.b16 %v2820, %v2819
        %v2843 = vpack.c.b16 %v2822, %v2821
        %v2844 = vpack.c.b16 %v2824, %v2823
        %v2845 = vpack.c.b16 %v2826, %v2825
        %v2846 = vpack.c.b16 %v2827, %v2827
        %vm2847 = vsmask.f32 6400
        %v2849 = vshrl.u32 %v2828, 16
        %v2851 = vrot.slane %v2849, 1
        %v2852 = vshll.u32 %v2828, 16
        %v2854 = vrot.slane %v2852, 2
        %v2855 = vor.u32 %v2851, %v2854
        %v2857 = vshrl.u32 %v2829, 16
        %v2859 = vrot.slane %v2857, 1
        %v2860 = vshll.u32 %v2829, 16
        %v2862 = vrot.slane %v2860, 2
        %v2863 = vor.u32 %v2859, %v2862
        %v2864 = vsel %vm2847, %v2855, %v2863
        %v2866 = vshrl.u32 %v2830, 16
        %v2868 = vrot.slane %v2866, 1
        %v2869 = vshll.u32 %v2830, 16
        %v2871 = vrot.slane %v2869, 2
        %v2872 = vor.u32 %v2868, %v2871
        %v2873 = vsel %vm2847, %v2863, %v2872
        %v2875 = vshrl.u32 %v2831, 16
        %v2877 = vrot.slane %v2875, 1
        %v2878 = vshll.u32 %v2831, 16
        %v2880 = vrot.slane %v2878, 2
        %v2881 = vor.u32 %v2877, %v2880
        %v2882 = vsel %vm2847, %v2872, %v2881
        %v2884 = vshrl.u32 %v2832, 16
        %v2886 = vrot.slane %v2884, 1
        %v2887 = vshll.u32 %v2832, 16
        %v2889 = vrot.slane %v2887, 2
        %v2890 = vor.u32 %v2886, %v2889
        %v2891 = vsel %vm2847, %v2881, %v2890
        %v2893 = vshrl.u32 %v2833, 16
        %v2895 = vrot.slane %v2893, 1
        %v2896 = vshll.u32 %v2833, 16
        %v2898 = vrot.slane %v2896, 2
        %v2899 = vor.u32 %v2895, %v2898
        %v2900 = vsel %vm2847, %v2890, %v2899
        %v2902 = vshrl.u32 %v2834, 16
        %v2904 = vrot.slane %v2902, 1
        %v2905 = vshll.u32 %v2834, 16
        %v2907 = vrot.slane %v2905, 2
        %v2908 = vor.u32 %v2904, %v2907
        %v2909 = vsel %vm2847, %v2899, %v2908
        %v2911 = vshrl.u32 %v2835, 16
        %v2913 = vrot.slane %v2911, 1
        %v2914 = vshll.u32 %v2835, 16
        %v2916 = vrot.slane %v2914, 2
        %v2917 = vor.u32 %v2913, %v2916
        %v2918 = vsel %vm2847, %v2908, %v2917
        %v2920 = vshrl.u32 %v2836, 16
        %v2922 = vrot.slane %v2920, 1
        %v2923 = vshll.u32 %v2836, 16
        %v2925 = vrot.slane %v2923, 2
        %v2926 = vor.u32 %v2922, %v2925
        %v2927 = vsel %vm2847, %v2917, %v2926
        %v2929 = vshrl.u32 %v2837, 16
        %v2931 = vrot.slane %v2929, 1
        %v2932 = vshll.u32 %v2837, 16
        %v2934 = vrot.slane %v2932, 2
        %v2935 = vor.u32 %v2931, %v2934
        %v2936 = vsel %vm2847, %v2926, %v2935
        %v2938 = vshrl.u32 %v2838, 16
        %v2940 = vrot.slane %v2938, 1
        %v2941 = vshll.u32 %v2838, 16
        %v2943 = vrot.slane %v2941, 2
        %v2944 = vor.u32 %v2940, %v2943
        %v2945 = vsel %vm2847, %v2935, %v2944
        %v2947 = vshrl.u32 %v2839, 16
        %v2949 = vrot.slane %v2947, 1
        %v2950 = vshll.u32 %v2839, 16
        %v2952 = vrot.slane %v2950, 2
        %v2953 = vor.u32 %v2949, %v2952
        %v2954 = vsel %vm2847, %v2944, %v2953
        %v2956 = vshrl.u32 %v2840, 16
        %v2958 = vrot.slane %v2956, 1
        %v2959 = vshll.u32 %v2840, 16
        %v2961 = vrot.slane %v2959, 2
        %v2962 = vor.u32 %v2958, %v2961
        %v2963 = vsel %vm2847, %v2953, %v2962
        %v2965 = vshrl.u32 %v2841, 16
        %v2967 = vrot.slane %v2965, 1
        %v2968 = vshll.u32 %v2841, 16
        %v2970 = vrot.slane %v2968, 2
        %v2971 = vor.u32 %v2967, %v2970
        %v2972 = vsel %vm2847, %v2962, %v2971
        %v2974 = vshrl.u32 %v2842, 16
        %v2976 = vrot.slane %v2974, 1
        %v2977 = vshll.u32 %v2842, 16
        %v2979 = vrot.slane %v2977, 2
        %v2980 = vor.u32 %v2976, %v2979
        %v2981 = vsel %vm2847, %v2971, %v2980
        %v2983 = vshrl.u32 %v2843, 16
        %v2985 = vrot.slane %v2983, 1
        %v2986 = vshll.u32 %v2843, 16
        %v2988 = vrot.slane %v2986, 2
        %v2989 = vor.u32 %v2985, %v2988
        %v2990 = vsel %vm2847, %v2980, %v2989
        %v2992 = vshrl.u32 %v2844, 16
        %v2994 = vrot.slane %v2992, 1
        %v2995 = vshll.u32 %v2844, 16
        %v2997 = vrot.slane %v2995, 2
        %v2998 = vor.u32 %v2994, %v2997
        %v2999 = vsel %vm2847, %v2989, %v2998
        %v3001 = vshrl.u32 %v2845, 16
        %v3003 = vrot.slane %v3001, 1
        %v3004 = vshll.u32 %v2845, 16
        %v3006 = vrot.slane %v3004, 2
        %v3007 = vor.u32 %v3003, %v3006
        %v3008 = vsel %vm2847, %v2998, %v3007
        %v3010 = vshrl.u32 %v2846, 16
        %v3012 = vrot.slane %v3010, 1
        %v3013 = vshll.u32 %v2846, 16
        %v3015 = vrot.slane %v3013, 2
        %v3016 = vor.u32 %v3012, %v3015
        %v3017 = vsel %vm2847, %v3007, %v3016
        %3036 = vst.msk [vmem:[#allocation3 + $0x8] sm:$0xff] %vm1865, %v2864
        %3037 = vst.msk [vmem:[#allocation3 + $0x20] sm:$0xff] %vm1865, %v2873
        %3038 = vst.msk [vmem:[#allocation3 + $0x38] sm:$0xff] %vm1865, %v2882
        %3039 = vst.msk [vmem:[#allocation3 + $0x50] sm:$0xff] %vm1865, %v2891
        %3040 = vst.msk [vmem:[#allocation3 + $0x68] sm:$0xff] %vm1865, %v2900
        %3041 = vst.msk [vmem:[#allocation3 + $0x80] sm:$0xff] %vm1865, %v2909
        %3042 = vst.msk [vmem:[#allocation3 + $0x98] sm:$0xff] %vm1865, %v2918
        %3043 = vst.msk [vmem:[#allocation3 + $0xb0] sm:$0xff] %vm1865, %v2927
        %3044 = vst.msk [vmem:[#allocation3 + $0xc8] sm:$0xff] %vm1865, %v2936
        %3045 = vst.msk [vmem:[#allocation3 + $0xe0] sm:$0xff] %vm1865, %v2945
        %3046 = vst.msk [vmem:[#allocation3 + $0xf8] sm:$0xff] %vm1865, %v2954
        %3047 = vst.msk [vmem:[#allocation3 + $0x110] sm:$0xff] %vm1865, %v2963
        %3048 = vst.msk [vmem:[#allocation3 + $0x128] sm:$0xff] %vm1865, %v2972
        %3049 = vst.msk [vmem:[#allocation3 + $0x140] sm:$0xff] %vm1865, %v2981
        %3050 = vst.msk [vmem:[#allocation3 + $0x158] sm:$0xff] %vm1865, %v2990
        %3051 = vst.msk [vmem:[#allocation3 + $0x170] sm:$0xff] %vm1865, %v2999
        %3052 = vst.msk [vmem:[#allocation3 + $0x188] sm:$0xff] %vm1865, %v3008
        %3053 = vst.msk [vmem:[#allocation3 + $0x1a0] sm:$0xff] %vm1865, %v3017
        %v3054 = vld [vmem:[#allocation2 + $0x8] sm:$0xc]
        %v3055 = vld [vmem:[#allocation2 + $0xc] sm:$0xf]
        %v3056 = vld [vmem:[#allocation2 + $0x10] sm:$0xf]
        %v3057 = vld [vmem:[#allocation2 + $0x14] sm:$0xf]
        %v3058 = vld [vmem:[#allocation2 + $0x18] sm:$0xf]
        %v3059 = vld [vmem:[#allocation2 + $0x1c] sm:$0xf]
        %v3060 = vld [vmem:[#allocation2 + $0x20] sm:$0xf]
        %v3061 = vld [vmem:[#allocation2 + $0x24] sm:$0xf]
        %v3062 = vld [vmem:[#allocation2 + $0x28] sm:$0xf]
        %v3063 = vld [vmem:[#allocation2 + $0x2c] sm:$0xf]
        %v3064 = vld [vmem:[#allocation2 + $0x30] sm:$0xf]
        %v3065 = vld [vmem:[#allocation2 + $0x34] sm:$0xf]
        %v3066 = vld [vmem:[#allocation2 + $0x38] sm:$0xf]
        %v3067 = vld [vmem:[#allocation2 + $0x3c] sm:$0xf]
        %v3068 = vld [vmem:[#allocation2 + $0x40] sm:$0xf]
        %v3069 = vld [vmem:[#allocation2 + $0x44] sm:$0xf]
        %v3070 = vld [vmem:[#allocation2 + $0x48] sm:$0xf]
        %v3071 = vld [vmem:[#allocation2 + $0x4c] sm:$0xf]
        %v3072 = vld [vmem:[#allocation2 + $0x50] sm:$0xf]
        %v3073 = vld [vmem:[#allocation2 + $0x54] sm:$0xf]
        %v3074 = vld [vmem:[#allocation2 + $0x58] sm:$0xf]
        %v3075 = vld [vmem:[#allocation2 + $0x5c] sm:$0xf]
        %v3076 = vld [vmem:[#allocation2 + $0x60] sm:$0xf]
        %v3077 = vld [vmem:[#allocation2 + $0x64] sm:$0xf]
        %v3078 = vld [vmem:[#allocation2 + $0x68] sm:$0xf]
        %v3079 = vld [vmem:[#allocation2 + $0x6c] sm:$0xf]
        %v3080 = vld [vmem:[#allocation2 + $0x70] sm:$0xf]
        %v3081 = vld [vmem:[#allocation2 + $0x74] sm:$0xf]
        %v3082 = vld [vmem:[#allocation2 + $0x78] sm:$0xf]
        %v3083 = vld [vmem:[#allocation2 + $0x7c] sm:$0xf]
        %v3084 = vld [vmem:[#allocation2 + $0x80] sm:$0xf]
        %v3085 = vld [vmem:[#allocation2 + $0x84] sm:$0xf]
        %v3086 = vld [vmem:[#allocation2 + $0x88] sm:$0xf]
        %v3087 = vld [vmem:[#allocation2 + $0x8c] sm:$0xf]
        %v3088 = vld [vmem:[#allocation2 + $0x90] sm:$0xf]
        %v3089 = vld [vmem:[#allocation2 + $0x94] sm:$0xf]
        %v3090 = vld [vmem:[#allocation2 + $0x98] sm:$0x3]
        %v3128 = vunpack.c.l.b16 %v3054
        %v3129 = vunpack.c.l.b16 %v3055
        %v3130 = vunpack.c.l.b16 %v3056
        %v3131 = vunpack.c.l.b16 %v3057
        %v3132 = vunpack.c.l.b16 %v3058
        %v3133 = vunpack.c.l.b16 %v3059
        %v3134 = vunpack.c.l.b16 %v3060
        %v3135 = vunpack.c.l.b16 %v3061
        %v3136 = vunpack.c.l.b16 %v3062
        %v3137 = vunpack.c.l.b16 %v3063
        %v3138 = vunpack.c.l.b16 %v3064
        %v3139 = vunpack.c.l.b16 %v3065
        %v3140 = vunpack.c.l.b16 %v3066
        %v3141 = vunpack.c.l.b16 %v3067
        %v3142 = vunpack.c.l.b16 %v3068
        %v3143 = vunpack.c.l.b16 %v3069
        %v3144 = vunpack.c.l.b16 %v3070
        %v3145 = vunpack.c.l.b16 %v3071
        %v3146 = vunpack.c.l.b16 %v3072
        %v3147 = vunpack.c.l.b16 %v3073
        %v3148 = vunpack.c.l.b16 %v3074
        %v3149 = vunpack.c.l.b16 %v3075
        %v3150 = vunpack.c.l.b16 %v3076
        %v3151 = vunpack.c.l.b16 %v3077
        %v3152 = vunpack.c.l.b16 %v3078
        %v3153 = vunpack.c.l.b16 %v3079
        %v3154 = vunpack.c.l.b16 %v3080
        %v3155 = vunpack.c.l.b16 %v3081
        %v3156 = vunpack.c.l.b16 %v3082
        %v3157 = vunpack.c.l.b16 %v3083
        %v3158 = vunpack.c.l.b16 %v3084
        %v3159 = vunpack.c.l.b16 %v3085
        %v3160 = vunpack.c.l.b16 %v3086
        %v3161 = vunpack.c.l.b16 %v3087
        %v3162 = vunpack.c.l.b16 %v3088
        %v3163 = vunpack.c.l.b16 %v3089
        %v3164 = vunpack.c.l.b16 %v3090
        %v3165 = vpack.c.b16 %v3129, %v3128
        %v3166 = vpack.c.b16 %v3131, %v3130
        %v3167 = vpack.c.b16 %v3133, %v3132
        %v3168 = vpack.c.b16 %v3135, %v3134
        %v3169 = vpack.c.b16 %v3137, %v3136
        %v3170 = vpack.c.b16 %v3139, %v3138
        %v3171 = vpack.c.b16 %v3141, %v3140
        %v3172 = vpack.c.b16 %v3143, %v3142
        %v3173 = vpack.c.b16 %v3145, %v3144
        %v3174 = vpack.c.b16 %v3147, %v3146
        %v3175 = vpack.c.b16 %v3149, %v3148
        %v3176 = vpack.c.b16 %v3151, %v3150
        %v3177 = vpack.c.b16 %v3153, %v3152
        %v3178 = vpack.c.b16 %v3155, %v3154
        %v3179 = vpack.c.b16 %v3157, %v3156
        %v3180 = vpack.c.b16 %v3159, %v3158
        %v3181 = vpack.c.b16 %v3161, %v3160
        %v3182 = vpack.c.b16 %v3163, %v3162
        %v3183 = vpack.c.b16 %v3164, %v3164
        %vm3184 = vcmask 1045504
        %v3185 = vrot.slane %v3165, 2
        %v3186 = vrot.slane %v3166, 2
        %v3187 = vsel %vm3184, %v3185, %v3186
        %v3188 = vrot.slane %v3167, 2
        %v3189 = vsel %vm3184, %v3186, %v3188
        %v3190 = vrot.slane %v3168, 2
        %v3191 = vsel %vm3184, %v3188, %v3190
        %v3192 = vrot.slane %v3169, 2
        %v3193 = vsel %vm3184, %v3190, %v3192
        %v3194 = vrot.slane %v3170, 2
        %v3195 = vsel %vm3184, %v3192, %v3194
        %v3196 = vrot.slane %v3171, 2
        %v3197 = vsel %vm3184, %v3194, %v3196
        %v3198 = vrot.slane %v3172, 2
        %v3199 = vsel %vm3184, %v3196, %v3198
        %v3200 = vrot.slane %v3173, 2
        %v3201 = vsel %vm3184, %v3198, %v3200
        %v3202 = vrot.slane %v3174, 2
        %v3203 = vsel %vm3184, %v3200, %v3202
        %v3204 = vrot.slane %v3175, 2
        %v3205 = vsel %vm3184, %v3202, %v3204
        %v3206 = vrot.slane %v3176, 2
        %v3207 = vsel %vm3184, %v3204, %v3206
        %v3208 = vrot.slane %v3177, 2
        %v3209 = vsel %vm3184, %v3206, %v3208
        %v3210 = vrot.slane %v3178, 2
        %v3211 = vsel %vm3184, %v3208, %v3210
        %v3212 = vrot.slane %v3179, 2
        %v3213 = vsel %vm3184, %v3210, %v3212
        %v3214 = vrot.slane %v3180, 2
        %v3215 = vsel %vm3184, %v3212, %v3214
        %v3216 = vrot.slane %v3181, 2
        %v3217 = vsel %vm3184, %v3214, %v3216
        %v3218 = vrot.slane %v3182, 2
        %v3219 = vsel %vm3184, %v3216, %v3218
        %v3220 = vrot.slane %v3183, 2
        %v3221 = vsel %vm3184, %v3218, %v3220
        %3222 = vrot.lane.b32.xlu0 %v3187, 32
        %v3223 = vpop.permute.xlu0 %3222
        %3224 = vrot.lane.b32.xlu0 %v3189, 32
        %v3225 = vpop.permute.xlu0 %3224
        %3226 = vrot.lane.b32.xlu0 %v3191, 32
        %v3227 = vpop.permute.xlu0 %3226
        %3228 = vrot.lane.b32.xlu0 %v3193, 32
        %v3229 = vpop.permute.xlu0 %3228
        %3230 = vrot.lane.b32.xlu0 %v3195, 32
        %v3231 = vpop.permute.xlu0 %3230
        %3232 = vrot.lane.b32.xlu0 %v3197, 32
        %v3233 = vpop.permute.xlu0 %3232
        %3234 = vrot.lane.b32.xlu0 %v3199, 32
        %v3235 = vpop.permute.xlu0 %3234
        %3236 = vrot.lane.b32.xlu0 %v3201, 32
        %v3237 = vpop.permute.xlu0 %3236
        %3238 = vrot.lane.b32.xlu0 %v3203, 32
        %v3239 = vpop.permute.xlu0 %3238
        %3240 = vrot.lane.b32.xlu0 %v3205, 32
        %v3241 = vpop.permute.xlu0 %3240
        %3242 = vrot.lane.b32.xlu0 %v3207, 32
        %v3243 = vpop.permute.xlu0 %3242
        %3244 = vrot.lane.b32.xlu0 %v3209, 32
        %v3245 = vpop.permute.xlu0 %3244
        %3246 = vrot.lane.b32.xlu0 %v3211, 32
        %v3247 = vpop.permute.xlu0 %3246
        %3248 = vrot.lane.b32.xlu0 %v3213, 32
        %v3249 = vpop.permute.xlu0 %3248
        %3250 = vrot.lane.b32.xlu0 %v3215, 32
        %v3251 = vpop.permute.xlu0 %3250
        %3252 = vrot.lane.b32.xlu0 %v3217, 32
        %v3253 = vpop.permute.xlu0 %3252
        %3254 = vrot.lane.b32.xlu0 %v3219, 32
        %v3255 = vpop.permute.xlu0 %3254
        %3256 = vrot.lane.b32.xlu0 %v3221, 32
        %v3257 = vpop.permute.xlu0 %3256
        %3276 = vst.msk [vmem:[#allocation3 + $0x8] sm:$0xff] %vm2217, %v3223
        %3277 = vst.msk [vmem:[#allocation3 + $0x20] sm:$0xff] %vm2217, %v3225
        %3278 = vst.msk [vmem:[#allocation3 + $0x38] sm:$0xff] %vm2217, %v3227
        %3279 = vst.msk [vmem:[#allocation3 + $0x50] sm:$0xff] %vm2217, %v3229
        %3280 = vst.msk [vmem:[#allocation3 + $0x68] sm:$0xff] %vm2217, %v3231
        %3281 = vst.msk [vmem:[#allocation3 + $0x80] sm:$0xff] %vm2217, %v3233
        %3282 = vst.msk [vmem:[#allocation3 + $0x98] sm:$0xff] %vm2217, %v3235
        %3283 = vst.msk [vmem:[#allocation3 + $0xb0] sm:$0xff] %vm2217, %v3237
        %3284 = vst.msk [vmem:[#allocation3 + $0xc8] sm:$0xff] %vm2217, %v3239
        %3285 = vst.msk [vmem:[#allocation3 + $0xe0] sm:$0xff] %vm2217, %v3241
        %3286 = vst.msk [vmem:[#allocation3 + $0xf8] sm:$0xff] %vm2217, %v3243
        %3287 = vst.msk [vmem:[#allocation3 + $0x110] sm:$0xff] %vm2217, %v3245
        %3288 = vst.msk [vmem:[#allocation3 + $0x128] sm:$0xff] %vm2217, %v3247
        %3289 = vst.msk [vmem:[#allocation3 + $0x140] sm:$0xff] %vm2217, %v3249
        %3290 = vst.msk [vmem:[#allocation3 + $0x158] sm:$0xff] %vm2217, %v3251
        %3291 = vst.msk [vmem:[#allocation3 + $0x170] sm:$0xff] %vm2217, %v3253
        %3292 = vst.msk [vmem:[#allocation3 + $0x188] sm:$0xff] %vm2217, %v3255
        %3293 = vst.msk [vmem:[#allocation3 + $0x1a0] sm:$0xff] %vm2217, %v3257
        %v3294 = vld [vmem:[#allocation2 + $0x10] sm:$0xc]
        %v3295 = vld [vmem:[#allocation2 + $0x14] sm:$0xf]
        %v3296 = vld [vmem:[#allocation2 + $0x18] sm:$0xf]
        %v3297 = vld [vmem:[#allocation2 + $0x1c] sm:$0xf]
        %v3298 = vld [vmem:[#allocation2 + $0x20] sm:$0xf]
        %v3299 = vld [vmem:[#allocation2 + $0x24] sm:$0xf]
        %v3300 = vld [vmem:[#allocation2 + $0x28] sm:$0xf]
        %v3301 = vld [vmem:[#allocation2 + $0x2c] sm:$0xf]
        %v3302 = vld [vmem:[#allocation2 + $0x30] sm:$0xf]
        %v3303 = vld [vmem:[#allocation2 + $0x34] sm:$0xf]
        %v3304 = vld [vmem:[#allocation2 + $0x38] sm:$0xf]
        %v3305 = vld [vmem:[#allocation2 + $0x3c] sm:$0xf]
        %v3306 = vld [vmem:[#allocation2 + $0x40] sm:$0xf]
        %v3307 = vld [vmem:[#allocation2 + $0x44] sm:$0xf]
        %v3308 = vld [vmem:[#allocation2 + $0x48] sm:$0xf]
        %v3309 = vld [vmem:[#allocation2 + $0x4c] sm:$0xf]
        %v3310 = vld [vmem:[#allocation2 + $0x50] sm:$0xf]
        %v3311 = vld [vmem:[#allocation2 + $0x54] sm:$0xf]
        %v3312 = vld [vmem:[#allocation2 + $0x58] sm:$0xf]
        %v3313 = vld [vmem:[#allocation2 + $0x5c] sm:$0xf]
        %v3314 = vld [vmem:[#allocation2 + $0x60] sm:$0xf]
        %v3315 = vld [vmem:[#allocation2 + $0x64] sm:$0xf]
        %v3316 = vld [vmem:[#allocation2 + $0x68] sm:$0xf]
        %v3317 = vld [vmem:[#allocation2 + $0x6c] sm:$0xf]
        %v3318 = vld [vmem:[#allocation2 + $0x70] sm:$0xf]
        %v3319 = vld [vmem:[#allocation2 + $0x74] sm:$0xf]
        %v3320 = vld [vmem:[#allocation2 + $0x78] sm:$0xf]
        %v3321 = vld [vmem:[#allocation2 + $0x7c] sm:$0xf]
        %v3322 = vld [vmem:[#allocation2 + $0x80] sm:$0xf]
        %v3323 = vld [vmem:[#allocation2 + $0x84] sm:$0xf]
        %v3324 = vld [vmem:[#allocation2 + $0x88] sm:$0xf]
        %v3325 = vld [vmem:[#allocation2 + $0x8c] sm:$0xf]
        %v3326 = vld [vmem:[#allocation2 + $0x90] sm:$0xf]
        %v3327 = vld [vmem:[#allocation2 + $0x94] sm:$0xf]
        %v3328 = vld [vmem:[#allocation2 + $0x98] sm:$0xf]
        %v3329 = vld [vmem:[#allocation2 + $0x9c] sm:$0xf]
        %v3330 = vld [vmem:[#allocation2 + $0xa0] sm:$0x3]
        %v3368 = vunpack.c.l.b16 %v3294
        %v3369 = vunpack.c.l.b16 %v3295
        %v3370 = vunpack.c.l.b16 %v3296
        %v3371 = vunpack.c.l.b16 %v3297
        %v3372 = vunpack.c.l.b16 %v3298
        %v3373 = vunpack.c.l.b16 %v3299
        %v3374 = vunpack.c.l.b16 %v3300
        %v3375 = vunpack.c.l.b16 %v3301
        %v3376 = vunpack.c.l.b16 %v3302
        %v3377 = vunpack.c.l.b16 %v3303
        %v3378 = vunpack.c.l.b16 %v3304
        %v3379 = vunpack.c.l.b16 %v3305
        %v3380 = vunpack.c.l.b16 %v3306
        %v3381 = vunpack.c.l.b16 %v3307
        %v3382 = vunpack.c.l.b16 %v3308
        %v3383 = vunpack.c.l.b16 %v3309
        %v3384 = vunpack.c.l.b16 %v3310
        %v3385 = vunpack.c.l.b16 %v3311
        %v3386 = vunpack.c.l.b16 %v3312
        %v3387 = vunpack.c.l.b16 %v3313
        %v3388 = vunpack.c.l.b16 %v3314
        %v3389 = vunpack.c.l.b16 %v3315
        %v3390 = vunpack.c.l.b16 %v3316
        %v3391 = vunpack.c.l.b16 %v3317
        %v3392 = vunpack.c.l.b16 %v3318
        %v3393 = vunpack.c.l.b16 %v3319
        %v3394 = vunpack.c.l.b16 %v3320
        %v3395 = vunpack.c.l.b16 %v3321
        %v3396 = vunpack.c.l.b16 %v3322
        %v3397 = vunpack.c.l.b16 %v3323
        %v3398 = vunpack.c.l.b16 %v3324
        %v3399 = vunpack.c.l.b16 %v3325
        %v3400 = vunpack.c.l.b16 %v3326
        %v3401 = vunpack.c.l.b16 %v3327
        %v3402 = vunpack.c.l.b16 %v3328
        %v3403 = vunpack.c.l.b16 %v3329
        %v3404 = vunpack.c.l.b16 %v3330
        %v3405 = vpack.c.b16 %v3369, %v3368
        %v3406 = vpack.c.b16 %v3371, %v3370
        %v3407 = vpack.c.b16 %v3373, %v3372
        %v3408 = vpack.c.b16 %v3375, %v3374
        %v3409 = vpack.c.b16 %v3377, %v3376
        %v3410 = vpack.c.b16 %v3379, %v3378
        %v3411 = vpack.c.b16 %v3381, %v3380
        %v3412 = vpack.c.b16 %v3383, %v3382
        %v3413 = vpack.c.b16 %v3385, %v3384
        %v3414 = vpack.c.b16 %v3387, %v3386
        %v3415 = vpack.c.b16 %v3389, %v3388
        %v3416 = vpack.c.b16 %v3391, %v3390
        %v3417 = vpack.c.b16 %v3393, %v3392
        %v3418 = vpack.c.b16 %v3395, %v3394
        %v3419 = vpack.c.b16 %v3397, %v3396
        %v3420 = vpack.c.b16 %v3399, %v3398
        %v3421 = vpack.c.b16 %v3401, %v3400
        %v3422 = vpack.c.b16 %v3403, %v3402
        %v3423 = vpack.c.b16 %v3404, %v3404
        %v3424 = vrot.slane %v3405, 2
        %v3425 = vrot.slane %v3406, 2
        %v3426 = vsel %vm3184, %v3424, %v3425
        %v3427 = vrot.slane %v3407, 2
        %v3428 = vsel %vm3184, %v3425, %v3427
        %v3429 = vrot.slane %v3408, 2
        %v3430 = vsel %vm3184, %v3427, %v3429
        %v3431 = vrot.slane %v3409, 2
        %v3432 = vsel %vm3184, %v3429, %v3431
        %v3433 = vrot.slane %v3410, 2
        %v3434 = vsel %vm3184, %v3431, %v3433
        %v3435 = vrot.slane %v3411, 2
        %v3436 = vsel %vm3184, %v3433, %v3435
        %v3437 = vrot.slane %v3412, 2
        %v3438 = vsel %vm3184, %v3435, %v3437
        %v3439 = vrot.slane %v3413, 2
        %v3440 = vsel %vm3184, %v3437, %v3439
        %v3441 = vrot.slane %v3414, 2
        %v3442 = vsel %vm3184, %v3439, %v3441
        %v3443 = vrot.slane %v3415, 2
        %v3444 = vsel %vm3184, %v3441, %v3443
        %v3445 = vrot.slane %v3416, 2
        %v3446 = vsel %vm3184, %v3443, %v3445
        %v3447 = vrot.slane %v3417, 2
        %v3448 = vsel %vm3184, %v3445, %v3447
        %v3449 = vrot.slane %v3418, 2
        %v3450 = vsel %vm3184, %v3447, %v3449
        %v3451 = vrot.slane %v3419, 2
        %v3452 = vsel %vm3184, %v3449, %v3451
        %v3453 = vrot.slane %v3420, 2
        %v3454 = vsel %vm3184, %v3451, %v3453
        %v3455 = vrot.slane %v3421, 2
        %v3456 = vsel %vm3184, %v3453, %v3455
        %v3457 = vrot.slane %v3422, 2
        %v3458 = vsel %vm3184, %v3455, %v3457
        %v3459 = vrot.slane %v3423, 2
        %v3460 = vsel %vm3184, %v3457, %v3459
        %3461 = vrot.lane.b32.xlu0 %v3426, 64
        %v3462 = vpop.permute.xlu0 %3461
        %3463 = vrot.lane.b32.xlu0 %v3428, 64
        %v3464 = vpop.permute.xlu0 %3463
        %3465 = vrot.lane.b32.xlu0 %v3430, 64
        %v3466 = vpop.permute.xlu0 %3465
        %3467 = vrot.lane.b32.xlu0 %v3432, 64
        %v3468 = vpop.permute.xlu0 %3467
        %3469 = vrot.lane.b32.xlu0 %v3434, 64
        %v3470 = vpop.permute.xlu0 %3469
        %3471 = vrot.lane.b32.xlu0 %v3436, 64
        %v3472 = vpop.permute.xlu0 %3471
        %3473 = vrot.lane.b32.xlu0 %v3438, 64
        %v3474 = vpop.permute.xlu0 %3473
        %3475 = vrot.lane.b32.xlu0 %v3440, 64
        %v3476 = vpop.permute.xlu0 %3475
        %3477 = vrot.lane.b32.xlu0 %v3442, 64
        %v3478 = vpop.permute.xlu0 %3477
        %3479 = vrot.lane.b32.xlu0 %v3444, 64
        %v3480 = vpop.permute.xlu0 %3479
        %3481 = vrot.lane.b32.xlu0 %v3446, 64
        %v3482 = vpop.permute.xlu0 %3481
        %3483 = vrot.lane.b32.xlu0 %v3448, 64
        %v3484 = vpop.permute.xlu0 %3483
        %3485 = vrot.lane.b32.xlu0 %v3450, 64
        %v3486 = vpop.permute.xlu0 %3485
        %3487 = vrot.lane.b32.xlu0 %v3452, 64
        %v3488 = vpop.permute.xlu0 %3487
        %3489 = vrot.lane.b32.xlu0 %v3454, 64
        %v3490 = vpop.permute.xlu0 %3489
        %3491 = vrot.lane.b32.xlu0 %v3456, 64
        %v3492 = vpop.permute.xlu0 %3491
        %3493 = vrot.lane.b32.xlu0 %v3458, 64
        %v3494 = vpop.permute.xlu0 %3493
        %3495 = vrot.lane.b32.xlu0 %v3460, 64
        %v3496 = vpop.permute.xlu0 %3495
        %3515 = vst.msk [vmem:[#allocation3 + $0x8] sm:$0xff] %vm2458, %v3462
        %3516 = vst.msk [vmem:[#allocation3 + $0x20] sm:$0xff] %vm2458, %v3464
        %3517 = vst.msk [vmem:[#allocation3 + $0x38] sm:$0xff] %vm2458, %v3466
        %3518 = vst.msk [vmem:[#allocation3 + $0x50] sm:$0xff] %vm2458, %v3468
        %3519 = vst.msk [vmem:[#allocation3 + $0x68] sm:$0xff] %vm2458, %v3470
        %3520 = vst.msk [vmem:[#allocation3 + $0x80] sm:$0xff] %vm2458, %v3472
        %3521 = vst.msk [vmem:[#allocation3 + $0x98] sm:$0xff] %vm2458, %v3474
        %3522 = vst.msk [vmem:[#allocation3 + $0xb0] sm:$0xff] %vm2458, %v3476
        %3523 = vst.msk [vmem:[#allocation3 + $0xc8] sm:$0xff] %vm2458, %v3478
        %3524 = vst.msk [vmem:[#allocation3 + $0xe0] sm:$0xff] %vm2458, %v3480
        %3525 = vst.msk [vmem:[#allocation3 + $0xf8] sm:$0xff] %vm2458, %v3482
        %3526 = vst.msk [vmem:[#allocation3 + $0x110] sm:$0xff] %vm2458, %v3484
        %3527 = vst.msk [vmem:[#allocation3 + $0x128] sm:$0xff] %vm2458, %v3486
        %3528 = vst.msk [vmem:[#allocation3 + $0x140] sm:$0xff] %vm2458, %v3488
        %3529 = vst.msk [vmem:[#allocation3 + $0x158] sm:$0xff] %vm2458, %v3490
        %3530 = vst.msk [vmem:[#allocation3 + $0x170] sm:$0xff] %vm2458, %v3492
        %3531 = vst.msk [vmem:[#allocation3 + $0x188] sm:$0xff] %vm2458, %v3494
        %3532 = vst.msk [vmem:[#allocation3 + $0x1a0] sm:$0xff] %vm2458, %v3496
        %v3533 = vld [vmem:[#allocation2 + $0x10] sm:$0xc]
        %v3534 = vld [vmem:[#allocation2 + $0x14] sm:$0xf]
        %v3535 = vld [vmem:[#allocation2 + $0x18] sm:$0xf]
        %v3536 = vld [vmem:[#allocation2 + $0x1c] sm:$0xf]
        %v3537 = vld [vmem:[#allocation2 + $0x20] sm:$0xf]
        %v3538 = vld [vmem:[#allocation2 + $0x24] sm:$0xf]
        %v3539 = vld [vmem:[#allocation2 + $0x28] sm:$0xf]
        %v3540 = vld [vmem:[#allocation2 + $0x2c] sm:$0xf]
        %v3541 = vld [vmem:[#allocation2 + $0x30] sm:$0xf]
        %v3542 = vld [vmem:[#allocation2 + $0x34] sm:$0xf]
        %v3543 = vld [vmem:[#allocation2 + $0x38] sm:$0xf]
        %v3544 = vld [vmem:[#allocation2 + $0x3c] sm:$0xf]
        %v3545 = vld [vmem:[#allocation2 + $0x40] sm:$0xf]
        %v3546 = vld [vmem:[#allocation2 + $0x44] sm:$0xf]
        %v3547 = vld [vmem:[#allocation2 + $0x48] sm:$0xf]
        %v3548 = vld [vmem:[#allocation2 + $0x4c] sm:$0xf]
        %v3549 = vld [vmem:[#allocation2 + $0x50] sm:$0xf]
        %v3550 = vld [vmem:[#allocation2 + $0x54] sm:$0xf]
        %v3551 = vld [vmem:[#allocation2 + $0x58] sm:$0xf]
        %v3552 = vld [vmem:[#allocation2 + $0x5c] sm:$0xf]
        %v3553 = vld [vmem:[#allocation2 + $0x60] sm:$0xf]
        %v3554 = vld [vmem:[#allocation2 + $0x64] sm:$0xf]
        %v3555 = vld [vmem:[#allocation2 + $0x68] sm:$0xf]
        %v3556 = vld [vmem:[#allocation2 + $0x6c] sm:$0xf]
        %v3557 = vld [vmem:[#allocation2 + $0x70] sm:$0xf]
        %v3558 = vld [vmem:[#allocation2 + $0x74] sm:$0xf]
        %v3559 = vld [vmem:[#allocation2 + $0x78] sm:$0xf]
        %v3560 = vld [vmem:[#allocation2 + $0x7c] sm:$0xf]
        %v3561 = vld [vmem:[#allocation2 + $0x80] sm:$0xf]
        %v3562 = vld [vmem:[#allocation2 + $0x84] sm:$0xf]
        %v3563 = vld [vmem:[#allocation2 + $0x88] sm:$0xf]
        %v3564 = vld [vmem:[#allocation2 + $0x8c] sm:$0xf]
        %v3565 = vld [vmem:[#allocation2 + $0x90] sm:$0xf]
        %v3566 = vld [vmem:[#allocation2 + $0x94] sm:$0xf]
        %v3567 = vld [vmem:[#allocation2 + $0x98] sm:$0xf]
        %v3568 = vld [vmem:[#allocation2 + $0x9c] sm:$0xf]
        %v3569 = vld [vmem:[#allocation2 + $0xa0] sm:$0x7]
        %v3607 = vunpack.c.l.b16 %v3533
        %v3608 = vunpack.c.l.b16 %v3534
        %v3609 = vunpack.c.l.b16 %v3535
        %v3610 = vunpack.c.l.b16 %v3536
        %v3611 = vunpack.c.l.b16 %v3537
        %v3612 = vunpack.c.l.b16 %v3538
        %v3613 = vunpack.c.l.b16 %v3539
        %v3614 = vunpack.c.l.b16 %v3540
        %v3615 = vunpack.c.l.b16 %v3541
        %v3616 = vunpack.c.l.b16 %v3542
        %v3617 = vunpack.c.l.b16 %v3543
        %v3618 = vunpack.c.l.b16 %v3544
        %v3619 = vunpack.c.l.b16 %v3545
        %v3620 = vunpack.c.l.b16 %v3546
        %v3621 = vunpack.c.l.b16 %v3547
        %v3622 = vunpack.c.l.b16 %v3548
        %v3623 = vunpack.c.l.b16 %v3549
        %v3624 = vunpack.c.l.b16 %v3550
        %v3625 = vunpack.c.l.b16 %v3551
        %v3626 = vunpack.c.l.b16 %v3552
        %v3627 = vunpack.c.l.b16 %v3553
        %v3628 = vunpack.c.l.b16 %v3554
        %v3629 = vunpack.c.l.b16 %v3555
        %v3630 = vunpack.c.l.b16 %v3556
        %v3631 = vunpack.c.l.b16 %v3557
        %v3632 = vunpack.c.l.b16 %v3558
        %v3633 = vunpack.c.l.b16 %v3559
        %v3634 = vunpack.c.l.b16 %v3560
        %v3635 = vunpack.c.l.b16 %v3561
        %v3636 = vunpack.c.l.b16 %v3562
        %v3637 = vunpack.c.l.b16 %v3563
        %v3638 = vunpack.c.l.b16 %v3564
        %v3639 = vunpack.c.l.b16 %v3565
        %v3640 = vunpack.c.l.b16 %v3566
        %v3641 = vunpack.c.l.b16 %v3567
        %v3642 = vunpack.c.l.b16 %v3568
        %v3643 = vunpack.c.l.b16 %v3569
        %v3644 = vpack.c.b16 %v3608, %v3607
        %v3645 = vpack.c.b16 %v3610, %v3609
        %v3646 = vpack.c.b16 %v3612, %v3611
        %v3647 = vpack.c.b16 %v3614, %v3613
        %v3648 = vpack.c.b16 %v3616, %v3615
        %v3649 = vpack.c.b16 %v3618, %v3617
        %v3650 = vpack.c.b16 %v3620, %v3619
        %v3651 = vpack.c.b16 %v3622, %v3621
        %v3652 = vpack.c.b16 %v3624, %v3623
        %v3653 = vpack.c.b16 %v3626, %v3625
        %v3654 = vpack.c.b16 %v3628, %v3627
        %v3655 = vpack.c.b16 %v3630, %v3629
        %v3656 = vpack.c.b16 %v3632, %v3631
        %v3657 = vpack.c.b16 %v3634, %v3633
        %v3658 = vpack.c.b16 %v3636, %v3635
        %v3659 = vpack.c.b16 %v3638, %v3637
        %v3660 = vpack.c.b16 %v3640, %v3639
        %v3661 = vpack.c.b16 %v3642, %v3641
        %v3662 = vpack.c.b16 %v3643, %v3643
        %vm3663 = vsmask.f32 5376
        %v3665 = vshrl.u32 %v3644, 16
        %v3667 = vrot.slane %v3665, 2
        %v3668 = vshll.u32 %v3644, 16
        %v3670 = vrot.slane %v3668, 3
        %v3671 = vor.u32 %v3667, %v3670
        %v3673 = vshrl.u32 %v3645, 16
        %v3675 = vrot.slane %v3673, 2
        %v3676 = vshll.u32 %v3645, 16
        %v3678 = vrot.slane %v3676, 3
        %v3679 = vor.u32 %v3675, %v3678
        %v3680 = vsel %vm3663, %v3671, %v3679
        %v3682 = vshrl.u32 %v3646, 16
        %v3684 = vrot.slane %v3682, 2
        %v3685 = vshll.u32 %v3646, 16
        %v3687 = vrot.slane %v3685, 3
        %v3688 = vor.u32 %v3684, %v3687
        %v3689 = vsel %vm3663, %v3679, %v3688
        %v3691 = vshrl.u32 %v3647, 16
        %v3693 = vrot.slane %v3691, 2
        %v3694 = vshll.u32 %v3647, 16
        %v3696 = vrot.slane %v3694, 3
        %v3697 = vor.u32 %v3693, %v3696
        %v3698 = vsel %vm3663, %v3688, %v3697
        %v3700 = vshrl.u32 %v3648, 16
        %v3702 = vrot.slane %v3700, 2
        %v3703 = vshll.u32 %v3648, 16
        %v3705 = vrot.slane %v3703, 3
        %v3706 = vor.u32 %v3702, %v3705
        %v3707 = vsel %vm3663, %v3697, %v3706
        %v3709 = vshrl.u32 %v3649, 16
        %v3711 = vrot.slane %v3709, 2
        %v3712 = vshll.u32 %v3649, 16
        %v3714 = vrot.slane %v3712, 3
        %v3715 = vor.u32 %v3711, %v3714
        %v3716 = vsel %vm3663, %v3706, %v3715
        %v3718 = vshrl.u32 %v3650, 16
        %v3720 = vrot.slane %v3718, 2
        %v3721 = vshll.u32 %v3650, 16
        %v3723 = vrot.slane %v3721, 3
        %v3724 = vor.u32 %v3720, %v3723
        %v3725 = vsel %vm3663, %v3715, %v3724
        %v3727 = vshrl.u32 %v3651, 16
        %v3729 = vrot.slane %v3727, 2
        %v3730 = vshll.u32 %v3651, 16
        %v3732 = vrot.slane %v3730, 3
        %v3733 = vor.u32 %v3729, %v3732
        %v3734 = vsel %vm3663, %v3724, %v3733
        %v3736 = vshrl.u32 %v3652, 16
        %v3738 = vrot.slane %v3736, 2
        %v3739 = vshll.u32 %v3652, 16
        %v3741 = vrot.slane %v3739, 3
        %v3742 = vor.u32 %v3738, %v3741
        %v3743 = vsel %vm3663, %v3733, %v3742
        %v3745 = vshrl.u32 %v3653, 16
        %v3747 = vrot.slane %v3745, 2
        %v3748 = vshll.u32 %v3653, 16
        %v3750 = vrot.slane %v3748, 3
        %v3751 = vor.u32 %v3747, %v3750
        %v3752 = vsel %vm3663, %v3742, %v3751
        %v3754 = vshrl.u32 %v3654, 16
        %v3756 = vrot.slane %v3754, 2
        %v3757 = vshll.u32 %v3654, 16
        %v3759 = vrot.slane %v3757, 3
        %v3760 = vor.u32 %v3756, %v3759
        %v3761 = vsel %vm3663, %v3751, %v3760
        %v3763 = vshrl.u32 %v3655, 16
        %v3765 = vrot.slane %v3763, 2
        %v3766 = vshll.u32 %v3655, 16
        %v3768 = vrot.slane %v3766, 3
        %v3769 = vor.u32 %v3765, %v3768
        %v3770 = vsel %vm3663, %v3760, %v3769
        %v3772 = vshrl.u32 %v3656, 16
        %v3774 = vrot.slane %v3772, 2
        %v3775 = vshll.u32 %v3656, 16
        %v3777 = vrot.slane %v3775, 3
        %v3778 = vor.u32 %v3774, %v3777
        %v3779 = vsel %vm3663, %v3769, %v3778
        %v3781 = vshrl.u32 %v3657, 16
        %v3783 = vrot.slane %v3781, 2
        %v3784 = vshll.u32 %v3657, 16
        %v3786 = vrot.slane %v3784, 3
        %v3787 = vor.u32 %v3783, %v3786
        %v3788 = vsel %vm3663, %v3778, %v3787
        %v3790 = vshrl.u32 %v3658, 16
        %v3792 = vrot.slane %v3790, 2
        %v3793 = vshll.u32 %v3658, 16
        %v3795 = vrot.slane %v3793, 3
        %v3796 = vor.u32 %v3792, %v3795
        %v3797 = vsel %vm3663, %v3787, %v3796
        %v3799 = vshrl.u32 %v3659, 16
        %v3801 = vrot.slane %v3799, 2
        %v3802 = vshll.u32 %v3659, 16
        %v3804 = vrot.slane %v3802, 3
        %v3805 = vor.u32 %v3801, %v3804
        %v3806 = vsel %vm3663, %v3796, %v3805
        %v3808 = vshrl.u32 %v3660, 16
        %v3810 = vrot.slane %v3808, 2
        %v3811 = vshll.u32 %v3660, 16
        %v3813 = vrot.slane %v3811, 3
        %v3814 = vor.u32 %v3810, %v3813
        %v3815 = vsel %vm3663, %v3805, %v3814
        %v3817 = vshrl.u32 %v3661, 16
        %v3819 = vrot.slane %v3817, 2
        %v3820 = vshll.u32 %v3661, 16
        %v3822 = vrot.slane %v3820, 3
        %v3823 = vor.u32 %v3819, %v3822
        %v3824 = vsel %vm3663, %v3814, %v3823
        %v3826 = vshrl.u32 %v3662, 16
        %v3828 = vrot.slane %v3826, 2
        %v3829 = vshll.u32 %v3662, 16
        %v3831 = vrot.slane %v3829, 3
        %v3832 = vor.u32 %v3828, %v3831
        %v3833 = vsel %vm3663, %v3823, %v3832
        %3834 = vrot.lane.b32.xlu0 %v3680, 96
        %v3835 = vpop.permute.xlu0 %3834
        %3836 = vrot.lane.b32.xlu0 %v3689, 96
        %v3837 = vpop.permute.xlu0 %3836
        %3838 = vrot.lane.b32.xlu0 %v3698, 96
        %v3839 = vpop.permute.xlu0 %3838
        %3840 = vrot.lane.b32.xlu0 %v3707, 96
        %v3841 = vpop.permute.xlu0 %3840
        %3842 = vrot.lane.b32.xlu0 %v3716, 96
        %v3843 = vpop.permute.xlu0 %3842
        %3844 = vrot.lane.b32.xlu0 %v3725, 96
        %v3845 = vpop.permute.xlu0 %3844
        %3846 = vrot.lane.b32.xlu0 %v3734, 96
        %v3847 = vpop.permute.xlu0 %3846
        %3848 = vrot.lane.b32.xlu0 %v3743, 96
        %v3849 = vpop.permute.xlu0 %3848
        %3850 = vrot.lane.b32.xlu0 %v3752, 96
        %v3851 = vpop.permute.xlu0 %3850
        %3852 = vrot.lane.b32.xlu0 %v3761, 96
        %v3853 = vpop.permute.xlu0 %3852
        %3854 = vrot.lane.b32.xlu0 %v3770, 96
        %v3855 = vpop.permute.xlu0 %3854
        %3856 = vrot.lane.b32.xlu0 %v3779, 96
        %v3857 = vpop.permute.xlu0 %3856
        %3858 = vrot.lane.b32.xlu0 %v3788, 96
        %v3859 = vpop.permute.xlu0 %3858
        %3860 = vrot.lane.b32.xlu0 %v3797, 96
        %v3861 = vpop.permute.xlu0 %3860
        %3862 = vrot.lane.b32.xlu0 %v3806, 96
        %v3863 = vpop.permute.xlu0 %3862
        %3864 = vrot.lane.b32.xlu0 %v3815, 96
        %v3865 = vpop.permute.xlu0 %3864
        %3866 = vrot.lane.b32.xlu0 %v3824, 96
        %v3867 = vpop.permute.xlu0 %3866
        %3868 = vrot.lane.b32.xlu0 %v3833, 96
        %v3869 = vpop.permute.xlu0 %3868
        %3888 = vst.msk [vmem:[#allocation3 + $0x8] sm:$0xff] %vm2698, %v3835
        %3889 = vst.msk [vmem:[#allocation3 + $0x20] sm:$0xff] %vm2698, %v3837
        %3890 = vst.msk [vmem:[#allocation3 + $0x38] sm:$0xff] %vm2698, %v3839
        %3891 = vst.msk [vmem:[#allocation3 + $0x50] sm:$0xff] %vm2698, %v3841
        %3892 = vst.msk [vmem:[#allocation3 + $0x68] sm:$0xff] %vm2698, %v3843
        %3893 = vst.msk [vmem:[#allocation3 + $0x80] sm:$0xff] %vm2698, %v3845
        %3894 = vst.msk [vmem:[#allocation3 + $0x98] sm:$0xff] %vm2698, %v3847
        %3895 = vst.msk [vmem:[#allocation3 + $0xb0] sm:$0xff] %vm2698, %v3849
        %3896 = vst.msk [vmem:[#allocation3 + $0xc8] sm:$0xff] %vm2698, %v3851
        %3897 = vst.msk [vmem:[#allocation3 + $0xe0] sm:$0xff] %vm2698, %v3853
        %3898 = vst.msk [vmem:[#allocation3 + $0xf8] sm:$0xff] %vm2698, %v3855
        %3899 = vst.msk [vmem:[#allocation3 + $0x110] sm:$0xff] %vm2698, %v3857
        %3900 = vst.msk [vmem:[#allocation3 + $0x128] sm:$0xff] %vm2698, %v3859
        %3901 = vst.msk [vmem:[#allocation3 + $0x140] sm:$0xff] %vm2698, %v3861
        %3902 = vst.msk [vmem:[#allocation3 + $0x158] sm:$0xff] %vm2698, %v3863
        %3903 = vst.msk [vmem:[#allocation3 + $0x170] sm:$0xff] %vm2698, %v3865
        %3904 = vst.msk [vmem:[#allocation3 + $0x188] sm:$0xff] %vm2698, %v3867
        %3905 = vst.msk [vmem:[#allocation3 + $0x1a0] sm:$0xff] %vm2698, %v3869
        %v3906 = vld [vmem:[#allocation2 + $0x10] sm:$0x8]
        %v3907 = vld [vmem:[#allocation2 + $0x14] sm:$0xf]
        %v3908 = vld [vmem:[#allocation2 + $0x18] sm:$0xf]
        %v3909 = vld [vmem:[#allocation2 + $0x1c] sm:$0xf]
        %v3910 = vld [vmem:[#allocation2 + $0x20] sm:$0xf]
        %v3911 = vld [vmem:[#allocation2 + $0x24] sm:$0xf]
        %v3912 = vld [vmem:[#allocation2 + $0x28] sm:$0xf]
        %v3913 = vld [vmem:[#allocation2 + $0x2c] sm:$0xf]
        %v3914 = vld [vmem:[#allocation2 + $0x30] sm:$0xf]
        %v3915 = vld [vmem:[#allocation2 + $0x34] sm:$0xf]
        %v3916 = vld [vmem:[#allocation2 + $0x38] sm:$0xf]
        %v3917 = vld [vmem:[#allocation2 + $0x3c] sm:$0xf]
        %v3918 = vld [vmem:[#allocation2 + $0x40] sm:$0xf]
        %v3919 = vld [vmem:[#allocation2 + $0x44] sm:$0xf]
        %v3920 = vld [vmem:[#allocation2 + $0x48] sm:$0xf]
        %v3921 = vld [vmem:[#allocation2 + $0x4c] sm:$0xf]
        %v3922 = vld [vmem:[#allocation2 + $0x50] sm:$0xf]
        %v3923 = vld [vmem:[#allocation2 + $0x54] sm:$0xf]
        %v3924 = vld [vmem:[#allocation2 + $0x58] sm:$0xf]
        %v3925 = vld [vmem:[#allocation2 + $0x5c] sm:$0xf]
        %v3926 = vld [vmem:[#allocation2 + $0x60] sm:$0xf]
        %v3927 = vld [vmem:[#allocation2 + $0x64] sm:$0xf]
        %v3928 = vld [vmem:[#allocation2 + $0x68] sm:$0xf]
        %v3929 = vld [vmem:[#allocation2 + $0x6c] sm:$0xf]
        %v3930 = vld [vmem:[#allocation2 + $0x70] sm:$0xf]
        %v3931 = vld [vmem:[#allocation2 + $0x74] sm:$0xf]
        %v3932 = vld [vmem:[#allocation2 + $0x78] sm:$0xf]
        %v3933 = vld [vmem:[#allocation2 + $0x7c] sm:$0xf]
        %v3934 = vld [vmem:[#allocation2 + $0x80] sm:$0xf]
        %v3935 = vld [vmem:[#allocation2 + $0x84] sm:$0xf]
        %v3936 = vld [vmem:[#allocation2 + $0x88] sm:$0xf]
        %v3937 = vld [vmem:[#allocation2 + $0x8c] sm:$0xf]
        %v3938 = vld [vmem:[#allocation2 + $0x90] sm:$0xf]
        %v3939 = vld [vmem:[#allocation2 + $0x94] sm:$0xf]
        %v3940 = vld [vmem:[#allocation2 + $0x98] sm:$0xf]
        %v3941 = vld [vmem:[#allocation2 + $0x9c] sm:$0xf]
        %v3942 = vld [vmem:[#allocation2 + $0xa0] sm:$0x7]
        %v3980 = vunpack.c.l.b16 %v3906
        %v3981 = vunpack.c.l.b16 %v3907
        %v3982 = vunpack.c.l.b16 %v3908
        %v3983 = vunpack.c.l.b16 %v3909
        %v3984 = vunpack.c.l.b16 %v3910
        %v3985 = vunpack.c.l.b16 %v3911
        %v3986 = vunpack.c.l.b16 %v3912
        %v3987 = vunpack.c.l.b16 %v3913
        %v3988 = vunpack.c.l.b16 %v3914
        %v3989 = vunpack.c.l.b16 %v3915
        %v3990 = vunpack.c.l.b16 %v3916
        %v3991 = vunpack.c.l.b16 %v3917
        %v3992 = vunpack.c.l.b16 %v3918
        %v3993 = vunpack.c.l.b16 %v3919
        %v3994 = vunpack.c.l.b16 %v3920
        %v3995 = vunpack.c.l.b16 %v3921
        %v3996 = vunpack.c.l.b16 %v3922
        %v3997 = vunpack.c.l.b16 %v3923
        %v3998 = vunpack.c.l.b16 %v3924
        %v3999 = vunpack.c.l.b16 %v3925
        %v4000 = vunpack.c.l.b16 %v3926
        %v4001 = vunpack.c.l.b16 %v3927
        %v4002 = vunpack.c.l.b16 %v3928
        %v4003 = vunpack.c.l.b16 %v3929
        %v4004 = vunpack.c.l.b16 %v3930
        %v4005 = vunpack.c.l.b16 %v3931
        %v4006 = vunpack.c.l.b16 %v3932
        %v4007 = vunpack.c.l.b16 %v3933
        %v4008 = vunpack.c.l.b16 %v3934
        %v4009 = vunpack.c.l.b16 %v3935
        %v4010 = vunpack.c.l.b16 %v3936
        %v4011 = vunpack.c.l.b16 %v3937
        %v4012 = vunpack.c.l.b16 %v3938
        %v4013 = vunpack.c.l.b16 %v3939
        %v4014 = vunpack.c.l.b16 %v3940
        %v4015 = vunpack.c.l.b16 %v3941
        %v4016 = vunpack.c.l.b16 %v3942
        %v4017 = vpack.c.b16 %v3981, %v3980
        %v4018 = vpack.c.b16 %v3983, %v3982
        %v4019 = vpack.c.b16 %v3985, %v3984
        %v4020 = vpack.c.b16 %v3987, %v3986
        %v4021 = vpack.c.b16 %v3989, %v3988
        %v4022 = vpack.c.b16 %v3991, %v3990
        %v4023 = vpack.c.b16 %v3993, %v3992
        %v4024 = vpack.c.b16 %v3995, %v3994
        %v4025 = vpack.c.b16 %v3997, %v3996
        %v4026 = vpack.c.b16 %v3999, %v3998
        %v4027 = vpack.c.b16 %v4001, %v4000
        %v4028 = vpack.c.b16 %v4003, %v4002
        %v4029 = vpack.c.b16 %v4005, %v4004
        %v4030 = vpack.c.b16 %v4007, %v4006
        %v4031 = vpack.c.b16 %v4009, %v4008
        %v4032 = vpack.c.b16 %v4011, %v4010
        %v4033 = vpack.c.b16 %v4013, %v4012
        %v4034 = vpack.c.b16 %v4015, %v4014
        %v4035 = vpack.c.b16 %v4016, %v4016
        %vm4036 = vcmask 1044480
        %v4037 = vrot.slane %v4017, 3
        %v4038 = vrot.slane %v4018, 3
        %v4039 = vsel %vm4036, %v4037, %v4038
        %v4040 = vrot.slane %v4019, 3
        %v4041 = vsel %vm4036, %v4038, %v4040
        %v4042 = vrot.slane %v4020, 3
        %v4043 = vsel %vm4036, %v4040, %v4042
        %v4044 = vrot.slane %v4021, 3
        %v4045 = vsel %vm4036, %v4042, %v4044
        %v4046 = vrot.slane %v4022, 3
        %v4047 = vsel %vm4036, %v4044, %v4046
        %v4048 = vrot.slane %v4023, 3
        %v4049 = vsel %vm4036, %v4046, %v4048
        %v4050 = vrot.slane %v4024, 3
        %v4051 = vsel %vm4036, %v4048, %v4050
        %v4052 = vrot.slane %v4025, 3
        %v4053 = vsel %vm4036, %v4050, %v4052
        %v4054 = vrot.slane %v4026, 3
        %v4055 = vsel %vm4036, %v4052, %v4054
        %v4056 = vrot.slane %v4027, 3
        %v4057 = vsel %vm4036, %v4054, %v4056
        %v4058 = vrot.slane %v4028, 3
        %v4059 = vsel %vm4036, %v4056, %v4058
        %v4060 = vrot.slane %v4029, 3
        %v4061 = vsel %vm4036, %v4058, %v4060
        %v4062 = vrot.slane %v4030, 3
        %v4063 = vsel %vm4036, %v4060, %v4062
        %v4064 = vrot.slane %v4031, 3
        %v4065 = vsel %vm4036, %v4062, %v4064
        %v4066 = vrot.slane %v4032, 3
        %v4067 = vsel %vm4036, %v4064, %v4066
        %v4068 = vrot.slane %v4033, 3
        %v4069 = vsel %vm4036, %v4066, %v4068
        %v4070 = vrot.slane %v4034, 3
        %v4071 = vsel %vm4036, %v4068, %v4070
        %v4072 = vrot.slane %v4035, 3
        %v4073 = vsel %vm4036, %v4070, %v4072
        %4092 = vst.msk [vmem:[#allocation3 + $0x10] sm:$0xff] %vm1865, %v4039
        %4093 = vst.msk [vmem:[#allocation3 + $0x28] sm:$0xff] %vm1865, %v4041
        %4094 = vst.msk [vmem:[#allocation3 + $0x40] sm:$0xff] %vm1865, %v4043
        %4095 = vst.msk [vmem:[#allocation3 + $0x58] sm:$0xff] %vm1865, %v4045
        %4096 = vst.msk [vmem:[#allocation3 + $0x70] sm:$0xff] %vm1865, %v4047
        %4097 = vst.msk [vmem:[#allocation3 + $0x88] sm:$0xff] %vm1865, %v4049
        %4098 = vst.msk [vmem:[#allocation3 + $0xa0] sm:$0xff] %vm1865, %v4051
        %4099 = vst.msk [vmem:[#allocation3 + $0xb8] sm:$0xff] %vm1865, %v4053
        %4100 = vst.msk [vmem:[#allocation3 + $0xd0] sm:$0xff] %vm1865, %v4055
        %4101 = vst.msk [vmem:[#allocation3 + $0xe8] sm:$0xff] %vm1865, %v4057
        %4102 = vst.msk [vmem:[#allocation3 + $0x100] sm:$0xff] %vm1865, %v4059
        %4103 = vst.msk [vmem:[#allocation3 + $0x118] sm:$0xff] %vm1865, %v4061
        %4104 = vst.msk [vmem:[#allocation3 + $0x130] sm:$0xff] %vm1865, %v4063
        %4105 = vst.msk [vmem:[#allocation3 + $0x148] sm:$0xff] %vm1865, %v4065
        %4106 = vst.msk [vmem:[#allocation3 + $0x160] sm:$0xff] %vm1865, %v4067
        %4107 = vst.msk [vmem:[#allocation3 + $0x178] sm:$0xff] %vm1865, %v4069
        %4108 = vst.msk [vmem:[#allocation3 + $0x190] sm:$0xff] %vm1865, %v4071
        %4109 = vst.msk [vmem:[#allocation3 + $0x1a8] sm:$0xff] %vm1865, %v4073
        %v4110 = vld [vmem:[#allocation3] sm:$0xff]
        %v4111 = vld [vmem:[#allocation3 + $0x8] sm:$0xff]
        %v4112 = vld [vmem:[#allocation3 + $0x10] sm:$0xff]
        %v4113 = vld [vmem:[#allocation3 + $0x18] sm:$0xff]
        %v4114 = vld [vmem:[#allocation3 + $0x20] sm:$0xff]
        %v4115 = vld [vmem:[#allocation3 + $0x28] sm:$0xff]
        %v4116 = vld [vmem:[#allocation3 + $0x30] sm:$0xff]
        %v4117 = vld [vmem:[#allocation3 + $0x38] sm:$0xff]
        %v4118 = vld [vmem:[#allocation3 + $0x40] sm:$0xff]
        %v4119 = vld [vmem:[#allocation3 + $0x48] sm:$0xff]
        %v4120 = vld [vmem:[#allocation3 + $0x50] sm:$0xff]
        %v4121 = vld [vmem:[#allocation3 + $0x58] sm:$0xff]
        %v4122 = vld [vmem:[#allocation3 + $0x60] sm:$0xff]
        %v4123 = vld [vmem:[#allocation3 + $0x68] sm:$0xff]
        %v4124 = vld [vmem:[#allocation3 + $0x70] sm:$0xff]
        %v4125 = vld [vmem:[#allocation3 + $0x78] sm:$0xff]
        %v4126 = vld [vmem:[#allocation3 + $0x80] sm:$0xff]
        %v4127 = vld [vmem:[#allocation3 + $0x88] sm:$0xff]
        %v4128 = vld [vmem:[#allocation3 + $0x90] sm:$0xff]
        %v4129 = vld [vmem:[#allocation3 + $0x98] sm:$0xff]
        %v4130 = vld [vmem:[#allocation3 + $0xa0] sm:$0xff]
        %v4131 = vld [vmem:[#allocation3 + $0xa8] sm:$0xff]
        %v4132 = vld [vmem:[#allocation3 + $0xb0] sm:$0xff]
        %v4133 = vld [vmem:[#allocation3 + $0xb8] sm:$0xff]
        %v4134 = vld [vmem:[#allocation3 + $0xc0] sm:$0xff]
        %v4135 = vld [vmem:[#allocation3 + $0xc8] sm:$0xff]
        %v4136 = vld [vmem:[#allocation3 + $0xd0] sm:$0xff]
        %v4137 = vld [vmem:[#allocation3 + $0xd8] sm:$0xff]
        %v4138 = vld [vmem:[#allocation3 + $0xe0] sm:$0xff]
        %v4139 = vld [vmem:[#allocation3 + $0xe8] sm:$0xff]
        %v4140 = vld [vmem:[#allocation3 + $0xf0] sm:$0xff]
        %v4141 = vld [vmem:[#allocation3 + $0xf8] sm:$0xff]
        %v4142 = vld [vmem:[#allocation3 + $0x100] sm:$0xff]
        %v4143 = vld [vmem:[#allocation3 + $0x108] sm:$0xff]
        %v4144 = vld [vmem:[#allocation3 + $0x110] sm:$0xff]
        %v4145 = vld [vmem:[#allocation3 + $0x118] sm:$0xff]
        %v4146 = vld [vmem:[#allocation3 + $0x120] sm:$0xff]
        %v4147 = vld [vmem:[#allocation3 + $0x128] sm:$0xff]
        %v4148 = vld [vmem:[#allocation3 + $0x130] sm:$0xff]
        %v4149 = vld [vmem:[#allocation3 + $0x138] sm:$0xff]
        %v4150 = vld [vmem:[#allocation3 + $0x140] sm:$0xff]
        %v4151 = vld [vmem:[#allocation3 + $0x148] sm:$0xff]
        %v4152 = vld [vmem:[#allocation3 + $0x150] sm:$0xff]
        %v4153 = vld [vmem:[#allocation3 + $0x158] sm:$0xff]
        %v4154 = vld [vmem:[#allocation3 + $0x160] sm:$0xff]
        %v4155 = vld [vmem:[#allocation3 + $0x168] sm:$0xff]
        %v4156 = vld [vmem:[#allocation3 + $0x170] sm:$0xff]
        %v4157 = vld [vmem:[#allocation3 + $0x178] sm:$0xff]
        %v4158 = vld [vmem:[#allocation3 + $0x180] sm:$0xff]
        %v4159 = vld [vmem:[#allocation3 + $0x188] sm:$0xff]
        %v4160 = vld [vmem:[#allocation3 + $0x190] sm:$0xff]
        %v4161 = vld [vmem:[#allocation3 + $0x198] sm:$0xff]
        %v4162 = vld [vmem:[#allocation3 + $0x1a0] sm:$0xff]
        %v4163 = vld [vmem:[#allocation3 + $0x1a8] sm:$0xff]
        %v4164 = vld [vmem:[%s4] sm:$0xf]
        %v4165 = vld [vmem:[%s4 + $0x4] sm:$0xf]
        %v4166 = vld [vmem:[%s4 + $0x8] sm:$0xf]
        %v4167 = vld [vmem:[%s4 + $0xc] sm:$0xf]
        %v4168 = vld [vmem:[%s4 + $0x10] sm:$0xf]
        %v4169 = vld [vmem:[%s4 + $0x14] sm:$0xf]
        %v4170 = vld [vmem:[%s4 + $0x18] sm:$0xf]
        %v4171 = vld [vmem:[%s4 + $0x1c] sm:$0xf]
        %v4172 = vld [vmem:[%s4 + $0x20] sm:$0xf]
        %v4173 = vld [vmem:[%s4 + $0x24] sm:$0xf]
        %v4174 = vld [vmem:[%s4 + $0x28] sm:$0xf]
        %v4175 = vld [vmem:[%s4 + $0x2c] sm:$0xf]
        %v4176 = vld [vmem:[%s4 + $0x30] sm:$0xf]
        %v4177 = vld [vmem:[%s4 + $0x34] sm:$0xf]
        %v4178 = vld [vmem:[%s4 + $0x38] sm:$0xf]
        %v4179 = vld [vmem:[%s4 + $0x3c] sm:$0xf]
        %v4180 = vld [vmem:[%s4 + $0x40] sm:$0xf]
        %v4181 = vld [vmem:[%s4 + $0x44] sm:$0xf]
        %v4182 = vld [vmem:[%s4 + $0x48] sm:$0xf]
        %v4183 = vld [vmem:[%s4 + $0x4c] sm:$0xf]
        %v4184 = vld [vmem:[%s4 + $0x50] sm:$0xf]
        %v4185 = vld [vmem:[%s4 + $0x54] sm:$0xf]
        %v4186 = vld [vmem:[%s4 + $0x58] sm:$0xf]
        %v4187 = vld [vmem:[%s4 + $0x5c] sm:$0xf]
        %v4188 = vld [vmem:[%s4 + $0x60] sm:$0xf]
        %v4189 = vld [vmem:[%s4 + $0x64] sm:$0xf]
        %v4190 = vld [vmem:[%s4 + $0x68] sm:$0xf]
        %v4191 = vld [vmem:[%s4 + $0x6c] sm:$0xf]
        %v4192 = vld [vmem:[%s4 + $0x70] sm:$0xf]
        %v4193 = vld [vmem:[%s4 + $0x74] sm:$0xf]
        %v4194 = vld [vmem:[%s4 + $0x78] sm:$0xf]
        %v4195 = vld [vmem:[%s4 + $0x7c] sm:$0xf]
        %v4196 = vld [vmem:[%s4 + $0x80] sm:$0xf]
        %v4197 = vld [vmem:[%s4 + $0x84] sm:$0xf]
        %v4198 = vld [vmem:[%s4 + $0x88] sm:$0xf]
        %v4199 = vld [vmem:[%s4 + $0x8c] sm:$0xf]
        %v4236 = vunpack.c.l.b16 %v4164
        %v4237 = vunpack.c.l.b16 %v4165
        %v4238 = vunpack.c.l.b16 %v4166
        %v4239 = vunpack.c.l.b16 %v4167
        %v4240 = vunpack.c.l.b16 %v4168
        %v4241 = vunpack.c.l.b16 %v4169
        %v4242 = vunpack.c.l.b16 %v4170
        %v4243 = vunpack.c.l.b16 %v4171
        %v4244 = vunpack.c.l.b16 %v4172
        %v4245 = vunpack.c.l.b16 %v4173
        %v4246 = vunpack.c.l.b16 %v4174
        %v4247 = vunpack.c.l.b16 %v4175
        %v4248 = vunpack.c.l.b16 %v4176
        %v4249 = vunpack.c.l.b16 %v4177
        %v4250 = vunpack.c.l.b16 %v4178
        %v4251 = vunpack.c.l.b16 %v4179
        %v4252 = vunpack.c.l.b16 %v4180
        %v4253 = vunpack.c.l.b16 %v4181
        %v4254 = vunpack.c.l.b16 %v4182
        %v4255 = vunpack.c.l.b16 %v4183
        %v4256 = vunpack.c.l.b16 %v4184
        %v4257 = vunpack.c.l.b16 %v4185
        %v4258 = vunpack.c.l.b16 %v4186
        %v4259 = vunpack.c.l.b16 %v4187
        %v4260 = vunpack.c.l.b16 %v4188
        %v4261 = vunpack.c.l.b16 %v4189
        %v4262 = vunpack.c.l.b16 %v4190
        %v4263 = vunpack.c.l.b16 %v4191
        %v4264 = vunpack.c.l.b16 %v4192
        %v4265 = vunpack.c.l.b16 %v4193
        %v4266 = vunpack.c.l.b16 %v4194
        %v4267 = vunpack.c.l.b16 %v4195
        %v4268 = vunpack.c.l.b16 %v4196
        %v4269 = vunpack.c.l.b16 %v4197
        %v4270 = vunpack.c.l.b16 %v4198
        %v4271 = vunpack.c.l.b16 %v4199
        %v4272 = vpack.c.b16 %v4237, %v4236
        %v4273 = vpack.c.b16 %v4239, %v4238
        %v4274 = vpack.c.b16 %v4241, %v4240
        %v4275 = vpack.c.b16 %v4243, %v4242
        %v4276 = vpack.c.b16 %v4245, %v4244
        %v4277 = vpack.c.b16 %v4247, %v4246
        %v4278 = vpack.c.b16 %v4249, %v4248
        %v4279 = vpack.c.b16 %v4251, %v4250
        %v4280 = vpack.c.b16 %v4253, %v4252
        %v4281 = vpack.c.b16 %v4255, %v4254
        %v4282 = vpack.c.b16 %v4257, %v4256
        %v4283 = vpack.c.b16 %v4259, %v4258
        %v4284 = vpack.c.b16 %v4261, %v4260
        %v4285 = vpack.c.b16 %v4263, %v4262
        %v4286 = vpack.c.b16 %v4265, %v4264
        %v4287 = vpack.c.b16 %v4267, %v4266
        %v4288 = vpack.c.b16 %v4269, %v4268
        %v4289 = vpack.c.b16 %v4271, %v4270
        %v4309 = vsel %vm1865, %v4112, 0
        %v4312 = vsel %vm1865, %v4115, 0
        %v4315 = vsel %vm1865, %v4118, 0
        %v4318 = vsel %vm1865, %v4121, 0
        %v4321 = vsel %vm1865, %v4124, 0
        %v4324 = vsel %vm1865, %v4127, 0
        %v4327 = vsel %vm1865, %v4130, 0
        %v4330 = vsel %vm1865, %v4133, 0
        %v4333 = vsel %vm1865, %v4136, 0
        %v4336 = vsel %vm1865, %v4139, 0
        %v4339 = vsel %vm1865, %v4142, 0
        %v4342 = vsel %vm1865, %v4145, 0
        %v4345 = vsel %vm1865, %v4148, 0
        %v4348 = vsel %vm1865, %v4151, 0
        %v4351 = vsel %vm1865, %v4154, 0
        %v4354 = vsel %vm1865, %v4157, 0
        %v4357 = vsel %vm1865, %v4160, 0
        %v4360 = vsel %vm1865, %v4163, 0
        %4362 = vmatprep.subr.bf16.mxu0 0
        %4363 = vmatpush1.bf16.msra.mxu0 %v4272
        %4364 = vmatprep.subr.bf16.mxu0 0
        %4365 = vmatpush1.bf16.msra.mxu0 %v4273
        %4366 = vmatprep.subr.bf16.mxu0 0
        %4367 = vmatpush1.bf16.msra.mxu0 %v4274
        %4368 = vmatprep.subr.bf16.mxu0 0
        %4369 = vmatpush1.bf16.msra.mxu0 %v4275
        %4370 = vmatprep.subr.bf16.mxu0 0
        %4371 = vmatpush1.bf16.msra.mxu0 %v4276
        %4372 = vmatprep.subr.bf16.mxu0 0
        %4373 = vmatpush1.bf16.msra.mxu0 %v4277
        %4374 = vmatprep.subr.bf16.mxu0 0
        %4375 = vmatpush1.bf16.msra.mxu0 %v4278
        %4376 = vmatprep.subr.bf16.mxu0 0
        %4377 = vmatpush1.bf16.msra.mxu0 %v4279
        %4378 = vmatprep.subr.bf16.mxu0 0
        %4379 = vmatpush1.bf16.msra.mxu0 %v4280
        %4380 = vmatprep.subr.bf16.mxu0 0
        %4381 = vmatpush1.bf16.msra.mxu0 %v4281
        %4382 = vmatprep.subr.bf16.mxu0 0
        %4383 = vmatpush1.bf16.msra.mxu0 %v4282
        %4384 = vmatprep.subr.bf16.mxu0 0
        %4385 = vmatpush1.bf16.msra.mxu0 %v4283
        %4386 = vmatprep.subr.bf16.mxu0 0
        %4387 = vmatpush1.bf16.msra.mxu0 %v4284
        %4388 = vmatprep.subr.bf16.mxu0 0
        %4389 = vmatpush1.bf16.msra.mxu0 %v4285
        %4390 = vmatprep.subr.bf16.mxu0 0
        %4391 = vmatpush1.bf16.msra.mxu0 %v4286
        %4392 = vmatprep.subr.bf16.mxu0 0
        %4393 = vmatpush1.bf16.msra.mxu0 %v4287
        %4394 = vmatprep.mubr.bf16.mxu0 %v4111
        %4395 = vmatmul.mubr.bf16.gmra.mrb[0].mxu0 %v4110
        %v4396 = vpop.f32.mrb[0].mxu0
        %v4397 = vadd.f32 0.0, %v4396
        %v4398 = vpop.f32.mrb[0].mxu0
        %v4399 = vpop.f32.mrb[0].mxu0
        %v4400 = vadd.f32 0.0, %v4399
        %v4401 = vpop.f32.mrb[0].mxu0
        %4402 = vmatprep.mubr.bf16.mxu0 %v4114
        %4403 = vmatmul.mubr.bf16.gmra.mrb[0].mxu0 %v4113
        %v4404 = vpop.f32.mrb[0].mxu0
        %v4405 = vadd.f32 0.0, %v4404
        %v4406 = vpop.f32.mrb[0].mxu0
        %v4407 = vpop.f32.mrb[0].mxu0
        %v4408 = vadd.f32 0.0, %v4407
        %v4409 = vpop.f32.mrb[0].mxu0
        %4410 = vmatprep.mubr.bf16.mxu0 %v4117
        %4411 = vmatmul.mubr.bf16.gmra.mrb[0].mxu0 %v4116
        %v4412 = vpop.f32.mrb[0].mxu0
        %v4413 = vadd.f32 0.0, %v4412
        %v4414 = vpop.f32.mrb[0].mxu0
        %v4415 = vpop.f32.mrb[0].mxu0
        %v4416 = vadd.f32 0.0, %v4415
        %v4417 = vpop.f32.mrb[0].mxu0
        %4418 = vmatprep.mubr.bf16.mxu0 %v4120
        %4419 = vmatmul.mubr.bf16.gmra.mrb[0].mxu0 %v4119
        %v4420 = vpop.f32.mrb[0].mxu0
        %v4421 = vadd.f32 0.0, %v4420
        %v4422 = vpop.f32.mrb[0].mxu0
        %v4423 = vpop.f32.mrb[0].mxu0
        %v4424 = vadd.f32 0.0, %v4423
        %v4425 = vpop.f32.mrb[0].mxu0
        %4426 = vmatprep.mubr.bf16.mxu0 %v4123
        %4427 = vmatmul.mubr.bf16.gmra.mrb[0].mxu0 %v4122
        %v4428 = vpop.f32.mrb[0].mxu0
        %v4429 = vadd.f32 0.0, %v4428
        %v4430 = vpop.f32.mrb[0].mxu0
        %v4431 = vpop.f32.mrb[0].mxu0
        %v4432 = vadd.f32 0.0, %v4431
        %v4433 = vpop.f32.mrb[0].mxu0
        %4434 = vmatprep.mubr.bf16.mxu0 %v4126
        %4435 = vmatmul.mubr.bf16.gmra.mrb[0].mxu0 %v4125
        %v4436 = vpop.f32.mrb[0].mxu0
        %v4437 = vadd.f32 0.0, %v4436
        %v4438 = vpop.f32.mrb[0].mxu0
        %v4439 = vpop.f32.mrb[0].mxu0
        %v4440 = vadd.f32 0.0, %v4439
        %v4441 = vpop.f32.mrb[0].mxu0
        %4442 = vmatprep.mubr.bf16.mxu0 %v4129
        %4443 = vmatmul.mubr.bf16.gmra.mrb[0].mxu0 %v4128
        %v4444 = vpop.f32.mrb[0].mxu0
        %v4445 = vadd.f32 0.0, %v4444
        %v4446 = vpop.f32.mrb[0].mxu0
        %v4447 = vpop.f32.mrb[0].mxu0
        %v4448 = vadd.f32 0.0, %v4447
        %v4449 = vpop.f32.mrb[0].mxu0
        %4450 = vmatprep.mubr.bf16.mxu0 %v4132
        %4451 = vmatmul.mubr.bf16.gmra.mrb[0].mxu0 %v4131
        %v4452 = vpop.f32.mrb[0].mxu0
        %v4453 = vadd.f32 0.0, %v4452
        %v4454 = vpop.f32.mrb[0].mxu0
        %v4455 = vpop.f32.mrb[0].mxu0
        %v4456 = vadd.f32 0.0, %v4455
        %v4457 = vpop.f32.mrb[0].mxu0
        %4458 = vmatprep.mubr.bf16.mxu0 %v4135
        %4459 = vmatmul.mubr.bf16.gmra.mrb[0].mxu0 %v4134
        %v4460 = vpop.f32.mrb[0].mxu0
        %v4461 = vadd.f32 0.0, %v4460
        %v4462 = vpop.f32.mrb[0].mxu0
        %v4463 = vpop.f32.mrb[0].mxu0
        %v4464 = vadd.f32 0.0, %v4463
        %v4465 = vpop.f32.mrb[0].mxu0
        %4466 = vmatprep.mubr.bf16.mxu0 %v4138
        %4467 = vmatmul.mubr.bf16.gmra.mrb[0].mxu0 %v4137
        %v4468 = vpop.f32.mrb[0].mxu0
        %v4469 = vadd.f32 0.0, %v4468
        %v4470 = vpop.f32.mrb[0].mxu0
        %v4471 = vpop.f32.mrb[0].mxu0
        %v4472 = vadd.f32 0.0, %v4471
        %v4473 = vpop.f32.mrb[0].mxu0
        %4474 = vmatprep.mubr.bf16.mxu0 %v4141
        %4475 = vmatmul.mubr.bf16.gmra.mrb[0].mxu0 %v4140
        %v4476 = vpop.f32.mrb[0].mxu0
        %v4477 = vadd.f32 0.0, %v4476
        %v4478 = vpop.f32.mrb[0].mxu0
        %v4479 = vpop.f32.mrb[0].mxu0
        %v4480 = vadd.f32 0.0, %v4479
        %v4481 = vpop.f32.mrb[0].mxu0
        %4482 = vmatprep.mubr.bf16.mxu0 %v4144
        %4483 = vmatmul.mubr.bf16.gmra.mrb[0].mxu0 %v4143
        %v4484 = vpop.f32.mrb[0].mxu0
        %v4485 = vadd.f32 0.0, %v4484
        %v4486 = vpop.f32.mrb[0].mxu0
        %v4487 = vpop.f32.mrb[0].mxu0
        %v4488 = vadd.f32 0.0, %v4487
        %v4489 = vpop.f32.mrb[0].mxu0
        %4490 = vmatprep.mubr.bf16.mxu0 %v4147
        %4491 = vmatmul.mubr.bf16.gmra.mrb[0].mxu0 %v4146
        %v4492 = vpop.f32.mrb[0].mxu0
        %v4493 = vadd.f32 0.0, %v4492
        %v4494 = vpop.f32.mrb[0].mxu0
        %v4495 = vpop.f32.mrb[0].mxu0
        %v4496 = vadd.f32 0.0, %v4495
        %v4497 = vpop.f32.mrb[0].mxu0
        %4498 = vmatprep.mubr.bf16.mxu0 %v4150
        %4499 = vmatmul.mubr.bf16.gmra.mrb[0].mxu0 %v4149
        %v4500 = vpop.f32.mrb[0].mxu0
        %v4501 = vadd.f32 0.0, %v4500
        %v4502 = vpop.f32.mrb[0].mxu0
        %v4503 = vpop.f32.mrb[0].mxu0
        %v4504 = vadd.f32 0.0, %v4503
        %v4505 = vpop.f32.mrb[0].mxu0
        %4506 = vmatprep.mubr.bf16.mxu0 %v4153
        %4507 = vmatmul.mubr.bf16.gmra.mrb[0].mxu0 %v4152
        %v4508 = vpop.f32.mrb[0].mxu0
        %v4509 = vadd.f32 0.0, %v4508
        %v4510 = vpop.f32.mrb[0].mxu0
        %v4511 = vpop.f32.mrb[0].mxu0
        %v4512 = vadd.f32 0.0, %v4511
        %v4513 = vpop.f32.mrb[0].mxu0
        %4514 = vmatprep.mubr.bf16.mxu0 %v4156
        %4515 = vmatmul.mubr.bf16.gmra.mrb[0].mxu0 %v4155
        %v4516 = vpop.f32.mrb[0].mxu0
        %v4517 = vadd.f32 0.0, %v4516
        %v4518 = vpop.f32.mrb[0].mxu0
        %v4519 = vpop.f32.mrb[0].mxu0
        %v4520 = vadd.f32 0.0, %v4519
        %v4521 = vpop.f32.mrb[0].mxu0
        %4522 = vmatprep.mubr.bf16.mxu0 %v4159
        %4523 = vmatmul.mubr.bf16.gmra.mrb[0].mxu0 %v4158
        %v4524 = vpop.f32.mrb[0].mxu0
        %v4525 = vadd.f32 0.0, %v4524
        %v4526 = vpop.f32.mrb[0].mxu0
        %v4527 = vpop.f32.mrb[0].mxu0
        %v4528 = vadd.f32 0.0, %v4527
        %v4529 = vpop.f32.mrb[0].mxu0
        %4530 = vmatprep.mubr.bf16.mxu0 %v4162
        %4531 = vmatmul.mubr.bf16.gmra.mrb[0].mxu0 %v4161
        %v4532 = vpop.f32.mrb[0].mxu0
        %v4533 = vadd.f32 0.0, %v4532
        %v4534 = vpop.f32.mrb[0].mxu0
        %v4535 = vpop.f32.mrb[0].mxu0
        %v4536 = vadd.f32 0.0, %v4535
        %v4537 = vpop.f32.mrb[0].mxu0
        %4538 = vdwg.mxu0
        %4539 = vmatprep.subr.bf16.mxu0 0
        %4540 = vmatpush1.bf16.msra.mxu0 %v4288
        %4541 = vmatprep.subr.bf16.mxu0 0
        %4542 = vmatpush1.bf16.msra.mxu0 %v4289
        %4543 = vmatprep.subr.bf16.mxu0 0
        %4544 = vmatpush1.bf16.msra.mxu0 0
        %4545 = vmatprep.subr.bf16.mxu0 0
        %4546 = vmatpush1.bf16.msra.mxu0 0
        %4547 = vmatprep.subr.bf16.mxu0 0
        %4548 = vmatpush1.bf16.msra.mxu0 0
        %4549 = vmatprep.subr.bf16.mxu0 0
        %4550 = vmatpush1.bf16.msra.mxu0 0
        %4551 = vmatprep.subr.bf16.mxu0 0
        %4552 = vmatpush1.bf16.msra.mxu0 0
        %4553 = vmatprep.subr.bf16.mxu0 0
        %4554 = vmatpush1.bf16.msra.mxu0 0
        %4555 = vmatprep.subr.bf16.mxu0 0
        %4556 = vmatpush1.bf16.msra.mxu0 0
        %4557 = vmatprep.subr.bf16.mxu0 0
        %4558 = vmatpush1.bf16.msra.mxu0 0
        %4559 = vmatprep.subr.bf16.mxu0 0
        %4560 = vmatpush1.bf16.msra.mxu0 0
        %4561 = vmatprep.subr.bf16.mxu0 0
        %4562 = vmatpush1.bf16.msra.mxu0 0
        %4563 = vmatprep.subr.bf16.mxu0 0
        %4564 = vmatpush1.bf16.msra.mxu0 0
        %4565 = vmatprep.subr.bf16.mxu0 0
        %4566 = vmatpush1.bf16.msra.mxu0 0
        %4567 = vmatprep.subr.bf16.mxu0 0
        %4568 = vmatpush1.bf16.msra.mxu0 0
        %4569 = vmatprep.subr.bf16.mxu0 0
        %4570 = vmatpush1.bf16.msra.mxu0 0
        %4571 = vmatprep.mubr.bf16.mxu0 0
        %4572 = vmatmul.mubr.bf16.gmra.mrb[0].mxu0 %v4309
        %v4573 = vpop.f32.mrb[0].mxu0
        %v4574 = vadd.f32 %v4397, %v4573
        %v4575 = vpop.f32.mrb[0].mxu0
        %v4576 = vpop.f32.mrb[0].mxu0
        %v4577 = vadd.f32 %v4400, %v4576
        %v4578 = vpop.f32.mrb[0].mxu0
        %4579 = vmatprep.mubr.bf16.mxu0 0
        %4580 = vmatmul.mubr.bf16.gmra.mrb[0].mxu0 %v4312
        %v4581 = vpop.f32.mrb[0].mxu0
        %v4582 = vadd.f32 %v4405, %v4581
        %v4583 = vpop.f32.mrb[0].mxu0
        %v4584 = vpop.f32.mrb[0].mxu0
        %v4585 = vadd.f32 %v4408, %v4584
        %v4586 = vpop.f32.mrb[0].mxu0
        %4587 = vmatprep.mubr.bf16.mxu0 0
        %4588 = vmatmul.mubr.bf16.gmra.mrb[0].mxu0 %v4315
        %v4589 = vpop.f32.mrb[0].mxu0
        %v4590 = vadd.f32 %v4413, %v4589
        %v4591 = vpop.f32.mrb[0].mxu0
        %v4592 = vpop.f32.mrb[0].mxu0
        %v4593 = vadd.f32 %v4416, %v4592
        %v4594 = vpop.f32.mrb[0].mxu0
        %4595 = vmatprep.mubr.bf16.mxu0 0
        %4596 = vmatmul.mubr.bf16.gmra.mrb[0].mxu0 %v4318
        %v4597 = vpop.f32.mrb[0].mxu0
        %v4598 = vadd.f32 %v4421, %v4597
        %v4599 = vpop.f32.mrb[0].mxu0
        %v4600 = vpop.f32.mrb[0].mxu0
        %v4601 = vadd.f32 %v4424, %v4600
        %v4602 = vpop.f32.mrb[0].mxu0
        %4603 = vmatprep.mubr.bf16.mxu0 0
        %4604 = vmatmul.mubr.bf16.gmra.mrb[0].mxu0 %v4321
        %v4605 = vpop.f32.mrb[0].mxu0
        %v4606 = vadd.f32 %v4429, %v4605
        %v4607 = vpop.f32.mrb[0].mxu0
        %v4608 = vpop.f32.mrb[0].mxu0
        %v4609 = vadd.f32 %v4432, %v4608
        %v4610 = vpop.f32.mrb[0].mxu0
        %4611 = vmatprep.mubr.bf16.mxu0 0
        %4612 = vmatmul.mubr.bf16.gmra.mrb[0].mxu0 %v4324
        %v4613 = vpop.f32.mrb[0].mxu0
        %v4614 = vadd.f32 %v4437, %v4613
        %v4615 = vpop.f32.mrb[0].mxu0
        %v4616 = vpop.f32.mrb[0].mxu0
        %v4617 = vadd.f32 %v4440, %v4616
        %v4618 = vpop.f32.mrb[0].mxu0
        %4619 = vmatprep.mubr.bf16.mxu0 0
        %4620 = vmatmul.mubr.bf16.gmra.mrb[0].mxu0 %v4327
        %v4621 = vpop.f32.mrb[0].mxu0
        %v4622 = vadd.f32 %v4445, %v4621
        %v4623 = vpop.f32.mrb[0].mxu0
        %v4624 = vpop.f32.mrb[0].mxu0
        %v4625 = vadd.f32 %v4448, %v4624
        %v4626 = vpop.f32.mrb[0].mxu0
        %4627 = vmatprep.mubr.bf16.mxu0 0
        %4628 = vmatmul.mubr.bf16.gmra.mrb[0].mxu0 %v4330
        %v4629 = vpop.f32.mrb[0].mxu0
        %v4630 = vadd.f32 %v4453, %v4629
        %v4631 = vpop.f32.mrb[0].mxu0
        %v4632 = vpop.f32.mrb[0].mxu0
        %v4633 = vadd.f32 %v4456, %v4632
        %v4634 = vpop.f32.mrb[0].mxu0
        %4635 = vmatprep.mubr.bf16.mxu0 0
        %4636 = vmatmul.mubr.bf16.gmra.mrb[0].mxu0 %v4333
        %v4637 = vpop.f32.mrb[0].mxu0
        %v4638 = vadd.f32 %v4461, %v4637
        %v4639 = vpop.f32.mrb[0].mxu0
        %v4640 = vpop.f32.mrb[0].mxu0
        %v4641 = vadd.f32 %v4464, %v4640
        %v4642 = vpop.f32.mrb[0].mxu0
        %4643 = vmatprep.mubr.bf16.mxu0 0
        %4644 = vmatmul.mubr.bf16.gmra.mrb[0].mxu0 %v4336
        %v4645 = vpop.f32.mrb[0].mxu0
        %v4646 = vadd.f32 %v4469, %v4645
        %v4647 = vpop.f32.mrb[0].mxu0
        %v4648 = vpop.f32.mrb[0].mxu0
        %v4649 = vadd.f32 %v4472, %v4648
        %v4650 = vpop.f32.mrb[0].mxu0
        %4651 = vmatprep.mubr.bf16.mxu0 0
        %4652 = vmatmul.mubr.bf16.gmra.mrb[0].mxu0 %v4339
        %v4653 = vpop.f32.mrb[0].mxu0
        %v4654 = vadd.f32 %v4477, %v4653
        %v4655 = vpop.f32.mrb[0].mxu0
        %v4656 = vpop.f32.mrb[0].mxu0
        %v4657 = vadd.f32 %v4480, %v4656
        %v4658 = vpop.f32.mrb[0].mxu0
        %4659 = vmatprep.mubr.bf16.mxu0 0
        %4660 = vmatmul.mubr.bf16.gmra.mrb[0].mxu0 %v4342
        %v4661 = vpop.f32.mrb[0].mxu0
        %v4662 = vadd.f32 %v4485, %v4661
        %v4663 = vpop.f32.mrb[0].mxu0
        %v4664 = vpop.f32.mrb[0].mxu0
        %v4665 = vadd.f32 %v4488, %v4664
        %v4666 = vpop.f32.mrb[0].mxu0
        %4667 = vmatprep.mubr.bf16.mxu0 0
        %4668 = vmatmul.mubr.bf16.gmra.mrb[0].mxu0 %v4345
        %v4669 = vpop.f32.mrb[0].mxu0
        %v4670 = vadd.f32 %v4493, %v4669
        %v4671 = vpop.f32.mrb[0].mxu0
        %v4672 = vpop.f32.mrb[0].mxu0
        %v4673 = vadd.f32 %v4496, %v4672
        %v4674 = vpop.f32.mrb[0].mxu0
        %4675 = vmatprep.mubr.bf16.mxu0 0
        %4676 = vmatmul.mubr.bf16.gmra.mrb[0].mxu0 %v4348
        %v4677 = vpop.f32.mrb[0].mxu0
        %v4678 = vadd.f32 %v4501, %v4677
        %v4679 = vpop.f32.mrb[0].mxu0
        %v4680 = vpop.f32.mrb[0].mxu0
        %v4681 = vadd.f32 %v4504, %v4680
        %v4682 = vpop.f32.mrb[0].mxu0
        %4683 = vmatprep.mubr.bf16.mxu0 0
        %4684 = vmatmul.mubr.bf16.gmra.mrb[0].mxu0 %v4351
        %v4685 = vpop.f32.mrb[0].mxu0
        %v4686 = vadd.f32 %v4509, %v4685
        %v4687 = vpop.f32.mrb[0].mxu0
        %v4688 = vpop.f32.mrb[0].mxu0
        %v4689 = vadd.f32 %v4512, %v4688
        %v4690 = vpop.f32.mrb[0].mxu0
        %4691 = vmatprep.mubr.bf16.mxu0 0
        %4692 = vmatmul.mubr.bf16.gmra.mrb[0].mxu0 %v4354
        %v4693 = vpop.f32.mrb[0].mxu0
        %v4694 = vadd.f32 %v4517, %v4693
        %v4695 = vpop.f32.mrb[0].mxu0
        %v4696 = vpop.f32.mrb[0].mxu0
        %v4697 = vadd.f32 %v4520, %v4696
        %v4698 = vpop.f32.mrb[0].mxu0
        %4699 = vmatprep.mubr.bf16.mxu0 0
        %4700 = vmatmul.mubr.bf16.gmra.mrb[0].mxu0 %v4357
        %v4701 = vpop.f32.mrb[0].mxu0
        %v4702 = vadd.f32 %v4525, %v4701
        %v4703 = vpop.f32.mrb[0].mxu0
        %v4704 = vpop.f32.mrb[0].mxu0
        %v4705 = vadd.f32 %v4528, %v4704
        %v4706 = vpop.f32.mrb[0].mxu0
        %4707 = vmatprep.mubr.bf16.mxu0 0
        %4708 = vmatmul.mubr.bf16.gmra.mrb[0].mxu0 %v4360
        %v4709 = vpop.f32.mrb[0].mxu0
        %v4710 = vadd.f32 %v4533, %v4709
        %v4711 = vpop.f32.mrb[0].mxu0
        %v4712 = vpop.f32.mrb[0].mxu0
        %v4713 = vadd.f32 %v4536, %v4712
        %v4714 = vpop.f32.mrb[0].mxu0
        %4715 = vdwg.mxu0
        %v4716 = vld [vmem:[%s5] sm:$0x1]
        %v4718 = vlaneseq
        %v4719 = vshrl.u32 %v4718, 7
        %v4720 = vsub.s32 0, %v4719
        %v4721 = vrot.slane %v4716, %v4720
        %v4723 = vmul.f32 %v4574, %v4721
        %v4724 = vmul.f32 %v4577, %v4721
        %v4725 = vmul.f32 %v4582, %v4721
        %v4726 = vmul.f32 %v4585, %v4721
        %v4727 = vmul.f32 %v4590, %v4721
        %v4728 = vmul.f32 %v4593, %v4721
        %v4729 = vmul.f32 %v4598, %v4721
        %v4730 = vmul.f32 %v4601, %v4721
        %v4731 = vmul.f32 %v4606, %v4721
        %v4732 = vmul.f32 %v4609, %v4721
        %v4733 = vmul.f32 %v4614, %v4721
        %v4734 = vmul.f32 %v4617, %v4721
        %v4735 = vmul.f32 %v4622, %v4721
        %v4736 = vmul.f32 %v4625, %v4721
        %v4737 = vmul.f32 %v4630, %v4721
        %v4738 = vmul.f32 %v4633, %v4721
        %v4739 = vmul.f32 %v4638, %v4721
        %v4740 = vmul.f32 %v4641, %v4721
        %v4741 = vmul.f32 %v4646, %v4721
        %v4742 = vmul.f32 %v4649, %v4721
        %v4743 = vmul.f32 %v4654, %v4721
        %v4744 = vmul.f32 %v4657, %v4721
        %v4745 = vmul.f32 %v4662, %v4721
        %v4746 = vmul.f32 %v4665, %v4721
        %v4747 = vmul.f32 %v4670, %v4721
        %v4748 = vmul.f32 %v4673, %v4721
        %v4749 = vmul.f32 %v4678, %v4721
        %v4750 = vmul.f32 %v4681, %v4721
        %v4751 = vmul.f32 %v4686, %v4721
        %v4752 = vmul.f32 %v4689, %v4721
        %v4753 = vmul.f32 %v4694, %v4721
        %v4754 = vmul.f32 %v4697, %v4721
        %v4755 = vmul.f32 %v4702, %v4721
        %v4756 = vmul.f32 %v4705, %v4721
        %v4757 = vmul.f32 %v4710, %v4721
        %v4758 = vmul.f32 %v4713, %v4721
        %v4759 = vld [vmem:[%s6] sm:$0x1]
        %v4761 = vlaneseq
        %v4762 = vshrl.u32 %v4761, 7
        %v4763 = vsub.s32 0, %v4762
        %v4764 = vrot.slane %v4759, %v4763
        %v4766 = vadd.f32 %v4723, %v4764
        %v4767 = vadd.f32 %v4724, %v4764
        %v4768 = vadd.f32 %v4725, %v4764
        %v4769 = vadd.f32 %v4726, %v4764
        %v4770 = vadd.f32 %v4727, %v4764
        %v4771 = vadd.f32 %v4728, %v4764
        %v4772 = vadd.f32 %v4729, %v4764
        %v4773 = vadd.f32 %v4730, %v4764
        %v4774 = vadd.f32 %v4731, %v4764
        %v4775 = vadd.f32 %v4732, %v4764
        %v4776 = vadd.f32 %v4733, %v4764
        %v4777 = vadd.f32 %v4734, %v4764
        %v4778 = vadd.f32 %v4735, %v4764
        %v4779 = vadd.f32 %v4736, %v4764
        %v4780 = vadd.f32 %v4737, %v4764
        %v4781 = vadd.f32 %v4738, %v4764
        %v4782 = vadd.f32 %v4739, %v4764
        %v4783 = vadd.f32 %v4740, %v4764
        %v4784 = vadd.f32 %v4741, %v4764
        %v4785 = vadd.f32 %v4742, %v4764
        %v4786 = vadd.f32 %v4743, %v4764
        %v4787 = vadd.f32 %v4744, %v4764
        %v4788 = vadd.f32 %v4745, %v4764
        %v4789 = vadd.f32 %v4746, %v4764
        %v4790 = vadd.f32 %v4747, %v4764
        %v4791 = vadd.f32 %v4748, %v4764
        %v4792 = vadd.f32 %v4749, %v4764
        %v4793 = vadd.f32 %v4750, %v4764
        %v4794 = vadd.f32 %v4751, %v4764
        %v4795 = vadd.f32 %v4752, %v4764
        %v4796 = vadd.f32 %v4753, %v4764
        %v4797 = vadd.f32 %v4754, %v4764
        %v4798 = vadd.f32 %v4755, %v4764
        %v4799 = vadd.f32 %v4756, %v4764
        %v4800 = vadd.f32 %v4757, %v4764
        %v4801 = vadd.f32 %v4758, %v4764
        %v4802 = vmul.f32 %v4766, 0.5
        %v4803 = vmul.f32 %v4767, 0.5
        %v4804 = vmul.f32 %v4768, 0.5
        %v4805 = vmul.f32 %v4769, 0.5
        %v4806 = vmul.f32 %v4770, 0.5
        %v4807 = vmul.f32 %v4771, 0.5
        %v4808 = vmul.f32 %v4772, 0.5
        %v4809 = vmul.f32 %v4773, 0.5
        %v4810 = vmul.f32 %v4774, 0.5
        %v4811 = vmul.f32 %v4775, 0.5
        %v4812 = vmul.f32 %v4776, 0.5
        %v4813 = vmul.f32 %v4777, 0.5
        %v4814 = vmul.f32 %v4778, 0.5
        %v4815 = vmul.f32 %v4779, 0.5
        %v4816 = vmul.f32 %v4780, 0.5
        %v4817 = vmul.f32 %v4781, 0.5
        %v4818 = vmul.f32 %v4782, 0.5
        %v4819 = vmul.f32 %v4783, 0.5
        %v4820 = vmul.f32 %v4784, 0.5
        %v4821 = vmul.f32 %v4785, 0.5
        %v4822 = vmul.f32 %v4786, 0.5
        %v4823 = vmul.f32 %v4787, 0.5
        %v4824 = vmul.f32 %v4788, 0.5
        %v4825 = vmul.f32 %v4789, 0.5
        %v4826 = vmul.f32 %v4790, 0.5
        %v4827 = vmul.f32 %v4791, 0.5
        %v4828 = vmul.f32 %v4792, 0.5
        %v4829 = vmul.f32 %v4793, 0.5
        %v4830 = vmul.f32 %v4794, 0.5
        %v4831 = vmul.f32 %v4795, 0.5
        %v4832 = vmul.f32 %v4796, 0.5
        %v4833 = vmul.f32 %v4797, 0.5
        %v4834 = vmul.f32 %v4798, 0.5
        %v4835 = vmul.f32 %v4799, 0.5
        %v4836 = vmul.f32 %v4800, 0.5
        %v4837 = vmul.f32 %v4801, 0.5
        %v4838 = vmul.f32 %v4766, 0.70710677
        %v4839 = vmul.f32 %v4767, 0.70710677
        %v4840 = vmul.f32 %v4768, 0.70710677
        %v4841 = vmul.f32 %v4769, 0.70710677
        %v4842 = vmul.f32 %v4770, 0.70710677
        %v4843 = vmul.f32 %v4771, 0.70710677
        %v4844 = vmul.f32 %v4772, 0.70710677
        %v4845 = vmul.f32 %v4773, 0.70710677
        %v4846 = vmul.f32 %v4774, 0.70710677
        %v4847 = vmul.f32 %v4775, 0.70710677
        %v4848 = vmul.f32 %v4776, 0.70710677
        %v4849 = vmul.f32 %v4777, 0.70710677
        %v4850 = vmul.f32 %v4778, 0.70710677
        %v4851 = vmul.f32 %v4779, 0.70710677
        %v4852 = vmul.f32 %v4780, 0.70710677
        %v4853 = vmul.f32 %v4781, 0.70710677
        %v4854 = vmul.f32 %v4782, 0.70710677
        %v4855 = vmul.f32 %v4783, 0.70710677
        %v4856 = vmul.f32 %v4784, 0.70710677
        %v4857 = vmul.f32 %v4785, 0.70710677
        %v4858 = vmul.f32 %v4786, 0.70710677
        %v4859 = vmul.f32 %v4787, 0.70710677
        %v4860 = vmul.f32 %v4788, 0.70710677
        %v4861 = vmul.f32 %v4789, 0.70710677
        %v4862 = vmul.f32 %v4790, 0.70710677
        %v4863 = vmul.f32 %v4791, 0.70710677
        %v4864 = vmul.f32 %v4792, 0.70710677
        %v4865 = vmul.f32 %v4793, 0.70710677
        %v4866 = vmul.f32 %v4794, 0.70710677
        %v4867 = vmul.f32 %v4795, 0.70710677
        %v4868 = vmul.f32 %v4796, 0.70710677
        %v4869 = vmul.f32 %v4797, 0.70710677
        %v4870 = vmul.f32 %v4798, 0.70710677
        %v4871 = vmul.f32 %v4799, 0.70710677
        %v4872 = vmul.f32 %v4800, 0.70710677
        %v4873 = vmul.f32 %v4801, 0.70710677
        %v4874 = verf.f32.pop %v4838
        %v4875 = verf.f32.pop %v4839
        %v4876 = verf.f32.pop %v4840
        %v4877 = verf.f32.pop %v4841
        %v4878 = verf.f32.pop %v4842
        %v4879 = verf.f32.pop %v4843
        %v4880 = verf.f32.pop %v4844
        %v4881 = verf.f32.pop %v4845
        %v4882 = verf.f32.pop %v4846
        %v4883 = verf.f32.pop %v4847
        %v4884 = verf.f32.pop %v4848
        %v4885 = verf.f32.pop %v4849
        %v4886 = verf.f32.pop %v4850
        %v4887 = verf.f32.pop %v4851
        %v4888 = verf.f32.pop %v4852
        %v4889 = verf.f32.pop %v4853
        %v4890 = verf.f32.pop %v4854
        %v4891 = verf.f32.pop %v4855
        %v4892 = verf.f32.pop %v4856
        %v4893 = verf.f32.pop %v4857
        %v4894 = verf.f32.pop %v4858
        %v4895 = verf.f32.pop %v4859
        %v4896 = verf.f32.pop %v4860
        %v4897 = verf.f32.pop %v4861
        %v4898 = verf.f32.pop %v4862
        %v4899 = verf.f32.pop %v4863
        %v4900 = verf.f32.pop %v4864
        %v4901 = verf.f32.pop %v4865
        %v4902 = verf.f32.pop %v4866
        %v4903 = verf.f32.pop %v4867
        %v4904 = verf.f32.pop %v4868
        %v4905 = verf.f32.pop %v4869
        %v4906 = verf.f32.pop %v4870
        %v4907 = verf.f32.pop %v4871
        %v4908 = verf.f32.pop %v4872
        %v4909 = verf.f32.pop %v4873
        %v4910 = vadd.f32 %v4874, 1.0
        %v4911 = vadd.f32 %v4875, 1.0
        %v4912 = vadd.f32 %v4876, 1.0
        %v4913 = vadd.f32 %v4877, 1.0
        %v4914 = vadd.f32 %v4878, 1.0
        %v4915 = vadd.f32 %v4879, 1.0
        %v4916 = vadd.f32 %v4880, 1.0
        %v4917 = vadd.f32 %v4881, 1.0
        %v4918 = vadd.f32 %v4882, 1.0
        %v4919 = vadd.f32 %v4883, 1.0
        %v4920 = vadd.f32 %v4884, 1.0
        %v4921 = vadd.f32 %v4885, 1.0
        %v4922 = vadd.f32 %v4886, 1.0
        %v4923 = vadd.f32 %v4887, 1.0
        %v4924 = vadd.f32 %v4888, 1.0
        %v4925 = vadd.f32 %v4889, 1.0
        %v4926 = vadd.f32 %v4890, 1.0
        %v4927 = vadd.f32 %v4891, 1.0
        %v4928 = vadd.f32 %v4892, 1.0
        %v4929 = vadd.f32 %v4893, 1.0
        %v4930 = vadd.f32 %v4894, 1.0
        %v4931 = vadd.f32 %v4895, 1.0
        %v4932 = vadd.f32 %v4896, 1.0
        %v4933 = vadd.f32 %v4897, 1.0
        %v4934 = vadd.f32 %v4898, 1.0
        %v4935 = vadd.f32 %v4899, 1.0
        %v4936 = vadd.f32 %v4900, 1.0
        %v4937 = vadd.f32 %v4901, 1.0
        %v4938 = vadd.f32 %v4902, 1.0
        %v4939 = vadd.f32 %v4903, 1.0
        %v4940 = vadd.f32 %v4904, 1.0
        %v4941 = vadd.f32 %v4905, 1.0
        %v4942 = vadd.f32 %v4906, 1.0
        %v4943 = vadd.f32 %v4907, 1.0
        %v4944 = vadd.f32 %v4908, 1.0
        %v4945 = vadd.f32 %v4909, 1.0
        %v4946 = vmul.f32 %v4802, %v4910
        %v4947 = vmul.f32 %v4803, %v4911
        %v4948 = vmul.f32 %v4804, %v4912
        %v4949 = vmul.f32 %v4805, %v4913
        %v4950 = vmul.f32 %v4806, %v4914
        %v4951 = vmul.f32 %v4807, %v4915
        %v4952 = vmul.f32 %v4808, %v4916
        %v4953 = vmul.f32 %v4809, %v4917
        %v4954 = vmul.f32 %v4810, %v4918
        %v4955 = vmul.f32 %v4811, %v4919
        %v4956 = vmul.f32 %v4812, %v4920
        %v4957 = vmul.f32 %v4813, %v4921
        %v4958 = vmul.f32 %v4814, %v4922
        %v4959 = vmul.f32 %v4815, %v4923
        %v4960 = vmul.f32 %v4816, %v4924
        %v4961 = vmul.f32 %v4817, %v4925
        %v4962 = vmul.f32 %v4818, %v4926
        %v4963 = vmul.f32 %v4819, %v4927
        %v4964 = vmul.f32 %v4820, %v4928
        %v4965 = vmul.f32 %v4821, %v4929
        %v4966 = vmul.f32 %v4822, %v4930
        %v4967 = vmul.f32 %v4823, %v4931
        %v4968 = vmul.f32 %v4824, %v4932
        %v4969 = vmul.f32 %v4825, %v4933
        %v4970 = vmul.f32 %v4826, %v4934
        %v4971 = vmul.f32 %v4827, %v4935
        %v4972 = vmul.f32 %v4828, %v4936
        %v4973 = vmul.f32 %v4829, %v4937
        %v4974 = vmul.f32 %v4830, %v4938
        %v4975 = vmul.f32 %v4831, %v4939
        %v4976 = vmul.f32 %v4832, %v4940
        %v4977 = vmul.f32 %v4833, %v4941
        %v4978 = vmul.f32 %v4834, %v4942
        %v4979 = vmul.f32 %v4835, %v4943
        %v4980 = vmul.f32 %v4836, %v4944
        %v4981 = vmul.f32 %v4837, %v4945
        %v5018 = vcombine.high %v4946, %v4946
        %v5020 = vunpack.c.l.s4 1983009808
        %v5021 = vunpack.c.0.s8 %v5020
        %v5022 = vlaneseq
        %v5023 = vshrl.u32 %v5022, 7
        %v5024 = vsub.s32 %v5021, %v5023
        %v5025 = vrot.slane %v4946, %v5024
        %v5027 = vunpack.c.l.s4 1983009808
        %v5028 = vunpack.c.0.s8 %v5027
        %v5029 = vlaneseq
        %v5030 = vshrl.u32 %v5029, 7
        %v5031 = vsub.s32 %v5028, %v5030
        %v5032 = vrot.slane %v5018, %v5031
        %v5033 = vcombine.high %v5025, %v5025
        %v5034 = vcombine.high %v5032, %v5032
        %v5035 = vcombine.high %v4947, %v4947
        %v5037 = vunpack.c.l.s4 1983009808
        %v5038 = vunpack.c.0.s8 %v5037
        %v5039 = vlaneseq
        %v5040 = vshrl.u32 %v5039, 7
        %v5041 = vsub.s32 %v5038, %v5040
        %v5042 = vrot.slane %v4947, %v5041
        %v5044 = vunpack.c.l.s4 1983009808
        %v5045 = vunpack.c.0.s8 %v5044
        %v5046 = vlaneseq
        %v5047 = vshrl.u32 %v5046, 7
        %v5048 = vsub.s32 %v5045, %v5047
        %v5049 = vrot.slane %v5035, %v5048
        %v5050 = vcombine.high %v5042, %v5042
        %v5051 = vcombine.high %v5049, %v5049
        %v5052 = vcombine.high %v4948, %v4948
        %v5054 = vunpack.c.l.s4 1983009808
        %v5055 = vunpack.c.0.s8 %v5054
        %v5056 = vlaneseq
        %v5057 = vshrl.u32 %v5056, 7
        %v5058 = vsub.s32 %v5055, %v5057
        %v5059 = vrot.slane %v4948, %v5058
        %v5061 = vunpack.c.l.s4 1983009808
        %v5062 = vunpack.c.0.s8 %v5061
        %v5063 = vlaneseq
        %v5064 = vshrl.u32 %v5063, 7
        %v5065 = vsub.s32 %v5062, %v5064
        %v5066 = vrot.slane %v5052, %v5065
        %v5067 = vcombine.high %v5059, %v5059
        %v5068 = vcombine.high %v5066, %v5066
        %v5069 = vcombine.high %v4949, %v4949
        %v5071 = vunpack.c.l.s4 1983009808
        %v5072 = vunpack.c.0.s8 %v5071
        %v5073 = vlaneseq
        %v5074 = vshrl.u32 %v5073, 7
        %v5075 = vsub.s32 %v5072, %v5074
        %v5076 = vrot.slane %v4949, %v5075
        %v5078 = vunpack.c.l.s4 1983009808
        %v5079 = vunpack.c.0.s8 %v5078
        %v5080 = vlaneseq
        %v5081 = vshrl.u32 %v5080, 7
        %v5082 = vsub.s32 %v5079, %v5081
        %v5083 = vrot.slane %v5069, %v5082
        %v5084 = vcombine.high %v5076, %v5076
        %v5085 = vcombine.high %v5083, %v5083
        %v5086 = vcombine.high %v4950, %v4950
        %v5088 = vunpack.c.l.s4 1983009808
        %v5089 = vunpack.c.0.s8 %v5088
        %v5090 = vlaneseq
        %v5091 = vshrl.u32 %v5090, 7
        %v5092 = vsub.s32 %v5089, %v5091
        %v5093 = vrot.slane %v4950, %v5092
        %v5095 = vunpack.c.l.s4 1983009808
        %v5096 = vunpack.c.0.s8 %v5095
        %v5097 = vlaneseq
        %v5098 = vshrl.u32 %v5097, 7
        %v5099 = vsub.s32 %v5096, %v5098
        %v5100 = vrot.slane %v5086, %v5099
        %v5101 = vcombine.high %v5100, %v5100
        %v5102 = vcombine.high %v4951, %v4951
        %v5104 = vunpack.c.l.s4 1983009808
        %v5105 = vunpack.c.0.s8 %v5104
        %v5106 = vlaneseq
        %v5107 = vshrl.u32 %v5106, 7
        %v5108 = vsub.s32 %v5105, %v5107
        %v5109 = vrot.slane %v4951, %v5108
        %v5111 = vunpack.c.l.s4 1983009808
        %v5112 = vunpack.c.0.s8 %v5111
        %v5113 = vlaneseq
        %v5114 = vshrl.u32 %v5113, 7
        %v5115 = vsub.s32 %v5112, %v5114
        %v5116 = vrot.slane %v5102, %v5115
        %v5117 = vcombine.high %v5109, %v5109
        %v5118 = vcombine.high %v5116, %v5116
        %v5119 = vcombine.high %v4952, %v4952
        %v5121 = vunpack.c.l.s4 1983009808
        %v5122 = vunpack.c.0.s8 %v5121
        %v5123 = vlaneseq
        %v5124 = vshrl.u32 %v5123, 7
        %v5125 = vsub.s32 %v5122, %v5124
        %v5126 = vrot.slane %v4952, %v5125
        %v5128 = vunpack.c.l.s4 1983009808
        %v5129 = vunpack.c.0.s8 %v5128
        %v5130 = vlaneseq
        %v5131 = vshrl.u32 %v5130, 7
        %v5132 = vsub.s32 %v5129, %v5131
        %v5133 = vrot.slane %v5119, %v5132
        %v5134 = vcombine.high %v5126, %v5126
        %v5135 = vcombine.high %v5133, %v5133
        %v5136 = vcombine.high %v4953, %v4953
        %v5138 = vunpack.c.l.s4 1983009808
        %v5139 = vunpack.c.0.s8 %v5138
        %v5140 = vlaneseq
        %v5141 = vshrl.u32 %v5140, 7
        %v5142 = vsub.s32 %v5139, %v5141
        %v5143 = vrot.slane %v4953, %v5142
        %v5145 = vunpack.c.l.s4 1983009808
        %v5146 = vunpack.c.0.s8 %v5145
        %v5147 = vlaneseq
        %v5148 = vshrl.u32 %v5147, 7
        %v5149 = vsub.s32 %v5146, %v5148
        %v5150 = vrot.slane %v5136, %v5149
        %v5151 = vcombine.high %v5143, %v5143
        %v5152 = vcombine.high %v5150, %v5150
        %v5153 = vcombine.high %v4954, %v4954
        %v5155 = vunpack.c.l.s4 1983009808
        %v5156 = vunpack.c.0.s8 %v5155
        %v5157 = vlaneseq
        %v5158 = vshrl.u32 %v5157, 7
        %v5159 = vsub.s32 %v5156, %v5158
        %v5160 = vrot.slane %v4954, %v5159
        %v5162 = vunpack.c.l.s4 1983009808
        %v5163 = vunpack.c.0.s8 %v5162
        %v5164 = vlaneseq
        %v5165 = vshrl.u32 %v5164, 7
        %v5166 = vsub.s32 %v5163, %v5165
        %v5167 = vrot.slane %v5153, %v5166
        %v5168 = vcombine.high %v5160, %v5160
        %v5169 = vcombine.high %v4955, %v4955
        %v5171 = vunpack.c.l.s4 1983009808
        %v5172 = vunpack.c.0.s8 %v5171
        %v5173 = vlaneseq
        %v5174 = vshrl.u32 %v5173, 7
        %v5175 = vsub.s32 %v5172, %v5174
        %v5176 = vrot.slane %v4955, %v5175
        %v5178 = vunpack.c.l.s4 1983009808
        %v5179 = vunpack.c.0.s8 %v5178
        %v5180 = vlaneseq
        %v5181 = vshrl.u32 %v5180, 7
        %v5182 = vsub.s32 %v5179, %v5181
        %v5183 = vrot.slane %v5169, %v5182
        %v5184 = vcombine.high %v5176, %v5176
        %v5185 = vcombine.high %v5183, %v5183
        %v5186 = vcombine.high %v4956, %v4956
        %v5188 = vunpack.c.l.s4 1983009808
        %v5189 = vunpack.c.0.s8 %v5188
        %v5190 = vlaneseq
        %v5191 = vshrl.u32 %v5190, 7
        %v5192 = vsub.s32 %v5189, %v5191
        %v5193 = vrot.slane %v4956, %v5192
        %v5195 = vunpack.c.l.s4 1983009808
        %v5196 = vunpack.c.0.s8 %v5195
        %v5197 = vlaneseq
        %v5198 = vshrl.u32 %v5197, 7
        %v5199 = vsub.s32 %v5196, %v5198
        %v5200 = vrot.slane %v5186, %v5199
        %v5201 = vcombine.high %v5193, %v5193
        %v5202 = vcombine.high %v5200, %v5200
        %v5203 = vcombine.high %v4957, %v4957
        %v5205 = vunpack.c.l.s4 1983009808
        %v5206 = vunpack.c.0.s8 %v5205
        %v5207 = vlaneseq
        %v5208 = vshrl.u32 %v5207, 7
        %v5209 = vsub.s32 %v5206, %v5208
        %v5210 = vrot.slane %v4957, %v5209
        %v5212 = vunpack.c.l.s4 1983009808
        %v5213 = vunpack.c.0.s8 %v5212
        %v5214 = vlaneseq
        %v5215 = vshrl.u32 %v5214, 7
        %v5216 = vsub.s32 %v5213, %v5215
        %v5217 = vrot.slane %v5203, %v5216
        %v5218 = vcombine.high %v5210, %v5210
        %v5219 = vcombine.high %v5217, %v5217
        %v5220 = vcombine.high %v4958, %v4958
        %v5222 = vunpack.c.l.s4 1983009808
        %v5223 = vunpack.c.0.s8 %v5222
        %v5224 = vlaneseq
        %v5225 = vshrl.u32 %v5224, 7
        %v5226 = vsub.s32 %v5223, %v5225
        %v5227 = vrot.slane %v4958, %v5226
        %v5229 = vunpack.c.l.s4 1983009808
        %v5230 = vunpack.c.0.s8 %v5229
        %v5231 = vlaneseq
        %v5232 = vshrl.u32 %v5231, 7
        %v5233 = vsub.s32 %v5230, %v5232
        %v5234 = vrot.slane %v5220, %v5233
        %v5235 = vcombine.high %v5227, %v5227
        %v5236 = vcombine.high %v5234, %v5234
        %v5237 = vcombine.high %v4959, %v4959
        %v5239 = vunpack.c.l.s4 1983009808
        %v5240 = vunpack.c.0.s8 %v5239
        %v5241 = vlaneseq
        %v5242 = vshrl.u32 %v5241, 7
        %v5243 = vsub.s32 %v5240, %v5242
        %v5244 = vrot.slane %v4959, %v5243
        %v5246 = vunpack.c.l.s4 1983009808
        %v5247 = vunpack.c.0.s8 %v5246
        %v5248 = vlaneseq
        %v5249 = vshrl.u32 %v5248, 7
        %v5250 = vsub.s32 %v5247, %v5249
        %v5251 = vrot.slane %v5237, %v5250
        %v5252 = vcombine.high %v5251, %v5251
        %v5253 = vcombine.high %v4960, %v4960
        %v5255 = vunpack.c.l.s4 1983009808
        %v5256 = vunpack.c.0.s8 %v5255
        %v5257 = vlaneseq
        %v5258 = vshrl.u32 %v5257, 7
        %v5259 = vsub.s32 %v5256, %v5258
        %v5260 = vrot.slane %v4960, %v5259
        %v5262 = vunpack.c.l.s4 1983009808
        %v5263 = vunpack.c.0.s8 %v5262
        %v5264 = vlaneseq
        %v5265 = vshrl.u32 %v5264, 7
        %v5266 = vsub.s32 %v5263, %v5265
        %v5267 = vrot.slane %v5253, %v5266
        %v5268 = vcombine.high %v5260, %v5260
        %v5269 = vcombine.high %v5267, %v5267
        %v5270 = vcombine.high %v4961, %v4961
        %v5272 = vunpack.c.l.s4 1983009808
        %v5273 = vunpack.c.0.s8 %v5272
        %v5274 = vlaneseq
        %v5275 = vshrl.u32 %v5274, 7
        %v5276 = vsub.s32 %v5273, %v5275
        %v5277 = vrot.slane %v4961, %v5276
        %v5279 = vunpack.c.l.s4 1983009808
        %v5280 = vunpack.c.0.s8 %v5279
        %v5281 = vlaneseq
        %v5282 = vshrl.u32 %v5281, 7
        %v5283 = vsub.s32 %v5280, %v5282
        %v5284 = vrot.slane %v5270, %v5283
        %v5285 = vcombine.high %v5277, %v5277
        %v5286 = vcombine.high %v5284, %v5284
        %v5287 = vcombine.high %v4962, %v4962
        %v5289 = vunpack.c.l.s4 1983009808
        %v5290 = vunpack.c.0.s8 %v5289
        %v5291 = vlaneseq
        %v5292 = vshrl.u32 %v5291, 7
        %v5293 = vsub.s32 %v5290, %v5292
        %v5294 = vrot.slane %v4962, %v5293
        %v5296 = vunpack.c.l.s4 1983009808
        %v5297 = vunpack.c.0.s8 %v5296
        %v5298 = vlaneseq
        %v5299 = vshrl.u32 %v5298, 7
        %v5300 = vsub.s32 %v5297, %v5299
        %v5301 = vrot.slane %v5287, %v5300
        %v5302 = vcombine.high %v5294, %v5294
        %v5303 = vcombine.high %v5301, %v5301
        %v5304 = vcombine.high %v4963, %v4963
        %v5306 = vunpack.c.l.s4 1983009808
        %v5307 = vunpack.c.0.s8 %v5306
        %v5308 = vlaneseq
        %v5309 = vshrl.u32 %v5308, 7
        %v5310 = vsub.s32 %v5307, %v5309
        %v5311 = vrot.slane %v4963, %v5310
        %v5313 = vunpack.c.l.s4 1983009808
        %v5314 = vunpack.c.0.s8 %v5313
        %v5315 = vlaneseq
        %v5316 = vshrl.u32 %v5315, 7
        %v5317 = vsub.s32 %v5314, %v5316
        %v5318 = vrot.slane %v5304, %v5317
        %v5319 = vcombine.high %v5311, %v5311
        %v5320 = vcombine.high %v4964, %v4964
        %v5322 = vunpack.c.l.s4 1983009808
        %v5323 = vunpack.c.0.s8 %v5322
        %v5324 = vlaneseq
        %v5325 = vshrl.u32 %v5324, 7
        %v5326 = vsub.s32 %v5323, %v5325
        %v5327 = vrot.slane %v4964, %v5326
        %v5329 = vunpack.c.l.s4 1983009808
        %v5330 = vunpack.c.0.s8 %v5329
        %v5331 = vlaneseq
        %v5332 = vshrl.u32 %v5331, 7
        %v5333 = vsub.s32 %v5330, %v5332
        %v5334 = vrot.slane %v5320, %v5333
        %v5335 = vcombine.high %v5327, %v5327
        %v5336 = vcombine.high %v5334, %v5334
        %v5337 = vcombine.high %v4965, %v4965
        %v5339 = vunpack.c.l.s4 1983009808
        %v5340 = vunpack.c.0.s8 %v5339
        %v5341 = vlaneseq
        %v5342 = vshrl.u32 %v5341, 7
        %v5343 = vsub.s32 %v5340, %v5342
        %v5344 = vrot.slane %v4965, %v5343
        %v5346 = vunpack.c.l.s4 1983009808
        %v5347 = vunpack.c.0.s8 %v5346
        %v5348 = vlaneseq
        %v5349 = vshrl.u32 %v5348, 7
        %v5350 = vsub.s32 %v5347, %v5349
        %v5351 = vrot.slane %v5337, %v5350
        %v5352 = vcombine.high %v5344, %v5344
        %v5353 = vcombine.high %v5351, %v5351
        %v5354 = vcombine.high %v4966, %v4966
        %v5356 = vunpack.c.l.s4 1983009808
        %v5357 = vunpack.c.0.s8 %v5356
        %v5358 = vlaneseq
        %v5359 = vshrl.u32 %v5358, 7
        %v5360 = vsub.s32 %v5357, %v5359
        %v5361 = vrot.slane %v4966, %v5360
        %v5363 = vunpack.c.l.s4 1983009808
        %v5364 = vunpack.c.0.s8 %v5363
        %v5365 = vlaneseq
        %v5366 = vshrl.u32 %v5365, 7
        %v5367 = vsub.s32 %v5364, %v5366
        %v5368 = vrot.slane %v5354, %v5367
        %v5369 = vcombine.high %v5361, %v5361
        %v5370 = vcombine.high %v5368, %v5368
        %v5371 = vcombine.high %v4967, %v4967
        %v5373 = vunpack.c.l.s4 1983009808
        %v5374 = vunpack.c.0.s8 %v5373
        %v5375 = vlaneseq
        %v5376 = vshrl.u32 %v5375, 7
        %v5377 = vsub.s32 %v5374, %v5376
        %v5378 = vrot.slane %v4967, %v5377
        %v5380 = vunpack.c.l.s4 1983009808
        %v5381 = vunpack.c.0.s8 %v5380
        %v5382 = vlaneseq
        %v5383 = vshrl.u32 %v5382, 7
        %v5384 = vsub.s32 %v5381, %v5383
        %v5385 = vrot.slane %v5371, %v5384
        %v5386 = vcombine.high %v5378, %v5378
        %v5387 = vcombine.high %v5385, %v5385
        %v5388 = vcombine.high %v4968, %v4968
        %v5390 = vunpack.c.l.s4 1983009808
        %v5391 = vunpack.c.0.s8 %v5390
        %v5392 = vlaneseq
        %v5393 = vshrl.u32 %v5392, 7
        %v5394 = vsub.s32 %v5391, %v5393
        %v5395 = vrot.slane %v4968, %v5394
        %v5397 = vunpack.c.l.s4 1983009808
        %v5398 = vunpack.c.0.s8 %v5397
        %v5399 = vlaneseq
        %v5400 = vshrl.u32 %v5399, 7
        %v5401 = vsub.s32 %v5398, %v5400
        %v5402 = vrot.slane %v5388, %v5401
        %v5403 = vcombine.high %v5402, %v5402
        %v5404 = vcombine.high %v4969, %v4969
        %v5406 = vunpack.c.l.s4 1983009808
        %v5407 = vunpack.c.0.s8 %v5406
        %v5408 = vlaneseq
        %v5409 = vshrl.u32 %v5408, 7
        %v5410 = vsub.s32 %v5407, %v5409
        %v5411 = vrot.slane %v4969, %v5410
        %v5413 = vunpack.c.l.s4 1983009808
        %v5414 = vunpack.c.0.s8 %v5413
        %v5415 = vlaneseq
        %v5416 = vshrl.u32 %v5415, 7
        %v5417 = vsub.s32 %v5414, %v5416
        %v5418 = vrot.slane %v5404, %v5417
        %v5419 = vcombine.high %v5411, %v5411
        %v5420 = vcombine.high %v5418, %v5418
        %v5421 = vcombine.high %v4970, %v4970
        %v5423 = vunpack.c.l.s4 1983009808
        %v5424 = vunpack.c.0.s8 %v5423
        %v5425 = vlaneseq
        %v5426 = vshrl.u32 %v5425, 7
        %v5427 = vsub.s32 %v5424, %v5426
        %v5428 = vrot.slane %v4970, %v5427
        %v5430 = vunpack.c.l.s4 1983009808
        %v5431 = vunpack.c.0.s8 %v5430
        %v5432 = vlaneseq
        %v5433 = vshrl.u32 %v5432, 7
        %v5434 = vsub.s32 %v5431, %v5433
        %v5435 = vrot.slane %v5421, %v5434
        %v5436 = vcombine.high %v5428, %v5428
        %v5437 = vcombine.high %v5435, %v5435
        %v5438 = vcombine.high %v4971, %v4971
        %v5440 = vunpack.c.l.s4 1983009808
        %v5441 = vunpack.c.0.s8 %v5440
        %v5442 = vlaneseq
        %v5443 = vshrl.u32 %v5442, 7
        %v5444 = vsub.s32 %v5441, %v5443
        %v5445 = vrot.slane %v4971, %v5444
        %v5447 = vunpack.c.l.s4 1983009808
        %v5448 = vunpack.c.0.s8 %v5447
        %v5449 = vlaneseq
        %v5450 = vshrl.u32 %v5449, 7
        %v5451 = vsub.s32 %v5448, %v5450
        %v5452 = vrot.slane %v5438, %v5451
        %v5453 = vcombine.high %v5445, %v5445
        %v5454 = vcombine.high %v5452, %v5452
        %v5455 = vcombine.high %v4972, %v4972
        %v5457 = vunpack.c.l.s4 1983009808
        %v5458 = vunpack.c.0.s8 %v5457
        %v5459 = vlaneseq
        %v5460 = vshrl.u32 %v5459, 7
        %v5461 = vsub.s32 %v5458, %v5460
        %v5462 = vrot.slane %v4972, %v5461
        %v5464 = vunpack.c.l.s4 1983009808
        %v5465 = vunpack.c.0.s8 %v5464
        %v5466 = vlaneseq
        %v5467 = vshrl.u32 %v5466, 7
        %v5468 = vsub.s32 %v5465, %v5467
        %v5469 = vrot.slane %v5455, %v5468
        %v5470 = vcombine.high %v5462, %v5462
        %v5471 = vcombine.high %v4973, %v4973
        %v5473 = vunpack.c.l.s4 1983009808
        %v5474 = vunpack.c.0.s8 %v5473
        %v5475 = vlaneseq
        %v5476 = vshrl.u32 %v5475, 7
        %v5477 = vsub.s32 %v5474, %v5476
        %v5478 = vrot.slane %v4973, %v5477
        %v5480 = vunpack.c.l.s4 1983009808
        %v5481 = vunpack.c.0.s8 %v5480
        %v5482 = vlaneseq
        %v5483 = vshrl.u32 %v5482, 7
        %v5484 = vsub.s32 %v5481, %v5483
        %v5485 = vrot.slane %v5471, %v5484
        %v5486 = vcombine.high %v5478, %v5478
        %v5487 = vcombine.high %v5485, %v5485
        %v5488 = vcombine.high %v4974, %v4974
        %v5490 = vunpack.c.l.s4 1983009808
        %v5491 = vunpack.c.0.s8 %v5490
        %v5492 = vlaneseq
        %v5493 = vshrl.u32 %v5492, 7
        %v5494 = vsub.s32 %v5491, %v5493
        %v5495 = vrot.slane %v4974, %v5494
        %v5497 = vunpack.c.l.s4 1983009808
        %v5498 = vunpack.c.0.s8 %v5497
        %v5499 = vlaneseq
        %v5500 = vshrl.u32 %v5499, 7
        %v5501 = vsub.s32 %v5498, %v5500
        %v5502 = vrot.slane %v5488, %v5501
        %v5503 = vcombine.high %v5495, %v5495
        %v5504 = vcombine.high %v5502, %v5502
        %v5505 = vcombine.high %v4975, %v4975
        %v5507 = vunpack.c.l.s4 1983009808
        %v5508 = vunpack.c.0.s8 %v5507
        %v5509 = vlaneseq
        %v5510 = vshrl.u32 %v5509, 7
        %v5511 = vsub.s32 %v5508, %v5510
        %v5512 = vrot.slane %v4975, %v5511
        %v5514 = vunpack.c.l.s4 1983009808
        %v5515 = vunpack.c.0.s8 %v5514
        %v5516 = vlaneseq
        %v5517 = vshrl.u32 %v5516, 7
        %v5518 = vsub.s32 %v5515, %v5517
        %v5519 = vrot.slane %v5505, %v5518
        %v5520 = vcombine.high %v5512, %v5512
        %v5521 = vcombine.high %v5519, %v5519
        %v5522 = vcombine.high %v4976, %v4976
        %v5524 = vunpack.c.l.s4 1983009808
        %v5525 = vunpack.c.0.s8 %v5524
        %v5526 = vlaneseq
        %v5527 = vshrl.u32 %v5526, 7
        %v5528 = vsub.s32 %v5525, %v5527
        %v5529 = vrot.slane %v4976, %v5528
        %v5531 = vunpack.c.l.s4 1983009808
        %v5532 = vunpack.c.0.s8 %v5531
        %v5533 = vlaneseq
        %v5534 = vshrl.u32 %v5533, 7
        %v5535 = vsub.s32 %v5532, %v5534
        %v5536 = vrot.slane %v5522, %v5535
        %v5537 = vcombine.high %v5529, %v5529
        %v5538 = vcombine.high %v5536, %v5536
        %v5539 = vcombine.high %v4977, %v4977
        %v5541 = vunpack.c.l.s4 1983009808
        %v5542 = vunpack.c.0.s8 %v5541
        %v5543 = vlaneseq
        %v5544 = vshrl.u32 %v5543, 7
        %v5545 = vsub.s32 %v5542, %v5544
        %v5546 = vrot.slane %v4977, %v5545
        %v5548 = vunpack.c.l.s4 1983009808
        %v5549 = vunpack.c.0.s8 %v5548
        %v5550 = vlaneseq
        %v5551 = vshrl.u32 %v5550, 7
        %v5552 = vsub.s32 %v5549, %v5551
        %v5553 = vrot.slane %v5539, %v5552
        %v5554 = vcombine.high %v5553, %v5553
        %v5555 = vcombine.high %v4978, %v4978
        %v5557 = vunpack.c.l.s4 1983009808
        %v5558 = vunpack.c.0.s8 %v5557
        %v5559 = vlaneseq
        %v5560 = vshrl.u32 %v5559, 7
        %v5561 = vsub.s32 %v5558, %v5560
        %v5562 = vrot.slane %v4978, %v5561
        %v5564 = vunpack.c.l.s4 1983009808
        %v5565 = vunpack.c.0.s8 %v5564
        %v5566 = vlaneseq
        %v5567 = vshrl.u32 %v5566, 7
        %v5568 = vsub.s32 %v5565, %v5567
        %v5569 = vrot.slane %v5555, %v5568
        %v5570 = vcombine.high %v5562, %v5562
        %v5571 = vcombine.high %v5569, %v5569
        %v5572 = vcombine.high %v4979, %v4979
        %v5574 = vunpack.c.l.s4 1983009808
        %v5575 = vunpack.c.0.s8 %v5574
        %v5576 = vlaneseq
        %v5577 = vshrl.u32 %v5576, 7
        %v5578 = vsub.s32 %v5575, %v5577
        %v5579 = vrot.slane %v4979, %v5578
        %v5581 = vunpack.c.l.s4 1983009808
        %v5582 = vunpack.c.0.s8 %v5581
        %v5583 = vlaneseq
        %v5584 = vshrl.u32 %v5583, 7
        %v5585 = vsub.s32 %v5582, %v5584
        %v5586 = vrot.slane %v5572, %v5585
        %v5587 = vcombine.high %v5579, %v5579
        %v5588 = vcombine.high %v5586, %v5586
        %v5589 = vcombine.high %v4980, %v4980
        %v5591 = vunpack.c.l.s4 1983009808
        %v5592 = vunpack.c.0.s8 %v5591
        %v5593 = vlaneseq
        %v5594 = vshrl.u32 %v5593, 7
        %v5595 = vsub.s32 %v5592, %v5594
        %v5596 = vrot.slane %v4980, %v5595
        %v5598 = vunpack.c.l.s4 1983009808
        %v5599 = vunpack.c.0.s8 %v5598
        %v5600 = vlaneseq
        %v5601 = vshrl.u32 %v5600, 7
        %v5602 = vsub.s32 %v5599, %v5601
        %v5603 = vrot.slane %v5589, %v5602
        %v5604 = vcombine.high %v5596, %v5596
        %v5605 = vcombine.high %v5603, %v5603
        %v5606 = vcombine.high %v4981, %v4981
        %v5608 = vunpack.c.l.s4 1983009808
        %v5609 = vunpack.c.0.s8 %v5608
        %v5610 = vlaneseq
        %v5611 = vshrl.u32 %v5610, 7
        %v5612 = vsub.s32 %v5609, %v5611
        %v5613 = vrot.slane %v4981, %v5612
        %v5615 = vunpack.c.l.s4 1983009808
        %v5616 = vunpack.c.0.s8 %v5615
        %v5617 = vlaneseq
        %v5618 = vshrl.u32 %v5617, 7
        %v5619 = vsub.s32 %v5616, %v5618
        %v5620 = vrot.slane %v5606, %v5619
        %v5621 = vcombine.high %v5613, %v5613
        %v5622 = vcombine.low %v5025, %v5033
        %v5623 = vcombine.low %v5032, %v5034
        %v5625 = vunpack.c.l.s4 1983009808
        %v5626 = vunpack.c.0.s8 %v5625
        %v5627 = vlaneseq
        %v5628 = vshrl.u32 %v5627, 7
        %v5629 = vsub.s32 %v5626, %v5628
        %v5630 = vrot.slane %v5622, %v5629
        %v5632 = vunpack.c.l.s4 1983009808
        %v5633 = vunpack.c.0.s8 %v5632
        %v5634 = vlaneseq
        %v5635 = vshrl.u32 %v5634, 7
        %v5636 = vsub.s32 %v5633, %v5635
        %v5637 = vrot.slane %v5623, %v5636
        %v5638 = vcombine.low %v5630, %v5637
        %v5639 = vcombine.low %v5042, %v5050
        %v5640 = vcombine.low %v5049, %v5051
        %v5642 = vunpack.c.l.s4 1983009808
        %v5643 = vunpack.c.0.s8 %v5642
        %v5644 = vlaneseq
        %v5645 = vshrl.u32 %v5644, 7
        %v5646 = vsub.s32 %v5643, %v5645
        %v5647 = vrot.slane %v5639, %v5646
        %v5649 = vunpack.c.l.s4 1983009808
        %v5650 = vunpack.c.0.s8 %v5649
        %v5651 = vlaneseq
        %v5652 = vshrl.u32 %v5651, 7
        %v5653 = vsub.s32 %v5650, %v5652
        %v5654 = vrot.slane %v5640, %v5653
        %v5655 = vcombine.low %v5647, %v5654
        %v5656 = vcombine.low %v5067, %v5066
        %v5657 = vcombine.low %v5068, %v5076
        %v5659 = vunpack.c.l.s4 1983009808
        %v5660 = vunpack.c.0.s8 %v5659
        %v5661 = vlaneseq
        %v5662 = vshrl.u32 %v5661, 7
        %v5663 = vsub.s32 %v5660, %v5662
        %v5664 = vrot.slane %v5656, %v5663
        %v5666 = vunpack.c.l.s4 1983009808
        %v5667 = vunpack.c.0.s8 %v5666
        %v5668 = vlaneseq
        %v5669 = vshrl.u32 %v5668, 7
        %v5670 = vsub.s32 %v5667, %v5669
        %v5671 = vrot.slane %v5657, %v5670
        %v5672 = vcombine.low %v5664, %v5671
        %v5673 = vcombine.low %v5084, %v5083
        %v5674 = vcombine.low %v5085, %v5093
        %v5676 = vunpack.c.l.s4 1983009808
        %v5677 = vunpack.c.0.s8 %v5676
        %v5678 = vlaneseq
        %v5679 = vshrl.u32 %v5678, 7
        %v5680 = vsub.s32 %v5677, %v5679
        %v5681 = vrot.slane %v5673, %v5680
        %v5683 = vunpack.c.l.s4 1983009808
        %v5684 = vunpack.c.0.s8 %v5683
        %v5685 = vlaneseq
        %v5686 = vshrl.u32 %v5685, 7
        %v5687 = vsub.s32 %v5684, %v5686
        %v5688 = vrot.slane %v5674, %v5687
        %v5689 = vcombine.low %v5681, %v5688
        %v5690 = vcombine.low %v5100, %v5101
        %v5691 = vcombine.low %v5109, %v5117
        %v5693 = vunpack.c.l.s4 1983009808
        %v5694 = vunpack.c.0.s8 %v5693
        %v5695 = vlaneseq
        %v5696 = vshrl.u32 %v5695, 7
        %v5697 = vsub.s32 %v5694, %v5696
        %v5698 = vrot.slane %v5690, %v5697
        %v5700 = vunpack.c.l.s4 1983009808
        %v5701 = vunpack.c.0.s8 %v5700
        %v5702 = vlaneseq
        %v5703 = vshrl.u32 %v5702, 7
        %v5704 = vsub.s32 %v5701, %v5703
        %v5705 = vrot.slane %v5691, %v5704
        %v5706 = vcombine.low %v5698, %v5705
        %v5707 = vcombine.low %v5116, %v5118
        %v5708 = vcombine.low %v5126, %v5134
        %v5710 = vunpack.c.l.s4 1983009808
        %v5711 = vunpack.c.0.s8 %v5710
        %v5712 = vlaneseq
        %v5713 = vshrl.u32 %v5712, 7
        %v5714 = vsub.s32 %v5711, %v5713
        %v5715 = vrot.slane %v5707, %v5714
        %v5717 = vunpack.c.l.s4 1983009808
        %v5718 = vunpack.c.0.s8 %v5717
        %v5719 = vlaneseq
        %v5720 = vshrl.u32 %v5719, 7
        %v5721 = vsub.s32 %v5718, %v5720
        %v5722 = vrot.slane %v5708, %v5721
        %v5723 = vcombine.low %v5715, %v5722
        %v5724 = vcombine.low %v5135, %v5143
        %v5725 = vcombine.low %v5151, %v5150
        %v5727 = vunpack.c.l.s4 1983009808
        %v5728 = vunpack.c.0.s8 %v5727
        %v5729 = vlaneseq
        %v5730 = vshrl.u32 %v5729, 7
        %v5731 = vsub.s32 %v5728, %v5730
        %v5732 = vrot.slane %v5724, %v5731
        %v5734 = vunpack.c.l.s4 1983009808
        %v5735 = vunpack.c.0.s8 %v5734
        %v5736 = vlaneseq
        %v5737 = vshrl.u32 %v5736, 7
        %v5738 = vsub.s32 %v5735, %v5737
        %v5739 = vrot.slane %v5725, %v5738
        %v5740 = vcombine.low %v5732, %v5739
        %v5741 = vcombine.low %v5152, %v5160
        %v5742 = vcombine.low %v5168, %v5167
        %v5744 = vunpack.c.l.s4 1983009808
        %v5745 = vunpack.c.0.s8 %v5744
        %v5746 = vlaneseq
        %v5747 = vshrl.u32 %v5746, 7
        %v5748 = vsub.s32 %v5745, %v5747
        %v5749 = vrot.slane %v5741, %v5748
        %v5751 = vunpack.c.l.s4 1983009808
        %v5752 = vunpack.c.0.s8 %v5751
        %v5753 = vlaneseq
        %v5754 = vshrl.u32 %v5753, 7
        %v5755 = vsub.s32 %v5752, %v5754
        %v5756 = vrot.slane %v5742, %v5755
        %v5757 = vcombine.low %v5749, %v5756
        %v5758 = vcombine.low %v5176, %v5184
        %v5759 = vcombine.low %v5183, %v5185
        %v5761 = vunpack.c.l.s4 1983009808
        %v5762 = vunpack.c.0.s8 %v5761
        %v5763 = vlaneseq
        %v5764 = vshrl.u32 %v5763, 7
        %v5765 = vsub.s32 %v5762, %v5764
        %v5766 = vrot.slane %v5758, %v5765
        %v5768 = vunpack.c.l.s4 1983009808
        %v5769 = vunpack.c.0.s8 %v5768
        %v5770 = vlaneseq
        %v5771 = vshrl.u32 %v5770, 7
        %v5772 = vsub.s32 %v5769, %v5771
        %v5773 = vrot.slane %v5759, %v5772
        %v5774 = vcombine.low %v5766, %v5773
        %v5775 = vcombine.low %v5193, %v5201
        %v5776 = vcombine.low %v5200, %v5202
        %v5778 = vunpack.c.l.s4 1983009808
        %v5779 = vunpack.c.0.s8 %v5778
        %v5780 = vlaneseq
        %v5781 = vshrl.u32 %v5780, 7
        %v5782 = vsub.s32 %v5779, %v5781
        %v5783 = vrot.slane %v5775, %v5782
        %v5785 = vunpack.c.l.s4 1983009808
        %v5786 = vunpack.c.0.s8 %v5785
        %v5787 = vlaneseq
        %v5788 = vshrl.u32 %v5787, 7
        %v5789 = vsub.s32 %v5786, %v5788
        %v5790 = vrot.slane %v5776, %v5789
        %v5791 = vcombine.low %v5783, %v5790
        %v5792 = vcombine.low %v5218, %v5217
        %v5793 = vcombine.low %v5219, %v5227
        %v5795 = vunpack.c.l.s4 1983009808
        %v5796 = vunpack.c.0.s8 %v5795
        %v5797 = vlaneseq
        %v5798 = vshrl.u32 %v5797, 7
        %v5799 = vsub.s32 %v5796, %v5798
        %v5800 = vrot.slane %v5792, %v5799
        %v5802 = vunpack.c.l.s4 1983009808
        %v5803 = vunpack.c.0.s8 %v5802
        %v5804 = vlaneseq
        %v5805 = vshrl.u32 %v5804, 7
        %v5806 = vsub.s32 %v5803, %v5805
        %v5807 = vrot.slane %v5793, %v5806
        %v5808 = vcombine.low %v5800, %v5807
        %v5809 = vcombine.low %v5235, %v5234
        %v5810 = vcombine.low %v5236, %v5244
        %v5812 = vunpack.c.l.s4 1983009808
        %v5813 = vunpack.c.0.s8 %v5812
        %v5814 = vlaneseq
        %v5815 = vshrl.u32 %v5814, 7
        %v5816 = vsub.s32 %v5813, %v5815
        %v5817 = vrot.slane %v5809, %v5816
        %v5819 = vunpack.c.l.s4 1983009808
        %v5820 = vunpack.c.0.s8 %v5819
        %v5821 = vlaneseq
        %v5822 = vshrl.u32 %v5821, 7
        %v5823 = vsub.s32 %v5820, %v5822
        %v5824 = vrot.slane %v5810, %v5823
        %v5825 = vcombine.low %v5817, %v5824
        %v5826 = vcombine.low %v5251, %v5252
        %v5827 = vcombine.low %v5260, %v5268
        %v5829 = vunpack.c.l.s4 1983009808
        %v5830 = vunpack.c.0.s8 %v5829
        %v5831 = vlaneseq
        %v5832 = vshrl.u32 %v5831, 7
        %v5833 = vsub.s32 %v5830, %v5832
        %v5834 = vrot.slane %v5826, %v5833
        %v5836 = vunpack.c.l.s4 1983009808
        %v5837 = vunpack.c.0.s8 %v5836
        %v5838 = vlaneseq
        %v5839 = vshrl.u32 %v5838, 7
        %v5840 = vsub.s32 %v5837, %v5839
        %v5841 = vrot.slane %v5827, %v5840
        %v5842 = vcombine.low %v5834, %v5841
        %v5843 = vcombine.low %v5267, %v5269
        %v5844 = vcombine.low %v5277, %v5285
        %v5846 = vunpack.c.l.s4 1983009808
        %v5847 = vunpack.c.0.s8 %v5846
        %v5848 = vlaneseq
        %v5849 = vshrl.u32 %v5848, 7
        %v5850 = vsub.s32 %v5847, %v5849
        %v5851 = vrot.slane %v5843, %v5850
        %v5853 = vunpack.c.l.s4 1983009808
        %v5854 = vunpack.c.0.s8 %v5853
        %v5855 = vlaneseq
        %v5856 = vshrl.u32 %v5855, 7
        %v5857 = vsub.s32 %v5854, %v5856
        %v5858 = vrot.slane %v5844, %v5857
        %v5859 = vcombine.low %v5851, %v5858
        %v5860 = vcombine.low %v5286, %v5294
        %v5861 = vcombine.low %v5302, %v5301
        %v5863 = vunpack.c.l.s4 1983009808
        %v5864 = vunpack.c.0.s8 %v5863
        %v5865 = vlaneseq
        %v5866 = vshrl.u32 %v5865, 7
        %v5867 = vsub.s32 %v5864, %v5866
        %v5868 = vrot.slane %v5860, %v5867
        %v5870 = vunpack.c.l.s4 1983009808
        %v5871 = vunpack.c.0.s8 %v5870
        %v5872 = vlaneseq
        %v5873 = vshrl.u32 %v5872, 7
        %v5874 = vsub.s32 %v5871, %v5873
        %v5875 = vrot.slane %v5861, %v5874
        %v5876 = vcombine.low %v5868, %v5875
        %v5877 = vcombine.low %v5303, %v5311
        %v5878 = vcombine.low %v5319, %v5318
        %v5880 = vunpack.c.l.s4 1983009808
        %v5881 = vunpack.c.0.s8 %v5880
        %v5882 = vlaneseq
        %v5883 = vshrl.u32 %v5882, 7
        %v5884 = vsub.s32 %v5881, %v5883
        %v5885 = vrot.slane %v5877, %v5884
        %v5887 = vunpack.c.l.s4 1983009808
        %v5888 = vunpack.c.0.s8 %v5887
        %v5889 = vlaneseq
        %v5890 = vshrl.u32 %v5889, 7
        %v5891 = vsub.s32 %v5888, %v5890
        %v5892 = vrot.slane %v5878, %v5891
        %v5893 = vcombine.low %v5885, %v5892
        %v5894 = vcombine.low %v5327, %v5335
        %v5895 = vcombine.low %v5334, %v5336
        %v5897 = vunpack.c.l.s4 1983009808
        %v5898 = vunpack.c.0.s8 %v5897
        %v5899 = vlaneseq
        %v5900 = vshrl.u32 %v5899, 7
        %v5901 = vsub.s32 %v5898, %v5900
        %v5902 = vrot.slane %v5894, %v5901
        %v5904 = vunpack.c.l.s4 1983009808
        %v5905 = vunpack.c.0.s8 %v5904
        %v5906 = vlaneseq
        %v5907 = vshrl.u32 %v5906, 7
        %v5908 = vsub.s32 %v5905, %v5907
        %v5909 = vrot.slane %v5895, %v5908
        %v5910 = vcombine.low %v5902, %v5909
        %v5911 = vcombine.low %v5344, %v5352
        %v5912 = vcombine.low %v5351, %v5353
        %v5914 = vunpack.c.l.s4 1983009808
        %v5915 = vunpack.c.0.s8 %v5914
        %v5916 = vlaneseq
        %v5917 = vshrl.u32 %v5916, 7
        %v5918 = vsub.s32 %v5915, %v5917
        %v5919 = vrot.slane %v5911, %v5918
        %v5921 = vunpack.c.l.s4 1983009808
        %v5922 = vunpack.c.0.s8 %v5921
        %v5923 = vlaneseq
        %v5924 = vshrl.u32 %v5923, 7
        %v5925 = vsub.s32 %v5922, %v5924
        %v5926 = vrot.slane %v5912, %v5925
        %v5927 = vcombine.low %v5919, %v5926
        %v5928 = vcombine.low %v5369, %v5368
        %v5929 = vcombine.low %v5370, %v5378
        %v5931 = vunpack.c.l.s4 1983009808
        %v5932 = vunpack.c.0.s8 %v5931
        %v5933 = vlaneseq
        %v5934 = vshrl.u32 %v5933, 7
        %v5935 = vsub.s32 %v5932, %v5934
        %v5936 = vrot.slane %v5928, %v5935
        %v5938 = vunpack.c.l.s4 1983009808
        %v5939 = vunpack.c.0.s8 %v5938
        %v5940 = vlaneseq
        %v5941 = vshrl.u32 %v5940, 7
        %v5942 = vsub.s32 %v5939, %v5941
        %v5943 = vrot.slane %v5929, %v5942
        %v5944 = vcombine.low %v5936, %v5943
        %v5945 = vcombine.low %v5386, %v5385
        %v5946 = vcombine.low %v5387, %v5395
        %v5948 = vunpack.c.l.s4 1983009808
        %v5949 = vunpack.c.0.s8 %v5948
        %v5950 = vlaneseq
        %v5951 = vshrl.u32 %v5950, 7
        %v5952 = vsub.s32 %v5949, %v5951
        %v5953 = vrot.slane %v5945, %v5952
        %v5955 = vunpack.c.l.s4 1983009808
        %v5956 = vunpack.c.0.s8 %v5955
        %v5957 = vlaneseq
        %v5958 = vshrl.u32 %v5957, 7
        %v5959 = vsub.s32 %v5956, %v5958
        %v5960 = vrot.slane %v5946, %v5959
        %v5961 = vcombine.low %v5953, %v5960
        %v5962 = vcombine.low %v5402, %v5403
        %v5963 = vcombine.low %v5411, %v5419
        %v5965 = vunpack.c.l.s4 1983009808
        %v5966 = vunpack.c.0.s8 %v5965
        %v5967 = vlaneseq
        %v5968 = vshrl.u32 %v5967, 7
        %v5969 = vsub.s32 %v5966, %v5968
        %v5970 = vrot.slane %v5962, %v5969
        %v5972 = vunpack.c.l.s4 1983009808
        %v5973 = vunpack.c.0.s8 %v5972
        %v5974 = vlaneseq
        %v5975 = vshrl.u32 %v5974, 7
        %v5976 = vsub.s32 %v5973, %v5975
        %v5977 = vrot.slane %v5963, %v5976
        %v5978 = vcombine.low %v5970, %v5977
        %v5979 = vcombine.low %v5418, %v5420
        %v5980 = vcombine.low %v5428, %v5436
        %v5982 = vunpack.c.l.s4 1983009808
        %v5983 = vunpack.c.0.s8 %v5982
        %v5984 = vlaneseq
        %v5985 = vshrl.u32 %v5984, 7
        %v5986 = vsub.s32 %v5983, %v5985
        %v5987 = vrot.slane %v5979, %v5986
        %v5989 = vunpack.c.l.s4 1983009808
        %v5990 = vunpack.c.0.s8 %v5989
        %v5991 = vlaneseq
        %v5992 = vshrl.u32 %v5991, 7
        %v5993 = vsub.s32 %v5990, %v5992
        %v5994 = vrot.slane %v5980, %v5993
        %v5995 = vcombine.low %v5987, %v5994
        %v5996 = vcombine.low %v5437, %v5445
        %v5997 = vcombine.low %v5453, %v5452
        %v5999 = vunpack.c.l.s4 1983009808
        %v6000 = vunpack.c.0.s8 %v5999
        %v6001 = vlaneseq
        %v6002 = vshrl.u32 %v6001, 7
        %v6003 = vsub.s32 %v6000, %v6002
        %v6004 = vrot.slane %v5996, %v6003
        %v6006 = vunpack.c.l.s4 1983009808
        %v6007 = vunpack.c.0.s8 %v6006
        %v6008 = vlaneseq
        %v6009 = vshrl.u32 %v6008, 7
        %v6010 = vsub.s32 %v6007, %v6009
        %v6011 = vrot.slane %v5997, %v6010
        %v6012 = vcombine.low %v6004, %v6011
        %v6013 = vcombine.low %v5454, %v5462
        %v6014 = vcombine.low %v5470, %v5469
        %v6016 = vunpack.c.l.s4 1983009808
        %v6017 = vunpack.c.0.s8 %v6016
        %v6018 = vlaneseq
        %v6019 = vshrl.u32 %v6018, 7
        %v6020 = vsub.s32 %v6017, %v6019
        %v6021 = vrot.slane %v6013, %v6020
        %v6023 = vunpack.c.l.s4 1983009808
        %v6024 = vunpack.c.0.s8 %v6023
        %v6025 = vlaneseq
        %v6026 = vshrl.u32 %v6025, 7
        %v6027 = vsub.s32 %v6024, %v6026
        %v6028 = vrot.slane %v6014, %v6027
        %v6029 = vcombine.low %v6021, %v6028
        %v6030 = vcombine.low %v5478, %v5486
        %v6031 = vcombine.low %v5485, %v5487
        %v6033 = vunpack.c.l.s4 1983009808
        %v6034 = vunpack.c.0.s8 %v6033
        %v6035 = vlaneseq
        %v6036 = vshrl.u32 %v6035, 7
        %v6037 = vsub.s32 %v6034, %v6036
        %v6038 = vrot.slane %v6030, %v6037
        %v6040 = vunpack.c.l.s4 1983009808
        %v6041 = vunpack.c.0.s8 %v6040
        %v6042 = vlaneseq
        %v6043 = vshrl.u32 %v6042, 7
        %v6044 = vsub.s32 %v6041, %v6043
        %v6045 = vrot.slane %v6031, %v6044
        %v6046 = vcombine.low %v6038, %v6045
        %v6047 = vcombine.low %v5495, %v5503
        %v6048 = vcombine.low %v5502, %v5504
        %v6050 = vunpack.c.l.s4 1983009808
        %v6051 = vunpack.c.0.s8 %v6050
        %v6052 = vlaneseq
        %v6053 = vshrl.u32 %v6052, 7
        %v6054 = vsub.s32 %v6051, %v6053
        %v6055 = vrot.slane %v6047, %v6054
        %v6057 = vunpack.c.l.s4 1983009808
        %v6058 = vunpack.c.0.s8 %v6057
        %v6059 = vlaneseq
        %v6060 = vshrl.u32 %v6059, 7
        %v6061 = vsub.s32 %v6058, %v6060
        %v6062 = vrot.slane %v6048, %v6061
        %v6063 = vcombine.low %v6055, %v6062
        %v6064 = vcombine.low %v5520, %v5519
        %v6065 = vcombine.low %v5521, %v5529
        %v6067 = vunpack.c.l.s4 1983009808
        %v6068 = vunpack.c.0.s8 %v6067
        %v6069 = vlaneseq
        %v6070 = vshrl.u32 %v6069, 7
        %v6071 = vsub.s32 %v6068, %v6070
        %v6072 = vrot.slane %v6064, %v6071
        %v6074 = vunpack.c.l.s4 1983009808
        %v6075 = vunpack.c.0.s8 %v6074
        %v6076 = vlaneseq
        %v6077 = vshrl.u32 %v6076, 7
        %v6078 = vsub.s32 %v6075, %v6077
        %v6079 = vrot.slane %v6065, %v6078
        %v6080 = vcombine.low %v6072, %v6079
        %v6081 = vcombine.low %v5537, %v5536
        %v6082 = vcombine.low %v5538, %v5546
        %v6084 = vunpack.c.l.s4 1983009808
        %v6085 = vunpack.c.0.s8 %v6084
        %v6086 = vlaneseq
        %v6087 = vshrl.u32 %v6086, 7
        %v6088 = vsub.s32 %v6085, %v6087
        %v6089 = vrot.slane %v6081, %v6088
        %v6091 = vunpack.c.l.s4 1983009808
        %v6092 = vunpack.c.0.s8 %v6091
        %v6093 = vlaneseq
        %v6094 = vshrl.u32 %v6093, 7
        %v6095 = vsub.s32 %v6092, %v6094
        %v6096 = vrot.slane %v6082, %v6095
        %v6097 = vcombine.low %v6089, %v6096
        %v6098 = vcombine.low %v5553, %v5554
        %v6099 = vcombine.low %v5562, %v5570
        %v6101 = vunpack.c.l.s4 1983009808
        %v6102 = vunpack.c.0.s8 %v6101
        %v6103 = vlaneseq
        %v6104 = vshrl.u32 %v6103, 7
        %v6105 = vsub.s32 %v6102, %v6104
        %v6106 = vrot.slane %v6098, %v6105
        %v6108 = vunpack.c.l.s4 1983009808
        %v6109 = vunpack.c.0.s8 %v6108
        %v6110 = vlaneseq
        %v6111 = vshrl.u32 %v6110, 7
        %v6112 = vsub.s32 %v6109, %v6111
        %v6113 = vrot.slane %v6099, %v6112
        %v6114 = vcombine.low %v6106, %v6113
        %v6115 = vcombine.low %v5569, %v5571
        %v6116 = vcombine.low %v5579, %v5587
        %v6118 = vunpack.c.l.s4 1983009808
        %v6119 = vunpack.c.0.s8 %v6118
        %v6120 = vlaneseq
        %v6121 = vshrl.u32 %v6120, 7
        %v6122 = vsub.s32 %v6119, %v6121
        %v6123 = vrot.slane %v6115, %v6122
        %v6125 = vunpack.c.l.s4 1983009808
        %v6126 = vunpack.c.0.s8 %v6125
        %v6127 = vlaneseq
        %v6128 = vshrl.u32 %v6127, 7
        %v6129 = vsub.s32 %v6126, %v6128
        %v6130 = vrot.slane %v6116, %v6129
        %v6131 = vcombine.low %v6123, %v6130
        %v6132 = vcombine.low %v5588, %v5596
        %v6133 = vcombine.low %v5604, %v5603
        %v6135 = vunpack.c.l.s4 1983009808
        %v6136 = vunpack.c.0.s8 %v6135
        %v6137 = vlaneseq
        %v6138 = vshrl.u32 %v6137, 7
        %v6139 = vsub.s32 %v6136, %v6138
        %v6140 = vrot.slane %v6132, %v6139
        %v6142 = vunpack.c.l.s4 1983009808
        %v6143 = vunpack.c.0.s8 %v6142
        %v6144 = vlaneseq
        %v6145 = vshrl.u32 %v6144, 7
        %v6146 = vsub.s32 %v6143, %v6145
        %v6147 = vrot.slane %v6133, %v6146
        %v6148 = vcombine.low %v6140, %v6147
        %v6149 = vcombine.low %v5605, %v5613
        %v6150 = vcombine.low %v5621, %v5620
        %v6152 = vunpack.c.l.s4 1983009808
        %v6153 = vunpack.c.0.s8 %v6152
        %v6154 = vlaneseq
        %v6155 = vshrl.u32 %v6154, 7
        %v6156 = vsub.s32 %v6153, %v6155
        %v6157 = vrot.slane %v6149, %v6156
        %v6159 = vunpack.c.l.s4 1983009808
        %v6160 = vunpack.c.0.s8 %v6159
        %v6161 = vlaneseq
        %v6162 = vshrl.u32 %v6161, 7
        %v6163 = vsub.s32 %v6160, %v6162
        %v6164 = vrot.slane %v6150, %v6163
        %v6165 = vcombine.low %v6157, %v6164
        %v6198 = vpack.c.bf16 %v5655, %v5638
        %v6199 = vpack.c.bf16 %v5689, %v5672
        %v6200 = vpack.c.bf16 %v5723, %v5706
        %v6201 = vpack.c.bf16 %v5757, %v5740
        %v6202 = vpack.c.bf16 %v5791, %v5774
        %v6203 = vpack.c.bf16 %v5825, %v5808
        %v6204 = vpack.c.bf16 %v5859, %v5842
        %v6205 = vpack.c.bf16 %v5893, %v5876
        %v6206 = vpack.c.bf16 %v5927, %v5910
        %v6207 = vpack.c.bf16 %v5961, %v5944
        %v6208 = vpack.c.bf16 %v5995, %v5978
        %v6209 = vpack.c.bf16 %v6029, %v6012
        %v6210 = vpack.c.bf16 %v6063, %v6046
        %v6211 = vpack.c.bf16 %v6097, %v6080
        %v6212 = vpack.c.bf16 %v6131, %v6114
        %v6213 = vpack.c.bf16 %v6165, %v6148
        %v6214 = vld [vmem:[%s7] sm:$0xf]
        %v6215 = vld [vmem:[%s7 + $0x4] sm:$0xf]
        %v6216 = vld [vmem:[%s7 + $0x8] sm:$0xf]
        %v6217 = vld [vmem:[%s7 + $0xc] sm:$0xf]
        %v6222 = vunpack.c.l.b16 %v6214
        %v6223 = vunpack.c.l.b16 %v6215
        %v6224 = vunpack.c.l.b16 %v6216
        %v6225 = vunpack.c.l.b16 %v6217
        %v6226 = vpack.c.b16 %v6223, %v6222
        %v6227 = vpack.c.b16 %v6225, %v6224
        %v6231 = vsel %vm1865, %v6198, 0
        %v6234 = vsel %vm1865, %v6199, 0
        %v6237 = vsel %vm1865, %v6200, 0
        %v6240 = vsel %vm1865, %v6201, 0
        %v6243 = vsel %vm1865, %v6202, 0
        %v6246 = vsel %vm1865, %v6203, 0
        %v6249 = vsel %vm1865, %v6204, 0
        %v6252 = vsel %vm1865, %v6205, 0
        %v6255 = vsel %vm1865, %v6206, 0
        %v6258 = vsel %vm1865, %v6207, 0
        %v6261 = vsel %vm1865, %v6208, 0
        %v6264 = vsel %vm1865, %v6209, 0
        %v6267 = vsel %vm1865, %v6210, 0
        %v6270 = vsel %vm1865, %v6211, 0
        %v6273 = vsel %vm1865, %v6212, 0
        %v6276 = vsel %vm1865, %v6213, 0
        %6278 = vmatprep.subr.bf16.mxu0 0
        %6279 = vmatpush1.bf16.msra.mxu0 %v6226
        %6280 = vmatprep.subr.bf16.mxu0 0
        %6281 = vmatpush1.bf16.msra.mxu0 %v6227
        %6282 = vmatprep.subr.bf16.mxu0 0
        %6283 = vmatpush1.bf16.msra.mxu0 0
        %6284 = vmatprep.subr.bf16.mxu0 0
        %6285 = vmatpush1.bf16.msra.mxu0 0
        %6286 = vmatprep.subr.bf16.mxu0 0
        %6287 = vmatpush1.bf16.msra.mxu0 0
        %6288 = vmatprep.subr.bf16.mxu0 0
        %6289 = vmatpush1.bf16.msra.mxu0 0
        %6290 = vmatprep.subr.bf16.mxu0 0
        %6291 = vmatpush1.bf16.msra.mxu0 0
        %6292 = vmatprep.subr.bf16.mxu0 0
        %6293 = vmatpush1.bf16.msra.mxu0 0
        %6294 = vmatprep.subr.bf16.mxu0 0
        %6295 = vmatpush1.bf16.msra.mxu0 0
        %6296 = vmatprep.subr.bf16.mxu0 0
        %6297 = vmatpush1.bf16.msra.mxu0 0
        %6298 = vmatprep.subr.bf16.mxu0 0
        %6299 = vmatpush1.bf16.msra.mxu0 0
        %6300 = vmatprep.subr.bf16.mxu0 0
        %6301 = vmatpush1.bf16.msra.mxu0 0
        %6302 = vmatprep.subr.bf16.mxu0 0
        %6303 = vmatpush1.bf16.msra.mxu0 0
        %6304 = vmatprep.subr.bf16.mxu0 0
        %6305 = vmatpush1.bf16.msra.mxu0 0
        %6306 = vmatprep.subr.bf16.mxu0 0
        %6307 = vmatpush1.bf16.msra.mxu0 0
        %6308 = vmatprep.subr.bf16.mxu0 0
        %6309 = vmatpush1.bf16.msra.mxu0 0
        %6310 = vmatprep.mubr.bf16.mxu0 0
        %6311 = vmatmul.mubr.bf16.gmra.mrb[0].mxu0 %v6231
        %v6312 = vpop.f32.mrb[0].mxu0
        %v6313 = vadd.f32 0.0, %v6312
        %v6314 = vpop.f32.mrb[0].mxu0
        %v6315 = vpop.f32.mrb[0].mxu0
        %v6316 = vadd.f32 0.0, %v6315
        %v6317 = vpop.f32.mrb[0].mxu0
        %6318 = vmatprep.mubr.bf16.mxu0 0
        %6319 = vmatmul.mubr.bf16.gmra.mrb[0].mxu0 %v6234
        %v6320 = vpop.f32.mrb[0].mxu0
        %v6321 = vadd.f32 0.0, %v6320
        %v6322 = vpop.f32.mrb[0].mxu0
        %v6323 = vpop.f32.mrb[0].mxu0
        %v6324 = vadd.f32 0.0, %v6323
        %v6325 = vpop.f32.mrb[0].mxu0
        %6326 = vmatprep.mubr.bf16.mxu0 0
        %6327 = vmatmul.mubr.bf16.gmra.mrb[0].mxu0 %v6237
        %v6328 = vpop.f32.mrb[0].mxu0
        %v6329 = vadd.f32 0.0, %v6328
        %v6330 = vpop.f32.mrb[0].mxu0
        %v6331 = vpop.f32.mrb[0].mxu0
        %v6332 = vadd.f32 0.0, %v6331
        %v6333 = vpop.f32.mrb[0].mxu0
        %6334 = vmatprep.mubr.bf16.mxu0 0
        %6335 = vmatmul.mubr.bf16.gmra.mrb[0].mxu0 %v6240
        %v6336 = vpop.f32.mrb[0].mxu0
        %v6337 = vadd.f32 0.0, %v6336
        %v6338 = vpop.f32.mrb[0].mxu0
        %v6339 = vpop.f32.mrb[0].mxu0
        %v6340 = vadd.f32 0.0, %v6339
        %v6341 = vpop.f32.mrb[0].mxu0
        %6342 = vmatprep.mubr.bf16.mxu0 0
        %6343 = vmatmul.mubr.bf16.gmra.mrb[0].mxu0 %v6243
        %v6344 = vpop.f32.mrb[0].mxu0
        %v6345 = vadd.f32 0.0, %v6344
        %v6346 = vpop.f32.mrb[0].mxu0
        %v6347 = vpop.f32.mrb[0].mxu0
        %v6348 = vadd.f32 0.0, %v6347
        %v6349 = vpop.f32.mrb[0].mxu0
        %6350 = vmatprep.mubr.bf16.mxu0 0
        %6351 = vmatmul.mubr.bf16.gmra.mrb[0].mxu0 %v6246
        %v6352 = vpop.f32.mrb[0].mxu0
        %v6353 = vadd.f32 0.0, %v6352
        %v6354 = vpop.f32.mrb[0].mxu0
        %v6355 = vpop.f32.mrb[0].mxu0
        %v6356 = vadd.f32 0.0, %v6355
        %v6357 = vpop.f32.mrb[0].mxu0
        %6358 = vmatprep.mubr.bf16.mxu0 0
        %6359 = vmatmul.mubr.bf16.gmra.mrb[0].mxu0 %v6249
        %v6360 = vpop.f32.mrb[0].mxu0
        %v6361 = vadd.f32 0.0, %v6360
        %v6362 = vpop.f32.mrb[0].mxu0
        %v6363 = vpop.f32.mrb[0].mxu0
        %v6364 = vadd.f32 0.0, %v6363
        %v6365 = vpop.f32.mrb[0].mxu0
        %6366 = vmatprep.mubr.bf16.mxu0 0
        %6367 = vmatmul.mubr.bf16.gmra.mrb[0].mxu0 %v6252
        %v6368 = vpop.f32.mrb[0].mxu0
        %v6369 = vadd.f32 0.0, %v6368
        %v6370 = vpop.f32.mrb[0].mxu0
        %v6371 = vpop.f32.mrb[0].mxu0
        %v6372 = vadd.f32 0.0, %v6371
        %v6373 = vpop.f32.mrb[0].mxu0
        %6374 = vmatprep.mubr.bf16.mxu0 0
        %6375 = vmatmul.mubr.bf16.gmra.mrb[0].mxu0 %v6255
        %v6376 = vpop.f32.mrb[0].mxu0
        %v6377 = vadd.f32 0.0, %v6376
        %v6378 = vpop.f32.mrb[0].mxu0
        %v6379 = vpop.f32.mrb[0].mxu0
        %v6380 = vadd.f32 0.0, %v6379
        %v6381 = vpop.f32.mrb[0].mxu0
        %6382 = vmatprep.mubr.bf16.mxu0 0
        %6383 = vmatmul.mubr.bf16.gmra.mrb[0].mxu0 %v6258
        %v6384 = vpop.f32.mrb[0].mxu0
        %v6385 = vadd.f32 0.0, %v6384
        %v6386 = vpop.f32.mrb[0].mxu0
        %v6387 = vpop.f32.mrb[0].mxu0
        %v6388 = vadd.f32 0.0, %v6387
        %v6389 = vpop.f32.mrb[0].mxu0
        %6390 = vmatprep.mubr.bf16.mxu0 0
        %6391 = vmatmul.mubr.bf16.gmra.mrb[0].mxu0 %v6261
        %v6392 = vpop.f32.mrb[0].mxu0
        %v6393 = vadd.f32 0.0, %v6392
        %v6394 = vpop.f32.mrb[0].mxu0
        %v6395 = vpop.f32.mrb[0].mxu0
        %v6396 = vadd.f32 0.0, %v6395
        %v6397 = vpop.f32.mrb[0].mxu0
        %6398 = vmatprep.mubr.bf16.mxu0 0
        %6399 = vmatmul.mubr.bf16.gmra.mrb[0].mxu0 %v6264
        %v6400 = vpop.f32.mrb[0].mxu0
        %v6401 = vadd.f32 0.0, %v6400
        %v6402 = vpop.f32.mrb[0].mxu0
        %v6403 = vpop.f32.mrb[0].mxu0
        %v6404 = vadd.f32 0.0, %v6403
        %v6405 = vpop.f32.mrb[0].mxu0
        %6406 = vmatprep.mubr.bf16.mxu0 0
        %6407 = vmatmul.mubr.bf16.gmra.mrb[0].mxu0 %v6267
        %v6408 = vpop.f32.mrb[0].mxu0
        %v6409 = vadd.f32 0.0, %v6408
        %v6410 = vpop.f32.mrb[0].mxu0
        %v6411 = vpop.f32.mrb[0].mxu0
        %v6412 = vadd.f32 0.0, %v6411
        %v6413 = vpop.f32.mrb[0].mxu0
        %6414 = vmatprep.mubr.bf16.mxu0 0
        %6415 = vmatmul.mubr.bf16.gmra.mrb[0].mxu0 %v6270
        %v6416 = vpop.f32.mrb[0].mxu0
        %v6417 = vadd.f32 0.0, %v6416
        %v6418 = vpop.f32.mrb[0].mxu0
        %v6419 = vpop.f32.mrb[0].mxu0
        %v6420 = vadd.f32 0.0, %v6419
        %v6421 = vpop.f32.mrb[0].mxu0
        %6422 = vmatprep.mubr.bf16.mxu0 0
        %6423 = vmatmul.mubr.bf16.gmra.mrb[0].mxu0 %v6273
        %v6424 = vpop.f32.mrb[0].mxu0
        %v6425 = vadd.f32 0.0, %v6424
        %v6426 = vpop.f32.mrb[0].mxu0
        %v6427 = vpop.f32.mrb[0].mxu0
        %v6428 = vadd.f32 0.0, %v6427
        %v6429 = vpop.f32.mrb[0].mxu0
        %6430 = vmatprep.mubr.bf16.mxu0 0
        %6431 = vmatmul.mubr.bf16.gmra.mrb[0].mxu0 %v6276
        %v6432 = vpop.f32.mrb[0].mxu0
        %v6433 = vadd.f32 0.0, %v6432
        %v6434 = vpop.f32.mrb[0].mxu0
        %v6435 = vpop.f32.mrb[0].mxu0
        %v6436 = vadd.f32 0.0, %v6435
        %v6437 = vpop.f32.mrb[0].mxu0
        %6438 = vdwg.mxu0
        %v6439 = vld [vmem:[%s8] sm:$0x1]
        %v6441 = vlaneseq
        %v6442 = vshrl.u32 %v6441, 7
        %v6443 = vsub.s32 0, %v6442
        %v6444 = vrot.slane %v6439, %v6443
        %v6446 = vmul.f32 %v6313, %v6444
        %v6447 = vmul.f32 %v6316, %v6444
        %v6448 = vmul.f32 %v6321, %v6444
        %v6449 = vmul.f32 %v6324, %v6444
        %v6450 = vmul.f32 %v6329, %v6444
        %v6451 = vmul.f32 %v6332, %v6444
        %v6452 = vmul.f32 %v6337, %v6444
        %v6453 = vmul.f32 %v6340, %v6444
        %v6454 = vmul.f32 %v6345, %v6444
        %v6455 = vmul.f32 %v6348, %v6444
        %v6456 = vmul.f32 %v6353, %v6444
        %v6457 = vmul.f32 %v6356, %v6444
        %v6458 = vmul.f32 %v6361, %v6444
        %v6459 = vmul.f32 %v6364, %v6444
        %v6460 = vmul.f32 %v6369, %v6444
        %v6461 = vmul.f32 %v6372, %v6444
        %v6462 = vmul.f32 %v6377, %v6444
        %v6463 = vmul.f32 %v6380, %v6444
        %v6464 = vmul.f32 %v6385, %v6444
        %v6465 = vmul.f32 %v6388, %v6444
        %v6466 = vmul.f32 %v6393, %v6444
        %v6467 = vmul.f32 %v6396, %v6444
        %v6468 = vmul.f32 %v6401, %v6444
        %v6469 = vmul.f32 %v6404, %v6444
        %v6470 = vmul.f32 %v6409, %v6444
        %v6471 = vmul.f32 %v6412, %v6444
        %v6472 = vmul.f32 %v6417, %v6444
        %v6473 = vmul.f32 %v6420, %v6444
        %v6474 = vmul.f32 %v6425, %v6444
        %v6475 = vmul.f32 %v6428, %v6444
        %v6476 = vmul.f32 %v6433, %v6444
        %v6477 = vmul.f32 %v6436, %v6444
        %v6478 = vld [vmem:[%s9] sm:$0x1]
        %v6480 = vlaneseq
        %v6481 = vshrl.u32 %v6480, 7
        %v6482 = vsub.s32 0, %v6481
        %v6483 = vrot.slane %v6478, %v6482
        %v6485 = vadd.f32 %v6446, %v6483
        %v6486 = vadd.f32 %v6447, %v6483
        %v6487 = vadd.f32 %v6448, %v6483
        %v6488 = vadd.f32 %v6449, %v6483
        %v6489 = vadd.f32 %v6450, %v6483
        %v6490 = vadd.f32 %v6451, %v6483
        %v6491 = vadd.f32 %v6452, %v6483
        %v6492 = vadd.f32 %v6453, %v6483
        %v6493 = vadd.f32 %v6454, %v6483
        %v6494 = vadd.f32 %v6455, %v6483
        %v6495 = vadd.f32 %v6456, %v6483
        %v6496 = vadd.f32 %v6457, %v6483
        %v6497 = vadd.f32 %v6458, %v6483
        %v6498 = vadd.f32 %v6459, %v6483
        %v6499 = vadd.f32 %v6460, %v6483
        %v6500 = vadd.f32 %v6461, %v6483
        %v6501 = vadd.f32 %v6462, %v6483
        %v6502 = vadd.f32 %v6463, %v6483
        %v6503 = vadd.f32 %v6464, %v6483
        %v6504 = vadd.f32 %v6465, %v6483
        %v6505 = vadd.f32 %v6466, %v6483
        %v6506 = vadd.f32 %v6467, %v6483
        %v6507 = vadd.f32 %v6468, %v6483
        %v6508 = vadd.f32 %v6469, %v6483
        %v6509 = vadd.f32 %v6470, %v6483
        %v6510 = vadd.f32 %v6471, %v6483
        %v6511 = vadd.f32 %v6472, %v6483
        %v6512 = vadd.f32 %v6473, %v6483
        %v6513 = vadd.f32 %v6474, %v6483
        %v6514 = vadd.f32 %v6475, %v6483
        %v6515 = vadd.f32 %v6476, %v6483
        %v6516 = vadd.f32 %v6477, %v6483
        %v6517 = vadd.f32 %v6485, %v6486
        %v6518 = vadd.f32 %v6517, %v6487
        %v6519 = vadd.f32 %v6518, %v6488
        %v6520 = vadd.f32 %v6519, %v6489
        %v6521 = vadd.f32 %v6520, %v6490
        %v6522 = vadd.f32 %v6521, %v6491
        %v6523 = vadd.f32 %v6522, %v6492
        %v6524 = vadd.f32 %v6523, %v6493
        %v6525 = vadd.f32 %v6524, %v6494
        %v6526 = vadd.f32 %v6525, %v6495
        %v6527 = vadd.f32 %v6526, %v6496
        %v6528 = vadd.f32 %v6527, %v6497
        %v6529 = vadd.f32 %v6528, %v6498
        %v6530 = vadd.f32 %v6529, %v6499
        %v6531 = vadd.f32 %v6530, %v6500
        %v6532 = vadd.f32 %v6531, %v6501
        %v6533 = vadd.f32 %v6532, %v6502
        %v6534 = vadd.f32 %v6533, %v6503
        %v6535 = vadd.f32 %v6534, %v6504
        %v6536 = vadd.f32 %v6535, %v6505
        %v6537 = vadd.f32 %v6536, %v6506
        %v6538 = vadd.f32 %v6537, %v6507
        %v6539 = vadd.f32 %v6538, %v6508
        %v6540 = vadd.f32 %v6539, %v6509
        %v6541 = vadd.f32 %v6540, %v6510
        %v6542 = vadd.f32 %v6541, %v6511
        %v6543 = vadd.f32 %v6542, %v6512
        %v6544 = vadd.f32 %v6543, %v6513
        %v6545 = vadd.f32 %v6544, %v6514
        %v6546 = vadd.f32 %v6545, %v6515
        %v6547 = vadd.f32 %v6546, %v6516
        %v6548 = vrot.slane %v6547, 4
        %v6549 = vadd.f32 %v6547, %v6548
        %v6550 = vrot.slane %v6549, 2
        %v6551 = vadd.f32 %v6549, %v6550
        %v6552 = vrot.slane %v6551, 1
        %v6553 = vadd.f32 %v6551, %v6552
        %v6554 = vrcp.pop 256.0
        %v6555 = vmul.f32 %v6553, %v6554
        %v6556 = vld [vmem:[%s10] sm:$0xff]
        %v6557 = vld [vmem:[%s10 + $0x8] sm:$0xff]
        %v6558 = vld [vmem:[%s10 + $0x10] sm:$0xff]
        %v6559 = vld [vmem:[%s10 + $0x18] sm:$0xff]
        %v6560 = vld [vmem:[%s10 + $0x20] sm:$0xff]
        %v6561 = vld [vmem:[%s10 + $0x28] sm:$0xff]
        %v6562 = vld [vmem:[%s10 + $0x30] sm:$0xff]
        %v6563 = vld [vmem:[%s10 + $0x38] sm:$0xff]
        %v6564 = vld [vmem:[%s10 + $0x40] sm:$0xff]
        %v6565 = vld [vmem:[%s10 + $0x48] sm:$0xff]
        %v6566 = vld [vmem:[%s10 + $0x50] sm:$0xff]
        %v6567 = vld [vmem:[%s10 + $0x58] sm:$0xff]
        %v6568 = vld [vmem:[%s10 + $0x60] sm:$0xff]
        %v6569 = vld [vmem:[%s10 + $0x68] sm:$0xff]
        %v6570 = vld [vmem:[%s10 + $0x70] sm:$0xff]
        %v6571 = vld [vmem:[%s10 + $0x78] sm:$0xff]
        %v6572 = vld [vmem:[%s11] sm:$0x1]
        %6573 = vmatprep.subr.mxu0 0.0
        %6574 = vmatpush1.msra.mxu0 %v6556
        %6575 = vmatprep.subr.mxu0 0.0
        %6576 = vmatpush1.msra.mxu0 %v6557
        %6577 = vmatprep.subr.mxu0 0.0
        %6578 = vmatpush1.msra.mxu0 %v6558
        %6579 = vmatprep.subr.mxu0 0.0
        %6580 = vmatpush1.msra.mxu0 %v6559
        %6581 = vmatprep.subr.mxu0 0.0
        %6582 = vmatpush1.msra.mxu0 %v6560
        %6583 = vmatprep.subr.mxu0 0.0
        %6584 = vmatpush1.msra.mxu0 %v6561
        %6585 = vmatprep.subr.mxu0 0.0
        %6586 = vmatpush1.msra.mxu0 %v6562
        %6587 = vmatprep.subr.mxu0 0.0
        %6588 = vmatpush1.msra.mxu0 %v6563
        %6589 = vmatprep.subr.mxu0 0.0
        %6590 = vmatpush1.msra.mxu0 %v6564
        %6591 = vmatprep.subr.mxu0 0.0
        %6592 = vmatpush1.msra.mxu0 %v6565
        %6593 = vmatprep.subr.mxu0 0.0
        %6594 = vmatpush1.msra.mxu0 %v6566
        %6595 = vmatprep.subr.mxu0 0.0
        %6596 = vmatpush1.msra.mxu0 %v6567
        %6597 = vmatprep.subr.mxu0 0.0
        %6598 = vmatpush1.msra.mxu0 %v6568
        %6599 = vmatprep.subr.mxu0 0.0
        %6600 = vmatpush1.msra.mxu0 %v6569
        %6601 = vmatprep.subr.mxu0 0.0
        %6602 = vmatpush1.msra.mxu0 %v6570
        %6603 = vmatprep.subr.mxu0 0.0
        %6604 = vmatpush1.msra.mxu0 %v6571
        %6605 = vmatprep.subr.mxu0 0.0
        %6606 = vmatpush1.msra.mxu0 0.0
        %6607 = vmatprep.subr.mxu0 0.0
        %6608 = vmatpush1.msra.mxu0 0.0
        %6609 = vmatprep.subr.mxu0 0.0
        %6610 = vmatpush1.msra.mxu0 0.0
        %6611 = vmatprep.subr.mxu0 0.0
        %6612 = vmatpush1.msra.mxu0 0.0
        %6613 = vmatprep.subr.mxu0 0.0
        %6614 = vmatpush1.msra.mxu0 0.0
        %6615 = vmatprep.subr.mxu0 0.0
        %6616 = vmatpush1.msra.mxu0 0.0
        %6617 = vmatprep.subr.mxu0 0.0
        %6618 = vmatpush1.msra.mxu0 0.0
        %6619 = vmatprep.subr.mxu0 0.0
        %6620 = vmatpush1.msra.mxu0 0.0
        %6621 = vmatprep.subr.mxu0 0.0
        %6622 = vmatpush1.msra.mxu0 0.0
        %6623 = vmatprep.subr.mxu0 0.0
        %6624 = vmatpush1.msra.mxu0 0.0
        %6625 = vmatprep.subr.mxu0 0.0
        %6626 = vmatpush1.msra.mxu0 0.0
        %6627 = vmatprep.subr.mxu0 0.0
        %6628 = vmatpush1.msra.mxu0 0.0
        %6629 = vmatprep.subr.mxu0 0.0
        %6630 = vmatpush1.msra.mxu0 0.0
        %6631 = vmatprep.subr.mxu0 0.0
        %6632 = vmatpush1.msra.mxu0 0.0
        %6633 = vmatprep.subr.mxu0 0.0
        %6634 = vmatpush1.msra.mxu0 0.0
        %6635 = vmatprep.subr.mxu0 0.0
        %6636 = vmatpush1.msra.mxu0 0.0
        %6637 = vmatprep.mubr.f32.mxu0 0.0
        %6638 = vmatmul.mubr.f32.gmra.mrb[0].mxu0 %v6555
        %v6639 = vpop.f32.mrb[0].mxu0
        %v6640 = vadd.f32 %v6572, %v6639
        %v6641 = vpop.f32.mrb[0].mxu0
        %6642 = vdwg.mxu0
        %v6643 = vmax.f32 %v6640, 0.0
        %v6644 = vld [vmem:[%s12] sm:$0xff]
        %v6645 = vld [vmem:[%s13] sm:$0x1]
        %vm6646 = vcmask 64512
        %v6648 = vsel %vm6646, %v6643, 0
        %6650 = vmatprep.subr.mxu0 0.0
        %6651 = vmatpush1.msra.mxu0 %v6644
        %6652 = vmatprep.subr.mxu0 0.0
        %6653 = vmatpush1.msra.mxu0 0.0
        %6654 = vmatprep.subr.mxu0 0.0
        %6655 = vmatpush1.msra.mxu0 0.0
        %6656 = vmatprep.subr.mxu0 0.0
        %6657 = vmatpush1.msra.mxu0 0.0
        %6658 = vmatprep.subr.mxu0 0.0
        %6659 = vmatpush1.msra.mxu0 0.0
        %6660 = vmatprep.subr.mxu0 0.0
        %6661 = vmatpush1.msra.mxu0 0.0
        %6662 = vmatprep.subr.mxu0 0.0
        %6663 = vmatpush1.msra.mxu0 0.0
        %6664 = vmatprep.subr.mxu0 0.0
        %6665 = vmatpush1.msra.mxu0 0.0
        %6666 = vmatprep.subr.mxu0 0.0
        %6667 = vmatpush1.msra.mxu0 0.0
        %6668 = vmatprep.subr.mxu0 0.0
        %6669 = vmatpush1.msra.mxu0 0.0
        %6670 = vmatprep.subr.mxu0 0.0
        %6671 = vmatpush1.msra.mxu0 0.0
        %6672 = vmatprep.subr.mxu0 0.0
        %6673 = vmatpush1.msra.mxu0 0.0
        %6674 = vmatprep.subr.mxu0 0.0
        %6675 = vmatpush1.msra.mxu0 0.0
        %6676 = vmatprep.subr.mxu0 0.0
        %6677 = vmatpush1.msra.mxu0 0.0
        %6678 = vmatprep.subr.mxu0 0.0
        %6679 = vmatpush1.msra.mxu0 0.0
        %6680 = vmatprep.subr.mxu0 0.0
        %6681 = vmatpush1.msra.mxu0 0.0
        %6682 = vmatprep.subr.mxu0 0.0
        %6683 = vmatpush1.msra.mxu0 0.0
        %6684 = vmatprep.subr.mxu0 0.0
        %6685 = vmatpush1.msra.mxu0 0.0
        %6686 = vmatprep.subr.mxu0 0.0
        %6687 = vmatpush1.msra.mxu0 0.0
        %6688 = vmatprep.subr.mxu0 0.0
        %6689 = vmatpush1.msra.mxu0 0.0
        %6690 = vmatprep.subr.mxu0 0.0
        %6691 = vmatpush1.msra.mxu0 0.0
        %6692 = vmatprep.subr.mxu0 0.0
        %6693 = vmatpush1.msra.mxu0 0.0
        %6694 = vmatprep.subr.mxu0 0.0
        %6695 = vmatpush1.msra.mxu0 0.0
        %6696 = vmatprep.subr.mxu0 0.0
        %6697 = vmatpush1.msra.mxu0 0.0
        %6698 = vmatprep.subr.mxu0 0.0
        %6699 = vmatpush1.msra.mxu0 0.0
        %6700 = vmatprep.subr.mxu0 0.0
        %6701 = vmatpush1.msra.mxu0 0.0
        %6702 = vmatprep.subr.mxu0 0.0
        %6703 = vmatpush1.msra.mxu0 0.0
        %6704 = vmatprep.subr.mxu0 0.0
        %6705 = vmatpush1.msra.mxu0 0.0
        %6706 = vmatprep.subr.mxu0 0.0
        %6707 = vmatpush1.msra.mxu0 0.0
        %6708 = vmatprep.subr.mxu0 0.0
        %6709 = vmatpush1.msra.mxu0 0.0
        %6710 = vmatprep.subr.mxu0 0.0
        %6711 = vmatpush1.msra.mxu0 0.0
        %6712 = vmatprep.subr.mxu0 0.0
        %6713 = vmatpush1.msra.mxu0 0.0
        %6714 = vmatprep.mubr.f32.mxu0 0.0
        %6715 = vmatmul.mubr.f32.gmra.mrb[0].mxu0 %v6648
        %v6716 = vpop.f32.mrb[0].mxu0
        %v6717 = vadd.f32 %v6645, %v6716
        %v6718 = vpop.f32.mrb[0].mxu0
        %6719 = vdwg.mxu0
        %v6720 = vxor.u32 %v6717, 2147483648
        %v6721 = vmul.f32 %v6720, 1.442695
        %v6722 = vpow.pop %v6721
        %v6723 = vadd.f32 %v6722, 1.0
        %v6724 = vrcp.pop %v6723
        %v6725 = vmul.f32 1.0, %v6724
        %v6726 = vld [vmem:[%s465] sm:$0xf]
        %v6727 = vld [vmem:[%s465 + $0x4] sm:$0xf]
        %v6728 = vld [vmem:[%s465 + $0x8] sm:$0xf]
        %v6729 = vld [vmem:[%s465 + $0xc] sm:$0xf]
        %v6730 = vld [vmem:[%s465 + $0x10] sm:$0xf]
        %v6731 = vld [vmem:[%s465 + $0x14] sm:$0xf]
        %v6732 = vld [vmem:[%s465 + $0x18] sm:$0xf]
        %v6733 = vld [vmem:[%s465 + $0x1c] sm:$0xf]
        %v6734 = vld [vmem:[%s465 + $0x20] sm:$0xf]
        %v6735 = vld [vmem:[%s465 + $0x24] sm:$0xf]
        %v6736 = vld [vmem:[%s465 + $0x28] sm:$0xf]
        %v6737 = vld [vmem:[%s465 + $0x2c] sm:$0xf]
        %v6738 = vld [vmem:[%s465 + $0x30] sm:$0xf]
        %v6739 = vld [vmem:[%s465 + $0x34] sm:$0xf]
        %v6740 = vld [vmem:[%s465 + $0x38] sm:$0xf]
        %v6741 = vld [vmem:[%s465 + $0x3c] sm:$0xf]
        %v6742 = vld [vmem:[%s465 + $0x40] sm:$0xf]
        %v6743 = vld [vmem:[%s465 + $0x44] sm:$0xf]
        %v6744 = vld [vmem:[%s465 + $0x48] sm:$0xf]
        %v6745 = vld [vmem:[%s465 + $0x4c] sm:$0xf]
        %v6746 = vld [vmem:[%s465 + $0x50] sm:$0xf]
        %v6747 = vld [vmem:[%s465 + $0x54] sm:$0xf]
        %v6748 = vld [vmem:[%s465 + $0x58] sm:$0xf]
        %v6749 = vld [vmem:[%s465 + $0x5c] sm:$0xf]
        %v6750 = vld [vmem:[%s465 + $0x60] sm:$0xf]
        %v6751 = vld [vmem:[%s465 + $0x64] sm:$0xf]
        %v6752 = vld [vmem:[%s465 + $0x68] sm:$0xf]
        %v6753 = vld [vmem:[%s465 + $0x6c] sm:$0xf]
        %v6754 = vld [vmem:[%s465 + $0x70] sm:$0xf]
        %v6755 = vld [vmem:[%s465 + $0x74] sm:$0xf]
        %v6756 = vld [vmem:[%s465 + $0x78] sm:$0xf]
        %v6757 = vld [vmem:[%s465 + $0x7c] sm:$0xf]
        %v6758 = vunpack.c.l.bf16 %v6726
        %v6759 = vunpack.c.l.bf16 %v6727
        %v6760 = vunpack.c.l.bf16 %v6728
        %v6761 = vunpack.c.l.bf16 %v6729
        %v6762 = vunpack.c.l.bf16 %v6730
        %v6763 = vunpack.c.l.bf16 %v6731
        %v6764 = vunpack.c.l.bf16 %v6732
        %v6765 = vunpack.c.l.bf16 %v6733
        %v6766 = vunpack.c.l.bf16 %v6734
        %v6767 = vunpack.c.l.bf16 %v6735
        %v6768 = vunpack.c.l.bf16 %v6736
        %v6769 = vunpack.c.l.bf16 %v6737
        %v6770 = vunpack.c.l.bf16 %v6738
        %v6771 = vunpack.c.l.bf16 %v6739
        %v6772 = vunpack.c.l.bf16 %v6740
        %v6773 = vunpack.c.l.bf16 %v6741
        %v6774 = vunpack.c.l.bf16 %v6742
        %v6775 = vunpack.c.l.bf16 %v6743
        %v6776 = vunpack.c.l.bf16 %v6744
        %v6777 = vunpack.c.l.bf16 %v6745
        %v6778 = vunpack.c.l.bf16 %v6746
        %v6779 = vunpack.c.l.bf16 %v6747
        %v6780 = vunpack.c.l.bf16 %v6748
        %v6781 = vunpack.c.l.bf16 %v6749
        %v6782 = vunpack.c.l.bf16 %v6750
        %v6783 = vunpack.c.l.bf16 %v6751
        %v6784 = vunpack.c.l.bf16 %v6752
        %v6785 = vunpack.c.l.bf16 %v6753
        %v6786 = vunpack.c.l.bf16 %v6754
        %v6787 = vunpack.c.l.bf16 %v6755
        %v6788 = vunpack.c.l.bf16 %v6756
        %v6789 = vunpack.c.l.bf16 %v6757
        %v6790 = vlaneseq
        %v6791 = vshrl.u32 %v6790, 7
        %v6792 = vsub.s32 0, %v6791
        %v6793 = vrot.slane %v6725, %v6792
        %v6794 = vmul.f32 %v6485, %v6793
        %v6795 = vmul.f32 %v6486, %v6793
        %v6796 = vmul.f32 %v6487, %v6793
        %v6797 = vmul.f32 %v6488, %v6793
        %v6798 = vmul.f32 %v6489, %v6793
        %v6799 = vmul.f32 %v6490, %v6793
        %v6800 = vmul.f32 %v6491, %v6793
        %v6801 = vmul.f32 %v6492, %v6793
        %v6802 = vmul.f32 %v6493, %v6793
        %v6803 = vmul.f32 %v6494, %v6793
        %v6804 = vmul.f32 %v6495, %v6793
        %v6805 = vmul.f32 %v6496, %v6793
        %v6806 = vmul.f32 %v6497, %v6793
        %v6807 = vmul.f32 %v6498, %v6793
        %v6808 = vmul.f32 %v6499, %v6793
        %v6809 = vmul.f32 %v6500, %v6793
        %v6810 = vmul.f32 %v6501, %v6793
        %v6811 = vmul.f32 %v6502, %v6793
        %v6812 = vmul.f32 %v6503, %v6793
        %v6813 = vmul.f32 %v6504, %v6793
        %v6814 = vmul.f32 %v6505, %v6793
        %v6815 = vmul.f32 %v6506, %v6793
        %v6816 = vmul.f32 %v6507, %v6793
        %v6817 = vmul.f32 %v6508, %v6793
        %v6818 = vmul.f32 %v6509, %v6793
        %v6819 = vmul.f32 %v6510, %v6793
        %v6820 = vmul.f32 %v6511, %v6793
        %v6821 = vmul.f32 %v6512, %v6793
        %v6822 = vmul.f32 %v6513, %v6793
        %v6823 = vmul.f32 %v6514, %v6793
        %v6824 = vmul.f32 %v6515, %v6793
        %v6825 = vmul.f32 %v6516, %v6793
        %v6826 = vadd.f32 %v6794, %v6758
        %v6827 = vadd.f32 %v6795, %v6759
        %v6828 = vadd.f32 %v6796, %v6760
        %v6829 = vadd.f32 %v6797, %v6761
        %v6830 = vadd.f32 %v6798, %v6762
        %v6831 = vadd.f32 %v6799, %v6763
        %v6832 = vadd.f32 %v6800, %v6764
        %v6833 = vadd.f32 %v6801, %v6765
        %v6834 = vadd.f32 %v6802, %v6766
        %v6835 = vadd.f32 %v6803, %v6767
        %v6836 = vadd.f32 %v6804, %v6768
        %v6837 = vadd.f32 %v6805, %v6769
        %v6838 = vadd.f32 %v6806, %v6770
        %v6839 = vadd.f32 %v6807, %v6771
        %v6840 = vadd.f32 %v6808, %v6772
        %v6841 = vadd.f32 %v6809, %v6773
        %v6842 = vadd.f32 %v6810, %v6774
        %v6843 = vadd.f32 %v6811, %v6775
        %v6844 = vadd.f32 %v6812, %v6776
        %v6845 = vadd.f32 %v6813, %v6777
        %v6846 = vadd.f32 %v6814, %v6778
        %v6847 = vadd.f32 %v6815, %v6779
        %v6848 = vadd.f32 %v6816, %v6780
        %v6849 = vadd.f32 %v6817, %v6781
        %v6850 = vadd.f32 %v6818, %v6782
        %v6851 = vadd.f32 %v6819, %v6783
        %v6852 = vadd.f32 %v6820, %v6784
        %v6853 = vadd.f32 %v6821, %v6785
        %v6854 = vadd.f32 %v6822, %v6786
        %v6855 = vadd.f32 %v6823, %v6787
        %v6856 = vadd.f32 %v6824, %v6788
        %v6857 = vadd.f32 %v6825, %v6789
        %v6858 = vmul.f32 %v6826, 0.5
        %v6859 = vmul.f32 %v6827, 0.5
        %v6860 = vmul.f32 %v6828, 0.5
        %v6861 = vmul.f32 %v6829, 0.5
        %v6862 = vmul.f32 %v6830, 0.5
        %v6863 = vmul.f32 %v6831, 0.5
        %v6864 = vmul.f32 %v6832, 0.5
        %v6865 = vmul.f32 %v6833, 0.5
        %v6866 = vmul.f32 %v6834, 0.5
        %v6867 = vmul.f32 %v6835, 0.5
        %v6868 = vmul.f32 %v6836, 0.5
        %v6869 = vmul.f32 %v6837, 0.5
        %v6870 = vmul.f32 %v6838, 0.5
        %v6871 = vmul.f32 %v6839, 0.5
        %v6872 = vmul.f32 %v6840, 0.5
        %v6873 = vmul.f32 %v6841, 0.5
        %v6874 = vmul.f32 %v6842, 0.5
        %v6875 = vmul.f32 %v6843, 0.5
        %v6876 = vmul.f32 %v6844, 0.5
        %v6877 = vmul.f32 %v6845, 0.5
        %v6878 = vmul.f32 %v6846, 0.5
        %v6879 = vmul.f32 %v6847, 0.5
        %v6880 = vmul.f32 %v6848, 0.5
        %v6881 = vmul.f32 %v6849, 0.5
        %v6882 = vmul.f32 %v6850, 0.5
        %v6883 = vmul.f32 %v6851, 0.5
        %v6884 = vmul.f32 %v6852, 0.5
        %v6885 = vmul.f32 %v6853, 0.5
        %v6886 = vmul.f32 %v6854, 0.5
        %v6887 = vmul.f32 %v6855, 0.5
        %v6888 = vmul.f32 %v6856, 0.5
        %v6889 = vmul.f32 %v6857, 0.5
        %v6890 = vmul.f32 %v6826, 0.70710677
        %v6891 = vmul.f32 %v6827, 0.70710677
        %v6892 = vmul.f32 %v6828, 0.70710677
        %v6893 = vmul.f32 %v6829, 0.70710677
        %v6894 = vmul.f32 %v6830, 0.70710677
        %v6895 = vmul.f32 %v6831, 0.70710677
        %v6896 = vmul.f32 %v6832, 0.70710677
        %v6897 = vmul.f32 %v6833, 0.70710677
        %v6898 = vmul.f32 %v6834, 0.70710677
        %v6899 = vmul.f32 %v6835, 0.70710677
        %v6900 = vmul.f32 %v6836, 0.70710677
        %v6901 = vmul.f32 %v6837, 0.70710677
        %v6902 = vmul.f32 %v6838, 0.70710677
        %v6903 = vmul.f32 %v6839, 0.70710677
        %v6904 = vmul.f32 %v6840, 0.70710677
        %v6905 = vmul.f32 %v6841, 0.70710677
        %v6906 = vmul.f32 %v6842, 0.70710677
        %v6907 = vmul.f32 %v6843, 0.70710677
        %v6908 = vmul.f32 %v6844, 0.70710677
        %v6909 = vmul.f32 %v6845, 0.70710677
        %v6910 = vmul.f32 %v6846, 0.70710677
        %v6911 = vmul.f32 %v6847, 0.70710677
        %v6912 = vmul.f32 %v6848, 0.70710677
        %v6913 = vmul.f32 %v6849, 0.70710677
        %v6914 = vmul.f32 %v6850, 0.70710677
        %v6915 = vmul.f32 %v6851, 0.70710677
        %v6916 = vmul.f32 %v6852, 0.70710677
        %v6917 = vmul.f32 %v6853, 0.70710677
        %v6918 = vmul.f32 %v6854, 0.70710677
        %v6919 = vmul.f32 %v6855, 0.70710677
        %v6920 = vmul.f32 %v6856, 0.70710677
        %v6921 = vmul.f32 %v6857, 0.70710677
        %v6922 = verf.f32.pop %v6890
        %v6923 = verf.f32.pop %v6891
        %v6924 = verf.f32.pop %v6892
        %v6925 = verf.f32.pop %v6893
        %v6926 = verf.f32.pop %v6894
        %v6927 = verf.f32.pop %v6895
        %v6928 = verf.f32.pop %v6896
        %v6929 = verf.f32.pop %v6897
        %v6930 = verf.f32.pop %v6898
        %v6931 = verf.f32.pop %v6899
        %v6932 = verf.f32.pop %v6900
        %v6933 = verf.f32.pop %v6901
        %v6934 = verf.f32.pop %v6902
        %v6935 = verf.f32.pop %v6903
        %v6936 = verf.f32.pop %v6904
        %v6937 = verf.f32.pop %v6905
        %v6938 = verf.f32.pop %v6906
        %v6939 = verf.f32.pop %v6907
        %v6940 = verf.f32.pop %v6908
        %v6941 = verf.f32.pop %v6909
        %v6942 = verf.f32.pop %v6910
        %v6943 = verf.f32.pop %v6911
        %v6944 = verf.f32.pop %v6912
        %v6945 = verf.f32.pop %v6913
        %v6946 = verf.f32.pop %v6914
        %v6947 = verf.f32.pop %v6915
        %v6948 = verf.f32.pop %v6916
        %v6949 = verf.f32.pop %v6917
        %v6950 = verf.f32.pop %v6918
        %v6951 = verf.f32.pop %v6919
        %v6952 = verf.f32.pop %v6920
        %v6953 = verf.f32.pop %v6921
        %v6954 = vadd.f32 %v6922, 1.0
        %v6955 = vadd.f32 %v6923, 1.0
        %v6956 = vadd.f32 %v6924, 1.0
        %v6957 = vadd.f32 %v6925, 1.0
        %v6958 = vadd.f32 %v6926, 1.0
        %v6959 = vadd.f32 %v6927, 1.0
        %v6960 = vadd.f32 %v6928, 1.0
        %v6961 = vadd.f32 %v6929, 1.0
        %v6962 = vadd.f32 %v6930, 1.0
        %v6963 = vadd.f32 %v6931, 1.0
        %v6964 = vadd.f32 %v6932, 1.0
        %v6965 = vadd.f32 %v6933, 1.0
        %v6966 = vadd.f32 %v6934, 1.0
        %v6967 = vadd.f32 %v6935, 1.0
        %v6968 = vadd.f32 %v6936, 1.0
        %v6969 = vadd.f32 %v6937, 1.0
        %v6970 = vadd.f32 %v6938, 1.0
        %v6971 = vadd.f32 %v6939, 1.0
        %v6972 = vadd.f32 %v6940, 1.0
        %v6973 = vadd.f32 %v6941, 1.0
        %v6974 = vadd.f32 %v6942, 1.0
        %v6975 = vadd.f32 %v6943, 1.0
        %v6976 = vadd.f32 %v6944, 1.0
        %v6977 = vadd.f32 %v6945, 1.0
        %v6978 = vadd.f32 %v6946, 1.0
        %v6979 = vadd.f32 %v6947, 1.0
        %v6980 = vadd.f32 %v6948, 1.0
        %v6981 = vadd.f32 %v6949, 1.0
        %v6982 = vadd.f32 %v6950, 1.0
        %v6983 = vadd.f32 %v6951, 1.0
        %v6984 = vadd.f32 %v6952, 1.0
        %v6985 = vadd.f32 %v6953, 1.0
        %v6986 = vmul.f32 %v6858, %v6954
        %v6987 = vmul.f32 %v6859, %v6955
        %v6988 = vmul.f32 %v6860, %v6956
        %v6989 = vmul.f32 %v6861, %v6957
        %v6990 = vmul.f32 %v6862, %v6958
        %v6991 = vmul.f32 %v6863, %v6959
        %v6992 = vmul.f32 %v6864, %v6960
        %v6993 = vmul.f32 %v6865, %v6961
        %v6994 = vmul.f32 %v6866, %v6962
        %v6995 = vmul.f32 %v6867, %v6963
        %v6996 = vmul.f32 %v6868, %v6964
        %v6997 = vmul.f32 %v6869, %v6965
        %v6998 = vmul.f32 %v6870, %v6966
        %v6999 = vmul.f32 %v6871, %v6967
        %v7000 = vmul.f32 %v6872, %v6968
        %v7001 = vmul.f32 %v6873, %v6969
        %v7002 = vmul.f32 %v6874, %v6970
        %v7003 = vmul.f32 %v6875, %v6971
        %v7004 = vmul.f32 %v6876, %v6972
        %v7005 = vmul.f32 %v6877, %v6973
        %v7006 = vmul.f32 %v6878, %v6974
        %v7007 = vmul.f32 %v6879, %v6975
        %v7008 = vmul.f32 %v6880, %v6976
        %v7009 = vmul.f32 %v6881, %v6977
        %v7010 = vmul.f32 %v6882, %v6978
        %v7011 = vmul.f32 %v6883, %v6979
        %v7012 = vmul.f32 %v6884, %v6980
        %v7013 = vmul.f32 %v6885, %v6981
        %v7014 = vmul.f32 %v6886, %v6982
        %v7015 = vmul.f32 %v6887, %v6983
        %v7016 = vmul.f32 %v6888, %v6984
        %v7017 = vmul.f32 %v6889, %v6985
        %7018 = vst [vmem:[%s460] sm:$0xff] %v6986
        %7019 = vst [vmem:[%s460 + $0x8] sm:$0xff] %v6987
        %7020 = vst [vmem:[%s460 + $0x10] sm:$0xff] %v6988
        %7021 = vst [vmem:[%s460 + $0x18] sm:$0xff] %v6989
        %7022 = vst [vmem:[%s460 + $0x20] sm:$0xff] %v6990
        %7023 = vst [vmem:[%s460 + $0x28] sm:$0xff] %v6991
        %7024 = vst [vmem:[%s460 + $0x30] sm:$0xff] %v6992
        %7025 = vst [vmem:[%s460 + $0x38] sm:$0xff] %v6993
        %7026 = vst [vmem:[%s460 + $0x40] sm:$0xff] %v6994
        %7027 = vst [vmem:[%s460 + $0x48] sm:$0xff] %v6995
        %7028 = vst [vmem:[%s460 + $0x50] sm:$0xff] %v6996
        %7029 = vst [vmem:[%s460 + $0x58] sm:$0xff] %v6997
        %7030 = vst [vmem:[%s460 + $0x60] sm:$0xff] %v6998
        %7031 = vst [vmem:[%s460 + $0x68] sm:$0xff] %v6999
        %7032 = vst [vmem:[%s460 + $0x70] sm:$0xff] %v7000
        %7033 = vst [vmem:[%s460 + $0x78] sm:$0xff] %v7001
        %7034 = vst [vmem:[%s460 + $0x80] sm:$0xff] %v7002
        %7035 = vst [vmem:[%s460 + $0x88] sm:$0xff] %v7003
        %7036 = vst [vmem:[%s460 + $0x90] sm:$0xff] %v7004
        %7037 = vst [vmem:[%s460 + $0x98] sm:$0xff] %v7005
        %7038 = vst [vmem:[%s460 + $0xa0] sm:$0xff] %v7006
        %7039 = vst [vmem:[%s460 + $0xa8] sm:$0xff] %v7007
        %7040 = vst [vmem:[%s460 + $0xb0] sm:$0xff] %v7008
        %7041 = vst [vmem:[%s460 + $0xb8] sm:$0xff] %v7009
        %7042 = vst [vmem:[%s460 + $0xc0] sm:$0xff] %v7010
        %7043 = vst [vmem:[%s460 + $0xc8] sm:$0xff] %v7011
        %7044 = vst [vmem:[%s460 + $0xd0] sm:$0xff] %v7012
        %7045 = vst [vmem:[%s460 + $0xd8] sm:$0xff] %v7013
        %7046 = vst [vmem:[%s460 + $0xe0] sm:$0xff] %v7014
        %7047 = vst [vmem:[%s460 + $0xe8] sm:$0xff] %v7015
        %7048 = vst [vmem:[%s460 + $0xf0] sm:$0xff] %v7016
        %7049 = vst [vmem:[%s460 + $0xf8] sm:$0xff] %v7017
        %s7050 = sand.u32 %s335, 1
        %s7051 = scalar_lea.sflag [#allocation5], %s7050
        %s7052 = sand.u32 %s335, 1
        %s7053 = smul.addr %s7052, 256
        %s7054 = scalar_lea.vmem [#allocation4], %s7053
        // Predicated region
        $region77: #{tpu_custom_call.1} parent=75 // pred_check
          %p7055 = pneg %p345
        $region78: #{tpu_custom_call.1} parent=75 // pred_check_branch
          %7057 = sbr.rel (%p7055) target = $region80
        $region79: #{tpu_custom_call.1} parent=75 // pred_region
          %s7059 = ssub.s32 4096, 4096
          %7060 = vsyncadd %s7051, %s7059
          %s7061 = smul.addr %s28, 32
          %s7062 = smul.addr %s7061, 128
          %s7063 = scalar_lea.hbm %s14, %s7062
          %s7064 = sshll.u32 %s7054, 4
          %s7065 = int_to_ptr.vmem [resolvable:$true] %s7064
          %7070 = dma.vmem_to_hbm [thread:$0]  %s7065, 4096, %s7063, %s7051, 128, 128, 8
        $region80: #{tpu_custom_call.1} parent=75 // pred_fallthru
          _
      $region76: #{tpu_custom_call.1} parent=5 // pred_fallthru
        _
      %p7071 = scmp.le.s32.totalorder 2, %s23
      // Predicated region
      $region81: #{tpu_custom_call.1} parent=5 // pred_check
        %p7072 = pneg %p7071
      $region82: #{tpu_custom_call.1} parent=5 // pred_check_branch
        %7074 = sbr.rel (%p7072) target = $region84
      $region83: #{tpu_custom_call.1} parent=5 // pred_region
        %s7075 = ssub.s32 %s23, 2
        // Predicated region
        $region85: #{tpu_custom_call.1} parent=83 // pred_check
          %p7076 = pneg %p351
        $region86: #{tpu_custom_call.1} parent=83 // pred_check_branch
          %7078 = sbr.rel (%p7076) target = $region88
        $region87: #{tpu_custom_call.1} parent=83 // pred_region
          %s7079 = sand.u32 %s336, 1
          %s7080 = scalar_lea.sflag [#allocation5], %s7079
          %s7081 = sand.u32 %s336, 1
          %s7082 = smul.addr %s7081, 256
          %s7083 = scalar_lea.vmem [#allocation4], %s7082
          %7084 = dma.done %s7080, 4096
        $region88: #{tpu_custom_call.1} parent=83 // pred_fallthru
          _
      $region84: #{tpu_custom_call.1} parent=5 // pred_fallthru
        _
    $region6: #{tpu_custom_call.1} parent=1 // loop_footer
      %s27 = sadd.s32 1, %s23
    $region7: #{tpu_custom_call.1} parent=1 // loop_footer_branch
      %22 = sbr.rel target = $region3
    $region8: #{tpu_custom_call.1} parent=1 // loop_exit
      _
    %7085 = vsyncpa [#allocation5], 1
    %s7086 = scalar_lea.sflag [#allocation5], 1
    %7087 = vsyncpa %s7086, 1

</llo_original>
